<compile_context>
chip_gen: v7x
topology: tpu7x:2x2x1
jax: 0.10.0
libtpu: 0.0.40
codegen_flags: <defaults>
</compile_context>

<pallas_src>
import functools

import jax
import jax.numpy as jnp
from jax.experimental import pallas as pl


# ----------------------------------------------------------------------------
# In-kernel math helpers
# ----------------------------------------------------------------------------

def _erf_f32(x):
    # Abramowitz & Stegun 7.1.26 erf approximation (max abs error ~1.5e-7,
    # i.e. float32 accuracy), composed only of mul/add/div/exp/select.
    p = 0.3275911
    a1, a2, a3, a4, a5 = (0.254829592, -0.284496736, 1.421413741,
                          -1.453152027, 1.061405429)
    ax = jnp.abs(x)
    t = 1.0 / (1.0 + p * ax)
    poly = ((((a5 * t + a4) * t + a3) * t + a2) * t + a1) * t
    e = 1.0 - poly * jnp.exp(-ax * ax)
    return jnp.where(x < 0, -e, e)


def _gelu_exact(x):
    # Matches torch.nn.functional.gelu default (erf-based) to f32 accuracy.
    return 0.5 * x * (1.0 + _erf_f32(x * 0.7071067811865476))


# ----------------------------------------------------------------------------
# Pallas kernels (all single-block: whole operands resident in VMEM)
# ----------------------------------------------------------------------------

def _linear_kernel(x_ref, w_ref, b_ref, o_ref, *, apply_gelu):
    y = jnp.dot(x_ref[...], w_ref[...], preferred_element_type=jnp.float32) + b_ref[...]
    if apply_gelu:
        y = _gelu_exact(y)
    o_ref[...] = y


def _linear_add_kernel(x_ref, w_ref, b_ref, r_ref, o_ref, *, apply_gelu):
    # 1x1 conv + spectral residual (+ optional GELU), fully fused.
    y = (jnp.dot(x_ref[...], w_ref[...], preferred_element_type=jnp.float32)
         + b_ref[...] + r_ref[...])
    if apply_gelu:
        y = _gelu_exact(y)
    o_ref[...] = y


def _mlp_kernel(x_ref, w1_ref, b1_ref, w2_ref, b2_ref, o_ref):
    # fc1 + exact GELU + fc2 fused; the [M, fc_dim] intermediate never leaves VMEM.
    h = jnp.dot(x_ref[...], w1_ref[...], preferred_element_type=jnp.float32) + b1_ref[...]
    h = _gelu_exact(h)
    o_ref[...] = (jnp.dot(h, w2_ref[...], preferred_element_type=jnp.float32)
                  + b2_ref[...])


def _spectral_modes_kernel(x_ref, w_ref, o_ref, *, n_modes):
    # x_ref: [S, B, 2*Ci], w_ref: [S, 2*Ci, 2*Co], o_ref: [S, B, 2*Co]
    # One real matmul per Fourier mode (complex packed as [re | im]); S is a
    # small static constant, so the loop unrolls inside a single grid step.
    for s in range(n_modes):
        o_ref[s] = jnp.dot(x_ref[s], w_ref[s], preferred_element_type=jnp.float32)


# ----------------------------------------------------------------------------
# Pallas wrappers
# ----------------------------------------------------------------------------

def linear_pallas(x2d, w, b, residual=None, gelu=False):
    """[M,K] @ [K,N] + b (+ residual) (+ exact GELU) in one single-block call."""
    M = x2d.shape[0]
    N = w.shape[1]
    out_shape = jax.ShapeDtypeStruct((M, N), jnp.float32)
    b2 = b.reshape(1, N)
    if residual is None:
        kern = functools.partial(_linear_kernel, apply_gelu=gelu)
        return pl.pallas_call(kern, out_shape=out_shape)(x2d, w, b2)
    kern = functools.partial(_linear_add_kernel, apply_gelu=gelu)
    return pl.pallas_call(kern, out_shape=out_shape)(x2d, w, b2, residual)


def mlp_pallas(x2d, w1, b1, w2, b2):
    """fc1 + exact GELU + fc2 fused into one single-block Pallas call."""
    M = x2d.shape[0]
    N = w2.shape[1]
    return pl.pallas_call(
        _mlp_kernel, out_shape=jax.ShapeDtypeStruct((M, N), jnp.float32)
    )(x2d, w1, b1.reshape(1, -1), w2, b2.reshape(1, -1))


def spectral_modes_pallas(x_packed, w_packed):
    """x_packed: [S,B,2Ci] real-packed modes, w_packed: [S,2Ci,2Co] -> [S,B,2Co]."""
    S, B, _ = x_packed.shape
    n_out = w_packed.shape[2]
    kern = functools.partial(_spectral_modes_kernel, n_modes=S)
    return pl.pallas_call(
        kern, out_shape=jax.ShapeDtypeStruct((S, B, n_out), jnp.float32)
    )(x_packed, w_packed)


# ----------------------------------------------------------------------------
# Model forward (FFT + tiny glue in XLA, all matmuls / activations in Pallas)
# ----------------------------------------------------------------------------

def spectral_conv2d_nhwc(h, w_packed, m1, m2):
    """SpectralConv2d.forward in NHWC. h: [B,H,W,Ci] f32 -> [B,H,W,Co] f32."""
    B, H, W, Ci = h.shape
    Co = w_packed.shape[2] // 2
    Wf = W // 2 + 1
    # TODO(synk): rfft2 / irfft2 have no Pallas TPU primitive; computed with XLA FFT.
    x_ft = jnp.fft.rfft2(h, axes=(1, 2))                         # [B,H,Wf,Ci] c64

    top = x_ft[:, :m1, :m2, :]                                   # [B,m1,m2,Ci]
    bot = x_ft[:, H - m1:, :m2, :]                               # [B,m1,m2,Ci]
    xm = jnp.concatenate([top, bot], axis=1)                     # [B,2*m1,m2,Ci]
    S = 2 * m1 * m2
    xm = jnp.transpose(xm, (1, 2, 0, 3)).reshape(S, B, Ci)       # tiny tensor
    x_packed = jnp.concatenate([jnp.real(xm), jnp.imag(xm)], axis=-1)  # [S,B,2Ci]

    out = spectral_modes_pallas(x_packed, w_packed)              # [S,B,2Co]
    out_c = out[..., :Co] + 1j * out[..., Co:]                   # [S,B,Co] c64
    out_c = jnp.transpose(out_c.reshape(2 * m1, m2, B, Co), (2, 0, 1, 3))

    out_ft = jnp.zeros((B, H, Wf, Co), dtype=jnp.complex64)
    out_ft = out_ft.at[:, :m1, :m2, :].set(out_c[:, :m1])
    out_ft = out_ft.at[:, H - m1:, :m2, :].set(out_c[:, m1:])
    return jnp.fft.irfft2(out_ft, s=(H, W), axes=(1, 2))         # [B,H,W,Co] f32


def block_forward(h, bp, apply_gelu):
    """Block.forward (+ optional fused GELU). h: [B,H,W,C] NHWC float32."""
    B, H, W, C = h.shape
    Co = bp["ws_w"].shape[1]
    x1 = spectral_conv2d_nhwc(h, bp["w_packed"], bp["m1"], bp["m2"])
    M = B * H * W
    out = linear_pallas(h.reshape(M, C), bp["ws_w"], bp["ws_b"],
                        residual=x1.reshape(M, Co), gelu=apply_gelu)
    return out.reshape(B, H, W, Co)


def fno2d_forward(params, x, y):
    """x: [B,Sx,Sy,Cx], y: [B,Sx,Sy,Cy] with Cx + Cy + 2 == in_dim."""
    x = jnp.concatenate([x, y], axis=-1)
    B, Sx, Sy, _ = x.shape

    # get_grid
    gridx = jnp.broadcast_to(
        jnp.linspace(0.0, 1.0, Sx, dtype=jnp.float32).reshape(1, Sx, 1, 1),
        (B, Sx, Sy, 1))
    gridy = jnp.broadcast_to(
        jnp.linspace(0.0, 1.0, Sy, dtype=jnp.float32).reshape(1, 1, Sy, 1),
        (B, Sx, Sy, 1))
    x = jnp.concatenate([x, gridx, gridy], axis=-1)              # [B,Sx,Sy,in_dim]

    width = params["fc0_w"].shape[1]
    h = linear_pallas(x.reshape(B * Sx * Sy, -1), params["fc0_w"], params["fc0_b"])
    h = h.reshape(B, Sx, Sy, width)

    pad = params["padding"]
    # F.pad(x_nchw, [0, pad]) pads the last spatial dim (W == Sy): axis 2 in NHWC.
    if pad > 0:
        h = jnp.pad(h, ((0, 0), (0, 0), (0, pad), (0, 0)))

    # The PyTorch forward reuses self.layers1 for every depth iteration.
    depth = params["depth"]
    for i in range(depth):
        h = block_forward(h, params["block"], apply_gelu=(i != depth - 1))

    if pad > 0:  # guard: padding == 0 would otherwise produce an empty slice
        h = h[:, :, :-pad, :]

    out = mlp_pallas(h.reshape(B * Sx * Sy, width),
                     params["fc1_w"], params["fc1_b"],
                     params["fc2_w"], params["fc2_b"])
    out_dim = params["fc2_w"].shape[1]
    return out.reshape(B, Sx, Sy, out_dim)


# ----------------------------------------------------------------------------
# Deterministic parameter init (shapes from the PyTorch __init__)
# ----------------------------------------------------------------------------

def _pack_complex_weight(wr, wi):
    """[Ci,Co,m1,m2] real/imag -> per-mode real-packed [[wr,wi],[-wi,wr]]:
    returns [m1*m2, 2*Ci, 2*Co] so [xr|xi] @ W gives [Re|Im]."""
    Ci, Co, m1, m2 = wr.shape
    wr_m = jnp.transpose(wr, (2, 3, 0, 1)).reshape(m1 * m2, Ci, Co)
    wi_m = jnp.transpose(wi, (2, 3, 0, 1)).reshape(m1 * m2, Ci, Co)
    top = jnp.concatenate([wr_m, wi_m], axis=2)      # rows multiplied by xr
    bot = jnp.concatenate([-wi_m, wr_m], axis=2)     # rows multiplied by xi
    return jnp.concatenate([top, bot], axis=1)       # [S, 2Ci, 2Co]


def init_params(key, depth=4, modes1=4, modes2=4, width=30,
                fc_dim=128, in_dim=5, out_dim=1, padding=2):
    ks = jax.random.split(key, 8)

    def lin(k, fan_in, fan_out):
        k1, k2 = jax.random.split(k)
        bound = 1.0 / jnp.sqrt(jnp.float32(fan_in))
        w = jax.random.uniform(k1, (fan_in, fan_out), jnp.float32, -bound, bound)
        b = jax.random.uniform(k2, (fan_out,), jnp.float32, -bound, bound)
        return w, b

    fc0_w, fc0_b = lin(ks[0], in_dim, width)
    fc1_w, fc1_b = lin(ks[1], width, fc_dim)
    fc2_w, fc2_b = lin(ks[2], fc_dim, out_dim)
    ws_w, ws_b = lin(ks[3], width, width)  # Conv2d(width, width, 1) as [Ci, Co]

    scale = 1.0 / (width * width)
    wshape = (width, width, modes1, modes2)
    wr1 = scale * jax.random.uniform(ks[4], wshape, jnp.float32)
    wi1 = scale * jax.random.uniform(ks[5], wshape, jnp.float32)
    wr2 = scale * jax.random.uniform(ks[6], wshape, jnp.float32)
    wi2 = scale * jax.random.uniform(ks[7], wshape, jnp.float32)

    # Both frequency corners stacked along the mode axis: [2*m1*m2, 2Ci, 2Co].
    w_packed = jnp.concatenate([_pack_complex_weight(wr1, wi1),
                                _pack_complex_weight(wr2, wi2)], axis=0)

    return {
        "depth": depth,
        "padding": padding,
        "fc0_w": fc0_w, "fc0_b": fc0_b,
        "fc1_w": fc1_w, "fc1_b": fc1_b,
        "fc2_w": fc2_w, "fc2_b": fc2_b,
        "block": {
            "m1": modes1, "m2": modes2,
            "w_packed": w_packed,
            "ws_w": ws_w, "ws_b": ws_b,
        },
    }


if __name__ == "__main__":
    key = jax.random.PRNGKey(0)
    kp, kx, ky = jax.random.split(key, 3)

    # in_dim = 5 = (x channels) + (y channels) + 2 grid channels
    B, Sx, Sy = 2, 16, 16
    x = jax.random.normal(kx, (B, Sx, Sy, 1), jnp.float32)
    y = jax.random.normal(ky, (B, Sx, Sy, 2), jnp.float32)

    params = init_params(kp, depth=4, modes1=4, modes2=4, width=30,
                         fc_dim=128, in_dim=5, out_dim=1, padding=2)

    fwd = jax.jit(lambda xx, yy: fno2d_forward(params, xx, yy))
    out = jax.block_until_ready(fwd(x, y))
    assert out.shape == (B, Sx, Sy, 1), out.shape
    assert bool(jnp.all(jnp.isfinite(out)))
    print("KERNEL_OK")
</pallas_src>

<mosaic_0001>
module attributes {stable_mosaic.version = 11 : i64} {
  func.func @_linear_kernel(%arg0: memref<512x5xf32, #tpu.memory_space<vmem>>, %arg1: memref<5x30xf32, #tpu.memory_space<vmem>>, %arg2: memref<1x30xf32, #tpu.memory_space<vmem>>, %arg3: memref<512x30xf32, #tpu.memory_space<vmem>>) attributes {dimension_semantics = [], scalar_prefetch = 0 : i64, scratch_operands = 0 : i64, tpu.core_type = #tpu.core_type<tc>} {
    %c0 = arith.constant 0 : index
    %c0_0 = arith.constant 0 : index
    %0 = vector.load %arg0[%c0, %c0_0] : memref<512x5xf32, #tpu.memory_space<vmem>>, vector<512x5xf32>
    %c0_1 = arith.constant 0 : index
    %c0_2 = arith.constant 0 : index
    %1 = vector.load %arg1[%c0_1, %c0_2] : memref<5x30xf32, #tpu.memory_space<vmem>>, vector<5x30xf32>
    %cst = arith.constant dense<0.000000e+00> : vector<512x30xf32>
    %2 = tpu.matmul %0, %1, %cst {dimension_numbers = #tpu.dot_dimension_numbers<[1], [0], [0], [1], [0, 0, 1, 1], [], []>} : vector<512x5xf32>, vector<5x30xf32>, vector<512x30xf32> -> vector<512x30xf32>
    %c0_3 = arith.constant 0 : index
    %c0_4 = arith.constant 0 : index
    %3 = vector.load %arg2[%c0_3, %c0_4] : memref<1x30xf32, #tpu.memory_space<vmem>>, vector<1x30xf32>
    %4 = vector.broadcast %3 : vector<1x30xf32> to vector<512x30xf32>
    %5 = arith.addf %2, %4 : vector<512x30xf32>
    %c0_5 = arith.constant 0 : index
    %c0_6 = arith.constant 0 : index
    %6 = vector.load %arg3[%c0_5, %c0_6] : memref<512x30xf32, #tpu.memory_space<vmem>>, vector<512x30xf32>
    tpu.vector_store %arg3[%c0_5, %c0_6], %5 {strides = array<i32>} : memref<512x30xf32, #tpu.memory_space<vmem>>, vector<512x30xf32>,
    return
  }
}

module attributes {stable_mosaic.version = 11 : i64} {
  func.func @_spectral_modes_kernel(%arg0: memref<32x2x60xf32, #tpu.memory_space<vmem>>, %arg1: memref<32x60x60xf32, #tpu.memory_space<vmem>>, %arg2: memref<32x2x60xf32, #tpu.memory_space<vmem>>) attributes {dimension_semantics = [], scalar_prefetch = 0 : i64, scratch_operands = 0 : i64, tpu.core_type = #tpu.core_type<tc>} {
    %c0 = arith.constant 0 : index
    %c0_0 = arith.constant 0 : index
    %c0_1 = arith.constant 0 : index
    %0 = vector.load %arg0[%c0, %c0_0, %c0_1] : memref<32x2x60xf32, #tpu.memory_space<vmem>>, vector<1x2x60xf32>
    %1 = vector.shape_cast %0 : vector<1x2x60xf32> to vector<2x60xf32>
    %c0_2 = arith.constant 0 : index
    %c0_3 = arith.constant 0 : index
    %c0_4 = arith.constant 0 : index
    %2 = vector.load %arg1[%c0_2, %c0_3, %c0_4] : memref<32x60x60xf32, #tpu.memory_space<vmem>>, vector<1x60x60xf32>
    %3 = vector.shape_cast %2 : vector<1x60x60xf32> to vector<60x60xf32>
    %cst = arith.constant dense<0.000000e+00> : vector<2x60xf32>
    %4 = tpu.matmul %1, %3, %cst {dimension_numbers = #tpu.dot_dimension_numbers<[1], [0], [0], [1], [0, 0, 1, 1], [], []>} : vector<2x60xf32>, vector<60x60xf32>, vector<2x60xf32> -> vector<2x60xf32>
    %c0_5 = arith.constant 0 : index
    %c0_6 = arith.constant 0 : index
    %c0_7 = arith.constant 0 : index
    %5 = vector.load %arg2[%c0_5, %c0_6, %c0_7] : memref<32x2x60xf32, #tpu.memory_space<vmem>>, vector<1x2x60xf32>
    %6 = vector.shape_cast %5 : vector<1x2x60xf32> to vector<2x60xf32>
    %7 = vector.shape_cast %4 : vector<2x60xf32> to vector<1x2x60xf32>
    tpu.vector_store %arg2[%c0_5, %c0_6, %c0_7], %7 {strides = array<i32>} : memref<32x2x60xf32, #tpu.memory_space<vmem>>, vector<1x2x60xf32>,
    %c1 = arith.constant 1 : index
    %c0_8 = arith.constant 0 : index
    %c0_9 = arith.constant 0 : index
    %8 = vector.load %arg0[%c1, %c0_8, %c0_9] : memref<32x2x60xf32, #tpu.memory_space<vmem>>, vector<1x2x60xf32>
    %9 = vector.shape_cast %8 : vector<1x2x60xf32> to vector<2x60xf32>
    %c1_10 = arith.constant 1 : index
    %c0_11 = arith.constant 0 : index
    %c0_12 = arith.constant 0 : index
    %10 = vector.load %arg1[%c1_10, %c0_11, %c0_12] : memref<32x60x60xf32, #tpu.memory_space<vmem>>, vector<1x60x60xf32>
    %11 = vector.shape_cast %10 : vector<1x60x60xf32> to vector<60x60xf32>
    %cst_13 = arith.constant dense<0.000000e+00> : vector<2x60xf32>
    %12 = tpu.matmul %9, %11, %cst_13 {dimension_numbers = #tpu.dot_dimension_numbers<[1], [0], [0], [1], [0, 0, 1, 1], [], []>} : vector<2x60xf32>, vector<60x60xf32>, vector<2x60xf32> -> vector<2x60xf32>
    %c1_14 = arith.constant 1 : index
    %c0_15 = arith.constant 0 : index
    %c0_16 = arith.constant 0 : index
    %13 = vector.load %arg2[%c1_14, %c0_15, %c0_16] : memref<32x2x60xf32, #tpu.memory_space<vmem>>, vector<1x2x60xf32>
    %14 = vector.shape_cast %13 : vector<1x2x60xf32> to vector<2x60xf32>
    %15 = vector.shape_cast %12 : vector<2x60xf32> to vector<1x2x60xf32>
    tpu.vector_store %arg2[%c1_14, %c0_15, %c0_16], %15 {strides = array<i32>} : memref<32x2x60xf32, #tpu.memory_space<vmem>>, vector<1x2x60xf32>,
    %c2 = arith.constant 2 : index
    %c0_17 = arith.constant 0 : index
    %c0_18 = arith.constant 0 : index
    %16 = vector.load %arg0[%c2, %c0_17, %c0_18] : memref<32x2x60xf32, #tpu.memory_space<vmem>>, vector<1x2x60xf32>
    %17 = vector.shape_cast %16 : vector<1x2x60xf32> to vector<2x60xf32>
    %c2_19 = arith.constant 2 : index
    %c0_20 = arith.constant 0 : index
    %c0_21 = arith.constant 0 : index
    %18 = vector.load %arg1[%c2_19, %c0_20, %c0_21] : memref<32x60x60xf32, #tpu.memory_space<vmem>>, vector<1x60x60xf32>
    %19 = vector.shape_cast %18 : vector<1x60x60xf32> to vector<60x60xf32>
    %cst_22 = arith.constant dense<0.000000e+00> : vector<2x60xf32>
    %20 = tpu.matmul %17, %19, %cst_22 {dimension_numbers = #tpu.dot_dimension_numbers<[1], [0], [0], [1], [0, 0, 1, 1], [], []>} : vector<2x60xf32>, vector<60x60xf32>, vector<2x60xf32> -> vector<2x60xf32>
    %c2_23 = arith.constant 2 : index
    %c0_24 = arith.constant 0 : index
    %c0_25 = arith.constant 0 : index
    %21 = vector.load %arg2[%c2_23, %c0_24, %c0_25] : memref<32x2x60xf32, #tpu.memory_space<vmem>>, vector<1x2x60xf32>
    %22 = vector.shape_cast %21 : vector<1x2x60xf32> to vector<2x60xf32>
    %23 = vector.shape_cast %20 : vector<2x60xf32> to vector<1x2x60xf32>
    tpu.vector_store %arg2[%c2_23, %c0_24, %c0_25], %23 {strides = array<i32>} : memref<32x2x60xf32, #tpu.memory_space<vmem>>, vector<1x2x60xf32>,
    %c3 = arith.constant 3 : index
    %c0_26 = arith.constant 0 : index
    %c0_27 = arith.constant 0 : index
    %24 = vector.load %arg0[%c3, %c0_26, %c0_27] : memref<32x2x60xf32, #tpu.memory_space<vmem>>, vector<1x2x60xf32>
    %25 = vector.shape_cast %24 : vector<1x2x60xf32> to vector<2x60xf32>
    %c3_28 = arith.constant 3 : index
    %c0_29 = arith.constant 0 : index
    %c0_30 = arith.constant 0 : index
    %26 = vector.load %arg1[%c3_28, %c0_29, %c0_30] : memref<32x60x60xf32, #tpu.memory_space<vmem>>, vector<1x60x60xf32>
    %27 = vector.shape_cast %26 : vector<1x60x60xf32> to vector<60x60xf32>
    %cst_31 = arith.constant dense<0.000000e+00> : vector<2x60xf32>
    %28 = tpu.matmul %25, %27, %cst_31 {dimension_numbers = #tpu.dot_dimension_numbers<[1], [0], [0], [1], [0, 0, 1, 1], [], []>} : vector<2x60xf32>, vector<60x60xf32>, vector<2x60xf32> -> vector<2x60xf32>
    %c3_32 = arith.constant 3 : index
    %c0_33 = arith.constant 0 : index
    %c0_34 = arith.constant 0 : index
    %29 = vector.load %arg2[%c3_32, %c0_33, %c0_34] : memref<32x2x60xf32, #tpu.memory_space<vmem>>, vector<1x2x60xf32>
    %30 = vector.shape_cast %29 : vector<1x2x60xf32> to vector<2x60xf32>
    %31 = vector.shape_cast %28 : vector<2x60xf32> to vector<1x2x60xf32>
    tpu.vector_store %arg2[%c3_32, %c0_33, %c0_34], %31 {strides = array<i32>} : memref<32x2x60xf32, #tpu.memory_space<vmem>>, vector<1x2x60xf32>,
    %c4 = arith.constant 4 : index
    %c0_35 = arith.constant 0 : index
    %c0_36 = arith.constant 0 : index
    %32 = vector.load %arg0[%c4, %c0_35, %c0_36] : memref<32x2x60xf32, #tpu.memory_space<vmem>>, vector<1x2x60xf32>
    %33 = vector.shape_cast %32 : vector<1x2x60xf32> to vector<2x60xf32>
    %c4_37 = arith.constant 4 : index
    %c0_38 = arith.constant 0 : index
    %c0_39 = arith.constant 0 : index
    %34 = vector.load %arg1[%c4_37, %c0_38, %c0_39] : memref<32x60x60xf32, #tpu.memory_space<vmem>>, vector<1x60x60xf32>
    %35 = vector.shape_cast %34 : vector<1x60x60xf32> to vector<60x60xf32>
    %cst_40 = arith.constant dense<0.000000e+00> : vector<2x60xf32>
    %36 = tpu.matmul %33, %35, %cst_40 {dimension_numbers = #tpu.dot_dimension_numbers<[1], [0], [0], [1], [0, 0, 1, 1], [], []>} : vector<2x60xf32>, vector<60x60xf32>, vector<2x60xf32> -> vector<2x60xf32>
    %c4_41 = arith.constant 4 : index
    %c0_42 = arith.constant 0 : index
    %c0_43 = arith.constant 0 : index
    %37 = vector.load %arg2[%c4_41, %c0_42, %c0_43] : memref<32x2x60xf32, #tpu.memory_space<vmem>>, vector<1x2x60xf32>
    %38 = vector.shape_cast %37 : vector<1x2x60xf32> to vector<2x60xf32>
    %39 = vector.shape_cast %36 : vector<2x60xf32> to vector<1x2x60xf32>
    tpu.vector_store %arg2[%c4_41, %c0_42, %c0_43], %39 {strides = array<i32>} : memref<32x2x60xf32, #tpu.memory_space<vmem>>, vector<1x2x60xf32>,
    %c5 = arith.constant 5 : index
    %c0_44 = arith.constant 0 : index
    %c0_45 = arith.constant 0 : index
    %40 = vector.load %arg0[%c5, %c0_44, %c0_45] : memref<32x2x60xf32, #tpu.memory_space<vmem>>, vector<1x2x60xf32>
    %41 = vector.shape_cast %40 : vector<1x2x60xf32> to vector<2x60xf32>
    %c5_46 = arith.constant 5 : index
    %c0_47 = arith.constant 0 : index
    %c0_48 = arith.constant 0 : index
    %42 = vector.load %arg1[%c5_46, %c0_47, %c0_48] : memref<32x60x60xf32, #tpu.memory_space<vmem>>, vector<1x60x60xf32>
    %43 = vector.shape_cast %42 : vector<1x60x60xf32> to vector<60x60xf32>
    %cst_49 = arith.constant dense<0.000000e+00> : vector<2x60xf32>
    %44 = tpu.matmul %41, %43, %cst_49 {dimension_numbers = #tpu.dot_dimension_numbers<[1], [0], [0], [1], [0, 0, 1, 1], [], []>} : vector<2x60xf32>, vector<60x60xf32>, vector<2x60xf32> -> vector<2x60xf32>
    %c5_50 = arith.constant 5 : index
    %c0_51 = arith.constant 0 : index
    %c0_52 = arith.constant 0 : index
    %45 = vector.load %arg2[%c5_50, %c0_51, %c0_52] : memref<32x2x60xf32, #tpu.memory_space<vmem>>, vector<1x2x60xf32>
    %46 = vector.shape_cast %45 : vector<1x2x60xf32> to vector<2x60xf32>
    %47 = vector.shape_cast %44 : vector<2x60xf32> to vector<1x2x60xf32>
    tpu.vector_store %arg2[%c5_50, %c0_51, %c0_52], %47 {strides = array<i32>} : memref<32x2x60xf32, #tpu.memory_space<vmem>>, vector<1x2x60xf32>,
    %c6 = arith.constant 6 : index
    %c0_53 = arith.constant 0 : index
    %c0_54 = arith.constant 0 : index
    %48 = vector.load %arg0[%c6, %c0_53, %c0_54] : memref<32x2x60xf32, #tpu.memory_space<vmem>>, vector<1x2x60xf32>
    %49 = vector.shape_cast %48 : vector<1x2x60xf32> to vector<2x60xf32>
    %c6_55 = arith.constant 6 : index
    %c0_56 = arith.constant 0 : index
    %c0_57 = arith.constant 0 : index
    %50 = vector.load %arg1[%c6_55, %c0_56, %c0_57] : memref<32x60x60xf32, #tpu.memory_space<vmem>>, vector<1x60x60xf32>
    %51 = vector.shape_cast %50 : vector<1x60x60xf32> to vector<60x60xf32>
    %cst_58 = arith.constant dense<0.000000e+00> : vector<2x60xf32>
    %52 = tpu.matmul %49, %51, %cst_58 {dimension_numbers = #tpu.dot_dimension_numbers<[1], [0], [0], [1], [0, 0, 1, 1], [], []>} : vector<2x60xf32>, vector<60x60xf32>, vector<2x60xf32> -> vector<2x60xf32>
    %c6_59 = arith.constant 6 : index
    %c0_60 = arith.constant 0 : index
    %c0_61 = arith.constant 0 : index
    %53 = vector.load %arg2[%c6_59, %c0_60, %c0_61] : memref<32x2x60xf32, #tpu.memory_space<vmem>>, vector<1x2x60xf32>
    %54 = vector.shape_cast %53 : vector<1x2x60xf32> to vector<2x60xf32>
    %55 = vector.shape_cast %52 : vector<2x60xf32> to vector<1x2x60xf32>
    tpu.vector_store %arg2[%c6_59, %c0_60, %c0_61], %55 {strides = array<i32>} : memref<32x2x60xf32, #tpu.memory_space<vmem>>, vector<1x2x60xf32>,
    %c7 = arith.constant 7 : index
    %c0_62 = arith.constant 0 : index
    %c0_63 = arith.constant 0 : index
    %56 = vector.load %arg0[%c7, %c0_62, %c0_63] : memref<32x2x60xf32, #tpu.memory_space<vmem>>, vector<1x2x60xf32>
    %57 = vector.shape_cast %56 : vector<1x2x60xf32> to vector<2x60xf32>
    %c7_64 = arith.constant 7 : index
    %c0_65 = arith.constant 0 : index
    %c0_66 = arith.constant 0 : index
    %58 = vector.load %arg1[%c7_64, %c0_65, %c0_66] : memref<32x60x60xf32, #tpu.memory_space<vmem>>, vector<1x60x60xf32>
    %59 = vector.shape_cast %58 : vector<1x60x60xf32> to vector<60x60xf32>
    %cst_67 = arith.constant dense<0.000000e+00> : vector<2x60xf32>
    %60 = tpu.matmul %57, %59, %cst_67 {dimension_numbers = #tpu.dot_dimension_numbers<[1], [0], [0], [1], [0, 0, 1, 1], [], []>} : vector<2x60xf32>, vector<60x60xf32>, vector<2x60xf32> -> vector<2x60xf32>
    %c7_68 = arith.constant 7 : index
    %c0_69 = arith.constant 0 : index
    %c0_70 = arith.constant 0 : index
    %61 = vector.load %arg2[%c7_68, %c0_69, %c0_70] : memref<32x2x60xf32, #tpu.memory_space<vmem>>, vector<1x2x60xf32>
    %62 = vector.shape_cast %61 : vector<1x2x60xf32> to vector<2x60xf32>
    %63 = vector.shape_cast %60 : vector<2x60xf32> to vector<1x2x60xf32>
    tpu.vector_store %arg2[%c7_68, %c0_69, %c0_70], %63 {strides = array<i32>} : memref<32x2x60xf32, #tpu.memory_space<vmem>>, vector<1x2x60xf32>,
    %c8 = arith.constant 8 : index
    %c0_71 = arith.constant 0 : index
    %c0_72 = arith.constant 0 : index
    %64 = vector.load %arg0[%c8, %c0_71, %c0_72] : memref<32x2x60xf32, #tpu.memory_space<vmem>>, vector<1x2x60xf32>
    %65 = vector.shape_cast %64 : vector<1x2x60xf32> to vector<2x60xf32>
    %c8_73 = arith.constant 8 : index
    %c0_74 = arith.constant 0 : index
    %c0_75 = arith.constant 0 : index
    %66 = vector.load %arg1[%c8_73, %c0_74, %c0_75] : memref<32x60x60xf32, #tpu.memory_space<vmem>>, vector<1x60x60xf32>
    %67 = vector.shape_cast %66 : vector<1x60x60xf32> to vector<60x60xf32>
    %cst_76 = arith.constant dense<0.000000e+00> : vector<2x60xf32>
    %68 = tpu.matmul %65, %67, %cst_76 {dimension_numbers = #tpu.dot_dimension_numbers<[1], [0], [0], [1], [0, 0, 1, 1], [], []>} : vector<2x60xf32>, vector<60x60xf32>, vector<2x60xf32> -> vector<2x60xf32>
    %c8_77 = arith.constant 8 : index
    %c0_78 = arith.constant 0 : index
    %c0_79 = arith.constant 0 : index
    %69 = vector.load %arg2[%c8_77, %c0_78, %c0_79] : memref<32x2x60xf32, #tpu.memory_space<vmem>>, vector<1x2x60xf32>
    %70 = vector.shape_cast %69 : vector<1x2x60xf32> to vector<2x60xf32>
    %71 = vector.shape_cast %68 : vector<2x60xf32> to vector<1x2x60xf32>
    tpu.vector_store %arg2[%c8_77, %c0_78, %c0_79], %71 {strides = array<i32>} : memref<32x2x60xf32, #tpu.memory_space<vmem>>, vector<1x2x60xf32>,
    %c9 = arith.constant 9 : index
    %c0_80 = arith.constant 0 : index
    %c0_81 = arith.constant 0 : index
    %72 = vector.load %arg0[%c9, %c0_80, %c0_81] : memref<32x2x60xf32, #tpu.memory_space<vmem>>, vector<1x2x60xf32>
    %73 = vector.shape_cast %72 : vector<1x2x60xf32> to vector<2x60xf32>
    %c9_82 = arith.constant 9 : index
    %c0_83 = arith.constant 0 : index
    %c0_84 = arith.constant 0 : index
    %74 = vector.load %arg1[%c9_82, %c0_83, %c0_84] : memref<32x60x60xf32, #tpu.memory_space<vmem>>, vector<1x60x60xf32>
    %75 = vector.shape_cast %74 : vector<1x60x60xf32> to vector<60x60xf32>
    %cst_85 = arith.constant dense<0.000000e+00> : vector<2x60xf32>
    %76 = tpu.matmul %73, %75, %cst_85 {dimension_numbers = #tpu.dot_dimension_numbers<[1], [0], [0], [1], [0, 0, 1, 1], [], []>} : vector<2x60xf32>, vector<60x60xf32>, vector<2x60xf32> -> vector<2x60xf32>
    %c9_86 = arith.constant 9 : index
    %c0_87 = arith.constant 0 : index
    %c0_88 = arith.constant 0 : index
    %77 = vector.load %arg2[%c9_86, %c0_87, %c0_88] : memref<32x2x60xf32, #tpu.memory_space<vmem>>, vector<1x2x60xf32>
    %78 = vector.shape_cast %77 : vector<1x2x60xf32> to vector<2x60xf32>
    %79 = vector.shape_cast %76 : vector<2x60xf32> to vector<1x2x60xf32>
    tpu.vector_store %arg2[%c9_86, %c0_87, %c0_88], %79 {strides = array<i32>} : memref<32x2x60xf32, #tpu.memory_space<vmem>>, vector<1x2x60xf32>,
    %c10 = arith.constant 10 : index
    %c0_89 = arith.constant 0 : index
    %c0_90 = arith.constant 0 : index
    %80 = vector.load %arg0[%c10, %c0_89, %c0_90] : memref<32x2x60xf32, #tpu.memory_space<vmem>>, vector<1x2x60xf32>
    %81 = vector.shape_cast %80 : vector<1x2x60xf32> to vector<2x60xf32>
    %c10_91 = arith.constant 10 : index
    %c0_92 = arith.constant 0 : index
    %c0_93 = arith.constant 0 : index
    %82 = vector.load %arg1[%c10_91, %c0_92, %c0_93] : memref<32x60x60xf32, #tpu.memory_space<vmem>>, vector<1x60x60xf32>
    %83 = vector.shape_cast %82 : vector<1x60x60xf32> to vector<60x60xf32>
    %cst_94 = arith.constant dense<0.000000e+00> : vector<2x60xf32>
    %84 = tpu.matmul %81, %83, %cst_94 {dimension_numbers = #tpu.dot_dimension_numbers<[1], [0], [0], [1], [0, 0, 1, 1], [], []>} : vector<2x60xf32>, vector<60x60xf32>, vector<2x60xf32> -> vector<2x60xf32>
    %c10_95 = arith.constant 10 : index
    %c0_96 = arith.constant 0 : index
    %c0_97 = arith.constant 0 : index
    %85 = vector.load %arg2[%c10_95, %c0_96, %c0_97] : memref<32x2x60xf32, #tpu.memory_space<vmem>>, vector<1x2x60xf32>
    %86 = vector.shape_cast %85 : vector<1x2x60xf32> to vector<2x60xf32>
    %87 = vector.shape_cast %84 : vector<2x60xf32> to vector<1x2x60xf32>
    tpu.vector_store %arg2[%c10_95, %c0_96, %c0_97], %87 {strides = array<i32>} : memref<32x2x60xf32, #tpu.memory_space<vmem>>, vector<1x2x60xf32>,
    %c11 = arith.constant 11 : index
    %c0_98 = arith.constant 0 : index
    %c0_99 = arith.constant 0 : index
    %88 = vector.load %arg0[%c11, %c0_98, %c0_99] : memref<32x2x60xf32, #tpu.memory_space<vmem>>, vector<1x2x60xf32>
    %89 = vector.shape_cast %88 : vector<1x2x60xf32> to vector<2x60xf32>
    %c11_100 = arith.constant 11 : index
    %c0_101 = arith.constant 0 : index
    %c0_102 = arith.constant 0 : index
    %90 = vector.load %arg1[%c11_100, %c0_101, %c0_102] : memref<32x60x60xf32, #tpu.memory_space<vmem>>, vector<1x60x60xf32>
    %91 = vector.shape_cast %90 : vector<1x60x60xf32> to vector<60x60xf32>
    %cst_103 = arith.constant dense<0.000000e+00> : vector<2x60xf32>
    %92 = tpu.matmul %89, %91, %cst_103 {dimension_numbers = #tpu.dot_dimension_numbers<[1], [0], [0], [1], [0, 0, 1, 1], [], []>} : vector<2x60xf32>, vector<60x60xf32>, vector<2x60xf32> -> vector<2x60xf32>
    %c11_104 = arith.constant 11 : index
    %c0_105 = arith.constant 0 : index
    %c0_106 = arith.constant 0 : index
    %93 = vector.load %arg2[%c11_104, %c0_105, %c0_106] : memref<32x2x60xf32, #tpu.memory_space<vmem>>, vector<1x2x60xf32>
    %94 = vector.shape_cast %93 : vector<1x2x60xf32> to vector<2x60xf32>
    %95 = vector.shape_cast %92 : vector<2x60xf32> to vector<1x2x60xf32>
    tpu.vector_store %arg2[%c11_104, %c0_105, %c0_106], %95 {strides = array<i32>} : memref<32x2x60xf32, #tpu.memory_space<vmem>>, vector<1x2x60xf32>,
    %c12 = arith.constant 12 : index
    %c0_107 = arith.constant 0 : index
    %c0_108 = arith.constant 0 : index
    %96 = vector.load %arg0[%c12, %c0_107, %c0_108] : memref<32x2x60xf32, #tpu.memory_space<vmem>>, vector<1x2x60xf32>
    %97 = vector.shape_cast %96 : vector<1x2x60xf32> to vector<2x60xf32>
    %c12_109 = arith.constant 12 : index
    %c0_110 = arith.constant 0 : index
    %c0_111 = arith.constant 0 : index
    %98 = vector.load %arg1[%c12_109, %c0_110, %c0_111] : memref<32x60x60xf32, #tpu.memory_space<vmem>>, vector<1x60x60xf32>
    %99 = vector.shape_cast %98 : vector<1x60x60xf32> to vector<60x60xf32>
    %cst_112 = arith.constant dense<0.000000e+00> : vector<2x60xf32>
    %100 = tpu.matmul %97, %99, %cst_112 {dimension_numbers = #tpu.dot_dimension_numbers<[1], [0], [0], [1], [0, 0, 1, 1], [], []>} : vector<2x60xf32>, vector<60x60xf32>, vector<2x60xf32> -> vector<2x60xf32>
    %c12_113 = arith.constant 12 : index
    %c0_114 = arith.constant 0 : index
    %c0_115 = arith.constant 0 : index
    %101 = vector.load %arg2[%c12_113, %c0_114, %c0_115] : memref<32x2x60xf32, #tpu.memory_space<vmem>>, vector<1x2x60xf32>
    %102 = vector.shape_cast %101 : vector<1x2x60xf32> to vector<2x60xf32>
    %103 = vector.shape_cast %100 : vector<2x60xf32> to vector<1x2x60xf32>
    tpu.vector_store %arg2[%c12_113, %c0_114, %c0_115], %103 {strides = array<i32>} : memref<32x2x60xf32, #tpu.memory_space<vmem>>, vector<1x2x60xf32>,
    %c13 = arith.constant 13 : index
    %c0_116 = arith.constant 0 : index
    %c0_117 = arith.constant 0 : index
    %104 = vector.load %arg0[%c13, %c0_116, %c0_117] : memref<32x2x60xf32, #tpu.memory_space<vmem>>, vector<1x2x60xf32>
    %105 = vector.shape_cast %104 : vector<1x2x60xf32> to vector<2x60xf32>
    %c13_118 = arith.constant 13 : index
    %c0_119 = arith.constant 0 : index
    %c0_120 = arith.constant 0 : index
    %106 = vector.load %arg1[%c13_118, %c0_119, %c0_120] : memref<32x60x60xf32, #tpu.memory_space<vmem>>, vector<1x60x60xf32>
    %107 = vector.shape_cast %106 : vector<1x60x60xf32> to vector<60x60xf32>
    %cst_121 = arith.constant dense<0.000000e+00> : vector<2x60xf32>
    %108 = tpu.matmul %105, %107, %cst_121 {dimension_numbers = #tpu.dot_dimension_numbers<[1], [0], [0], [1], [0, 0, 1, 1], [], []>} : vector<2x60xf32>, vector<60x60xf32>, vector<2x60xf32> -> vector<2x60xf32>
    %c13_122 = arith.constant 13 : index
    %c0_123 = arith.constant 0 : index
    %c0_124 = arith.constant 0 : index
    %109 = vector.load %arg2[%c13_122, %c0_123, %c0_124] : memref<32x2x60xf32, #tpu.memory_space<vmem>>, vector<1x2x60xf32>
    %110 = vector.shape_cast %109 : vector<1x2x60xf32> to vector<2x60xf32>
    %111 = vector.shape_cast %108 : vector<2x60xf32> to vector<1x2x60xf32>
    tpu.vector_store %arg2[%c13_122, %c0_123, %c0_124], %111 {strides = array<i32>} : memref<32x2x60xf32, #tpu.memory_space<vmem>>, vector<1x2x60xf32>,
    %c14 = arith.constant 14 : index
    %c0_125 = arith.constant 0 : index
    %c0_126 = arith.constant 0 : index
    %112 = vector.load %arg0[%c14, %c0_125, %c0_126] : memref<32x2x60xf32, #tpu.memory_space<vmem>>, vector<1x2x60xf32>
    %113 = vector.shape_cast %112 : vector<1x2x60xf32> to vector<2x60xf32>
    %c14_127 = arith.constant 14 : index
    %c0_128 = arith.constant 0 : index
    %c0_129 = arith.constant 0 : index
    %114 = vector.load %arg1[%c14_127, %c0_128, %c0_129] : memref<32x60x60xf32, #tpu.memory_space<vmem>>, vector<1x60x60xf32>
    %115 = vector.shape_cast %114 : vector<1x60x60xf32> to vector<60x60xf32>
    %cst_130 = arith.constant dense<0.000000e+00> : vector<2x60xf32>
    %116 = tpu.matmul %113, %115, %cst_130 {dimension_numbers = #tpu.dot_dimension_numbers<[1], [0], [0], [1], [0, 0, 1, 1], [], []>} : vector<2x60xf32>, vector<60x60xf32>, vector<2x60xf32> -> vector<2x60xf32>
    %c14_131 = arith.constant 14 : index
    %c0_132 = arith.constant 0 : index
    %c0_133 = arith.constant 0 : index
    %117 = vector.load %arg2[%c14_131, %c0_132, %c0_133] : memref<32x2x60xf32, #tpu.memory_space<vmem>>, vector<1x2x60xf32>
    %118 = vector.shape_cast %117 : vector<1x2x60xf32> to vector<2x60xf32>
    %119 = vector.shape_cast %116 : vector<2x60xf32> to vector<1x2x60xf32>
    tpu.vector_store %arg2[%c14_131, %c0_132, %c0_133], %119 {strides = array<i32>} : memref<32x2x60xf32, #tpu.memory_space<vmem>>, vector<1x2x60xf32>,
    %c15 = arith.constant 15 : index
    %c0_134 = arith.constant 0 : index
    %c0_135 = arith.constant 0 : index
    %120 = vector.load %arg0[%c15, %c0_134, %c0_135] : memref<32x2x60xf32, #tpu.memory_space<vmem>>, vector<1x2x60xf32>
    %121 = vector.shape_cast %120 : vector<1x2x60xf32> to vector<2x60xf32>
    %c15_136 = arith.constant 15 : index
    %c0_137 = arith.constant 0 : index
    %c0_138 = arith.constant 0 : index
    %122 = vector.load %arg1[%c15_136, %c0_137, %c0_138] : memref<32x60x60xf32, #tpu.memory_space<vmem>>, vector<1x60x60xf32>
    %123 = vector.shape_cast %122 : vector<1x60x60xf32> to vector<60x60xf32>
    %cst_139 = arith.constant dense<0.000000e+00> : vector<2x60xf32>
    %124 = tpu.matmul %121, %123, %cst_139 {dimension_numbers = #tpu.dot_dimension_numbers<[1], [0], [0], [1], [0, 0, 1, 1], [], []>} : vector<2x60xf32>, vector<60x60xf32>, vector<2x60xf32> -> vector<2x60xf32>
    %c15_140 = arith.constant 15 : index
    %c0_141 = arith.constant 0 : index
    %c0_142 = arith.constant 0 : index
    %125 = vector.load %arg2[%c15_140, %c0_141, %c0_142] : memref<32x2x60xf32, #tpu.memory_space<vmem>>, vector<1x2x60xf32>
    %126 = vector.shape_cast %125 : vector<1x2x60xf32> to vector<2x60xf32>
    %127 = vector.shape_cast %124 : vector<2x60xf32> to vector<1x2x60xf32>
    tpu.vector_store %arg2[%c15_140, %c0_141, %c0_142], %127 {strides = array<i32>} : memref<32x2x60xf32, #tpu.memory_space<vmem>>, vector<1x2x60xf32>,
    %c16 = arith.constant 16 : index
    %c0_143 = arith.constant 0 : index
    %c0_144 = arith.constant 0 : index
    %128 = vector.load %arg0[%c16, %c0_143, %c0_144] : memref<32x2x60xf32, #tpu.memory_space<vmem>>, vector<1x2x60xf32>
    %129 = vector.shape_cast %128 : vector<1x2x60xf32> to vector<2x60xf32>
    %c16_145 = arith.constant 16 : index
    %c0_146 = arith.constant 0 : index
    %c0_147 = arith.constant 0 : index
    %130 = vector.load %arg1[%c16_145, %c0_146, %c0_147] : memref<32x60x60xf32, #tpu.memory_space<vmem>>, vector<1x60x60xf32>
    %131 = vector.shape_cast %130 : vector<1x60x60xf32> to vector<60x60xf32>
    %cst_148 = arith.constant dense<0.000000e+00> : vector<2x60xf32>
    %132 = tpu.matmul %129, %131, %cst_148 {dimension_numbers = #tpu.dot_dimension_numbers<[1], [0], [0], [1], [0, 0, 1, 1], [], []>} : vector<2x60xf32>, vector<60x60xf32>, vector<2x60xf32> -> vector<2x60xf32>
    %c16_149 = arith.constant 16 : index
    %c0_150 = arith.constant 0 : index
    %c0_151 = arith.constant 0 : index
    %133 = vector.load %arg2[%c16_149, %c0_150, %c0_151] : memref<32x2x60xf32, #tpu.memory_space<vmem>>, vector<1x2x60xf32>
    %134 = vector.shape_cast %133 : vector<1x2x60xf32> to vector<2x60xf32>
    %135 = vector.shape_cast %132 : vector<2x60xf32> to vector<1x2x60xf32>
    tpu.vector_store %arg2[%c16_149, %c0_150, %c0_151], %135 {strides = array<i32>} : memref<32x2x60xf32, #tpu.memory_space<vmem>>, vector<1x2x60xf32>,
    %c17 = arith.constant 17 : index
    %c0_152 = arith.constant 0 : index
    %c0_153 = arith.constant 0 : index
    %136 = vector.load %arg0[%c17, %c0_152, %c0_153] : memref<32x2x60xf32, #tpu.memory_space<vmem>>, vector<1x2x60xf32>
    %137 = vector.shape_cast %136 : vector<1x2x60xf32> to vector<2x60xf32>
    %c17_154 = arith.constant 17 : index
    %c0_155 = arith.constant 0 : index
    %c0_156 = arith.constant 0 : index
    %138 = vector.load %arg1[%c17_154, %c0_155, %c0_156] : memref<32x60x60xf32, #tpu.memory_space<vmem>>, vector<1x60x60xf32>
    %139 = vector.shape_cast %138 : vector<1x60x60xf32> to vector<60x60xf32>
    %cst_157 = arith.constant dense<0.000000e+00> : vector<2x60xf32>
    %140 = tpu.matmul %137, %139, %cst_157 {dimension_numbers = #tpu.dot_dimension_numbers<[1], [0], [0], [1], [0, 0, 1, 1], [], []>} : vector<2x60xf32>, vector<60x60xf32>, vector<2x60xf32> -> vector<2x60xf32>
    %c17_158 = arith.constant 17 : index
    %c0_159 = arith.constant 0 : index
    %c0_160 = arith.constant 0 : index
    %141 = vector.load %arg2[%c17_158, %c0_159, %c0_160] : memref<32x2x60xf32, #tpu.memory_space<vmem>>, vector<1x2x60xf32>
    %142 = vector.shape_cast %141 : vector<1x2x60xf32> to vector<2x60xf32>
    %143 = vector.shape_cast %140 : vector<2x60xf32> to vector<1x2x60xf32>
    tpu.vector_store %arg2[%c17_158, %c0_159, %c0_160], %143 {strides = array<i32>} : memref<32x2x60xf32, #tpu.memory_space<vmem>>, vector<1x2x60xf32>,
    %c18 = arith.constant 18 : index
    %c0_161 = arith.constant 0 : index
    %c0_162 = arith.constant 0 : index
    %144 = vector.load %arg0[%c18, %c0_161, %c0_162] : memref<32x2x60xf32, #tpu.memory_space<vmem>>, vector<1x2x60xf32>
    %145 = vector.shape_cast %144 : vector<1x2x60xf32> to vector<2x60xf32>
    %c18_163 = arith.constant 18 : index
    %c0_164 = arith.constant 0 : index
    %c0_165 = arith.constant 0 : index
    %146 = vector.load %arg1[%c18_163, %c0_164, %c0_165] : memref<32x60x60xf32, #tpu.memory_space<vmem>>, vector<1x60x60xf32>
    %147 = vector.shape_cast %146 : vector<1x60x60xf32> to vector<60x60xf32>
    %cst_166 = arith.constant dense<0.000000e+00> : vector<2x60xf32>
    %148 = tpu.matmul %145, %147, %cst_166 {dimension_numbers = #tpu.dot_dimension_numbers<[1], [0], [0], [1], [0, 0, 1, 1], [], []>} : vector<2x60xf32>, vector<60x60xf32>, vector<2x60xf32> -> vector<2x60xf32>
    %c18_167 = arith.constant 18 : index
    %c0_168 = arith.constant 0 : index
    %c0_169 = arith.constant 0 : index
    %149 = vector.load %arg2[%c18_167, %c0_168, %c0_169] : memref<32x2x60xf32, #tpu.memory_space<vmem>>, vector<1x2x60xf32>
    %150 = vector.shape_cast %149 : vector<1x2x60xf32> to vector<2x60xf32>
    %151 = vector.shape_cast %148 : vector<2x60xf32> to vector<1x2x60xf32>
    tpu.vector_store %arg2[%c18_167, %c0_168, %c0_169], %151 {strides = array<i32>} : memref<32x2x60xf32, #tpu.memory_space<vmem>>, vector<1x2x60xf32>,
    %c19 = arith.constant 19 : index
    %c0_170 = arith.constant 0 : index
    %c0_171 = arith.constant 0 : index
    %152 = vector.load %arg0[%c19, %c0_170, %c0_171] : memref<32x2x60xf32, #tpu.memory_space<vmem>>, vector<1x2x60xf32>
    %153 = vector.shape_cast %152 : vector<1x2x60xf32> to vector<2x60xf32>
    %c19_172 = arith.constant 19 : index
    %c0_173 = arith.constant 0 : index
    %c0_174 = arith.constant 0 : index
    %154 = vector.load %arg1[%c19_172, %c0_173, %c0_174] : memref<32x60x60xf32, #tpu.memory_space<vmem>>, vector<1x60x60xf32>
    %155 = vector.shape_cast %154 : vector<1x60x60xf32> to vector<60x60xf32>
    %cst_175 = arith.constant dense<0.000000e+00> : vector<2x60xf32>
    %156 = tpu.matmul %153, %155, %cst_175 {dimension_numbers = #tpu.dot_dimension_numbers<[1], [0], [0], [1], [0, 0, 1, 1], [], []>} : vector<2x60xf32>, vector<60x60xf32>, vector<2x60xf32> -> vector<2x60xf32>
    %c19_176 = arith.constant 19 : index
    %c0_177 = arith.constant 0 : index
    %c0_178 = arith.constant 0 : index
    %157 = vector.load %arg2[%c19_176, %c0_177, %c0_178] : memref<32x2x60xf32, #tpu.memory_space<vmem>>, vector<1x2x60xf32>
    %158 = vector.shape_cast %157 : vector<1x2x60xf32> to vector<2x60xf32>
    %159 = vector.shape_cast %156 : vector<2x60xf32> to vector<1x2x60xf32>
    tpu.vector_store %arg2[%c19_176, %c0_177, %c0_178], %159 {strides = array<i32>} : memref<32x2x60xf32, #tpu.memory_space<vmem>>, vector<1x2x60xf32>,
    %c20 = arith.constant 20 : index
    %c0_179 = arith.constant 0 : index
    %c0_180 = arith.constant 0 : index
    %160 = vector.load %arg0[%c20, %c0_179, %c0_180] : memref<32x2x60xf32, #tpu.memory_space<vmem>>, vector<1x2x60xf32>
    %161 = vector.shape_cast %160 : vector<1x2x60xf32> to vector<2x60xf32>
    %c20_181 = arith.constant 20 : index
    %c0_182 = arith.constant 0 : index
    %c0_183 = arith.constant 0 : index
    %162 = vector.load %arg1[%c20_181, %c0_182, %c0_183] : memref<32x60x60xf32, #tpu.memory_space<vmem>>, vector<1x60x60xf32>
    %163 = vector.shape_cast %162 : vector<1x60x60xf32> to vector<60x60xf32>
    %cst_184 = arith.constant dense<0.000000e+00> : vector<2x60xf32>
    %164 = tpu.matmul %161, %163, %cst_184 {dimension_numbers = #tpu.dot_dimension_numbers<[1], [0], [0], [1], [0, 0, 1, 1], [], []>} : vector<2x60xf32>, vector<60x60xf32>, vector<2x60xf32> -> vector<2x60xf32>
    %c20_185 = arith.constant 20 : index
    %c0_186 = arith.constant 0 : index
    %c0_187 = arith.constant 0 : index
    %165 = vector.load %arg2[%c20_185, %c0_186, %c0_187] : memref<32x2x60xf32, #tpu.memory_space<vmem>>, vector<1x2x60xf32>
    %166 = vector.shape_cast %165 : vector<1x2x60xf32> to vector<2x60xf32>
    %167 = vector.shape_cast %164 : vector<2x60xf32> to vector<1x2x60xf32>
    tpu.vector_store %arg2[%c20_185, %c0_186, %c0_187], %167 {strides = array<i32>} : memref<32x2x60xf32, #tpu.memory_space<vmem>>, vector<1x2x60xf32>,
    %c21 = arith.constant 21 : index
    %c0_188 = arith.constant 0 : index
    %c0_189 = arith.constant 0 : index
    %168 = vector.load %arg0[%c21, %c0_188, %c0_189] : memref<32x2x60xf32, #tpu.memory_space<vmem>>, vector<1x2x60xf32>
    %169 = vector.shape_cast %168 : vector<1x2x60xf32> to vector<2x60xf32>
    %c21_190 = arith.constant 21 : index
    %c0_191 = arith.constant 0 : index
    %c0_192 = arith.constant 0 : index
    %170 = vector.load %arg1[%c21_190, %c0_191, %c0_192] : memref<32x60x60xf32, #tpu.memory_space<vmem>>, vector<1x60x60xf32>
    %171 = vector.shape_cast %170 : vector<1x60x60xf32> to vector<60x60xf32>
    %cst_193 = arith.constant dense<0.000000e+00> : vector<2x60xf32>
    %172 = tpu.matmul %169, %171, %cst_193 {dimension_numbers = #tpu.dot_dimension_numbers<[1], [0], [0], [1], [0, 0, 1, 1], [], []>} : vector<2x60xf32>, vector<60x60xf32>, vector<2x60xf32> -> vector<2x60xf32>
    %c21_194 = arith.constant 21 : index
    %c0_195 = arith.constant 0 : index
    %c0_196 = arith.constant 0 : index
    %173 = vector.load %arg2[%c21_194, %c0_195, %c0_196] : memref<32x2x60xf32, #tpu.memory_space<vmem>>, vector<1x2x60xf32>
    %174 = vector.shape_cast %173 : vector<1x2x60xf32> to vector<2x60xf32>
    %175 = vector.shape_cast %172 : vector<2x60xf32> to vector<1x2x60xf32>
    tpu.vector_store %arg2[%c21_194, %c0_195, %c0_196], %175 {strides = array<i32>} : memref<32x2x60xf32, #tpu.memory_space<vmem>>, vector<1x2x60xf32>,
    %c22 = arith.constant 22 : index
    %c0_197 = arith.constant 0 : index
    %c0_198 = arith.constant 0 : index
    %176 = vector.load %arg0[%c22, %c0_197, %c0_198] : memref<32x2x60xf32, #tpu.memory_space<vmem>>, vector<1x2x60xf32>
    %177 = vector.shape_cast %176 : vector<1x2x60xf32> to vector<2x60xf32>
    %c22_199 = arith.constant 22 : index
    %c0_200 = arith.constant 0 : index
    %c0_201 = arith.constant 0 : index
    %178 = vector.load %arg1[%c22_199, %c0_200, %c0_201] : memref<32x60x60xf32, #tpu.memory_space<vmem>>, vector<1x60x60xf32>
    %179 = vector.shape_cast %178 : vector<1x60x60xf32> to vector<60x60xf32>
    %cst_202 = arith.constant dense<0.000000e+00> : vector<2x60xf32>
    %180 = tpu.matmul %177, %179, %cst_202 {dimension_numbers = #tpu.dot_dimension_numbers<[1], [0], [0], [1], [0, 0, 1, 1], [], []>} : vector<2x60xf32>, vector<60x60xf32>, vector<2x60xf32> -> vector<2x60xf32>
    %c22_203 = arith.constant 22 : index
    %c0_204 = arith.constant 0 : index
    %c0_205 = arith.constant 0 : index
    %181 = vector.load %arg2[%c22_203, %c0_204, %c0_205] : memref<32x2x60xf32, #tpu.memory_space<vmem>>, vector<1x2x60xf32>
    %182 = vector.shape_cast %181 : vector<1x2x60xf32> to vector<2x60xf32>
    %183 = vector.shape_cast %180 : vector<2x60xf32> to vector<1x2x60xf32>
    tpu.vector_store %arg2[%c22_203, %c0_204, %c0_205], %183 {strides = array<i32>} : memref<32x2x60xf32, #tpu.memory_space<vmem>>, vector<1x2x60xf32>,
    %c23 = arith.constant 23 : index
    %c0_206 = arith.constant 0 : index
    %c0_207 = arith.constant 0 : index
    %184 = vector.load %arg0[%c23, %c0_206, %c0_207] : memref<32x2x60xf32, #tpu.memory_space<vmem>>, vector<1x2x60xf32>
    %185 = vector.shape_cast %184 : vector<1x2x60xf32> to vector<2x60xf32>
    %c23_208 = arith.constant 23 : index
    %c0_209 = arith.constant 0 : index
    %c0_210 = arith.constant 0 : index
    %186 = vector.load %arg1[%c23_208, %c0_209, %c0_210] : memref<32x60x60xf32, #tpu.memory_space<vmem>>, vector<1x60x60xf32>
    %187 = vector.shape_cast %186 : vector<1x60x60xf32> to vector<60x60xf32>
    %cst_211 = arith.constant dense<0.000000e+00> : vector<2x60xf32>
    %188 = tpu.matmul %185, %187, %cst_211 {dimension_numbers = #tpu.dot_dimension_numbers<[1], [0], [0], [1], [0, 0, 1, 1], [], []>} : vector<2x60xf32>, vector<60x60xf32>, vector<2x60xf32> -> vector<2x60xf32>
    %c23_212 = arith.constant 23 : index
    %c0_213 = arith.constant 0 : index
    %c0_214 = arith.constant 0 : index
    %189 = vector.load %arg2[%c23_212, %c0_213, %c0_214] : memref<32x2x60xf32, #tpu.memory_space<vmem>>, vector<1x2x60xf32>
    %190 = vector.shape_cast %189 : vector<1x2x60xf32> to vector<2x60xf32>
    %191 = vector.shape_cast %188 : vector<2x60xf32> to vector<1x2x60xf32>
    tpu.vector_store %arg2[%c23_212, %c0_213, %c0_214], %191 {strides = array<i32>} : memref<32x2x60xf32, #tpu.memory_space<vmem>>, vector<1x2x60xf32>,
    %c24 = arith.constant 24 : index
    %c0_215 = arith.constant 0 : index
    %c0_216 = arith.constant 0 : index
    %192 = vector.load %arg0[%c24, %c0_215, %c0_216] : memref<32x2x60xf32, #tpu.memory_space<vmem>>, vector<1x2x60xf32>
    %193 = vector.shape_cast %192 : vector<1x2x60xf32> to vector<2x60xf32>
    %c24_217 = arith.constant 24 : index
    %c0_218 = arith.constant 0 : index
    %c0_219 = arith.constant 0 : index
    %194 = vector.load %arg1[%c24_217, %c0_218, %c0_219] : memref<32x60x60xf32, #tpu.memory_space<vmem>>, vector<1x60x60xf32>
    %195 = vector.shape_cast %194 : vector<1x60x60xf32> to vector<60x60xf32>
    %cst_220 = arith.constant dense<0.000000e+00> : vector<2x60xf32>
    %196 = tpu.matmul %193, %195, %cst_220 {dimension_numbers = #tpu.dot_dimension_numbers<[1], [0], [0], [1], [0, 0, 1, 1], [], []>} : vector<2x60xf32>, vector<60x60xf32>, vector<2x60xf32> -> vector<2x60xf32>
    %c24_221 = arith.constant 24 : index
    %c0_222 = arith.constant 0 : index
    %c0_223 = arith.constant 0 : index
    %197 = vector.load %arg2[%c24_221, %c0_222, %c0_223] : memref<32x2x60xf32, #tpu.memory_space<vmem>>, vector<1x2x60xf32>
    %198 = vector.shape_cast %197 : vector<1x2x60xf32> to vector<2x60xf32>
    %199 = vector.shape_cast %196 : vector<2x60xf32> to vector<1x2x60xf32>
    tpu.vector_store %arg2[%c24_221, %c0_222, %c0_223], %199 {strides = array<i32>} : memref<32x2x60xf32, #tpu.memory_space<vmem>>, vector<1x2x60xf32>,
    %c25 = arith.constant 25 : index
    %c0_224 = arith.constant 0 : index
    %c0_225 = arith.constant 0 : index
    %200 = vector.load %arg0[%c25, %c0_224, %c0_225] : memref<32x2x60xf32, #tpu.memory_space<vmem>>, vector<1x2x60xf32>
    %201 = vector.shape_cast %200 : vector<1x2x60xf32> to vector<2x60xf32>
    %c25_226 = arith.constant 25 : index
    %c0_227 = arith.constant 0 : index
    %c0_228 = arith.constant 0 : index
    %202 = vector.load %arg1[%c25_226, %c0_227, %c0_228] : memref<32x60x60xf32, #tpu.memory_space<vmem>>, vector<1x60x60xf32>
    %203 = vector.shape_cast %202 : vector<1x60x60xf32> to vector<60x60xf32>
    %cst_229 = arith.constant dense<0.000000e+00> : vector<2x60xf32>
    %204 = tpu.matmul %201, %203, %cst_229 {dimension_numbers = #tpu.dot_dimension_numbers<[1], [0], [0], [1], [0, 0, 1, 1], [], []>} : vector<2x60xf32>, vector<60x60xf32>, vector<2x60xf32> -> vector<2x60xf32>
    %c25_230 = arith.constant 25 : index
    %c0_231 = arith.constant 0 : index
    %c0_232 = arith.constant 0 : index
    %205 = vector.load %arg2[%c25_230, %c0_231, %c0_232] : memref<32x2x60xf32, #tpu.memory_space<vmem>>, vector<1x2x60xf32>
    %206 = vector.shape_cast %205 : vector<1x2x60xf32> to vector<2x60xf32>
    %207 = vector.shape_cast %204 : vector<2x60xf32> to vector<1x2x60xf32>
    tpu.vector_store %arg2[%c25_230, %c0_231, %c0_232], %207 {strides = array<i32>} : memref<32x2x60xf32, #tpu.memory_space<vmem>>, vector<1x2x60xf32>,
    %c26 = arith.constant 26 : index
    %c0_233 = arith.constant 0 : index
    %c0_234 = arith.constant 0 : index
    %208 = vector.load %arg0[%c26, %c0_233, %c0_234] : memref<32x2x60xf32, #tpu.memory_space<vmem>>, vector<1x2x60xf32>
    %209 = vector.shape_cast %208 : vector<1x2x60xf32> to vector<2x60xf32>
    %c26_235 = arith.constant 26 : index
    %c0_236 = arith.constant 0 : index
    %c0_237 = arith.constant 0 : index
    %210 = vector.load %arg1[%c26_235, %c0_236, %c0_237] : memref<32x60x60xf32, #tpu.memory_space<vmem>>, vector<1x60x60xf32>
    %211 = vector.shape_cast %210 : vector<1x60x60xf32> to vector<60x60xf32>
    %cst_238 = arith.constant dense<0.000000e+00> : vector<2x60xf32>
    %212 = tpu.matmul %209, %211, %cst_238 {dimension_numbers = #tpu.dot_dimension_numbers<[1], [0], [0], [1], [0, 0, 1, 1], [], []>} : vector<2x60xf32>, vector<60x60xf32>, vector<2x60xf32> -> vector<2x60xf32>
    %c26_239 = arith.constant 26 : index
    %c0_240 = arith.constant 0 : index
    %c0_241 = arith.constant 0 : index
    %213 = vector.load %arg2[%c26_239, %c0_240, %c0_241] : memref<32x2x60xf32, #tpu.memory_space<vmem>>, vector<1x2x60xf32>
    %214 = vector.shape_cast %213 : vector<1x2x60xf32> to vector<2x60xf32>
    %215 = vector.shape_cast %212 : vector<2x60xf32> to vector<1x2x60xf32>
    tpu.vector_store %arg2[%c26_239, %c0_240, %c0_241], %215 {strides = array<i32>} : memref<32x2x60xf32, #tpu.memory_space<vmem>>, vector<1x2x60xf32>,
    %c27 = arith.constant 27 : index
    %c0_242 = arith.constant 0 : index
    %c0_243 = arith.constant 0 : index
    %216 = vector.load %arg0[%c27, %c0_242, %c0_243] : memref<32x2x60xf32, #tpu.memory_space<vmem>>, vector<1x2x60xf32>
    %217 = vector.shape_cast %216 : vector<1x2x60xf32> to vector<2x60xf32>
    %c27_244 = arith.constant 27 : index
    %c0_245 = arith.constant 0 : index
    %c0_246 = arith.constant 0 : index
    %218 = vector.load %arg1[%c27_244, %c0_245, %c0_246] : memref<32x60x60xf32, #tpu.memory_space<vmem>>, vector<1x60x60xf32>
    %219 = vector.shape_cast %218 : vector<1x60x60xf32> to vector<60x60xf32>
    %cst_247 = arith.constant dense<0.000000e+00> : vector<2x60xf32>
    %220 = tpu.matmul %217, %219, %cst_247 {dimension_numbers = #tpu.dot_dimension_numbers<[1], [0], [0], [1], [0, 0, 1, 1], [], []>} : vector<2x60xf32>, vector<60x60xf32>, vector<2x60xf32> -> vector<2x60xf32>
    %c27_248 = arith.constant 27 : index
    %c0_249 = arith.constant 0 : index
    %c0_250 = arith.constant 0 : index
    %221 = vector.load %arg2[%c27_248, %c0_249, %c0_250] : memref<32x2x60xf32, #tpu.memory_space<vmem>>, vector<1x2x60xf32>
    %222 = vector.shape_cast %221 : vector<1x2x60xf32> to vector<2x60xf32>
    %223 = vector.shape_cast %220 : vector<2x60xf32> to vector<1x2x60xf32>
    tpu.vector_store %arg2[%c27_248, %c0_249, %c0_250], %223 {strides = array<i32>} : memref<32x2x60xf32, #tpu.memory_space<vmem>>, vector<1x2x60xf32>,
    %c28 = arith.constant 28 : index
    %c0_251 = arith.constant 0 : index
    %c0_252 = arith.constant 0 : index
    %224 = vector.load %arg0[%c28, %c0_251, %c0_252] : memref<32x2x60xf32, #tpu.memory_space<vmem>>, vector<1x2x60xf32>
    %225 = vector.shape_cast %224 : vector<1x2x60xf32> to vector<2x60xf32>
    %c28_253 = arith.constant 28 : index
    %c0_254 = arith.constant 0 : index
    %c0_255 = arith.constant 0 : index
    %226 = vector.load %arg1[%c28_253, %c0_254, %c0_255] : memref<32x60x60xf32, #tpu.memory_space<vmem>>, vector<1x60x60xf32>
    %227 = vector.shape_cast %226 : vector<1x60x60xf32> to vector<60x60xf32>
    %cst_256 = arith.constant dense<0.000000e+00> : vector<2x60xf32>
    %228 = tpu.matmul %225, %227, %cst_256 {dimension_numbers = #tpu.dot_dimension_numbers<[1], [0], [0], [1], [0, 0, 1, 1], [], []>} : vector<2x60xf32>, vector<60x60xf32>, vector<2x60xf32> -> vector<2x60xf32>
    %c28_257 = arith.constant 28 : index
    %c0_258 = arith.constant 0 : index
    %c0_259 = arith.constant 0 : index
    %229 = vector.load %arg2[%c28_257, %c0_258, %c0_259] : memref<32x2x60xf32, #tpu.memory_space<vmem>>, vector<1x2x60xf32>
    %230 = vector.shape_cast %229 : vector<1x2x60xf32> to vector<2x60xf32>
    %231 = vector.shape_cast %228 : vector<2x60xf32> to vector<1x2x60xf32>
    tpu.vector_store %arg2[%c28_257, %c0_258, %c0_259], %231 {strides = array<i32>} : memref<32x2x60xf32, #tpu.memory_space<vmem>>, vector<1x2x60xf32>,
    %c29 = arith.constant 29 : index
    %c0_260 = arith.constant 0 : index
    %c0_261 = arith.constant 0 : index
    %232 = vector.load %arg0[%c29, %c0_260, %c0_261] : memref<32x2x60xf32, #tpu.memory_space<vmem>>, vector<1x2x60xf32>
    %233 = vector.shape_cast %232 : vector<1x2x60xf32> to vector<2x60xf32>
    %c29_262 = arith.constant 29 : index
    %c0_263 = arith.constant 0 : index
    %c0_264 = arith.constant 0 : index
    %234 = vector.load %arg1[%c29_262, %c0_263, %c0_264] : memref<32x60x60xf32, #tpu.memory_space<vmem>>, vector<1x60x60xf32>
    %235 = vector.shape_cast %234 : vector<1x60x60xf32> to vector<60x60xf32>
    %cst_265 = arith.constant dense<0.000000e+00> : vector<2x60xf32>
    %236 = tpu.matmul %233, %235, %cst_265 {dimension_numbers = #tpu.dot_dimension_numbers<[1], [0], [0], [1], [0, 0, 1, 1], [], []>} : vector<2x60xf32>, vector<60x60xf32>, vector<2x60xf32> -> vector<2x60xf32>
    %c29_266 = arith.constant 29 : index
    %c0_267 = arith.constant 0 : index
    %c0_268 = arith.constant 0 : index
    %237 = vector.load %arg2[%c29_266, %c0_267, %c0_268] : memref<32x2x60xf32, #tpu.memory_space<vmem>>, vector<1x2x60xf32>
    %238 = vector.shape_cast %237 : vector<1x2x60xf32> to vector<2x60xf32>
    %239 = vector.shape_cast %236 : vector<2x60xf32> to vector<1x2x60xf32>
    tpu.vector_store %arg2[%c29_266, %c0_267, %c0_268], %239 {strides = array<i32>} : memref<32x2x60xf32, #tpu.memory_space<vmem>>, vector<1x2x60xf32>,
    %c30 = arith.constant 30 : index
    %c0_269 = arith.constant 0 : index
    %c0_270 = arith.constant 0 : index
    %240 = vector.load %arg0[%c30, %c0_269, %c0_270] : memref<32x2x60xf32, #tpu.memory_space<vmem>>, vector<1x2x60xf32>
    %241 = vector.shape_cast %240 : vector<1x2x60xf32> to vector<2x60xf32>
    %c30_271 = arith.constant 30 : index
    %c0_272 = arith.constant 0 : index
    %c0_273 = arith.constant 0 : index
    %242 = vector.load %arg1[%c30_271, %c0_272, %c0_273] : memref<32x60x60xf32, #tpu.memory_space<vmem>>, vector<1x60x60xf32>
    %243 = vector.shape_cast %242 : vector<1x60x60xf32> to vector<60x60xf32>
    %cst_274 = arith.constant dense<0.000000e+00> : vector<2x60xf32>
    %244 = tpu.matmul %241, %243, %cst_274 {dimension_numbers = #tpu.dot_dimension_numbers<[1], [0], [0], [1], [0, 0, 1, 1], [], []>} : vector<2x60xf32>, vector<60x60xf32>, vector<2x60xf32> -> vector<2x60xf32>
    %c30_275 = arith.constant 30 : index
    %c0_276 = arith.constant 0 : index
    %c0_277 = arith.constant 0 : index
    %245 = vector.load %arg2[%c30_275, %c0_276, %c0_277] : memref<32x2x60xf32, #tpu.memory_space<vmem>>, vector<1x2x60xf32>
    %246 = vector.shape_cast %245 : vector<1x2x60xf32> to vector<2x60xf32>
    %247 = vector.shape_cast %244 : vector<2x60xf32> to vector<1x2x60xf32>
    tpu.vector_store %arg2[%c30_275, %c0_276, %c0_277], %247 {strides = array<i32>} : memref<32x2x60xf32, #tpu.memory_space<vmem>>, vector<1x2x60xf32>,
    %c31 = arith.constant 31 : index
    %c0_278 = arith.constant 0 : index
    %c0_279 = arith.constant 0 : index
    %248 = vector.load %arg0[%c31, %c0_278, %c0_279] : memref<32x2x60xf32, #tpu.memory_space<vmem>>, vector<1x2x60xf32>
    %249 = vector.shape_cast %248 : vector<1x2x60xf32> to vector<2x60xf32>
    %c31_280 = arith.constant 31 : index
    %c0_281 = arith.constant 0 : index
    %c0_282 = arith.constant 0 : index
    %250 = vector.load %arg1[%c31_280, %c0_281, %c0_282] : memref<32x60x60xf32, #tpu.memory_space<vmem>>, vector<1x60x60xf32>
    %251 = vector.shape_cast %250 : vector<1x60x60xf32> to vector<60x60xf32>
    %cst_283 = arith.constant dense<0.000000e+00> : vector<2x60xf32>
    %252 = tpu.matmul %249, %251, %cst_283 {dimension_numbers = #tpu.dot_dimension_numbers<[1], [0], [0], [1], [0, 0, 1, 1], [], []>} : vector<2x60xf32>, vector<60x60xf32>, vector<2x60xf32> -> vector<2x60xf32>
    %c31_284 = arith.constant 31 : index
    %c0_285 = arith.constant 0 : index
    %c0_286 = arith.constant 0 : index
    %253 = vector.load %arg2[%c31_284, %c0_285, %c0_286] : memref<32x2x60xf32, #tpu.memory_space<vmem>>, vector<1x2x60xf32>
    %254 = vector.shape_cast %253 : vector<1x2x60xf32> to vector<2x60xf32>
    %255 = vector.shape_cast %252 : vector<2x60xf32> to vector<1x2x60xf32>
    tpu.vector_store %arg2[%c31_284, %c0_285, %c0_286], %255 {strides = array<i32>} : memref<32x2x60xf32, #tpu.memory_space<vmem>>, vector<1x2x60xf32>,
    return
  }
}

module attributes {stable_mosaic.version = 11 : i64} {
  func.func @_linear_add_kernel(%arg0: memref<576x30xf32, #tpu.memory_space<vmem>>, %arg1: memref<30x30xf32, #tpu.memory_space<vmem>>, %arg2: memref<1x30xf32, #tpu.memory_space<vmem>>, %arg3: memref<576x30xf32, #tpu.memory_space<vmem>>, %arg4: memref<576x30xf32, #tpu.memory_space<vmem>>) attributes {dimension_semantics = [], scalar_prefetch = 0 : i64, scratch_operands = 0 : i64, tpu.core_type = #tpu.core_type<tc>} {
    %c0 = arith.constant 0 : index
    %c0_0 = arith.constant 0 : index
    %0 = vector.load %arg0[%c0, %c0_0] : memref<576x30xf32, #tpu.memory_space<vmem>>, vector<576x30xf32>
    %c0_1 = arith.constant 0 : index
    %c0_2 = arith.constant 0 : index
    %1 = vector.load %arg1[%c0_1, %c0_2] : memref<30x30xf32, #tpu.memory_space<vmem>>, vector<30x30xf32>
    %cst = arith.constant dense<0.000000e+00> : vector<576x30xf32>
    %2 = tpu.matmul %0, %1, %cst {dimension_numbers = #tpu.dot_dimension_numbers<[1], [0], [0], [1], [0, 0, 1, 1], [], []>} : vector<576x30xf32>, vector<30x30xf32>, vector<576x30xf32> -> vector<576x30xf32>
    %c0_3 = arith.constant 0 : index
    %c0_4 = arith.constant 0 : index
    %3 = vector.load %arg2[%c0_3, %c0_4] : memref<1x30xf32, #tpu.memory_space<vmem>>, vector<1x30xf32>
    %4 = vector.broadcast %3 : vector<1x30xf32> to vector<576x30xf32>
    %5 = arith.addf %2, %4 : vector<576x30xf32>
    %c0_5 = arith.constant 0 : index
    %c0_6 = arith.constant 0 : index
    %6 = vector.load %arg3[%c0_5, %c0_6] : memref<576x30xf32, #tpu.memory_space<vmem>>, vector<576x30xf32>
    %7 = arith.addf %5, %6 : vector<576x30xf32>
    %cst_7 = arith.constant 5.000000e-01 : f32
    %8 = vector.broadcast %cst_7 : f32 to vector<576x30xf32>
    %9 = arith.mulf %8, %7 : vector<576x30xf32>
    %cst_8 = arith.constant 0.707106769 : f32
    %10 = vector.broadcast %cst_8 : f32 to vector<576x30xf32>
    %11 = arith.mulf %7, %10 : vector<576x30xf32>
    %12 = math.absf %11 : vector<576x30xf32>
    %cst_9 = arith.constant 0.327591091 : f32
    %13 = vector.broadcast %cst_9 : f32 to vector<576x30xf32>
    %14 = arith.mulf %13, %12 : vector<576x30xf32>
    %cst_10 = arith.constant 1.000000e+00 : f32
    %15 = vector.broadcast %cst_10 : f32 to vector<576x30xf32>
    %16 = arith.addf %15, %14 : vector<576x30xf32>
    %cst_11 = arith.constant 1.000000e+00 : f32
    %17 = vector.broadcast %cst_11 : f32 to vector<576x30xf32>
    %18 = arith.divf %17, %16 : vector<576x30xf32>
    %cst_12 = arith.constant 1.06140542 : f32
    %19 = vector.broadcast %cst_12 : f32 to vector<576x30xf32>
    %20 = arith.mulf %19, %18 : vector<576x30xf32>
    %cst_13 = arith.constant -1.45315206 : f32
    %21 = vector.broadcast %cst_13 : f32 to vector<576x30xf32>
    %22 = arith.addf %20, %21 : vector<576x30xf32>
    %23 = arith.mulf %22, %18 : vector<576x30xf32>
    %cst_14 = arith.constant 1.42141378 : f32
    %24 = vector.broadcast %cst_14 : f32 to vector<576x30xf32>
    %25 = arith.addf %23, %24 : vector<576x30xf32>
    %26 = arith.mulf %25, %18 : vector<576x30xf32>
    %cst_15 = arith.constant -0.284496725 : f32
    %27 = vector.broadcast %cst_15 : f32 to vector<576x30xf32>
    %28 = arith.addf %26, %27 : vector<576x30xf32>
    %29 = arith.mulf %28, %18 : vector<576x30xf32>
    %cst_16 = arith.constant 0.254829586 : f32
    %30 = vector.broadcast %cst_16 : f32 to vector<576x30xf32>
    %31 = arith.addf %29, %30 : vector<576x30xf32>
    %32 = arith.mulf %31, %18 : vector<576x30xf32>
    %cst_17 = arith.constant 0.000000e+00 : f32
    %33 = vector.broadcast %cst_17 : f32 to vector<576x30xf32>
    %34 = arith.subf %33, %12 : vector<576x30xf32>
    %35 = arith.mulf %34, %12 : vector<576x30xf32>
    %36 = math.exp %35 : vector<576x30xf32>
    %37 = arith.mulf %32, %36 : vector<576x30xf32>
    %cst_18 = arith.constant 1.000000e+00 : f32
    %38 = vector.broadcast %cst_18 : f32 to vector<576x30xf32>
    %39 = arith.subf %38, %37 : vector<576x30xf32>
    %cst_19 = arith.constant 0.000000e+00 : f32
    %40 = vector.broadcast %cst_19 : f32 to vector<576x30xf32>
    %41 = arith.cmpf olt, %11, %40 : vector<576x30xf32>
    %cst_20 = arith.constant 0.000000e+00 : f32
    %42 = vector.broadcast %cst_20 : f32 to vector<576x30xf32>
    %43 = arith.subf %42, %39 : vector<576x30xf32>
    %44 = arith.select %41, %43, %39 : vector<576x30xi1>, vector<576x30xf32>
    %cst_21 = arith.constant 1.000000e+00 : f32
    %45 = vector.broadcast %cst_21 : f32 to vector<576x30xf32>
    %46 = arith.addf %45, %44 : vector<576x30xf32>
    %47 = arith.mulf %9, %46 : vector<576x30xf32>
    %c0_22 = arith.constant 0 : index
    %c0_23 = arith.constant 0 : index
    %48 = vector.load %arg4[%c0_22, %c0_23] : memref<576x30xf32, #tpu.memory_space<vmem>>, vector<576x30xf32>
    tpu.vector_store %arg4[%c0_22, %c0_23], %47 {strides = array<i32>} : memref<576x30xf32, #tpu.memory_space<vmem>>, vector<576x30xf32>,
    return
  }
}

module attributes {stable_mosaic.version = 11 : i64} {
  func.func @_linear_add_kernel(%arg0: memref<576x30xf32, #tpu.memory_space<vmem>>, %arg1: memref<30x30xf32, #tpu.memory_space<vmem>>, %arg2: memref<1x30xf32, #tpu.memory_space<vmem>>, %arg3: memref<576x30xf32, #tpu.memory_space<vmem>>, %arg4: memref<576x30xf32, #tpu.memory_space<vmem>>) attributes {dimension_semantics = [], scalar_prefetch = 0 : i64, scratch_operands = 0 : i64, tpu.core_type = #tpu.core_type<tc>} {
    %c0 = arith.constant 0 : index
    %c0_0 = arith.constant 0 : index
    %0 = vector.load %arg0[%c0, %c0_0] : memref<576x30xf32, #tpu.memory_space<vmem>>, vector<576x30xf32>
    %c0_1 = arith.constant 0 : index
    %c0_2 = arith.constant 0 : index
    %1 = vector.load %arg1[%c0_1, %c0_2] : memref<30x30xf32, #tpu.memory_space<vmem>>, vector<30x30xf32>
    %cst = arith.constant dense<0.000000e+00> : vector<576x30xf32>
    %2 = tpu.matmul %0, %1, %cst {dimension_numbers = #tpu.dot_dimension_numbers<[1], [0], [0], [1], [0, 0, 1, 1], [], []>} : vector<576x30xf32>, vector<30x30xf32>, vector<576x30xf32> -> vector<576x30xf32>
    %c0_3 = arith.constant 0 : index
    %c0_4 = arith.constant 0 : index
    %3 = vector.load %arg2[%c0_3, %c0_4] : memref<1x30xf32, #tpu.memory_space<vmem>>, vector<1x30xf32>
    %4 = vector.broadcast %3 : vector<1x30xf32> to vector<576x30xf32>
    %5 = arith.addf %2, %4 : vector<576x30xf32>
    %c0_5 = arith.constant 0 : index
    %c0_6 = arith.constant 0 : index
    %6 = vector.load %arg3[%c0_5, %c0_6] : memref<576x30xf32, #tpu.memory_space<vmem>>, vector<576x30xf32>
    %7 = arith.addf %5, %6 : vector<576x30xf32>
    %c0_7 = arith.constant 0 : index
    %c0_8 = arith.constant 0 : index
    %8 = vector.load %arg4[%c0_7, %c0_8] : memref<576x30xf32, #tpu.memory_space<vmem>>, vector<576x30xf32>
    tpu.vector_store %arg4[%c0_7, %c0_8], %7 {strides = array<i32>} : memref<576x30xf32, #tpu.memory_space<vmem>>, vector<576x30xf32>,
    return
  }
}

module attributes {stable_mosaic.version = 11 : i64} {
  func.func @_mlp_kernel(%arg0: memref<512x30xf32, #tpu.memory_space<vmem>>, %arg1: memref<30x128xf32, #tpu.memory_space<vmem>>, %arg2: memref<1x128xf32, #tpu.memory_space<vmem>>, %arg3: memref<128x1xf32, #tpu.memory_space<vmem>>, %arg4: memref<1x1xf32, #tpu.memory_space<vmem>>, %arg5: memref<512x1xf32, #tpu.memory_space<vmem>>) attributes {dimension_semantics = [], scalar_prefetch = 0 : i64, scratch_operands = 0 : i64, tpu.core_type = #tpu.core_type<tc>} {
    %c0 = arith.constant 0 : index
    %c0_0 = arith.constant 0 : index
    %0 = vector.load %arg0[%c0, %c0_0] : memref<512x30xf32, #tpu.memory_space<vmem>>, vector<512x30xf32>
    %c0_1 = arith.constant 0 : index
    %c0_2 = arith.constant 0 : index
    %1 = vector.load %arg1[%c0_1, %c0_2] : memref<30x128xf32, #tpu.memory_space<vmem>>, vector<30x128xf32>
    %cst = arith.constant dense<0.000000e+00> : vector<512x128xf32>
    %2 = tpu.matmul %0, %1, %cst {dimension_numbers = #tpu.dot_dimension_numbers<[1], [0], [0], [1], [0, 0, 1, 1], [], []>} : vector<512x30xf32>, vector<30x128xf32>, vector<512x128xf32> -> vector<512x128xf32>
    %c0_3 = arith.constant 0 : index
    %c0_4 = arith.constant 0 : index
    %3 = vector.load %arg2[%c0_3, %c0_4] : memref<1x128xf32, #tpu.memory_space<vmem>>, vector<1x128xf32>
    %4 = vector.broadcast %3 : vector<1x128xf32> to vector<512x128xf32>
    %5 = arith.addf %2, %4 : vector<512x128xf32>
    %cst_5 = arith.constant 5.000000e-01 : f32
    %6 = vector.broadcast %cst_5 : f32 to vector<512x128xf32>
    %7 = arith.mulf %6, %5 : vector<512x128xf32>
    %cst_6 = arith.constant 0.707106769 : f32
    %8 = vector.broadcast %cst_6 : f32 to vector<512x128xf32>
    %9 = arith.mulf %5, %8 : vector<512x128xf32>
    %10 = math.absf %9 : vector<512x128xf32>
    %cst_7 = arith.constant 0.327591091 : f32
    %11 = vector.broadcast %cst_7 : f32 to vector<512x128xf32>
    %12 = arith.mulf %11, %10 : vector<512x128xf32>
    %cst_8 = arith.constant 1.000000e+00 : f32
    %13 = vector.broadcast %cst_8 : f32 to vector<512x128xf32>
    %14 = arith.addf %13, %12 : vector<512x128xf32>
    %cst_9 = arith.constant 1.000000e+00 : f32
    %15 = vector.broadcast %cst_9 : f32 to vector<512x128xf32>
    %16 = arith.divf %15, %14 : vector<512x128xf32>
    %cst_10 = arith.constant 1.06140542 : f32
    %17 = vector.broadcast %cst_10 : f32 to vector<512x128xf32>
    %18 = arith.mulf %17, %16 : vector<512x128xf32>
    %cst_11 = arith.constant -1.45315206 : f32
    %19 = vector.broadcast %cst_11 : f32 to vector<512x128xf32>
    %20 = arith.addf %18, %19 : vector<512x128xf32>
    %21 = arith.mulf %20, %16 : vector<512x128xf32>
    %cst_12 = arith.constant 1.42141378 : f32
    %22 = vector.broadcast %cst_12 : f32 to vector<512x128xf32>
    %23 = arith.addf %21, %22 : vector<512x128xf32>
    %24 = arith.mulf %23, %16 : vector<512x128xf32>
    %cst_13 = arith.constant -0.284496725 : f32
    %25 = vector.broadcast %cst_13 : f32 to vector<512x128xf32>
    %26 = arith.addf %24, %25 : vector<512x128xf32>
    %27 = arith.mulf %26, %16 : vector<512x128xf32>
    %cst_14 = arith.constant 0.254829586 : f32
    %28 = vector.broadcast %cst_14 : f32 to vector<512x128xf32>
    %29 = arith.addf %27, %28 : vector<512x128xf32>
    %30 = arith.mulf %29, %16 : vector<512x128xf32>
    %cst_15 = arith.constant 0.000000e+00 : f32
    %31 = vector.broadcast %cst_15 : f32 to vector<512x128xf32>
    %32 = arith.subf %31, %10 : vector<512x128xf32>
    %33 = arith.mulf %32, %10 : vector<512x128xf32>
    %34 = math.exp %33 : vector<512x128xf32>
    %35 = arith.mulf %30, %34 : vector<512x128xf32>
    %cst_16 = arith.constant 1.000000e+00 : f32
    %36 = vector.broadcast %cst_16 : f32 to vector<512x128xf32>
    %37 = arith.subf %36, %35 : vector<512x128xf32>
    %cst_17 = arith.constant 0.000000e+00 : f32
    %38 = vector.broadcast %cst_17 : f32 to vector<512x128xf32>
    %39 = arith.cmpf olt, %9, %38 : vector<512x128xf32>
    %cst_18 = arith.constant 0.000000e+00 : f32
    %40 = vector.broadcast %cst_18 : f32 to vector<512x128xf32>
    %41 = arith.subf %40, %37 : vector<512x128xf32>
    %42 = arith.select %39, %41, %37 : vector<512x128xi1>, vector<512x128xf32>
    %cst_19 = arith.constant 1.000000e+00 : f32
    %43 = vector.broadcast %cst_19 : f32 to vector<512x128xf32>
    %44 = arith.addf %43, %42 : vector<512x128xf32>
    %45 = arith.mulf %7, %44 : vector<512x128xf32>
    %c0_20 = arith.constant 0 : index
    %c0_21 = arith.constant 0 : index
    %46 = vector.load %arg3[%c0_20, %c0_21] : memref<128x1xf32, #tpu.memory_space<vmem>>, vector<128x1xf32>
    %cst_22 = arith.constant dense<0.000000e+00> : vector<512x1xf32>
    %47 = tpu.matmul %45, %46, %cst_22 {dimension_numbers = #tpu.dot_dimension_numbers<[1], [0], [0], [1], [0, 0, 1, 1], [], []>} : vector<512x128xf32>, vector<128x1xf32>, vector<512x1xf32> -> vector<512x1xf32>
    %c0_23 = arith.constant 0 : index
    %c0_24 = arith.constant 0 : index
    %48 = vector.load %arg4[%c0_23, %c0_24] : memref<1x1xf32, #tpu.memory_space<vmem>>, vector<1x1xf32>
    %49 = vector.broadcast %48 : vector<1x1xf32> to vector<512x1xf32>
    %50 = arith.addf %47, %49 : vector<512x1xf32>
    %c0_25 = arith.constant 0 : index
    %c0_26 = arith.constant 0 : index
    %51 = vector.load %arg5[%c0_25, %c0_26] : memref<512x1xf32, #tpu.memory_space<vmem>>, vector<512x1xf32>
    tpu.vector_store %arg5[%c0_25, %c0_26], %50 {strides = array<i32>} : memref<512x1xf32, #tpu.memory_space<vmem>>, vector<512x1xf32>,
    return
  }
}

</mosaic_0001>

<llo_original>
// kernel: _lambda_.10
$region0: #{_lambda_.10}
  #allocation0 [shape = 'u32[]', space=smem, size = 0x4, offset = 0x4, fixed_abs, tag = 'smem constant byte address 0x4 - core index']
  #allocation1 [shape = 'u32[144,128]{1,0:T(1,128)}', space=vmem, size = 0x12000, scoped, tag = 'internal scratch']
  %s0 = inlined_call_operand.vmem [shape: f32[512,5], index: 0, kind: input, shape index: {}]
  %s1 = inlined_call_operand.vmem [shape: f32[5,30], index: 1, kind: input, shape index: {}]
  %s2 = inlined_call_operand.vmem [shape: f32[1,30], index: 2, kind: input, shape index: {}]
  %s3 = inlined_call_operand.vmem [shape: f32[512,30], index: 3, kind: output, shape index: {}]
  %s4 = sld [smem:[#allocation0]]
  $region22: #{_lambda_.10} parent=0
    _
  %s6 = ssub.s32 1, %s4
  %s7 = scalar_select 0, %s6, %s4
  // Predicated region
  $region2: #{_lambda_.10} parent=0 // pred_check
    _
  $region3: #{_lambda_.10} parent=0 // pred_check_branch
    %9 = sbr.rel (0) target = $region5
  $region4: #{_lambda_.10} parent=0 // pred_region
    _
  $region5: #{_lambda_.10} parent=0 // pred_fallthru
    _
  // Predicated region
  $region6: #{_lambda_.10} parent=0 // pred_check
    _
  $region7: #{_lambda_.10} parent=0 // pred_check_branch
    %11 = sbr.rel (0) target = $region9
  $region8: #{_lambda_.10} parent=0 // pred_region
    _
  $region9: #{_lambda_.10} parent=0 // pred_fallthru
    _
  // Predicated region
  $region10: #{_lambda_.10} parent=0 // pred_check
    _
  $region11: #{_lambda_.10} parent=0 // pred_check_branch
    %13 = sbr.rel (0) target = $region13
  $region12: #{_lambda_.10} parent=0 // pred_region
    _
  $region13: #{_lambda_.10} parent=0 // pred_fallthru
    _
  %v14 = vld [vmem:[%s0] sm:$0xff]
  %v15 = vld [vmem:[%s0 + $0x8] sm:$0xff]
  %v16 = vld [vmem:[%s0 + $0x10] sm:$0xff]
  %v17 = vld [vmem:[%s0 + $0x18] sm:$0xff]
  %v18 = vld [vmem:[%s0 + $0x20] sm:$0xff]
  %v19 = vld [vmem:[%s0 + $0x28] sm:$0xff]
  %v20 = vld [vmem:[%s0 + $0x30] sm:$0xff]
  %v21 = vld [vmem:[%s0 + $0x38] sm:$0xff]
  %v22 = vld [vmem:[%s0 + $0x40] sm:$0xff]
  %v23 = vld [vmem:[%s0 + $0x48] sm:$0xff]
  %v24 = vld [vmem:[%s0 + $0x50] sm:$0xff]
  %v25 = vld [vmem:[%s0 + $0x58] sm:$0xff]
  %v26 = vld [vmem:[%s0 + $0x60] sm:$0xff]
  %v27 = vld [vmem:[%s0 + $0x68] sm:$0xff]
  %v28 = vld [vmem:[%s0 + $0x70] sm:$0xff]
  %v29 = vld [vmem:[%s0 + $0x78] sm:$0xff]
  %v30 = vld [vmem:[%s0 + $0x80] sm:$0xff]
  %v31 = vld [vmem:[%s0 + $0x88] sm:$0xff]
  %v32 = vld [vmem:[%s0 + $0x90] sm:$0xff]
  %v33 = vld [vmem:[%s0 + $0x98] sm:$0xff]
  %v34 = vld [vmem:[%s0 + $0xa0] sm:$0xff]
  %v35 = vld [vmem:[%s0 + $0xa8] sm:$0xff]
  %v36 = vld [vmem:[%s0 + $0xb0] sm:$0xff]
  %v37 = vld [vmem:[%s0 + $0xb8] sm:$0xff]
  %v38 = vld [vmem:[%s0 + $0xc0] sm:$0xff]
  %v39 = vld [vmem:[%s0 + $0xc8] sm:$0xff]
  %v40 = vld [vmem:[%s0 + $0xd0] sm:$0xff]
  %v41 = vld [vmem:[%s0 + $0xd8] sm:$0xff]
  %v42 = vld [vmem:[%s0 + $0xe0] sm:$0xff]
  %v43 = vld [vmem:[%s0 + $0xe8] sm:$0xff]
  %v44 = vld [vmem:[%s0 + $0xf0] sm:$0xff]
  %v45 = vld [vmem:[%s0 + $0xf8] sm:$0xff]
  %v46 = vld [vmem:[%s0 + $0x100] sm:$0xff]
  %v47 = vld [vmem:[%s0 + $0x108] sm:$0xff]
  %v48 = vld [vmem:[%s0 + $0x110] sm:$0xff]
  %v49 = vld [vmem:[%s0 + $0x118] sm:$0xff]
  %v50 = vld [vmem:[%s0 + $0x120] sm:$0xff]
  %v51 = vld [vmem:[%s0 + $0x128] sm:$0xff]
  %v52 = vld [vmem:[%s0 + $0x130] sm:$0xff]
  %v53 = vld [vmem:[%s0 + $0x138] sm:$0xff]
  %v54 = vld [vmem:[%s0 + $0x140] sm:$0xff]
  %v55 = vld [vmem:[%s0 + $0x148] sm:$0xff]
  %v56 = vld [vmem:[%s0 + $0x150] sm:$0xff]
  %v57 = vld [vmem:[%s0 + $0x158] sm:$0xff]
  %v58 = vld [vmem:[%s0 + $0x160] sm:$0xff]
  %v59 = vld [vmem:[%s0 + $0x168] sm:$0xff]
  %v60 = vld [vmem:[%s0 + $0x170] sm:$0xff]
  %v61 = vld [vmem:[%s0 + $0x178] sm:$0xff]
  %v62 = vld [vmem:[%s0 + $0x180] sm:$0xff]
  %v63 = vld [vmem:[%s0 + $0x188] sm:$0xff]
  %v64 = vld [vmem:[%s0 + $0x190] sm:$0xff]
  %v65 = vld [vmem:[%s0 + $0x198] sm:$0xff]
  %v66 = vld [vmem:[%s0 + $0x1a0] sm:$0xff]
  %v67 = vld [vmem:[%s0 + $0x1a8] sm:$0xff]
  %v68 = vld [vmem:[%s0 + $0x1b0] sm:$0xff]
  %v69 = vld [vmem:[%s0 + $0x1b8] sm:$0xff]
  %v70 = vld [vmem:[%s0 + $0x1c0] sm:$0xff]
  %v71 = vld [vmem:[%s0 + $0x1c8] sm:$0xff]
  %v72 = vld [vmem:[%s0 + $0x1d0] sm:$0xff]
  %v73 = vld [vmem:[%s0 + $0x1d8] sm:$0xff]
  %v74 = vld [vmem:[%s0 + $0x1e0] sm:$0xff]
  %v75 = vld [vmem:[%s0 + $0x1e8] sm:$0xff]
  %v76 = vld [vmem:[%s0 + $0x1f0] sm:$0xff]
  %v77 = vld [vmem:[%s0 + $0x1f8] sm:$0xff]
  %v78 = vld [vmem:[%s1] sm:$0x1f]
  %v79 = vld [vmem:[%s2] sm:$0x1]
  %v81 = vlaneseq
  %v82 = vshrl.u32 %v81, 7
  %v83 = vsub.s32 0, %v82
  %v84 = vrot.slane %v79, %v83
  %vm86 = vcmask 39936
  %v88 = vsel %vm86, %v14, 0
  %v91 = vsel %vm86, %v15, 0
  %v94 = vsel %vm86, %v16, 0
  %v97 = vsel %vm86, %v17, 0
  %v100 = vsel %vm86, %v18, 0
  %v103 = vsel %vm86, %v19, 0
  %v106 = vsel %vm86, %v20, 0
  %v109 = vsel %vm86, %v21, 0
  %v112 = vsel %vm86, %v22, 0
  %v115 = vsel %vm86, %v23, 0
  %v118 = vsel %vm86, %v24, 0
  %v121 = vsel %vm86, %v25, 0
  %v124 = vsel %vm86, %v26, 0
  %v127 = vsel %vm86, %v27, 0
  %v130 = vsel %vm86, %v28, 0
  %v133 = vsel %vm86, %v29, 0
  %v136 = vsel %vm86, %v30, 0
  %v139 = vsel %vm86, %v31, 0
  %v142 = vsel %vm86, %v32, 0
  %v145 = vsel %vm86, %v33, 0
  %v148 = vsel %vm86, %v34, 0
  %v151 = vsel %vm86, %v35, 0
  %v154 = vsel %vm86, %v36, 0
  %v157 = vsel %vm86, %v37, 0
  %v160 = vsel %vm86, %v38, 0
  %v163 = vsel %vm86, %v39, 0
  %v166 = vsel %vm86, %v40, 0
  %v169 = vsel %vm86, %v41, 0
  %v172 = vsel %vm86, %v42, 0
  %v175 = vsel %vm86, %v43, 0
  %v178 = vsel %vm86, %v44, 0
  %v181 = vsel %vm86, %v45, 0
  %v184 = vsel %vm86, %v46, 0
  %v187 = vsel %vm86, %v47, 0
  %v190 = vsel %vm86, %v48, 0
  %v193 = vsel %vm86, %v49, 0
  %v196 = vsel %vm86, %v50, 0
  %v199 = vsel %vm86, %v51, 0
  %v202 = vsel %vm86, %v52, 0
  %v205 = vsel %vm86, %v53, 0
  %v208 = vsel %vm86, %v54, 0
  %v211 = vsel %vm86, %v55, 0
  %v214 = vsel %vm86, %v56, 0
  %v217 = vsel %vm86, %v57, 0
  %v220 = vsel %vm86, %v58, 0
  %v223 = vsel %vm86, %v59, 0
  %v226 = vsel %vm86, %v60, 0
  %v229 = vsel %vm86, %v61, 0
  %v232 = vsel %vm86, %v62, 0
  %v235 = vsel %vm86, %v63, 0
  %v238 = vsel %vm86, %v64, 0
  %v241 = vsel %vm86, %v65, 0
  %v244 = vsel %vm86, %v66, 0
  %v247 = vsel %vm86, %v67, 0
  %v250 = vsel %vm86, %v68, 0
  %v253 = vsel %vm86, %v69, 0
  %v256 = vsel %vm86, %v70, 0
  %v259 = vsel %vm86, %v71, 0
  %v262 = vsel %vm86, %v72, 0
  %v265 = vsel %vm86, %v73, 0
  %v268 = vsel %vm86, %v74, 0
  %v271 = vsel %vm86, %v75, 0
  %v274 = vsel %vm86, %v76, 0
  %v277 = vsel %vm86, %v77, 0
  %vm279 = vcmask 1044480
  %v281 = vsel %vm279, %v78, 0
  %283 = vmatprep.subr.mxu0 0.0
  %284 = vmatpush1.msra.mxu0 %v281
  %285 = vmatprep.subr.mxu0 0.0
  %286 = vmatpush1.msra.mxu0 0.0
  %287 = vmatprep.subr.mxu0 0.0
  %288 = vmatpush1.msra.mxu0 0.0
  %289 = vmatprep.subr.mxu0 0.0
  %290 = vmatpush1.msra.mxu0 0.0
  %291 = vmatprep.subr.mxu0 0.0
  %292 = vmatpush1.msra.mxu0 0.0
  %293 = vmatprep.subr.mxu0 0.0
  %294 = vmatpush1.msra.mxu0 0.0
  %295 = vmatprep.subr.mxu0 0.0
  %296 = vmatpush1.msra.mxu0 0.0
  %297 = vmatprep.subr.mxu0 0.0
  %298 = vmatpush1.msra.mxu0 0.0
  %299 = vmatprep.subr.mxu0 0.0
  %300 = vmatpush1.msra.mxu0 0.0
  %301 = vmatprep.subr.mxu0 0.0
  %302 = vmatpush1.msra.mxu0 0.0
  %303 = vmatprep.subr.mxu0 0.0
  %304 = vmatpush1.msra.mxu0 0.0
  %305 = vmatprep.subr.mxu0 0.0
  %306 = vmatpush1.msra.mxu0 0.0
  %307 = vmatprep.subr.mxu0 0.0
  %308 = vmatpush1.msra.mxu0 0.0
  %309 = vmatprep.subr.mxu0 0.0
  %310 = vmatpush1.msra.mxu0 0.0
  %311 = vmatprep.subr.mxu0 0.0
  %312 = vmatpush1.msra.mxu0 0.0
  %313 = vmatprep.subr.mxu0 0.0
  %314 = vmatpush1.msra.mxu0 0.0
  %315 = vmatprep.subr.mxu0 0.0
  %316 = vmatpush1.msra.mxu0 0.0
  %317 = vmatprep.subr.mxu0 0.0
  %318 = vmatpush1.msra.mxu0 0.0
  %319 = vmatprep.subr.mxu0 0.0
  %320 = vmatpush1.msra.mxu0 0.0
  %321 = vmatprep.subr.mxu0 0.0
  %322 = vmatpush1.msra.mxu0 0.0
  %323 = vmatprep.subr.mxu0 0.0
  %324 = vmatpush1.msra.mxu0 0.0
  %325 = vmatprep.subr.mxu0 0.0
  %326 = vmatpush1.msra.mxu0 0.0
  %327 = vmatprep.subr.mxu0 0.0
  %328 = vmatpush1.msra.mxu0 0.0
  %329 = vmatprep.subr.mxu0 0.0
  %330 = vmatpush1.msra.mxu0 0.0
  %331 = vmatprep.subr.mxu0 0.0
  %332 = vmatpush1.msra.mxu0 0.0
  %333 = vmatprep.subr.mxu0 0.0
  %334 = vmatpush1.msra.mxu0 0.0
  %335 = vmatprep.subr.mxu0 0.0
  %336 = vmatpush1.msra.mxu0 0.0
  %337 = vmatprep.subr.mxu0 0.0
  %338 = vmatpush1.msra.mxu0 0.0
  %339 = vmatprep.subr.mxu0 0.0
  %340 = vmatpush1.msra.mxu0 0.0
  %341 = vmatprep.subr.mxu0 0.0
  %342 = vmatpush1.msra.mxu0 0.0
  %343 = vmatprep.subr.mxu0 0.0
  %344 = vmatpush1.msra.mxu0 0.0
  %345 = vmatprep.subr.mxu0 0.0
  %346 = vmatpush1.msra.mxu0 0.0
  %347 = vmatprep.mubr.f32.mxu0 0.0
  %348 = vmatmul.mubr.f32.gmra.mrb[0].mxu0 %v88
  %v349 = vpop.f32.mrb[0].mxu0
  %v350 = vadd.f32 %v84, %v349
  %v351 = vpop.f32.mrb[0].mxu0
  %352 = vmatprep.mubr.f32.mxu0 0.0
  %353 = vmatmul.mubr.f32.gmra.mrb[0].mxu0 %v91
  %v354 = vpop.f32.mrb[0].mxu0
  %v355 = vadd.f32 %v84, %v354
  %v356 = vpop.f32.mrb[0].mxu0
  %357 = vmatprep.mubr.f32.mxu0 0.0
  %358 = vmatmul.mubr.f32.gmra.mrb[0].mxu0 %v94
  %v359 = vpop.f32.mrb[0].mxu0
  %v360 = vadd.f32 %v84, %v359
  %v361 = vpop.f32.mrb[0].mxu0
  %362 = vmatprep.mubr.f32.mxu0 0.0
  %363 = vmatmul.mubr.f32.gmra.mrb[0].mxu0 %v97
  %v364 = vpop.f32.mrb[0].mxu0
  %v365 = vadd.f32 %v84, %v364
  %v366 = vpop.f32.mrb[0].mxu0
  %367 = vmatprep.mubr.f32.mxu0 0.0
  %368 = vmatmul.mubr.f32.gmra.mrb[0].mxu0 %v100
  %v369 = vpop.f32.mrb[0].mxu0
  %v370 = vadd.f32 %v84, %v369
  %v371 = vpop.f32.mrb[0].mxu0
  %372 = vmatprep.mubr.f32.mxu0 0.0
  %373 = vmatmul.mubr.f32.gmra.mrb[0].mxu0 %v103
  %v374 = vpop.f32.mrb[0].mxu0
  %v375 = vadd.f32 %v84, %v374
  %v376 = vpop.f32.mrb[0].mxu0
  %377 = vmatprep.mubr.f32.mxu0 0.0
  %378 = vmatmul.mubr.f32.gmra.mrb[0].mxu0 %v106
  %v379 = vpop.f32.mrb[0].mxu0
  %v380 = vadd.f32 %v84, %v379
  %v381 = vpop.f32.mrb[0].mxu0
  %382 = vmatprep.mubr.f32.mxu0 0.0
  %383 = vmatmul.mubr.f32.gmra.mrb[0].mxu0 %v109
  %v384 = vpop.f32.mrb[0].mxu0
  %v385 = vadd.f32 %v84, %v384
  %v386 = vpop.f32.mrb[0].mxu0
  %387 = vmatprep.mubr.f32.mxu0 0.0
  %388 = vmatmul.mubr.f32.gmra.mrb[0].mxu0 %v112
  %v389 = vpop.f32.mrb[0].mxu0
  %v390 = vadd.f32 %v84, %v389
  %v391 = vpop.f32.mrb[0].mxu0
  %392 = vmatprep.mubr.f32.mxu0 0.0
  %393 = vmatmul.mubr.f32.gmra.mrb[0].mxu0 %v115
  %v394 = vpop.f32.mrb[0].mxu0
  %v395 = vadd.f32 %v84, %v394
  %v396 = vpop.f32.mrb[0].mxu0
  %397 = vmatprep.mubr.f32.mxu0 0.0
  %398 = vmatmul.mubr.f32.gmra.mrb[0].mxu0 %v118
  %v399 = vpop.f32.mrb[0].mxu0
  %v400 = vadd.f32 %v84, %v399
  %v401 = vpop.f32.mrb[0].mxu0
  %402 = vmatprep.mubr.f32.mxu0 0.0
  %403 = vmatmul.mubr.f32.gmra.mrb[0].mxu0 %v121
  %v404 = vpop.f32.mrb[0].mxu0
  %v405 = vadd.f32 %v84, %v404
  %v406 = vpop.f32.mrb[0].mxu0
  %407 = vmatprep.mubr.f32.mxu0 0.0
  %408 = vmatmul.mubr.f32.gmra.mrb[0].mxu0 %v124
  %v409 = vpop.f32.mrb[0].mxu0
  %v410 = vadd.f32 %v84, %v409
  %v411 = vpop.f32.mrb[0].mxu0
  %412 = vmatprep.mubr.f32.mxu0 0.0
  %413 = vmatmul.mubr.f32.gmra.mrb[0].mxu0 %v127
  %v414 = vpop.f32.mrb[0].mxu0
  %v415 = vadd.f32 %v84, %v414
  %v416 = vpop.f32.mrb[0].mxu0
  %417 = vmatprep.mubr.f32.mxu0 0.0
  %418 = vmatmul.mubr.f32.gmra.mrb[0].mxu0 %v130
  %v419 = vpop.f32.mrb[0].mxu0
  %v420 = vadd.f32 %v84, %v419
  %v421 = vpop.f32.mrb[0].mxu0
  %422 = vmatprep.mubr.f32.mxu0 0.0
  %423 = vmatmul.mubr.f32.gmra.mrb[0].mxu0 %v133
  %v424 = vpop.f32.mrb[0].mxu0
  %v425 = vadd.f32 %v84, %v424
  %v426 = vpop.f32.mrb[0].mxu0
  %427 = vmatprep.mubr.f32.mxu0 0.0
  %428 = vmatmul.mubr.f32.gmra.mrb[0].mxu0 %v136
  %v429 = vpop.f32.mrb[0].mxu0
  %v430 = vadd.f32 %v84, %v429
  %v431 = vpop.f32.mrb[0].mxu0
  %432 = vmatprep.mubr.f32.mxu0 0.0
  %433 = vmatmul.mubr.f32.gmra.mrb[0].mxu0 %v139
  %v434 = vpop.f32.mrb[0].mxu0
  %v435 = vadd.f32 %v84, %v434
  %v436 = vpop.f32.mrb[0].mxu0
  %437 = vmatprep.mubr.f32.mxu0 0.0
  %438 = vmatmul.mubr.f32.gmra.mrb[0].mxu0 %v142
  %v439 = vpop.f32.mrb[0].mxu0
  %v440 = vadd.f32 %v84, %v439
  %v441 = vpop.f32.mrb[0].mxu0
  %442 = vmatprep.mubr.f32.mxu0 0.0
  %443 = vmatmul.mubr.f32.gmra.mrb[0].mxu0 %v145
  %v444 = vpop.f32.mrb[0].mxu0
  %v445 = vadd.f32 %v84, %v444
  %v446 = vpop.f32.mrb[0].mxu0
  %447 = vmatprep.mubr.f32.mxu0 0.0
  %448 = vmatmul.mubr.f32.gmra.mrb[0].mxu0 %v148
  %v449 = vpop.f32.mrb[0].mxu0
  %v450 = vadd.f32 %v84, %v449
  %v451 = vpop.f32.mrb[0].mxu0
  %452 = vmatprep.mubr.f32.mxu0 0.0
  %453 = vmatmul.mubr.f32.gmra.mrb[0].mxu0 %v151
  %v454 = vpop.f32.mrb[0].mxu0
  %v455 = vadd.f32 %v84, %v454
  %v456 = vpop.f32.mrb[0].mxu0
  %457 = vmatprep.mubr.f32.mxu0 0.0
  %458 = vmatmul.mubr.f32.gmra.mrb[0].mxu0 %v154
  %v459 = vpop.f32.mrb[0].mxu0
  %v460 = vadd.f32 %v84, %v459
  %v461 = vpop.f32.mrb[0].mxu0
  %462 = vmatprep.mubr.f32.mxu0 0.0
  %463 = vmatmul.mubr.f32.gmra.mrb[0].mxu0 %v157
  %v464 = vpop.f32.mrb[0].mxu0
  %v465 = vadd.f32 %v84, %v464
  %v466 = vpop.f32.mrb[0].mxu0
  %467 = vmatprep.mubr.f32.mxu0 0.0
  %468 = vmatmul.mubr.f32.gmra.mrb[0].mxu0 %v160
  %v469 = vpop.f32.mrb[0].mxu0
  %v470 = vadd.f32 %v84, %v469
  %v471 = vpop.f32.mrb[0].mxu0
  %472 = vmatprep.mubr.f32.mxu0 0.0
  %473 = vmatmul.mubr.f32.gmra.mrb[0].mxu0 %v163
  %v474 = vpop.f32.mrb[0].mxu0
  %v475 = vadd.f32 %v84, %v474
  %v476 = vpop.f32.mrb[0].mxu0
  %477 = vmatprep.mubr.f32.mxu0 0.0
  %478 = vmatmul.mubr.f32.gmra.mrb[0].mxu0 %v166
  %v479 = vpop.f32.mrb[0].mxu0
  %v480 = vadd.f32 %v84, %v479
  %v481 = vpop.f32.mrb[0].mxu0
  %482 = vmatprep.mubr.f32.mxu0 0.0
  %483 = vmatmul.mubr.f32.gmra.mrb[0].mxu0 %v169
  %v484 = vpop.f32.mrb[0].mxu0
  %v485 = vadd.f32 %v84, %v484
  %v486 = vpop.f32.mrb[0].mxu0
  %487 = vmatprep.mubr.f32.mxu0 0.0
  %488 = vmatmul.mubr.f32.gmra.mrb[0].mxu0 %v172
  %v489 = vpop.f32.mrb[0].mxu0
  %v490 = vadd.f32 %v84, %v489
  %v491 = vpop.f32.mrb[0].mxu0
  %492 = vmatprep.mubr.f32.mxu0 0.0
  %493 = vmatmul.mubr.f32.gmra.mrb[0].mxu0 %v175
  %v494 = vpop.f32.mrb[0].mxu0
  %v495 = vadd.f32 %v84, %v494
  %v496 = vpop.f32.mrb[0].mxu0
  %497 = vmatprep.mubr.f32.mxu0 0.0
  %498 = vmatmul.mubr.f32.gmra.mrb[0].mxu0 %v178
  %v499 = vpop.f32.mrb[0].mxu0
  %v500 = vadd.f32 %v84, %v499
  %v501 = vpop.f32.mrb[0].mxu0
  %502 = vmatprep.mubr.f32.mxu0 0.0
  %503 = vmatmul.mubr.f32.gmra.mrb[0].mxu0 %v181
  %v504 = vpop.f32.mrb[0].mxu0
  %v505 = vadd.f32 %v84, %v504
  %v506 = vpop.f32.mrb[0].mxu0
  %507 = vmatprep.mubr.f32.mxu0 0.0
  %508 = vmatmul.mubr.f32.gmra.mrb[0].mxu0 %v184
  %v509 = vpop.f32.mrb[0].mxu0
  %v510 = vadd.f32 %v84, %v509
  %v511 = vpop.f32.mrb[0].mxu0
  %512 = vmatprep.mubr.f32.mxu0 0.0
  %513 = vmatmul.mubr.f32.gmra.mrb[0].mxu0 %v187
  %v514 = vpop.f32.mrb[0].mxu0
  %v515 = vadd.f32 %v84, %v514
  %v516 = vpop.f32.mrb[0].mxu0
  %517 = vmatprep.mubr.f32.mxu0 0.0
  %518 = vmatmul.mubr.f32.gmra.mrb[0].mxu0 %v190
  %v519 = vpop.f32.mrb[0].mxu0
  %v520 = vadd.f32 %v84, %v519
  %v521 = vpop.f32.mrb[0].mxu0
  %522 = vmatprep.mubr.f32.mxu0 0.0
  %523 = vmatmul.mubr.f32.gmra.mrb[0].mxu0 %v193
  %v524 = vpop.f32.mrb[0].mxu0
  %v525 = vadd.f32 %v84, %v524
  %v526 = vpop.f32.mrb[0].mxu0
  %527 = vmatprep.mubr.f32.mxu0 0.0
  %528 = vmatmul.mubr.f32.gmra.mrb[0].mxu0 %v196
  %v529 = vpop.f32.mrb[0].mxu0
  %v530 = vadd.f32 %v84, %v529
  %v531 = vpop.f32.mrb[0].mxu0
  %532 = vmatprep.mubr.f32.mxu0 0.0
  %533 = vmatmul.mubr.f32.gmra.mrb[0].mxu0 %v199
  %v534 = vpop.f32.mrb[0].mxu0
  %v535 = vadd.f32 %v84, %v534
  %v536 = vpop.f32.mrb[0].mxu0
  %537 = vmatprep.mubr.f32.mxu0 0.0
  %538 = vmatmul.mubr.f32.gmra.mrb[0].mxu0 %v202
  %v539 = vpop.f32.mrb[0].mxu0
  %v540 = vadd.f32 %v84, %v539
  %v541 = vpop.f32.mrb[0].mxu0
  %542 = vmatprep.mubr.f32.mxu0 0.0
  %543 = vmatmul.mubr.f32.gmra.mrb[0].mxu0 %v205
  %v544 = vpop.f32.mrb[0].mxu0
  %v545 = vadd.f32 %v84, %v544
  %v546 = vpop.f32.mrb[0].mxu0
  %547 = vmatprep.mubr.f32.mxu0 0.0
  %548 = vmatmul.mubr.f32.gmra.mrb[0].mxu0 %v208
  %v549 = vpop.f32.mrb[0].mxu0
  %v550 = vadd.f32 %v84, %v549
  %v551 = vpop.f32.mrb[0].mxu0
  %552 = vmatprep.mubr.f32.mxu0 0.0
  %553 = vmatmul.mubr.f32.gmra.mrb[0].mxu0 %v211
  %v554 = vpop.f32.mrb[0].mxu0
  %v555 = vadd.f32 %v84, %v554
  %v556 = vpop.f32.mrb[0].mxu0
  %557 = vmatprep.mubr.f32.mxu0 0.0
  %558 = vmatmul.mubr.f32.gmra.mrb[0].mxu0 %v214
  %v559 = vpop.f32.mrb[0].mxu0
  %v560 = vadd.f32 %v84, %v559
  %v561 = vpop.f32.mrb[0].mxu0
  %562 = vmatprep.mubr.f32.mxu0 0.0
  %563 = vmatmul.mubr.f32.gmra.mrb[0].mxu0 %v217
  %v564 = vpop.f32.mrb[0].mxu0
  %v565 = vadd.f32 %v84, %v564
  %v566 = vpop.f32.mrb[0].mxu0
  %567 = vmatprep.mubr.f32.mxu0 0.0
  %568 = vmatmul.mubr.f32.gmra.mrb[0].mxu0 %v220
  %v569 = vpop.f32.mrb[0].mxu0
  %v570 = vadd.f32 %v84, %v569
  %v571 = vpop.f32.mrb[0].mxu0
  %572 = vmatprep.mubr.f32.mxu0 0.0
  %573 = vmatmul.mubr.f32.gmra.mrb[0].mxu0 %v223
  %v574 = vpop.f32.mrb[0].mxu0
  %v575 = vadd.f32 %v84, %v574
  %v576 = vpop.f32.mrb[0].mxu0
  %577 = vmatprep.mubr.f32.mxu0 0.0
  %578 = vmatmul.mubr.f32.gmra.mrb[0].mxu0 %v226
  %v579 = vpop.f32.mrb[0].mxu0
  %v580 = vadd.f32 %v84, %v579
  %v581 = vpop.f32.mrb[0].mxu0
  %582 = vmatprep.mubr.f32.mxu0 0.0
  %583 = vmatmul.mubr.f32.gmra.mrb[0].mxu0 %v229
  %v584 = vpop.f32.mrb[0].mxu0
  %v585 = vadd.f32 %v84, %v584
  %v586 = vpop.f32.mrb[0].mxu0
  %587 = vmatprep.mubr.f32.mxu0 0.0
  %588 = vmatmul.mubr.f32.gmra.mrb[0].mxu0 %v232
  %v589 = vpop.f32.mrb[0].mxu0
  %v590 = vadd.f32 %v84, %v589
  %v591 = vpop.f32.mrb[0].mxu0
  %592 = vmatprep.mubr.f32.mxu0 0.0
  %593 = vmatmul.mubr.f32.gmra.mrb[0].mxu0 %v235
  %v594 = vpop.f32.mrb[0].mxu0
  %v595 = vadd.f32 %v84, %v594
  %v596 = vpop.f32.mrb[0].mxu0
  %597 = vmatprep.mubr.f32.mxu0 0.0
  %598 = vmatmul.mubr.f32.gmra.mrb[0].mxu0 %v238
  %v599 = vpop.f32.mrb[0].mxu0
  %v600 = vadd.f32 %v84, %v599
  %v601 = vpop.f32.mrb[0].mxu0
  %602 = vmatprep.mubr.f32.mxu0 0.0
  %603 = vmatmul.mubr.f32.gmra.mrb[0].mxu0 %v241
  %v604 = vpop.f32.mrb[0].mxu0
  %v605 = vadd.f32 %v84, %v604
  %v606 = vpop.f32.mrb[0].mxu0
  %607 = vmatprep.mubr.f32.mxu0 0.0
  %608 = vmatmul.mubr.f32.gmra.mrb[0].mxu0 %v244
  %v609 = vpop.f32.mrb[0].mxu0
  %v610 = vadd.f32 %v84, %v609
  %v611 = vpop.f32.mrb[0].mxu0
  %612 = vmatprep.mubr.f32.mxu0 0.0
  %613 = vmatmul.mubr.f32.gmra.mrb[0].mxu0 %v247
  %v614 = vpop.f32.mrb[0].mxu0
  %v615 = vadd.f32 %v84, %v614
  %v616 = vpop.f32.mrb[0].mxu0
  %617 = vmatprep.mubr.f32.mxu0 0.0
  %618 = vmatmul.mubr.f32.gmra.mrb[0].mxu0 %v250
  %v619 = vpop.f32.mrb[0].mxu0
  %v620 = vadd.f32 %v84, %v619
  %v621 = vpop.f32.mrb[0].mxu0
  %622 = vmatprep.mubr.f32.mxu0 0.0
  %623 = vmatmul.mubr.f32.gmra.mrb[0].mxu0 %v253
  %v624 = vpop.f32.mrb[0].mxu0
  %v625 = vadd.f32 %v84, %v624
  %v626 = vpop.f32.mrb[0].mxu0
  %627 = vmatprep.mubr.f32.mxu0 0.0
  %628 = vmatmul.mubr.f32.gmra.mrb[0].mxu0 %v256
  %v629 = vpop.f32.mrb[0].mxu0
  %v630 = vadd.f32 %v84, %v629
  %v631 = vpop.f32.mrb[0].mxu0
  %632 = vmatprep.mubr.f32.mxu0 0.0
  %633 = vmatmul.mubr.f32.gmra.mrb[0].mxu0 %v259
  %v634 = vpop.f32.mrb[0].mxu0
  %v635 = vadd.f32 %v84, %v634
  %v636 = vpop.f32.mrb[0].mxu0
  %637 = vmatprep.mubr.f32.mxu0 0.0
  %638 = vmatmul.mubr.f32.gmra.mrb[0].mxu0 %v262
  %v639 = vpop.f32.mrb[0].mxu0
  %v640 = vadd.f32 %v84, %v639
  %v641 = vpop.f32.mrb[0].mxu0
  %642 = vmatprep.mubr.f32.mxu0 0.0
  %643 = vmatmul.mubr.f32.gmra.mrb[0].mxu0 %v265
  %v644 = vpop.f32.mrb[0].mxu0
  %v645 = vadd.f32 %v84, %v644
  %v646 = vpop.f32.mrb[0].mxu0
  %647 = vmatprep.mubr.f32.mxu0 0.0
  %648 = vmatmul.mubr.f32.gmra.mrb[0].mxu0 %v268
  %v649 = vpop.f32.mrb[0].mxu0
  %v650 = vadd.f32 %v84, %v649
  %v651 = vpop.f32.mrb[0].mxu0
  %652 = vmatprep.mubr.f32.mxu0 0.0
  %653 = vmatmul.mubr.f32.gmra.mrb[0].mxu0 %v271
  %v654 = vpop.f32.mrb[0].mxu0
  %v655 = vadd.f32 %v84, %v654
  %v656 = vpop.f32.mrb[0].mxu0
  %657 = vmatprep.mubr.f32.mxu0 0.0
  %658 = vmatmul.mubr.f32.gmra.mrb[0].mxu0 %v274
  %v659 = vpop.f32.mrb[0].mxu0
  %v660 = vadd.f32 %v84, %v659
  %v661 = vpop.f32.mrb[0].mxu0
  %662 = vmatprep.mubr.f32.mxu0 0.0
  %663 = vmatmul.mubr.f32.gmra.mrb[0].mxu0 %v277
  %v664 = vpop.f32.mrb[0].mxu0
  %v665 = vadd.f32 %v84, %v664
  %v666 = vpop.f32.mrb[0].mxu0
  %667 = vdwg.mxu0
  %vm668 = vcmask 244736
  %669 = vst.msk [vmem:[%s3] sm:$0xff] %vm668, %v350
  %670 = vst.msk [vmem:[%s3 + $0x8] sm:$0xff] %vm668, %v355
  %671 = vst.msk [vmem:[%s3 + $0x10] sm:$0xff] %vm668, %v360
  %672 = vst.msk [vmem:[%s3 + $0x18] sm:$0xff] %vm668, %v365
  %673 = vst.msk [vmem:[%s3 + $0x20] sm:$0xff] %vm668, %v370
  %674 = vst.msk [vmem:[%s3 + $0x28] sm:$0xff] %vm668, %v375
  %675 = vst.msk [vmem:[%s3 + $0x30] sm:$0xff] %vm668, %v380
  %676 = vst.msk [vmem:[%s3 + $0x38] sm:$0xff] %vm668, %v385
  %677 = vst.msk [vmem:[%s3 + $0x40] sm:$0xff] %vm668, %v390
  %678 = vst.msk [vmem:[%s3 + $0x48] sm:$0xff] %vm668, %v395
  %679 = vst.msk [vmem:[%s3 + $0x50] sm:$0xff] %vm668, %v400
  %680 = vst.msk [vmem:[%s3 + $0x58] sm:$0xff] %vm668, %v405
  %681 = vst.msk [vmem:[%s3 + $0x60] sm:$0xff] %vm668, %v410
  %682 = vst.msk [vmem:[%s3 + $0x68] sm:$0xff] %vm668, %v415
  %683 = vst.msk [vmem:[%s3 + $0x70] sm:$0xff] %vm668, %v420
  %684 = vst.msk [vmem:[%s3 + $0x78] sm:$0xff] %vm668, %v425
  %685 = vst.msk [vmem:[%s3 + $0x80] sm:$0xff] %vm668, %v430
  %686 = vst.msk [vmem:[%s3 + $0x88] sm:$0xff] %vm668, %v435
  %687 = vst.msk [vmem:[%s3 + $0x90] sm:$0xff] %vm668, %v440
  %688 = vst.msk [vmem:[%s3 + $0x98] sm:$0xff] %vm668, %v445
  %689 = vst.msk [vmem:[%s3 + $0xa0] sm:$0xff] %vm668, %v450
  %690 = vst.msk [vmem:[%s3 + $0xa8] sm:$0xff] %vm668, %v455
  %691 = vst.msk [vmem:[%s3 + $0xb0] sm:$0xff] %vm668, %v460
  %692 = vst.msk [vmem:[%s3 + $0xb8] sm:$0xff] %vm668, %v465
  %693 = vst.msk [vmem:[%s3 + $0xc0] sm:$0xff] %vm668, %v470
  %694 = vst.msk [vmem:[%s3 + $0xc8] sm:$0xff] %vm668, %v475
  %695 = vst.msk [vmem:[%s3 + $0xd0] sm:$0xff] %vm668, %v480
  %696 = vst.msk [vmem:[%s3 + $0xd8] sm:$0xff] %vm668, %v485
  %697 = vst.msk [vmem:[%s3 + $0xe0] sm:$0xff] %vm668, %v490
  %698 = vst.msk [vmem:[%s3 + $0xe8] sm:$0xff] %vm668, %v495
  %699 = vst.msk [vmem:[%s3 + $0xf0] sm:$0xff] %vm668, %v500
  %700 = vst.msk [vmem:[%s3 + $0xf8] sm:$0xff] %vm668, %v505
  %701 = vst.msk [vmem:[%s3 + $0x100] sm:$0xff] %vm668, %v510
  %702 = vst.msk [vmem:[%s3 + $0x108] sm:$0xff] %vm668, %v515
  %703 = vst.msk [vmem:[%s3 + $0x110] sm:$0xff] %vm668, %v520
  %704 = vst.msk [vmem:[%s3 + $0x118] sm:$0xff] %vm668, %v525
  %705 = vst.msk [vmem:[%s3 + $0x120] sm:$0xff] %vm668, %v530
  %706 = vst.msk [vmem:[%s3 + $0x128] sm:$0xff] %vm668, %v535
  %707 = vst.msk [vmem:[%s3 + $0x130] sm:$0xff] %vm668, %v540
  %708 = vst.msk [vmem:[%s3 + $0x138] sm:$0xff] %vm668, %v545
  %709 = vst.msk [vmem:[%s3 + $0x140] sm:$0xff] %vm668, %v550
  %710 = vst.msk [vmem:[%s3 + $0x148] sm:$0xff] %vm668, %v555
  %711 = vst.msk [vmem:[%s3 + $0x150] sm:$0xff] %vm668, %v560
  %712 = vst.msk [vmem:[%s3 + $0x158] sm:$0xff] %vm668, %v565
  %713 = vst.msk [vmem:[%s3 + $0x160] sm:$0xff] %vm668, %v570
  %714 = vst.msk [vmem:[%s3 + $0x168] sm:$0xff] %vm668, %v575
  %715 = vst.msk [vmem:[%s3 + $0x170] sm:$0xff] %vm668, %v580
  %716 = vst.msk [vmem:[%s3 + $0x178] sm:$0xff] %vm668, %v585
  %717 = vst.msk [vmem:[%s3 + $0x180] sm:$0xff] %vm668, %v590
  %718 = vst.msk [vmem:[%s3 + $0x188] sm:$0xff] %vm668, %v595
  %719 = vst.msk [vmem:[%s3 + $0x190] sm:$0xff] %vm668, %v600
  %720 = vst.msk [vmem:[%s3 + $0x198] sm:$0xff] %vm668, %v605
  %721 = vst.msk [vmem:[%s3 + $0x1a0] sm:$0xff] %vm668, %v610
  %722 = vst.msk [vmem:[%s3 + $0x1a8] sm:$0xff] %vm668, %v615
  %723 = vst.msk [vmem:[%s3 + $0x1b0] sm:$0xff] %vm668, %v620
  %724 = vst.msk [vmem:[%s3 + $0x1b8] sm:$0xff] %vm668, %v625
  %725 = vst.msk [vmem:[%s3 + $0x1c0] sm:$0xff] %vm668, %v630
  %726 = vst.msk [vmem:[%s3 + $0x1c8] sm:$0xff] %vm668, %v635
  %727 = vst.msk [vmem:[%s3 + $0x1d0] sm:$0xff] %vm668, %v640
  %728 = vst.msk [vmem:[%s3 + $0x1d8] sm:$0xff] %vm668, %v645
  %729 = vst.msk [vmem:[%s3 + $0x1e0] sm:$0xff] %vm668, %v650
  %730 = vst.msk [vmem:[%s3 + $0x1e8] sm:$0xff] %vm668, %v655
  %731 = vst.msk [vmem:[%s3 + $0x1f0] sm:$0xff] %vm668, %v660
  %732 = vst.msk [vmem:[%s3 + $0x1f8] sm:$0xff] %vm668, %v665
  // Predicated region
  $region14: #{_lambda_.10} parent=0 // pred_check
    _
  $region15: #{_lambda_.10} parent=0 // pred_check_branch
    %734 = sbr.rel (0) target = $region17
  $region16: #{_lambda_.10} parent=0 // pred_region
    _
  $region17: #{_lambda_.10} parent=0 // pred_fallthru
    _
  // Predicated region
  $region18: #{_lambda_.10} parent=0 // pred_check
    _
  $region19: #{_lambda_.10} parent=0 // pred_check_branch
    %736 = sbr.rel (0) target = $region21
  $region20: #{_lambda_.10} parent=0 // pred_region
    _
  $region21: #{_lambda_.10} parent=0 // pred_fallthru
    _

// kernel: _lambda_.11
$region0: #{_lambda_.11}
  #allocation0 [shape = 'u32[]', space=smem, size = 0x4, offset = 0x4, fixed_abs, tag = 'smem constant byte address 0x4 - core index']
  #allocation1 [shape = 'u32[144,128]{1,0:T(1,128)}', space=vmem, size = 0x12000, scoped, tag = 'internal scratch']
  %s0 = inlined_call_operand.vmem [shape: f32[32,2,60], index: 0, kind: input, shape index: {}]
  %s1 = inlined_call_operand.vmem [shape: f32[32,60,60], index: 1, kind: input, shape index: {}]
  %s2 = inlined_call_operand.vmem [shape: f32[32,2,60], index: 2, kind: output, shape index: {}]
  %s3 = sld [smem:[#allocation0]]
  $region18: #{_lambda_.11} parent=0
    _
  %s5 = ssub.s32 1, %s3
  %s6 = scalar_select 0, %s5, %s3
  // Predicated region
  $region2: #{_lambda_.11} parent=0 // pred_check
    _
  $region3: #{_lambda_.11} parent=0 // pred_check_branch
    %8 = sbr.rel (0) target = $region5
  $region4: #{_lambda_.11} parent=0 // pred_region
    _
  $region5: #{_lambda_.11} parent=0 // pred_fallthru
    _
  // Predicated region
  $region6: #{_lambda_.11} parent=0 // pred_check
    _
  $region7: #{_lambda_.11} parent=0 // pred_check_branch
    %10 = sbr.rel (0) target = $region9
  $region8: #{_lambda_.11} parent=0 // pred_region
    _
  $region9: #{_lambda_.11} parent=0 // pred_fallthru
    _
  %v11 = vld [vmem:[%s0] sm:$0x3]
  %v12 = vld [vmem:[%s1] sm:$0xff]
  %v13 = vld [vmem:[%s1 + $0x8] sm:$0xff]
  %v14 = vld [vmem:[%s1 + $0x10] sm:$0xff]
  %v15 = vld [vmem:[%s1 + $0x18] sm:$0xff]
  %v16 = vld [vmem:[%s1 + $0x20] sm:$0xff]
  %v17 = vld [vmem:[%s1 + $0x28] sm:$0xff]
  %v18 = vld [vmem:[%s1 + $0x30] sm:$0xff]
  %v19 = vld [vmem:[%s1 + $0x38] sm:$0xf]
  %vm20 = vcmask 490496
  %v22 = vsel %vm20, %v11, 0
  %vm24 = vcmask 1043456
  %v26 = vsel %vm24, %v19, 0
  %28 = vmatprep.subr.mxu0 0.0
  %29 = vmatpush1.msra.mxu0 %v12
  %30 = vmatprep.subr.mxu0 0.0
  %31 = vmatpush1.msra.mxu0 %v13
  %32 = vmatprep.subr.mxu0 0.0
  %33 = vmatpush1.msra.mxu0 %v14
  %34 = vmatprep.subr.mxu0 0.0
  %35 = vmatpush1.msra.mxu0 %v15
  %36 = vmatprep.subr.mxu0 0.0
  %37 = vmatpush1.msra.mxu0 %v16
  %38 = vmatprep.subr.mxu0 0.0
  %39 = vmatpush1.msra.mxu0 %v17
  %40 = vmatprep.subr.mxu0 0.0
  %41 = vmatpush1.msra.mxu0 %v18
  %42 = vmatprep.subr.mxu0 0.0
  %43 = vmatpush1.msra.mxu0 %v26
  %44 = vmatprep.subr.mxu0 0.0
  %45 = vmatpush1.msra.mxu0 0.0
  %46 = vmatprep.subr.mxu0 0.0
  %47 = vmatpush1.msra.mxu0 0.0
  %48 = vmatprep.subr.mxu0 0.0
  %49 = vmatpush1.msra.mxu0 0.0
  %50 = vmatprep.subr.mxu0 0.0
  %51 = vmatpush1.msra.mxu0 0.0
  %52 = vmatprep.subr.mxu0 0.0
  %53 = vmatpush1.msra.mxu0 0.0
  %54 = vmatprep.subr.mxu0 0.0
  %55 = vmatpush1.msra.mxu0 0.0
  %56 = vmatprep.subr.mxu0 0.0
  %57 = vmatpush1.msra.mxu0 0.0
  %58 = vmatprep.subr.mxu0 0.0
  %59 = vmatpush1.msra.mxu0 0.0
  %60 = vmatprep.subr.mxu0 0.0
  %61 = vmatpush1.msra.mxu0 0.0
  %62 = vmatprep.subr.mxu0 0.0
  %63 = vmatpush1.msra.mxu0 0.0
  %64 = vmatprep.subr.mxu0 0.0
  %65 = vmatpush1.msra.mxu0 0.0
  %66 = vmatprep.subr.mxu0 0.0
  %67 = vmatpush1.msra.mxu0 0.0
  %68 = vmatprep.subr.mxu0 0.0
  %69 = vmatpush1.msra.mxu0 0.0
  %70 = vmatprep.subr.mxu0 0.0
  %71 = vmatpush1.msra.mxu0 0.0
  %72 = vmatprep.subr.mxu0 0.0
  %73 = vmatpush1.msra.mxu0 0.0
  %74 = vmatprep.subr.mxu0 0.0
  %75 = vmatpush1.msra.mxu0 0.0
  %76 = vmatprep.subr.mxu0 0.0
  %77 = vmatpush1.msra.mxu0 0.0
  %78 = vmatprep.subr.mxu0 0.0
  %79 = vmatpush1.msra.mxu0 0.0
  %80 = vmatprep.subr.mxu0 0.0
  %81 = vmatpush1.msra.mxu0 0.0
  %82 = vmatprep.subr.mxu0 0.0
  %83 = vmatpush1.msra.mxu0 0.0
  %84 = vmatprep.subr.mxu0 0.0
  %85 = vmatpush1.msra.mxu0 0.0
  %86 = vmatprep.subr.mxu0 0.0
  %87 = vmatpush1.msra.mxu0 0.0
  %88 = vmatprep.subr.mxu0 0.0
  %89 = vmatpush1.msra.mxu0 0.0
  %90 = vmatprep.subr.mxu0 0.0
  %91 = vmatpush1.msra.mxu0 0.0
  %92 = vmatprep.mubr.f32.mxu0 0.0
  %93 = vmatmul.mubr.f32.gmra.mrb[0].mxu0 %v22
  %v94 = vpop.f32.mrb[0].mxu0
  %v95 = vadd.f32 0.0, %v94
  %v96 = vpop.f32.mrb[0].mxu0
  %97 = vdwg.mxu0
  %vm98 = vcmask 484352
  %99 = vst.msk [vmem:[%s2] sm:$0x3] %vm98, %v95
  %s100 = scalar_lea.vmem %s0, 2
  %v101 = vld [vmem:[%s100] sm:$0x3]
  %s102 = scalar_lea.vmem %s1, 64
  %v103 = vld [vmem:[%s102] sm:$0xff]
  %v104 = vld [vmem:[%s102 + $0x8] sm:$0xff]
  %v105 = vld [vmem:[%s102 + $0x10] sm:$0xff]
  %v106 = vld [vmem:[%s102 + $0x18] sm:$0xff]
  %v107 = vld [vmem:[%s102 + $0x20] sm:$0xff]
  %v108 = vld [vmem:[%s102 + $0x28] sm:$0xff]
  %v109 = vld [vmem:[%s102 + $0x30] sm:$0xff]
  %v110 = vld [vmem:[%s102 + $0x38] sm:$0xf]
  %v112 = vsel %vm20, %v101, 0
  %v115 = vsel %vm24, %v110, 0
  %117 = vmatprep.subr.mxu0 0.0
  %118 = vmatpush1.msra.mxu0 %v103
  %119 = vmatprep.subr.mxu0 0.0
  %120 = vmatpush1.msra.mxu0 %v104
  %121 = vmatprep.subr.mxu0 0.0
  %122 = vmatpush1.msra.mxu0 %v105
  %123 = vmatprep.subr.mxu0 0.0
  %124 = vmatpush1.msra.mxu0 %v106
  %125 = vmatprep.subr.mxu0 0.0
  %126 = vmatpush1.msra.mxu0 %v107
  %127 = vmatprep.subr.mxu0 0.0
  %128 = vmatpush1.msra.mxu0 %v108
  %129 = vmatprep.subr.mxu0 0.0
  %130 = vmatpush1.msra.mxu0 %v109
  %131 = vmatprep.subr.mxu0 0.0
  %132 = vmatpush1.msra.mxu0 %v115
  %133 = vmatprep.subr.mxu0 0.0
  %134 = vmatpush1.msra.mxu0 0.0
  %135 = vmatprep.subr.mxu0 0.0
  %136 = vmatpush1.msra.mxu0 0.0
  %137 = vmatprep.subr.mxu0 0.0
  %138 = vmatpush1.msra.mxu0 0.0
  %139 = vmatprep.subr.mxu0 0.0
  %140 = vmatpush1.msra.mxu0 0.0
  %141 = vmatprep.subr.mxu0 0.0
  %142 = vmatpush1.msra.mxu0 0.0
  %143 = vmatprep.subr.mxu0 0.0
  %144 = vmatpush1.msra.mxu0 0.0
  %145 = vmatprep.subr.mxu0 0.0
  %146 = vmatpush1.msra.mxu0 0.0
  %147 = vmatprep.subr.mxu0 0.0
  %148 = vmatpush1.msra.mxu0 0.0
  %149 = vmatprep.subr.mxu0 0.0
  %150 = vmatpush1.msra.mxu0 0.0
  %151 = vmatprep.subr.mxu0 0.0
  %152 = vmatpush1.msra.mxu0 0.0
  %153 = vmatprep.subr.mxu0 0.0
  %154 = vmatpush1.msra.mxu0 0.0
  %155 = vmatprep.subr.mxu0 0.0
  %156 = vmatpush1.msra.mxu0 0.0
  %157 = vmatprep.subr.mxu0 0.0
  %158 = vmatpush1.msra.mxu0 0.0
  %159 = vmatprep.subr.mxu0 0.0
  %160 = vmatpush1.msra.mxu0 0.0
  %161 = vmatprep.subr.mxu0 0.0
  %162 = vmatpush1.msra.mxu0 0.0
  %163 = vmatprep.subr.mxu0 0.0
  %164 = vmatpush1.msra.mxu0 0.0
  %165 = vmatprep.subr.mxu0 0.0
  %166 = vmatpush1.msra.mxu0 0.0
  %167 = vmatprep.subr.mxu0 0.0
  %168 = vmatpush1.msra.mxu0 0.0
  %169 = vmatprep.subr.mxu0 0.0
  %170 = vmatpush1.msra.mxu0 0.0
  %171 = vmatprep.subr.mxu0 0.0
  %172 = vmatpush1.msra.mxu0 0.0
  %173 = vmatprep.subr.mxu0 0.0
  %174 = vmatpush1.msra.mxu0 0.0
  %175 = vmatprep.subr.mxu0 0.0
  %176 = vmatpush1.msra.mxu0 0.0
  %177 = vmatprep.subr.mxu0 0.0
  %178 = vmatpush1.msra.mxu0 0.0
  %179 = vmatprep.subr.mxu0 0.0
  %180 = vmatpush1.msra.mxu0 0.0
  %181 = vmatprep.mubr.f32.mxu0 0.0
  %182 = vmatmul.mubr.f32.gmra.mrb[0].mxu0 %v112
  %v183 = vpop.f32.mrb[0].mxu0
  %v184 = vadd.f32 0.0, %v183
  %v185 = vpop.f32.mrb[0].mxu0
  %186 = vdwg.mxu0
  %s187 = scalar_lea.vmem %s2, 2
  %188 = vst.msk [vmem:[%s187] sm:$0x3] %vm98, %v184
  %s189 = scalar_lea.vmem %s0, 4
  %v190 = vld [vmem:[%s189] sm:$0x3]
  %s191 = scalar_lea.vmem %s1, 128
  %v192 = vld [vmem:[%s191] sm:$0xff]
  %v193 = vld [vmem:[%s191 + $0x8] sm:$0xff]
  %v194 = vld [vmem:[%s191 + $0x10] sm:$0xff]
  %v195 = vld [vmem:[%s191 + $0x18] sm:$0xff]
  %v196 = vld [vmem:[%s191 + $0x20] sm:$0xff]
  %v197 = vld [vmem:[%s191 + $0x28] sm:$0xff]
  %v198 = vld [vmem:[%s191 + $0x30] sm:$0xff]
  %v199 = vld [vmem:[%s191 + $0x38] sm:$0xf]
  %v201 = vsel %vm20, %v190, 0
  %v204 = vsel %vm24, %v199, 0
  %206 = vmatprep.subr.mxu0 0.0
  %207 = vmatpush1.msra.mxu0 %v192
  %208 = vmatprep.subr.mxu0 0.0
  %209 = vmatpush1.msra.mxu0 %v193
  %210 = vmatprep.subr.mxu0 0.0
  %211 = vmatpush1.msra.mxu0 %v194
  %212 = vmatprep.subr.mxu0 0.0
  %213 = vmatpush1.msra.mxu0 %v195
  %214 = vmatprep.subr.mxu0 0.0
  %215 = vmatpush1.msra.mxu0 %v196
  %216 = vmatprep.subr.mxu0 0.0
  %217 = vmatpush1.msra.mxu0 %v197
  %218 = vmatprep.subr.mxu0 0.0
  %219 = vmatpush1.msra.mxu0 %v198
  %220 = vmatprep.subr.mxu0 0.0
  %221 = vmatpush1.msra.mxu0 %v204
  %222 = vmatprep.subr.mxu0 0.0
  %223 = vmatpush1.msra.mxu0 0.0
  %224 = vmatprep.subr.mxu0 0.0
  %225 = vmatpush1.msra.mxu0 0.0
  %226 = vmatprep.subr.mxu0 0.0
  %227 = vmatpush1.msra.mxu0 0.0
  %228 = vmatprep.subr.mxu0 0.0
  %229 = vmatpush1.msra.mxu0 0.0
  %230 = vmatprep.subr.mxu0 0.0
  %231 = vmatpush1.msra.mxu0 0.0
  %232 = vmatprep.subr.mxu0 0.0
  %233 = vmatpush1.msra.mxu0 0.0
  %234 = vmatprep.subr.mxu0 0.0
  %235 = vmatpush1.msra.mxu0 0.0
  %236 = vmatprep.subr.mxu0 0.0
  %237 = vmatpush1.msra.mxu0 0.0
  %238 = vmatprep.subr.mxu0 0.0
  %239 = vmatpush1.msra.mxu0 0.0
  %240 = vmatprep.subr.mxu0 0.0
  %241 = vmatpush1.msra.mxu0 0.0
  %242 = vmatprep.subr.mxu0 0.0
  %243 = vmatpush1.msra.mxu0 0.0
  %244 = vmatprep.subr.mxu0 0.0
  %245 = vmatpush1.msra.mxu0 0.0
  %246 = vmatprep.subr.mxu0 0.0
  %247 = vmatpush1.msra.mxu0 0.0
  %248 = vmatprep.subr.mxu0 0.0
  %249 = vmatpush1.msra.mxu0 0.0
  %250 = vmatprep.subr.mxu0 0.0
  %251 = vmatpush1.msra.mxu0 0.0
  %252 = vmatprep.subr.mxu0 0.0
  %253 = vmatpush1.msra.mxu0 0.0
  %254 = vmatprep.subr.mxu0 0.0
  %255 = vmatpush1.msra.mxu0 0.0
  %256 = vmatprep.subr.mxu0 0.0
  %257 = vmatpush1.msra.mxu0 0.0
  %258 = vmatprep.subr.mxu0 0.0
  %259 = vmatpush1.msra.mxu0 0.0
  %260 = vmatprep.subr.mxu0 0.0
  %261 = vmatpush1.msra.mxu0 0.0
  %262 = vmatprep.subr.mxu0 0.0
  %263 = vmatpush1.msra.mxu0 0.0
  %264 = vmatprep.subr.mxu0 0.0
  %265 = vmatpush1.msra.mxu0 0.0
  %266 = vmatprep.subr.mxu0 0.0
  %267 = vmatpush1.msra.mxu0 0.0
  %268 = vmatprep.subr.mxu0 0.0
  %269 = vmatpush1.msra.mxu0 0.0
  %270 = vmatprep.mubr.f32.mxu0 0.0
  %271 = vmatmul.mubr.f32.gmra.mrb[0].mxu0 %v201
  %v272 = vpop.f32.mrb[0].mxu0
  %v273 = vadd.f32 0.0, %v272
  %v274 = vpop.f32.mrb[0].mxu0
  %275 = vdwg.mxu0
  %s276 = scalar_lea.vmem %s2, 4
  %277 = vst.msk [vmem:[%s276] sm:$0x3] %vm98, %v273
  %s278 = scalar_lea.vmem %s0, 6
  %v279 = vld [vmem:[%s278] sm:$0x3]
  %s280 = scalar_lea.vmem %s1, 192
  %v281 = vld [vmem:[%s280] sm:$0xff]
  %v282 = vld [vmem:[%s280 + $0x8] sm:$0xff]
  %v283 = vld [vmem:[%s280 + $0x10] sm:$0xff]
  %v284 = vld [vmem:[%s280 + $0x18] sm:$0xff]
  %v285 = vld [vmem:[%s280 + $0x20] sm:$0xff]
  %v286 = vld [vmem:[%s280 + $0x28] sm:$0xff]
  %v287 = vld [vmem:[%s280 + $0x30] sm:$0xff]
  %v288 = vld [vmem:[%s280 + $0x38] sm:$0xf]
  %v290 = vsel %vm20, %v279, 0
  %v293 = vsel %vm24, %v288, 0
  %295 = vmatprep.subr.mxu0 0.0
  %296 = vmatpush1.msra.mxu0 %v281
  %297 = vmatprep.subr.mxu0 0.0
  %298 = vmatpush1.msra.mxu0 %v282
  %299 = vmatprep.subr.mxu0 0.0
  %300 = vmatpush1.msra.mxu0 %v283
  %301 = vmatprep.subr.mxu0 0.0
  %302 = vmatpush1.msra.mxu0 %v284
  %303 = vmatprep.subr.mxu0 0.0
  %304 = vmatpush1.msra.mxu0 %v285
  %305 = vmatprep.subr.mxu0 0.0
  %306 = vmatpush1.msra.mxu0 %v286
  %307 = vmatprep.subr.mxu0 0.0
  %308 = vmatpush1.msra.mxu0 %v287
  %309 = vmatprep.subr.mxu0 0.0
  %310 = vmatpush1.msra.mxu0 %v293
  %311 = vmatprep.subr.mxu0 0.0
  %312 = vmatpush1.msra.mxu0 0.0
  %313 = vmatprep.subr.mxu0 0.0
  %314 = vmatpush1.msra.mxu0 0.0
  %315 = vmatprep.subr.mxu0 0.0
  %316 = vmatpush1.msra.mxu0 0.0
  %317 = vmatprep.subr.mxu0 0.0
  %318 = vmatpush1.msra.mxu0 0.0
  %319 = vmatprep.subr.mxu0 0.0
  %320 = vmatpush1.msra.mxu0 0.0
  %321 = vmatprep.subr.mxu0 0.0
  %322 = vmatpush1.msra.mxu0 0.0
  %323 = vmatprep.subr.mxu0 0.0
  %324 = vmatpush1.msra.mxu0 0.0
  %325 = vmatprep.subr.mxu0 0.0
  %326 = vmatpush1.msra.mxu0 0.0
  %327 = vmatprep.subr.mxu0 0.0
  %328 = vmatpush1.msra.mxu0 0.0
  %329 = vmatprep.subr.mxu0 0.0
  %330 = vmatpush1.msra.mxu0 0.0
  %331 = vmatprep.subr.mxu0 0.0
  %332 = vmatpush1.msra.mxu0 0.0
  %333 = vmatprep.subr.mxu0 0.0
  %334 = vmatpush1.msra.mxu0 0.0
  %335 = vmatprep.subr.mxu0 0.0
  %336 = vmatpush1.msra.mxu0 0.0
  %337 = vmatprep.subr.mxu0 0.0
  %338 = vmatpush1.msra.mxu0 0.0
  %339 = vmatprep.subr.mxu0 0.0
  %340 = vmatpush1.msra.mxu0 0.0
  %341 = vmatprep.subr.mxu0 0.0
  %342 = vmatpush1.msra.mxu0 0.0
  %343 = vmatprep.subr.mxu0 0.0
  %344 = vmatpush1.msra.mxu0 0.0
  %345 = vmatprep.subr.mxu0 0.0
  %346 = vmatpush1.msra.mxu0 0.0
  %347 = vmatprep.subr.mxu0 0.0
  %348 = vmatpush1.msra.mxu0 0.0
  %349 = vmatprep.subr.mxu0 0.0
  %350 = vmatpush1.msra.mxu0 0.0
  %351 = vmatprep.subr.mxu0 0.0
  %352 = vmatpush1.msra.mxu0 0.0
  %353 = vmatprep.subr.mxu0 0.0
  %354 = vmatpush1.msra.mxu0 0.0
  %355 = vmatprep.subr.mxu0 0.0
  %356 = vmatpush1.msra.mxu0 0.0
  %357 = vmatprep.subr.mxu0 0.0
  %358 = vmatpush1.msra.mxu0 0.0
  %359 = vmatprep.mubr.f32.mxu0 0.0
  %360 = vmatmul.mubr.f32.gmra.mrb[0].mxu0 %v290
  %v361 = vpop.f32.mrb[0].mxu0
  %v362 = vadd.f32 0.0, %v361
  %v363 = vpop.f32.mrb[0].mxu0
  %364 = vdwg.mxu0
  %s365 = scalar_lea.vmem %s2, 6
  %366 = vst.msk [vmem:[%s365] sm:$0x3] %vm98, %v362
  %s367 = scalar_lea.vmem %s0, 8
  %v368 = vld [vmem:[%s367] sm:$0x3]
  %s369 = scalar_lea.vmem %s1, 256
  %v370 = vld [vmem:[%s369] sm:$0xff]
  %v371 = vld [vmem:[%s369 + $0x8] sm:$0xff]
  %v372 = vld [vmem:[%s369 + $0x10] sm:$0xff]
  %v373 = vld [vmem:[%s369 + $0x18] sm:$0xff]
  %v374 = vld [vmem:[%s369 + $0x20] sm:$0xff]
  %v375 = vld [vmem:[%s369 + $0x28] sm:$0xff]
  %v376 = vld [vmem:[%s369 + $0x30] sm:$0xff]
  %v377 = vld [vmem:[%s369 + $0x38] sm:$0xf]
  %v379 = vsel %vm20, %v368, 0
  %v382 = vsel %vm24, %v377, 0
  %384 = vmatprep.subr.mxu0 0.0
  %385 = vmatpush1.msra.mxu0 %v370
  %386 = vmatprep.subr.mxu0 0.0
  %387 = vmatpush1.msra.mxu0 %v371
  %388 = vmatprep.subr.mxu0 0.0
  %389 = vmatpush1.msra.mxu0 %v372
  %390 = vmatprep.subr.mxu0 0.0
  %391 = vmatpush1.msra.mxu0 %v373
  %392 = vmatprep.subr.mxu0 0.0
  %393 = vmatpush1.msra.mxu0 %v374
  %394 = vmatprep.subr.mxu0 0.0
  %395 = vmatpush1.msra.mxu0 %v375
  %396 = vmatprep.subr.mxu0 0.0
  %397 = vmatpush1.msra.mxu0 %v376
  %398 = vmatprep.subr.mxu0 0.0
  %399 = vmatpush1.msra.mxu0 %v382
  %400 = vmatprep.subr.mxu0 0.0
  %401 = vmatpush1.msra.mxu0 0.0
  %402 = vmatprep.subr.mxu0 0.0
  %403 = vmatpush1.msra.mxu0 0.0
  %404 = vmatprep.subr.mxu0 0.0
  %405 = vmatpush1.msra.mxu0 0.0
  %406 = vmatprep.subr.mxu0 0.0
  %407 = vmatpush1.msra.mxu0 0.0
  %408 = vmatprep.subr.mxu0 0.0
  %409 = vmatpush1.msra.mxu0 0.0
  %410 = vmatprep.subr.mxu0 0.0
  %411 = vmatpush1.msra.mxu0 0.0
  %412 = vmatprep.subr.mxu0 0.0
  %413 = vmatpush1.msra.mxu0 0.0
  %414 = vmatprep.subr.mxu0 0.0
  %415 = vmatpush1.msra.mxu0 0.0
  %416 = vmatprep.subr.mxu0 0.0
  %417 = vmatpush1.msra.mxu0 0.0
  %418 = vmatprep.subr.mxu0 0.0
  %419 = vmatpush1.msra.mxu0 0.0
  %420 = vmatprep.subr.mxu0 0.0
  %421 = vmatpush1.msra.mxu0 0.0
  %422 = vmatprep.subr.mxu0 0.0
  %423 = vmatpush1.msra.mxu0 0.0
  %424 = vmatprep.subr.mxu0 0.0
  %425 = vmatpush1.msra.mxu0 0.0
  %426 = vmatprep.subr.mxu0 0.0
  %427 = vmatpush1.msra.mxu0 0.0
  %428 = vmatprep.subr.mxu0 0.0
  %429 = vmatpush1.msra.mxu0 0.0
  %430 = vmatprep.subr.mxu0 0.0
  %431 = vmatpush1.msra.mxu0 0.0
  %432 = vmatprep.subr.mxu0 0.0
  %433 = vmatpush1.msra.mxu0 0.0
  %434 = vmatprep.subr.mxu0 0.0
  %435 = vmatpush1.msra.mxu0 0.0
  %436 = vmatprep.subr.mxu0 0.0
  %437 = vmatpush1.msra.mxu0 0.0
  %438 = vmatprep.subr.mxu0 0.0
  %439 = vmatpush1.msra.mxu0 0.0
  %440 = vmatprep.subr.mxu0 0.0
  %441 = vmatpush1.msra.mxu0 0.0
  %442 = vmatprep.subr.mxu0 0.0
  %443 = vmatpush1.msra.mxu0 0.0
  %444 = vmatprep.subr.mxu0 0.0
  %445 = vmatpush1.msra.mxu0 0.0
  %446 = vmatprep.subr.mxu0 0.0
  %447 = vmatpush1.msra.mxu0 0.0
  %448 = vmatprep.mubr.f32.mxu0 0.0
  %449 = vmatmul.mubr.f32.gmra.mrb[0].mxu0 %v379
  %v450 = vpop.f32.mrb[0].mxu0
  %v451 = vadd.f32 0.0, %v450
  %v452 = vpop.f32.mrb[0].mxu0
  %453 = vdwg.mxu0
  %s454 = scalar_lea.vmem %s2, 8
  %455 = vst.msk [vmem:[%s454] sm:$0x3] %vm98, %v451
  %s456 = scalar_lea.vmem %s0, 10
  %v457 = vld [vmem:[%s456] sm:$0x3]
  %s458 = scalar_lea.vmem %s1, 320
  %v459 = vld [vmem:[%s458] sm:$0xff]
  %v460 = vld [vmem:[%s458 + $0x8] sm:$0xff]
  %v461 = vld [vmem:[%s458 + $0x10] sm:$0xff]
  %v462 = vld [vmem:[%s458 + $0x18] sm:$0xff]
  %v463 = vld [vmem:[%s458 + $0x20] sm:$0xff]
  %v464 = vld [vmem:[%s458 + $0x28] sm:$0xff]
  %v465 = vld [vmem:[%s458 + $0x30] sm:$0xff]
  %v466 = vld [vmem:[%s458 + $0x38] sm:$0xf]
  %v468 = vsel %vm20, %v457, 0
  %v471 = vsel %vm24, %v466, 0
  %473 = vmatprep.subr.mxu0 0.0
  %474 = vmatpush1.msra.mxu0 %v459
  %475 = vmatprep.subr.mxu0 0.0
  %476 = vmatpush1.msra.mxu0 %v460
  %477 = vmatprep.subr.mxu0 0.0
  %478 = vmatpush1.msra.mxu0 %v461
  %479 = vmatprep.subr.mxu0 0.0
  %480 = vmatpush1.msra.mxu0 %v462
  %481 = vmatprep.subr.mxu0 0.0
  %482 = vmatpush1.msra.mxu0 %v463
  %483 = vmatprep.subr.mxu0 0.0
  %484 = vmatpush1.msra.mxu0 %v464
  %485 = vmatprep.subr.mxu0 0.0
  %486 = vmatpush1.msra.mxu0 %v465
  %487 = vmatprep.subr.mxu0 0.0
  %488 = vmatpush1.msra.mxu0 %v471
  %489 = vmatprep.subr.mxu0 0.0
  %490 = vmatpush1.msra.mxu0 0.0
  %491 = vmatprep.subr.mxu0 0.0
  %492 = vmatpush1.msra.mxu0 0.0
  %493 = vmatprep.subr.mxu0 0.0
  %494 = vmatpush1.msra.mxu0 0.0
  %495 = vmatprep.subr.mxu0 0.0
  %496 = vmatpush1.msra.mxu0 0.0
  %497 = vmatprep.subr.mxu0 0.0
  %498 = vmatpush1.msra.mxu0 0.0
  %499 = vmatprep.subr.mxu0 0.0
  %500 = vmatpush1.msra.mxu0 0.0
  %501 = vmatprep.subr.mxu0 0.0
  %502 = vmatpush1.msra.mxu0 0.0
  %503 = vmatprep.subr.mxu0 0.0
  %504 = vmatpush1.msra.mxu0 0.0
  %505 = vmatprep.subr.mxu0 0.0
  %506 = vmatpush1.msra.mxu0 0.0
  %507 = vmatprep.subr.mxu0 0.0
  %508 = vmatpush1.msra.mxu0 0.0
  %509 = vmatprep.subr.mxu0 0.0
  %510 = vmatpush1.msra.mxu0 0.0
  %511 = vmatprep.subr.mxu0 0.0
  %512 = vmatpush1.msra.mxu0 0.0
  %513 = vmatprep.subr.mxu0 0.0
  %514 = vmatpush1.msra.mxu0 0.0
  %515 = vmatprep.subr.mxu0 0.0
  %516 = vmatpush1.msra.mxu0 0.0
  %517 = vmatprep.subr.mxu0 0.0
  %518 = vmatpush1.msra.mxu0 0.0
  %519 = vmatprep.subr.mxu0 0.0
  %520 = vmatpush1.msra.mxu0 0.0
  %521 = vmatprep.subr.mxu0 0.0
  %522 = vmatpush1.msra.mxu0 0.0
  %523 = vmatprep.subr.mxu0 0.0
  %524 = vmatpush1.msra.mxu0 0.0
  %525 = vmatprep.subr.mxu0 0.0
  %526 = vmatpush1.msra.mxu0 0.0
  %527 = vmatprep.subr.mxu0 0.0
  %528 = vmatpush1.msra.mxu0 0.0
  %529 = vmatprep.subr.mxu0 0.0
  %530 = vmatpush1.msra.mxu0 0.0
  %531 = vmatprep.subr.mxu0 0.0
  %532 = vmatpush1.msra.mxu0 0.0
  %533 = vmatprep.subr.mxu0 0.0
  %534 = vmatpush1.msra.mxu0 0.0
  %535 = vmatprep.subr.mxu0 0.0
  %536 = vmatpush1.msra.mxu0 0.0
  %537 = vmatprep.mubr.f32.mxu0 0.0
  %538 = vmatmul.mubr.f32.gmra.mrb[0].mxu0 %v468
  %v539 = vpop.f32.mrb[0].mxu0
  %v540 = vadd.f32 0.0, %v539
  %v541 = vpop.f32.mrb[0].mxu0
  %542 = vdwg.mxu0
  %s543 = scalar_lea.vmem %s2, 10
  %544 = vst.msk [vmem:[%s543] sm:$0x3] %vm98, %v540
  %s545 = scalar_lea.vmem %s0, 12
  %v546 = vld [vmem:[%s545] sm:$0x3]
  %s547 = scalar_lea.vmem %s1, 384
  %v548 = vld [vmem:[%s547] sm:$0xff]
  %v549 = vld [vmem:[%s547 + $0x8] sm:$0xff]
  %v550 = vld [vmem:[%s547 + $0x10] sm:$0xff]
  %v551 = vld [vmem:[%s547 + $0x18] sm:$0xff]
  %v552 = vld [vmem:[%s547 + $0x20] sm:$0xff]
  %v553 = vld [vmem:[%s547 + $0x28] sm:$0xff]
  %v554 = vld [vmem:[%s547 + $0x30] sm:$0xff]
  %v555 = vld [vmem:[%s547 + $0x38] sm:$0xf]
  %v557 = vsel %vm20, %v546, 0
  %v560 = vsel %vm24, %v555, 0
  %562 = vmatprep.subr.mxu0 0.0
  %563 = vmatpush1.msra.mxu0 %v548
  %564 = vmatprep.subr.mxu0 0.0
  %565 = vmatpush1.msra.mxu0 %v549
  %566 = vmatprep.subr.mxu0 0.0
  %567 = vmatpush1.msra.mxu0 %v550
  %568 = vmatprep.subr.mxu0 0.0
  %569 = vmatpush1.msra.mxu0 %v551
  %570 = vmatprep.subr.mxu0 0.0
  %571 = vmatpush1.msra.mxu0 %v552
  %572 = vmatprep.subr.mxu0 0.0
  %573 = vmatpush1.msra.mxu0 %v553
  %574 = vmatprep.subr.mxu0 0.0
  %575 = vmatpush1.msra.mxu0 %v554
  %576 = vmatprep.subr.mxu0 0.0
  %577 = vmatpush1.msra.mxu0 %v560
  %578 = vmatprep.subr.mxu0 0.0
  %579 = vmatpush1.msra.mxu0 0.0
  %580 = vmatprep.subr.mxu0 0.0
  %581 = vmatpush1.msra.mxu0 0.0
  %582 = vmatprep.subr.mxu0 0.0
  %583 = vmatpush1.msra.mxu0 0.0
  %584 = vmatprep.subr.mxu0 0.0
  %585 = vmatpush1.msra.mxu0 0.0
  %586 = vmatprep.subr.mxu0 0.0
  %587 = vmatpush1.msra.mxu0 0.0
  %588 = vmatprep.subr.mxu0 0.0
  %589 = vmatpush1.msra.mxu0 0.0
  %590 = vmatprep.subr.mxu0 0.0
  %591 = vmatpush1.msra.mxu0 0.0
  %592 = vmatprep.subr.mxu0 0.0
  %593 = vmatpush1.msra.mxu0 0.0
  %594 = vmatprep.subr.mxu0 0.0
  %595 = vmatpush1.msra.mxu0 0.0
  %596 = vmatprep.subr.mxu0 0.0
  %597 = vmatpush1.msra.mxu0 0.0
  %598 = vmatprep.subr.mxu0 0.0
  %599 = vmatpush1.msra.mxu0 0.0
  %600 = vmatprep.subr.mxu0 0.0
  %601 = vmatpush1.msra.mxu0 0.0
  %602 = vmatprep.subr.mxu0 0.0
  %603 = vmatpush1.msra.mxu0 0.0
  %604 = vmatprep.subr.mxu0 0.0
  %605 = vmatpush1.msra.mxu0 0.0
  %606 = vmatprep.subr.mxu0 0.0
  %607 = vmatpush1.msra.mxu0 0.0
  %608 = vmatprep.subr.mxu0 0.0
  %609 = vmatpush1.msra.mxu0 0.0
  %610 = vmatprep.subr.mxu0 0.0
  %611 = vmatpush1.msra.mxu0 0.0
  %612 = vmatprep.subr.mxu0 0.0
  %613 = vmatpush1.msra.mxu0 0.0
  %614 = vmatprep.subr.mxu0 0.0
  %615 = vmatpush1.msra.mxu0 0.0
  %616 = vmatprep.subr.mxu0 0.0
  %617 = vmatpush1.msra.mxu0 0.0
  %618 = vmatprep.subr.mxu0 0.0
  %619 = vmatpush1.msra.mxu0 0.0
  %620 = vmatprep.subr.mxu0 0.0
  %621 = vmatpush1.msra.mxu0 0.0
  %622 = vmatprep.subr.mxu0 0.0
  %623 = vmatpush1.msra.mxu0 0.0
  %624 = vmatprep.subr.mxu0 0.0
  %625 = vmatpush1.msra.mxu0 0.0
  %626 = vmatprep.mubr.f32.mxu0 0.0
  %627 = vmatmul.mubr.f32.gmra.mrb[0].mxu0 %v557
  %v628 = vpop.f32.mrb[0].mxu0
  %v629 = vadd.f32 0.0, %v628
  %v630 = vpop.f32.mrb[0].mxu0
  %631 = vdwg.mxu0
  %s632 = scalar_lea.vmem %s2, 12
  %633 = vst.msk [vmem:[%s632] sm:$0x3] %vm98, %v629
  %s634 = scalar_lea.vmem %s0, 14
  %v635 = vld [vmem:[%s634] sm:$0x3]
  %s636 = scalar_lea.vmem %s1, 448
  %v637 = vld [vmem:[%s636] sm:$0xff]
  %v638 = vld [vmem:[%s636 + $0x8] sm:$0xff]
  %v639 = vld [vmem:[%s636 + $0x10] sm:$0xff]
  %v640 = vld [vmem:[%s636 + $0x18] sm:$0xff]
  %v641 = vld [vmem:[%s636 + $0x20] sm:$0xff]
  %v642 = vld [vmem:[%s636 + $0x28] sm:$0xff]
  %v643 = vld [vmem:[%s636 + $0x30] sm:$0xff]
  %v644 = vld [vmem:[%s636 + $0x38] sm:$0xf]
  %v646 = vsel %vm20, %v635, 0
  %v649 = vsel %vm24, %v644, 0
  %651 = vmatprep.subr.mxu0 0.0
  %652 = vmatpush1.msra.mxu0 %v637
  %653 = vmatprep.subr.mxu0 0.0
  %654 = vmatpush1.msra.mxu0 %v638
  %655 = vmatprep.subr.mxu0 0.0
  %656 = vmatpush1.msra.mxu0 %v639
  %657 = vmatprep.subr.mxu0 0.0
  %658 = vmatpush1.msra.mxu0 %v640
  %659 = vmatprep.subr.mxu0 0.0
  %660 = vmatpush1.msra.mxu0 %v641
  %661 = vmatprep.subr.mxu0 0.0
  %662 = vmatpush1.msra.mxu0 %v642
  %663 = vmatprep.subr.mxu0 0.0
  %664 = vmatpush1.msra.mxu0 %v643
  %665 = vmatprep.subr.mxu0 0.0
  %666 = vmatpush1.msra.mxu0 %v649
  %667 = vmatprep.subr.mxu0 0.0
  %668 = vmatpush1.msra.mxu0 0.0
  %669 = vmatprep.subr.mxu0 0.0
  %670 = vmatpush1.msra.mxu0 0.0
  %671 = vmatprep.subr.mxu0 0.0
  %672 = vmatpush1.msra.mxu0 0.0
  %673 = vmatprep.subr.mxu0 0.0
  %674 = vmatpush1.msra.mxu0 0.0
  %675 = vmatprep.subr.mxu0 0.0
  %676 = vmatpush1.msra.mxu0 0.0
  %677 = vmatprep.subr.mxu0 0.0
  %678 = vmatpush1.msra.mxu0 0.0
  %679 = vmatprep.subr.mxu0 0.0
  %680 = vmatpush1.msra.mxu0 0.0
  %681 = vmatprep.subr.mxu0 0.0
  %682 = vmatpush1.msra.mxu0 0.0
  %683 = vmatprep.subr.mxu0 0.0
  %684 = vmatpush1.msra.mxu0 0.0
  %685 = vmatprep.subr.mxu0 0.0
  %686 = vmatpush1.msra.mxu0 0.0
  %687 = vmatprep.subr.mxu0 0.0
  %688 = vmatpush1.msra.mxu0 0.0
  %689 = vmatprep.subr.mxu0 0.0
  %690 = vmatpush1.msra.mxu0 0.0
  %691 = vmatprep.subr.mxu0 0.0
  %692 = vmatpush1.msra.mxu0 0.0
  %693 = vmatprep.subr.mxu0 0.0
  %694 = vmatpush1.msra.mxu0 0.0
  %695 = vmatprep.subr.mxu0 0.0
  %696 = vmatpush1.msra.mxu0 0.0
  %697 = vmatprep.subr.mxu0 0.0
  %698 = vmatpush1.msra.mxu0 0.0
  %699 = vmatprep.subr.mxu0 0.0
  %700 = vmatpush1.msra.mxu0 0.0
  %701 = vmatprep.subr.mxu0 0.0
  %702 = vmatpush1.msra.mxu0 0.0
  %703 = vmatprep.subr.mxu0 0.0
  %704 = vmatpush1.msra.mxu0 0.0
  %705 = vmatprep.subr.mxu0 0.0
  %706 = vmatpush1.msra.mxu0 0.0
  %707 = vmatprep.subr.mxu0 0.0
  %708 = vmatpush1.msra.mxu0 0.0
  %709 = vmatprep.subr.mxu0 0.0
  %710 = vmatpush1.msra.mxu0 0.0
  %711 = vmatprep.subr.mxu0 0.0
  %712 = vmatpush1.msra.mxu0 0.0
  %713 = vmatprep.subr.mxu0 0.0
  %714 = vmatpush1.msra.mxu0 0.0
  %715 = vmatprep.mubr.f32.mxu0 0.0
  %716 = vmatmul.mubr.f32.gmra.mrb[0].mxu0 %v646
  %v717 = vpop.f32.mrb[0].mxu0
  %v718 = vadd.f32 0.0, %v717
  %v719 = vpop.f32.mrb[0].mxu0
  %720 = vdwg.mxu0
  %s721 = scalar_lea.vmem %s2, 14
  %722 = vst.msk [vmem:[%s721] sm:$0x3] %vm98, %v718
  %s723 = scalar_lea.vmem %s0, 16
  %v724 = vld [vmem:[%s723] sm:$0x3]
  %s725 = scalar_lea.vmem %s1, 512
  %v726 = vld [vmem:[%s725] sm:$0xff]
  %v727 = vld [vmem:[%s725 + $0x8] sm:$0xff]
  %v728 = vld [vmem:[%s725 + $0x10] sm:$0xff]
  %v729 = vld [vmem:[%s725 + $0x18] sm:$0xff]
  %v730 = vld [vmem:[%s725 + $0x20] sm:$0xff]
  %v731 = vld [vmem:[%s725 + $0x28] sm:$0xff]
  %v732 = vld [vmem:[%s725 + $0x30] sm:$0xff]
  %v733 = vld [vmem:[%s725 + $0x38] sm:$0xf]
  %v735 = vsel %vm20, %v724, 0
  %v738 = vsel %vm24, %v733, 0
  %740 = vmatprep.subr.mxu0 0.0
  %741 = vmatpush1.msra.mxu0 %v726
  %742 = vmatprep.subr.mxu0 0.0
  %743 = vmatpush1.msra.mxu0 %v727
  %744 = vmatprep.subr.mxu0 0.0
  %745 = vmatpush1.msra.mxu0 %v728
  %746 = vmatprep.subr.mxu0 0.0
  %747 = vmatpush1.msra.mxu0 %v729
  %748 = vmatprep.subr.mxu0 0.0
  %749 = vmatpush1.msra.mxu0 %v730
  %750 = vmatprep.subr.mxu0 0.0
  %751 = vmatpush1.msra.mxu0 %v731
  %752 = vmatprep.subr.mxu0 0.0
  %753 = vmatpush1.msra.mxu0 %v732
  %754 = vmatprep.subr.mxu0 0.0
  %755 = vmatpush1.msra.mxu0 %v738
  %756 = vmatprep.subr.mxu0 0.0
  %757 = vmatpush1.msra.mxu0 0.0
  %758 = vmatprep.subr.mxu0 0.0
  %759 = vmatpush1.msra.mxu0 0.0
  %760 = vmatprep.subr.mxu0 0.0
  %761 = vmatpush1.msra.mxu0 0.0
  %762 = vmatprep.subr.mxu0 0.0
  %763 = vmatpush1.msra.mxu0 0.0
  %764 = vmatprep.subr.mxu0 0.0
  %765 = vmatpush1.msra.mxu0 0.0
  %766 = vmatprep.subr.mxu0 0.0
  %767 = vmatpush1.msra.mxu0 0.0
  %768 = vmatprep.subr.mxu0 0.0
  %769 = vmatpush1.msra.mxu0 0.0
  %770 = vmatprep.subr.mxu0 0.0
  %771 = vmatpush1.msra.mxu0 0.0
  %772 = vmatprep.subr.mxu0 0.0
  %773 = vmatpush1.msra.mxu0 0.0
  %774 = vmatprep.subr.mxu0 0.0
  %775 = vmatpush1.msra.mxu0 0.0
  %776 = vmatprep.subr.mxu0 0.0
  %777 = vmatpush1.msra.mxu0 0.0
  %778 = vmatprep.subr.mxu0 0.0
  %779 = vmatpush1.msra.mxu0 0.0
  %780 = vmatprep.subr.mxu0 0.0
  %781 = vmatpush1.msra.mxu0 0.0
  %782 = vmatprep.subr.mxu0 0.0
  %783 = vmatpush1.msra.mxu0 0.0
  %784 = vmatprep.subr.mxu0 0.0
  %785 = vmatpush1.msra.mxu0 0.0
  %786 = vmatprep.subr.mxu0 0.0
  %787 = vmatpush1.msra.mxu0 0.0
  %788 = vmatprep.subr.mxu0 0.0
  %789 = vmatpush1.msra.mxu0 0.0
  %790 = vmatprep.subr.mxu0 0.0
  %791 = vmatpush1.msra.mxu0 0.0
  %792 = vmatprep.subr.mxu0 0.0
  %793 = vmatpush1.msra.mxu0 0.0
  %794 = vmatprep.subr.mxu0 0.0
  %795 = vmatpush1.msra.mxu0 0.0
  %796 = vmatprep.subr.mxu0 0.0
  %797 = vmatpush1.msra.mxu0 0.0
  %798 = vmatprep.subr.mxu0 0.0
  %799 = vmatpush1.msra.mxu0 0.0
  %800 = vmatprep.subr.mxu0 0.0
  %801 = vmatpush1.msra.mxu0 0.0
  %802 = vmatprep.subr.mxu0 0.0
  %803 = vmatpush1.msra.mxu0 0.0
  %804 = vmatprep.mubr.f32.mxu0 0.0
  %805 = vmatmul.mubr.f32.gmra.mrb[0].mxu0 %v735
  %v806 = vpop.f32.mrb[0].mxu0
  %v807 = vadd.f32 0.0, %v806
  %v808 = vpop.f32.mrb[0].mxu0
  %809 = vdwg.mxu0
  %s810 = scalar_lea.vmem %s2, 16
  %811 = vst.msk [vmem:[%s810] sm:$0x3] %vm98, %v807
  %s812 = scalar_lea.vmem %s0, 18
  %v813 = vld [vmem:[%s812] sm:$0x3]
  %s814 = scalar_lea.vmem %s1, 576
  %v815 = vld [vmem:[%s814] sm:$0xff]
  %v816 = vld [vmem:[%s814 + $0x8] sm:$0xff]
  %v817 = vld [vmem:[%s814 + $0x10] sm:$0xff]
  %v818 = vld [vmem:[%s814 + $0x18] sm:$0xff]
  %v819 = vld [vmem:[%s814 + $0x20] sm:$0xff]
  %v820 = vld [vmem:[%s814 + $0x28] sm:$0xff]
  %v821 = vld [vmem:[%s814 + $0x30] sm:$0xff]
  %v822 = vld [vmem:[%s814 + $0x38] sm:$0xf]
  %v824 = vsel %vm20, %v813, 0
  %v827 = vsel %vm24, %v822, 0
  %829 = vmatprep.subr.mxu0 0.0
  %830 = vmatpush1.msra.mxu0 %v815
  %831 = vmatprep.subr.mxu0 0.0
  %832 = vmatpush1.msra.mxu0 %v816
  %833 = vmatprep.subr.mxu0 0.0
  %834 = vmatpush1.msra.mxu0 %v817
  %835 = vmatprep.subr.mxu0 0.0
  %836 = vmatpush1.msra.mxu0 %v818
  %837 = vmatprep.subr.mxu0 0.0
  %838 = vmatpush1.msra.mxu0 %v819
  %839 = vmatprep.subr.mxu0 0.0
  %840 = vmatpush1.msra.mxu0 %v820
  %841 = vmatprep.subr.mxu0 0.0
  %842 = vmatpush1.msra.mxu0 %v821
  %843 = vmatprep.subr.mxu0 0.0
  %844 = vmatpush1.msra.mxu0 %v827
  %845 = vmatprep.subr.mxu0 0.0
  %846 = vmatpush1.msra.mxu0 0.0
  %847 = vmatprep.subr.mxu0 0.0
  %848 = vmatpush1.msra.mxu0 0.0
  %849 = vmatprep.subr.mxu0 0.0
  %850 = vmatpush1.msra.mxu0 0.0
  %851 = vmatprep.subr.mxu0 0.0
  %852 = vmatpush1.msra.mxu0 0.0
  %853 = vmatprep.subr.mxu0 0.0
  %854 = vmatpush1.msra.mxu0 0.0
  %855 = vmatprep.subr.mxu0 0.0
  %856 = vmatpush1.msra.mxu0 0.0
  %857 = vmatprep.subr.mxu0 0.0
  %858 = vmatpush1.msra.mxu0 0.0
  %859 = vmatprep.subr.mxu0 0.0
  %860 = vmatpush1.msra.mxu0 0.0
  %861 = vmatprep.subr.mxu0 0.0
  %862 = vmatpush1.msra.mxu0 0.0
  %863 = vmatprep.subr.mxu0 0.0
  %864 = vmatpush1.msra.mxu0 0.0
  %865 = vmatprep.subr.mxu0 0.0
  %866 = vmatpush1.msra.mxu0 0.0
  %867 = vmatprep.subr.mxu0 0.0
  %868 = vmatpush1.msra.mxu0 0.0
  %869 = vmatprep.subr.mxu0 0.0
  %870 = vmatpush1.msra.mxu0 0.0
  %871 = vmatprep.subr.mxu0 0.0
  %872 = vmatpush1.msra.mxu0 0.0
  %873 = vmatprep.subr.mxu0 0.0
  %874 = vmatpush1.msra.mxu0 0.0
  %875 = vmatprep.subr.mxu0 0.0
  %876 = vmatpush1.msra.mxu0 0.0
  %877 = vmatprep.subr.mxu0 0.0
  %878 = vmatpush1.msra.mxu0 0.0
  %879 = vmatprep.subr.mxu0 0.0
  %880 = vmatpush1.msra.mxu0 0.0
  %881 = vmatprep.subr.mxu0 0.0
  %882 = vmatpush1.msra.mxu0 0.0
  %883 = vmatprep.subr.mxu0 0.0
  %884 = vmatpush1.msra.mxu0 0.0
  %885 = vmatprep.subr.mxu0 0.0
  %886 = vmatpush1.msra.mxu0 0.0
  %887 = vmatprep.subr.mxu0 0.0
  %888 = vmatpush1.msra.mxu0 0.0
  %889 = vmatprep.subr.mxu0 0.0
  %890 = vmatpush1.msra.mxu0 0.0
  %891 = vmatprep.subr.mxu0 0.0
  %892 = vmatpush1.msra.mxu0 0.0
  %893 = vmatprep.mubr.f32.mxu0 0.0
  %894 = vmatmul.mubr.f32.gmra.mrb[0].mxu0 %v824
  %v895 = vpop.f32.mrb[0].mxu0
  %v896 = vadd.f32 0.0, %v895
  %v897 = vpop.f32.mrb[0].mxu0
  %898 = vdwg.mxu0
  %s899 = scalar_lea.vmem %s2, 18
  %900 = vst.msk [vmem:[%s899] sm:$0x3] %vm98, %v896
  %s901 = scalar_lea.vmem %s0, 20
  %v902 = vld [vmem:[%s901] sm:$0x3]
  %s903 = scalar_lea.vmem %s1, 640
  %v904 = vld [vmem:[%s903] sm:$0xff]
  %v905 = vld [vmem:[%s903 + $0x8] sm:$0xff]
  %v906 = vld [vmem:[%s903 + $0x10] sm:$0xff]
  %v907 = vld [vmem:[%s903 + $0x18] sm:$0xff]
  %v908 = vld [vmem:[%s903 + $0x20] sm:$0xff]
  %v909 = vld [vmem:[%s903 + $0x28] sm:$0xff]
  %v910 = vld [vmem:[%s903 + $0x30] sm:$0xff]
  %v911 = vld [vmem:[%s903 + $0x38] sm:$0xf]
  %v913 = vsel %vm20, %v902, 0
  %v916 = vsel %vm24, %v911, 0
  %918 = vmatprep.subr.mxu0 0.0
  %919 = vmatpush1.msra.mxu0 %v904
  %920 = vmatprep.subr.mxu0 0.0
  %921 = vmatpush1.msra.mxu0 %v905
  %922 = vmatprep.subr.mxu0 0.0
  %923 = vmatpush1.msra.mxu0 %v906
  %924 = vmatprep.subr.mxu0 0.0
  %925 = vmatpush1.msra.mxu0 %v907
  %926 = vmatprep.subr.mxu0 0.0
  %927 = vmatpush1.msra.mxu0 %v908
  %928 = vmatprep.subr.mxu0 0.0
  %929 = vmatpush1.msra.mxu0 %v909
  %930 = vmatprep.subr.mxu0 0.0
  %931 = vmatpush1.msra.mxu0 %v910
  %932 = vmatprep.subr.mxu0 0.0
  %933 = vmatpush1.msra.mxu0 %v916
  %934 = vmatprep.subr.mxu0 0.0
  %935 = vmatpush1.msra.mxu0 0.0
  %936 = vmatprep.subr.mxu0 0.0
  %937 = vmatpush1.msra.mxu0 0.0
  %938 = vmatprep.subr.mxu0 0.0
  %939 = vmatpush1.msra.mxu0 0.0
  %940 = vmatprep.subr.mxu0 0.0
  %941 = vmatpush1.msra.mxu0 0.0
  %942 = vmatprep.subr.mxu0 0.0
  %943 = vmatpush1.msra.mxu0 0.0
  %944 = vmatprep.subr.mxu0 0.0
  %945 = vmatpush1.msra.mxu0 0.0
  %946 = vmatprep.subr.mxu0 0.0
  %947 = vmatpush1.msra.mxu0 0.0
  %948 = vmatprep.subr.mxu0 0.0
  %949 = vmatpush1.msra.mxu0 0.0
  %950 = vmatprep.subr.mxu0 0.0
  %951 = vmatpush1.msra.mxu0 0.0
  %952 = vmatprep.subr.mxu0 0.0
  %953 = vmatpush1.msra.mxu0 0.0
  %954 = vmatprep.subr.mxu0 0.0
  %955 = vmatpush1.msra.mxu0 0.0
  %956 = vmatprep.subr.mxu0 0.0
  %957 = vmatpush1.msra.mxu0 0.0
  %958 = vmatprep.subr.mxu0 0.0
  %959 = vmatpush1.msra.mxu0 0.0
  %960 = vmatprep.subr.mxu0 0.0
  %961 = vmatpush1.msra.mxu0 0.0
  %962 = vmatprep.subr.mxu0 0.0
  %963 = vmatpush1.msra.mxu0 0.0
  %964 = vmatprep.subr.mxu0 0.0
  %965 = vmatpush1.msra.mxu0 0.0
  %966 = vmatprep.subr.mxu0 0.0
  %967 = vmatpush1.msra.mxu0 0.0
  %968 = vmatprep.subr.mxu0 0.0
  %969 = vmatpush1.msra.mxu0 0.0
  %970 = vmatprep.subr.mxu0 0.0
  %971 = vmatpush1.msra.mxu0 0.0
  %972 = vmatprep.subr.mxu0 0.0
  %973 = vmatpush1.msra.mxu0 0.0
  %974 = vmatprep.subr.mxu0 0.0
  %975 = vmatpush1.msra.mxu0 0.0
  %976 = vmatprep.subr.mxu0 0.0
  %977 = vmatpush1.msra.mxu0 0.0
  %978 = vmatprep.subr.mxu0 0.0
  %979 = vmatpush1.msra.mxu0 0.0
  %980 = vmatprep.subr.mxu0 0.0
  %981 = vmatpush1.msra.mxu0 0.0
  %982 = vmatprep.mubr.f32.mxu0 0.0
  %983 = vmatmul.mubr.f32.gmra.mrb[0].mxu0 %v913
  %v984 = vpop.f32.mrb[0].mxu0
  %v985 = vadd.f32 0.0, %v984
  %v986 = vpop.f32.mrb[0].mxu0
  %987 = vdwg.mxu0
  %s988 = scalar_lea.vmem %s2, 20
  %989 = vst.msk [vmem:[%s988] sm:$0x3] %vm98, %v985
  %s990 = scalar_lea.vmem %s0, 22
  %v991 = vld [vmem:[%s990] sm:$0x3]
  %s992 = scalar_lea.vmem %s1, 704
  %v993 = vld [vmem:[%s992] sm:$0xff]
  %v994 = vld [vmem:[%s992 + $0x8] sm:$0xff]
  %v995 = vld [vmem:[%s992 + $0x10] sm:$0xff]
  %v996 = vld [vmem:[%s992 + $0x18] sm:$0xff]
  %v997 = vld [vmem:[%s992 + $0x20] sm:$0xff]
  %v998 = vld [vmem:[%s992 + $0x28] sm:$0xff]
  %v999 = vld [vmem:[%s992 + $0x30] sm:$0xff]
  %v1000 = vld [vmem:[%s992 + $0x38] sm:$0xf]
  %v1002 = vsel %vm20, %v991, 0
  %v1005 = vsel %vm24, %v1000, 0
  %1007 = vmatprep.subr.mxu0 0.0
  %1008 = vmatpush1.msra.mxu0 %v993
  %1009 = vmatprep.subr.mxu0 0.0
  %1010 = vmatpush1.msra.mxu0 %v994
  %1011 = vmatprep.subr.mxu0 0.0
  %1012 = vmatpush1.msra.mxu0 %v995
  %1013 = vmatprep.subr.mxu0 0.0
  %1014 = vmatpush1.msra.mxu0 %v996
  %1015 = vmatprep.subr.mxu0 0.0
  %1016 = vmatpush1.msra.mxu0 %v997
  %1017 = vmatprep.subr.mxu0 0.0
  %1018 = vmatpush1.msra.mxu0 %v998
  %1019 = vmatprep.subr.mxu0 0.0
  %1020 = vmatpush1.msra.mxu0 %v999
  %1021 = vmatprep.subr.mxu0 0.0
  %1022 = vmatpush1.msra.mxu0 %v1005
  %1023 = vmatprep.subr.mxu0 0.0
  %1024 = vmatpush1.msra.mxu0 0.0
  %1025 = vmatprep.subr.mxu0 0.0
  %1026 = vmatpush1.msra.mxu0 0.0
  %1027 = vmatprep.subr.mxu0 0.0
  %1028 = vmatpush1.msra.mxu0 0.0
  %1029 = vmatprep.subr.mxu0 0.0
  %1030 = vmatpush1.msra.mxu0 0.0
  %1031 = vmatprep.subr.mxu0 0.0
  %1032 = vmatpush1.msra.mxu0 0.0
  %1033 = vmatprep.subr.mxu0 0.0
  %1034 = vmatpush1.msra.mxu0 0.0
  %1035 = vmatprep.subr.mxu0 0.0
  %1036 = vmatpush1.msra.mxu0 0.0
  %1037 = vmatprep.subr.mxu0 0.0
  %1038 = vmatpush1.msra.mxu0 0.0
  %1039 = vmatprep.subr.mxu0 0.0
  %1040 = vmatpush1.msra.mxu0 0.0
  %1041 = vmatprep.subr.mxu0 0.0
  %1042 = vmatpush1.msra.mxu0 0.0
  %1043 = vmatprep.subr.mxu0 0.0
  %1044 = vmatpush1.msra.mxu0 0.0
  %1045 = vmatprep.subr.mxu0 0.0
  %1046 = vmatpush1.msra.mxu0 0.0
  %1047 = vmatprep.subr.mxu0 0.0
  %1048 = vmatpush1.msra.mxu0 0.0
  %1049 = vmatprep.subr.mxu0 0.0
  %1050 = vmatpush1.msra.mxu0 0.0
  %1051 = vmatprep.subr.mxu0 0.0
  %1052 = vmatpush1.msra.mxu0 0.0
  %1053 = vmatprep.subr.mxu0 0.0
  %1054 = vmatpush1.msra.mxu0 0.0
  %1055 = vmatprep.subr.mxu0 0.0
  %1056 = vmatpush1.msra.mxu0 0.0
  %1057 = vmatprep.subr.mxu0 0.0
  %1058 = vmatpush1.msra.mxu0 0.0
  %1059 = vmatprep.subr.mxu0 0.0
  %1060 = vmatpush1.msra.mxu0 0.0
  %1061 = vmatprep.subr.mxu0 0.0
  %1062 = vmatpush1.msra.mxu0 0.0
  %1063 = vmatprep.subr.mxu0 0.0
  %1064 = vmatpush1.msra.mxu0 0.0
  %1065 = vmatprep.subr.mxu0 0.0
  %1066 = vmatpush1.msra.mxu0 0.0
  %1067 = vmatprep.subr.mxu0 0.0
  %1068 = vmatpush1.msra.mxu0 0.0
  %1069 = vmatprep.subr.mxu0 0.0
  %1070 = vmatpush1.msra.mxu0 0.0
  %1071 = vmatprep.mubr.f32.mxu0 0.0
  %1072 = vmatmul.mubr.f32.gmra.mrb[0].mxu0 %v1002
  %v1073 = vpop.f32.mrb[0].mxu0
  %v1074 = vadd.f32 0.0, %v1073
  %v1075 = vpop.f32.mrb[0].mxu0
  %1076 = vdwg.mxu0
  %s1077 = scalar_lea.vmem %s2, 22
  %1078 = vst.msk [vmem:[%s1077] sm:$0x3] %vm98, %v1074
  %s1079 = scalar_lea.vmem %s0, 24
  %v1080 = vld [vmem:[%s1079] sm:$0x3]
  %s1081 = scalar_lea.vmem %s1, 768
  %v1082 = vld [vmem:[%s1081] sm:$0xff]
  %v1083 = vld [vmem:[%s1081 + $0x8] sm:$0xff]
  %v1084 = vld [vmem:[%s1081 + $0x10] sm:$0xff]
  %v1085 = vld [vmem:[%s1081 + $0x18] sm:$0xff]
  %v1086 = vld [vmem:[%s1081 + $0x20] sm:$0xff]
  %v1087 = vld [vmem:[%s1081 + $0x28] sm:$0xff]
  %v1088 = vld [vmem:[%s1081 + $0x30] sm:$0xff]
  %v1089 = vld [vmem:[%s1081 + $0x38] sm:$0xf]
  %v1091 = vsel %vm20, %v1080, 0
  %v1094 = vsel %vm24, %v1089, 0
  %1096 = vmatprep.subr.mxu0 0.0
  %1097 = vmatpush1.msra.mxu0 %v1082
  %1098 = vmatprep.subr.mxu0 0.0
  %1099 = vmatpush1.msra.mxu0 %v1083
  %1100 = vmatprep.subr.mxu0 0.0
  %1101 = vmatpush1.msra.mxu0 %v1084
  %1102 = vmatprep.subr.mxu0 0.0
  %1103 = vmatpush1.msra.mxu0 %v1085
  %1104 = vmatprep.subr.mxu0 0.0
  %1105 = vmatpush1.msra.mxu0 %v1086
  %1106 = vmatprep.subr.mxu0 0.0
  %1107 = vmatpush1.msra.mxu0 %v1087
  %1108 = vmatprep.subr.mxu0 0.0
  %1109 = vmatpush1.msra.mxu0 %v1088
  %1110 = vmatprep.subr.mxu0 0.0
  %1111 = vmatpush1.msra.mxu0 %v1094
  %1112 = vmatprep.subr.mxu0 0.0
  %1113 = vmatpush1.msra.mxu0 0.0
  %1114 = vmatprep.subr.mxu0 0.0
  %1115 = vmatpush1.msra.mxu0 0.0
  %1116 = vmatprep.subr.mxu0 0.0
  %1117 = vmatpush1.msra.mxu0 0.0
  %1118 = vmatprep.subr.mxu0 0.0
  %1119 = vmatpush1.msra.mxu0 0.0
  %1120 = vmatprep.subr.mxu0 0.0
  %1121 = vmatpush1.msra.mxu0 0.0
  %1122 = vmatprep.subr.mxu0 0.0
  %1123 = vmatpush1.msra.mxu0 0.0
  %1124 = vmatprep.subr.mxu0 0.0
  %1125 = vmatpush1.msra.mxu0 0.0
  %1126 = vmatprep.subr.mxu0 0.0
  %1127 = vmatpush1.msra.mxu0 0.0
  %1128 = vmatprep.subr.mxu0 0.0
  %1129 = vmatpush1.msra.mxu0 0.0
  %1130 = vmatprep.subr.mxu0 0.0
  %1131 = vmatpush1.msra.mxu0 0.0
  %1132 = vmatprep.subr.mxu0 0.0
  %1133 = vmatpush1.msra.mxu0 0.0
  %1134 = vmatprep.subr.mxu0 0.0
  %1135 = vmatpush1.msra.mxu0 0.0
  %1136 = vmatprep.subr.mxu0 0.0
  %1137 = vmatpush1.msra.mxu0 0.0
  %1138 = vmatprep.subr.mxu0 0.0
  %1139 = vmatpush1.msra.mxu0 0.0
  %1140 = vmatprep.subr.mxu0 0.0
  %1141 = vmatpush1.msra.mxu0 0.0
  %1142 = vmatprep.subr.mxu0 0.0
  %1143 = vmatpush1.msra.mxu0 0.0
  %1144 = vmatprep.subr.mxu0 0.0
  %1145 = vmatpush1.msra.mxu0 0.0
  %1146 = vmatprep.subr.mxu0 0.0
  %1147 = vmatpush1.msra.mxu0 0.0
  %1148 = vmatprep.subr.mxu0 0.0
  %1149 = vmatpush1.msra.mxu0 0.0
  %1150 = vmatprep.subr.mxu0 0.0
  %1151 = vmatpush1.msra.mxu0 0.0
  %1152 = vmatprep.subr.mxu0 0.0
  %1153 = vmatpush1.msra.mxu0 0.0
  %1154 = vmatprep.subr.mxu0 0.0
  %1155 = vmatpush1.msra.mxu0 0.0
  %1156 = vmatprep.subr.mxu0 0.0
  %1157 = vmatpush1.msra.mxu0 0.0
  %1158 = vmatprep.subr.mxu0 0.0
  %1159 = vmatpush1.msra.mxu0 0.0
  %1160 = vmatprep.mubr.f32.mxu0 0.0
  %1161 = vmatmul.mubr.f32.gmra.mrb[0].mxu0 %v1091
  %v1162 = vpop.f32.mrb[0].mxu0
  %v1163 = vadd.f32 0.0, %v1162
  %v1164 = vpop.f32.mrb[0].mxu0
  %1165 = vdwg.mxu0
  %s1166 = scalar_lea.vmem %s2, 24
  %1167 = vst.msk [vmem:[%s1166] sm:$0x3] %vm98, %v1163
  %s1168 = scalar_lea.vmem %s0, 26
  %v1169 = vld [vmem:[%s1168] sm:$0x3]
  %s1170 = scalar_lea.vmem %s1, 832
  %v1171 = vld [vmem:[%s1170] sm:$0xff]
  %v1172 = vld [vmem:[%s1170 + $0x8] sm:$0xff]
  %v1173 = vld [vmem:[%s1170 + $0x10] sm:$0xff]
  %v1174 = vld [vmem:[%s1170 + $0x18] sm:$0xff]
  %v1175 = vld [vmem:[%s1170 + $0x20] sm:$0xff]
  %v1176 = vld [vmem:[%s1170 + $0x28] sm:$0xff]
  %v1177 = vld [vmem:[%s1170 + $0x30] sm:$0xff]
  %v1178 = vld [vmem:[%s1170 + $0x38] sm:$0xf]
  %v1180 = vsel %vm20, %v1169, 0
  %v1183 = vsel %vm24, %v1178, 0
  %1185 = vmatprep.subr.mxu0 0.0
  %1186 = vmatpush1.msra.mxu0 %v1171
  %1187 = vmatprep.subr.mxu0 0.0
  %1188 = vmatpush1.msra.mxu0 %v1172
  %1189 = vmatprep.subr.mxu0 0.0
  %1190 = vmatpush1.msra.mxu0 %v1173
  %1191 = vmatprep.subr.mxu0 0.0
  %1192 = vmatpush1.msra.mxu0 %v1174
  %1193 = vmatprep.subr.mxu0 0.0
  %1194 = vmatpush1.msra.mxu0 %v1175
  %1195 = vmatprep.subr.mxu0 0.0
  %1196 = vmatpush1.msra.mxu0 %v1176
  %1197 = vmatprep.subr.mxu0 0.0
  %1198 = vmatpush1.msra.mxu0 %v1177
  %1199 = vmatprep.subr.mxu0 0.0
  %1200 = vmatpush1.msra.mxu0 %v1183
  %1201 = vmatprep.subr.mxu0 0.0
  %1202 = vmatpush1.msra.mxu0 0.0
  %1203 = vmatprep.subr.mxu0 0.0
  %1204 = vmatpush1.msra.mxu0 0.0
  %1205 = vmatprep.subr.mxu0 0.0
  %1206 = vmatpush1.msra.mxu0 0.0
  %1207 = vmatprep.subr.mxu0 0.0
  %1208 = vmatpush1.msra.mxu0 0.0
  %1209 = vmatprep.subr.mxu0 0.0
  %1210 = vmatpush1.msra.mxu0 0.0
  %1211 = vmatprep.subr.mxu0 0.0
  %1212 = vmatpush1.msra.mxu0 0.0
  %1213 = vmatprep.subr.mxu0 0.0
  %1214 = vmatpush1.msra.mxu0 0.0
  %1215 = vmatprep.subr.mxu0 0.0
  %1216 = vmatpush1.msra.mxu0 0.0
  %1217 = vmatprep.subr.mxu0 0.0
  %1218 = vmatpush1.msra.mxu0 0.0
  %1219 = vmatprep.subr.mxu0 0.0
  %1220 = vmatpush1.msra.mxu0 0.0
  %1221 = vmatprep.subr.mxu0 0.0
  %1222 = vmatpush1.msra.mxu0 0.0
  %1223 = vmatprep.subr.mxu0 0.0
  %1224 = vmatpush1.msra.mxu0 0.0
  %1225 = vmatprep.subr.mxu0 0.0
  %1226 = vmatpush1.msra.mxu0 0.0
  %1227 = vmatprep.subr.mxu0 0.0
  %1228 = vmatpush1.msra.mxu0 0.0
  %1229 = vmatprep.subr.mxu0 0.0
  %1230 = vmatpush1.msra.mxu0 0.0
  %1231 = vmatprep.subr.mxu0 0.0
  %1232 = vmatpush1.msra.mxu0 0.0
  %1233 = vmatprep.subr.mxu0 0.0
  %1234 = vmatpush1.msra.mxu0 0.0
  %1235 = vmatprep.subr.mxu0 0.0
  %1236 = vmatpush1.msra.mxu0 0.0
  %1237 = vmatprep.subr.mxu0 0.0
  %1238 = vmatpush1.msra.mxu0 0.0
  %1239 = vmatprep.subr.mxu0 0.0
  %1240 = vmatpush1.msra.mxu0 0.0
  %1241 = vmatprep.subr.mxu0 0.0
  %1242 = vmatpush1.msra.mxu0 0.0
  %1243 = vmatprep.subr.mxu0 0.0
  %1244 = vmatpush1.msra.mxu0 0.0
  %1245 = vmatprep.subr.mxu0 0.0
  %1246 = vmatpush1.msra.mxu0 0.0
  %1247 = vmatprep.subr.mxu0 0.0
  %1248 = vmatpush1.msra.mxu0 0.0
  %1249 = vmatprep.mubr.f32.mxu0 0.0
  %1250 = vmatmul.mubr.f32.gmra.mrb[0].mxu0 %v1180
  %v1251 = vpop.f32.mrb[0].mxu0
  %v1252 = vadd.f32 0.0, %v1251
  %v1253 = vpop.f32.mrb[0].mxu0
  %1254 = vdwg.mxu0
  %s1255 = scalar_lea.vmem %s2, 26
  %1256 = vst.msk [vmem:[%s1255] sm:$0x3] %vm98, %v1252
  %s1257 = scalar_lea.vmem %s0, 28
  %v1258 = vld [vmem:[%s1257] sm:$0x3]
  %s1259 = scalar_lea.vmem %s1, 896
  %v1260 = vld [vmem:[%s1259] sm:$0xff]
  %v1261 = vld [vmem:[%s1259 + $0x8] sm:$0xff]
  %v1262 = vld [vmem:[%s1259 + $0x10] sm:$0xff]
  %v1263 = vld [vmem:[%s1259 + $0x18] sm:$0xff]
  %v1264 = vld [vmem:[%s1259 + $0x20] sm:$0xff]
  %v1265 = vld [vmem:[%s1259 + $0x28] sm:$0xff]
  %v1266 = vld [vmem:[%s1259 + $0x30] sm:$0xff]
  %v1267 = vld [vmem:[%s1259 + $0x38] sm:$0xf]
  %v1269 = vsel %vm20, %v1258, 0
  %v1272 = vsel %vm24, %v1267, 0
  %1274 = vmatprep.subr.mxu0 0.0
  %1275 = vmatpush1.msra.mxu0 %v1260
  %1276 = vmatprep.subr.mxu0 0.0
  %1277 = vmatpush1.msra.mxu0 %v1261
  %1278 = vmatprep.subr.mxu0 0.0
  %1279 = vmatpush1.msra.mxu0 %v1262
  %1280 = vmatprep.subr.mxu0 0.0
  %1281 = vmatpush1.msra.mxu0 %v1263
  %1282 = vmatprep.subr.mxu0 0.0
  %1283 = vmatpush1.msra.mxu0 %v1264
  %1284 = vmatprep.subr.mxu0 0.0
  %1285 = vmatpush1.msra.mxu0 %v1265
  %1286 = vmatprep.subr.mxu0 0.0
  %1287 = vmatpush1.msra.mxu0 %v1266
  %1288 = vmatprep.subr.mxu0 0.0
  %1289 = vmatpush1.msra.mxu0 %v1272
  %1290 = vmatprep.subr.mxu0 0.0
  %1291 = vmatpush1.msra.mxu0 0.0
  %1292 = vmatprep.subr.mxu0 0.0
  %1293 = vmatpush1.msra.mxu0 0.0
  %1294 = vmatprep.subr.mxu0 0.0
  %1295 = vmatpush1.msra.mxu0 0.0
  %1296 = vmatprep.subr.mxu0 0.0
  %1297 = vmatpush1.msra.mxu0 0.0
  %1298 = vmatprep.subr.mxu0 0.0
  %1299 = vmatpush1.msra.mxu0 0.0
  %1300 = vmatprep.subr.mxu0 0.0
  %1301 = vmatpush1.msra.mxu0 0.0
  %1302 = vmatprep.subr.mxu0 0.0
  %1303 = vmatpush1.msra.mxu0 0.0
  %1304 = vmatprep.subr.mxu0 0.0
  %1305 = vmatpush1.msra.mxu0 0.0
  %1306 = vmatprep.subr.mxu0 0.0
  %1307 = vmatpush1.msra.mxu0 0.0
  %1308 = vmatprep.subr.mxu0 0.0
  %1309 = vmatpush1.msra.mxu0 0.0
  %1310 = vmatprep.subr.mxu0 0.0
  %1311 = vmatpush1.msra.mxu0 0.0
  %1312 = vmatprep.subr.mxu0 0.0
  %1313 = vmatpush1.msra.mxu0 0.0
  %1314 = vmatprep.subr.mxu0 0.0
  %1315 = vmatpush1.msra.mxu0 0.0
  %1316 = vmatprep.subr.mxu0 0.0
  %1317 = vmatpush1.msra.mxu0 0.0
  %1318 = vmatprep.subr.mxu0 0.0
  %1319 = vmatpush1.msra.mxu0 0.0
  %1320 = vmatprep.subr.mxu0 0.0
  %1321 = vmatpush1.msra.mxu0 0.0
  %1322 = vmatprep.subr.mxu0 0.0
  %1323 = vmatpush1.msra.mxu0 0.0
  %1324 = vmatprep.subr.mxu0 0.0
  %1325 = vmatpush1.msra.mxu0 0.0
  %1326 = vmatprep.subr.mxu0 0.0
  %1327 = vmatpush1.msra.mxu0 0.0
  %1328 = vmatprep.subr.mxu0 0.0
  %1329 = vmatpush1.msra.mxu0 0.0
  %1330 = vmatprep.subr.mxu0 0.0
  %1331 = vmatpush1.msra.mxu0 0.0
  %1332 = vmatprep.subr.mxu0 0.0
  %1333 = vmatpush1.msra.mxu0 0.0
  %1334 = vmatprep.subr.mxu0 0.0
  %1335 = vmatpush1.msra.mxu0 0.0
  %1336 = vmatprep.subr.mxu0 0.0
  %1337 = vmatpush1.msra.mxu0 0.0
  %1338 = vmatprep.mubr.f32.mxu0 0.0
  %1339 = vmatmul.mubr.f32.gmra.mrb[0].mxu0 %v1269
  %v1340 = vpop.f32.mrb[0].mxu0
  %v1341 = vadd.f32 0.0, %v1340
  %v1342 = vpop.f32.mrb[0].mxu0
  %1343 = vdwg.mxu0
  %s1344 = scalar_lea.vmem %s2, 28
  %1345 = vst.msk [vmem:[%s1344] sm:$0x3] %vm98, %v1341
  %s1346 = scalar_lea.vmem %s0, 30
  %v1347 = vld [vmem:[%s1346] sm:$0x3]
  %s1348 = scalar_lea.vmem %s1, 960
  %v1349 = vld [vmem:[%s1348] sm:$0xff]
  %v1350 = vld [vmem:[%s1348 + $0x8] sm:$0xff]
  %v1351 = vld [vmem:[%s1348 + $0x10] sm:$0xff]
  %v1352 = vld [vmem:[%s1348 + $0x18] sm:$0xff]
  %v1353 = vld [vmem:[%s1348 + $0x20] sm:$0xff]
  %v1354 = vld [vmem:[%s1348 + $0x28] sm:$0xff]
  %v1355 = vld [vmem:[%s1348 + $0x30] sm:$0xff]
  %v1356 = vld [vmem:[%s1348 + $0x38] sm:$0xf]
  %v1358 = vsel %vm20, %v1347, 0
  %v1361 = vsel %vm24, %v1356, 0
  %1363 = vmatprep.subr.mxu0 0.0
  %1364 = vmatpush1.msra.mxu0 %v1349
  %1365 = vmatprep.subr.mxu0 0.0
  %1366 = vmatpush1.msra.mxu0 %v1350
  %1367 = vmatprep.subr.mxu0 0.0
  %1368 = vmatpush1.msra.mxu0 %v1351
  %1369 = vmatprep.subr.mxu0 0.0
  %1370 = vmatpush1.msra.mxu0 %v1352
  %1371 = vmatprep.subr.mxu0 0.0
  %1372 = vmatpush1.msra.mxu0 %v1353
  %1373 = vmatprep.subr.mxu0 0.0
  %1374 = vmatpush1.msra.mxu0 %v1354
  %1375 = vmatprep.subr.mxu0 0.0
  %1376 = vmatpush1.msra.mxu0 %v1355
  %1377 = vmatprep.subr.mxu0 0.0
  %1378 = vmatpush1.msra.mxu0 %v1361
  %1379 = vmatprep.subr.mxu0 0.0
  %1380 = vmatpush1.msra.mxu0 0.0
  %1381 = vmatprep.subr.mxu0 0.0
  %1382 = vmatpush1.msra.mxu0 0.0
  %1383 = vmatprep.subr.mxu0 0.0
  %1384 = vmatpush1.msra.mxu0 0.0
  %1385 = vmatprep.subr.mxu0 0.0
  %1386 = vmatpush1.msra.mxu0 0.0
  %1387 = vmatprep.subr.mxu0 0.0
  %1388 = vmatpush1.msra.mxu0 0.0
  %1389 = vmatprep.subr.mxu0 0.0
  %1390 = vmatpush1.msra.mxu0 0.0
  %1391 = vmatprep.subr.mxu0 0.0
  %1392 = vmatpush1.msra.mxu0 0.0
  %1393 = vmatprep.subr.mxu0 0.0
  %1394 = vmatpush1.msra.mxu0 0.0
  %1395 = vmatprep.subr.mxu0 0.0
  %1396 = vmatpush1.msra.mxu0 0.0
  %1397 = vmatprep.subr.mxu0 0.0
  %1398 = vmatpush1.msra.mxu0 0.0
  %1399 = vmatprep.subr.mxu0 0.0
  %1400 = vmatpush1.msra.mxu0 0.0
  %1401 = vmatprep.subr.mxu0 0.0
  %1402 = vmatpush1.msra.mxu0 0.0
  %1403 = vmatprep.subr.mxu0 0.0
  %1404 = vmatpush1.msra.mxu0 0.0
  %1405 = vmatprep.subr.mxu0 0.0
  %1406 = vmatpush1.msra.mxu0 0.0
  %1407 = vmatprep.subr.mxu0 0.0
  %1408 = vmatpush1.msra.mxu0 0.0
  %1409 = vmatprep.subr.mxu0 0.0
  %1410 = vmatpush1.msra.mxu0 0.0
  %1411 = vmatprep.subr.mxu0 0.0
  %1412 = vmatpush1.msra.mxu0 0.0
  %1413 = vmatprep.subr.mxu0 0.0
  %1414 = vmatpush1.msra.mxu0 0.0
  %1415 = vmatprep.subr.mxu0 0.0
  %1416 = vmatpush1.msra.mxu0 0.0
  %1417 = vmatprep.subr.mxu0 0.0
  %1418 = vmatpush1.msra.mxu0 0.0
  %1419 = vmatprep.subr.mxu0 0.0
  %1420 = vmatpush1.msra.mxu0 0.0
  %1421 = vmatprep.subr.mxu0 0.0
  %1422 = vmatpush1.msra.mxu0 0.0
  %1423 = vmatprep.subr.mxu0 0.0
  %1424 = vmatpush1.msra.mxu0 0.0
  %1425 = vmatprep.subr.mxu0 0.0
  %1426 = vmatpush1.msra.mxu0 0.0
  %1427 = vmatprep.mubr.f32.mxu0 0.0
  %1428 = vmatmul.mubr.f32.gmra.mrb[0].mxu0 %v1358
  %v1429 = vpop.f32.mrb[0].mxu0
  %v1430 = vadd.f32 0.0, %v1429
  %v1431 = vpop.f32.mrb[0].mxu0
  %1432 = vdwg.mxu0
  %s1433 = scalar_lea.vmem %s2, 30
  %1434 = vst.msk [vmem:[%s1433] sm:$0x3] %vm98, %v1430
  %s1435 = scalar_lea.vmem %s0, 32
  %v1436 = vld [vmem:[%s1435] sm:$0x3]
  %s1437 = scalar_lea.vmem %s1, 1024
  %v1438 = vld [vmem:[%s1437] sm:$0xff]
  %v1439 = vld [vmem:[%s1437 + $0x8] sm:$0xff]
  %v1440 = vld [vmem:[%s1437 + $0x10] sm:$0xff]
  %v1441 = vld [vmem:[%s1437 + $0x18] sm:$0xff]
  %v1442 = vld [vmem:[%s1437 + $0x20] sm:$0xff]
  %v1443 = vld [vmem:[%s1437 + $0x28] sm:$0xff]
  %v1444 = vld [vmem:[%s1437 + $0x30] sm:$0xff]
  %v1445 = vld [vmem:[%s1437 + $0x38] sm:$0xf]
  %v1447 = vsel %vm20, %v1436, 0
  %v1450 = vsel %vm24, %v1445, 0
  %1452 = vmatprep.subr.mxu0 0.0
  %1453 = vmatpush1.msra.mxu0 %v1438
  %1454 = vmatprep.subr.mxu0 0.0
  %1455 = vmatpush1.msra.mxu0 %v1439
  %1456 = vmatprep.subr.mxu0 0.0
  %1457 = vmatpush1.msra.mxu0 %v1440
  %1458 = vmatprep.subr.mxu0 0.0
  %1459 = vmatpush1.msra.mxu0 %v1441
  %1460 = vmatprep.subr.mxu0 0.0
  %1461 = vmatpush1.msra.mxu0 %v1442
  %1462 = vmatprep.subr.mxu0 0.0
  %1463 = vmatpush1.msra.mxu0 %v1443
  %1464 = vmatprep.subr.mxu0 0.0
  %1465 = vmatpush1.msra.mxu0 %v1444
  %1466 = vmatprep.subr.mxu0 0.0
  %1467 = vmatpush1.msra.mxu0 %v1450
  %1468 = vmatprep.subr.mxu0 0.0
  %1469 = vmatpush1.msra.mxu0 0.0
  %1470 = vmatprep.subr.mxu0 0.0
  %1471 = vmatpush1.msra.mxu0 0.0
  %1472 = vmatprep.subr.mxu0 0.0
  %1473 = vmatpush1.msra.mxu0 0.0
  %1474 = vmatprep.subr.mxu0 0.0
  %1475 = vmatpush1.msra.mxu0 0.0
  %1476 = vmatprep.subr.mxu0 0.0
  %1477 = vmatpush1.msra.mxu0 0.0
  %1478 = vmatprep.subr.mxu0 0.0
  %1479 = vmatpush1.msra.mxu0 0.0
  %1480 = vmatprep.subr.mxu0 0.0
  %1481 = vmatpush1.msra.mxu0 0.0
  %1482 = vmatprep.subr.mxu0 0.0
  %1483 = vmatpush1.msra.mxu0 0.0
  %1484 = vmatprep.subr.mxu0 0.0
  %1485 = vmatpush1.msra.mxu0 0.0
  %1486 = vmatprep.subr.mxu0 0.0
  %1487 = vmatpush1.msra.mxu0 0.0
  %1488 = vmatprep.subr.mxu0 0.0
  %1489 = vmatpush1.msra.mxu0 0.0
  %1490 = vmatprep.subr.mxu0 0.0
  %1491 = vmatpush1.msra.mxu0 0.0
  %1492 = vmatprep.subr.mxu0 0.0
  %1493 = vmatpush1.msra.mxu0 0.0
  %1494 = vmatprep.subr.mxu0 0.0
  %1495 = vmatpush1.msra.mxu0 0.0
  %1496 = vmatprep.subr.mxu0 0.0
  %1497 = vmatpush1.msra.mxu0 0.0
  %1498 = vmatprep.subr.mxu0 0.0
  %1499 = vmatpush1.msra.mxu0 0.0
  %1500 = vmatprep.subr.mxu0 0.0
  %1501 = vmatpush1.msra.mxu0 0.0
  %1502 = vmatprep.subr.mxu0 0.0
  %1503 = vmatpush1.msra.mxu0 0.0
  %1504 = vmatprep.subr.mxu0 0.0
  %1505 = vmatpush1.msra.mxu0 0.0
  %1506 = vmatprep.subr.mxu0 0.0
  %1507 = vmatpush1.msra.mxu0 0.0
  %1508 = vmatprep.subr.mxu0 0.0
  %1509 = vmatpush1.msra.mxu0 0.0
  %1510 = vmatprep.subr.mxu0 0.0
  %1511 = vmatpush1.msra.mxu0 0.0
  %1512 = vmatprep.subr.mxu0 0.0
  %1513 = vmatpush1.msra.mxu0 0.0
  %1514 = vmatprep.subr.mxu0 0.0
  %1515 = vmatpush1.msra.mxu0 0.0
  %1516 = vmatprep.mubr.f32.mxu0 0.0
  %1517 = vmatmul.mubr.f32.gmra.mrb[0].mxu0 %v1447
  %v1518 = vpop.f32.mrb[0].mxu0
  %v1519 = vadd.f32 0.0, %v1518
  %v1520 = vpop.f32.mrb[0].mxu0
  %1521 = vdwg.mxu0
  %s1522 = scalar_lea.vmem %s2, 32
  %1523 = vst.msk [vmem:[%s1522] sm:$0x3] %vm98, %v1519
  %s1524 = scalar_lea.vmem %s0, 34
  %v1525 = vld [vmem:[%s1524] sm:$0x3]
  %s1526 = scalar_lea.vmem %s1, 1088
  %v1527 = vld [vmem:[%s1526] sm:$0xff]
  %v1528 = vld [vmem:[%s1526 + $0x8] sm:$0xff]
  %v1529 = vld [vmem:[%s1526 + $0x10] sm:$0xff]
  %v1530 = vld [vmem:[%s1526 + $0x18] sm:$0xff]
  %v1531 = vld [vmem:[%s1526 + $0x20] sm:$0xff]
  %v1532 = vld [vmem:[%s1526 + $0x28] sm:$0xff]
  %v1533 = vld [vmem:[%s1526 + $0x30] sm:$0xff]
  %v1534 = vld [vmem:[%s1526 + $0x38] sm:$0xf]
  %v1536 = vsel %vm20, %v1525, 0
  %v1539 = vsel %vm24, %v1534, 0
  %1541 = vmatprep.subr.mxu0 0.0
  %1542 = vmatpush1.msra.mxu0 %v1527
  %1543 = vmatprep.subr.mxu0 0.0
  %1544 = vmatpush1.msra.mxu0 %v1528
  %1545 = vmatprep.subr.mxu0 0.0
  %1546 = vmatpush1.msra.mxu0 %v1529
  %1547 = vmatprep.subr.mxu0 0.0
  %1548 = vmatpush1.msra.mxu0 %v1530
  %1549 = vmatprep.subr.mxu0 0.0
  %1550 = vmatpush1.msra.mxu0 %v1531
  %1551 = vmatprep.subr.mxu0 0.0
  %1552 = vmatpush1.msra.mxu0 %v1532
  %1553 = vmatprep.subr.mxu0 0.0
  %1554 = vmatpush1.msra.mxu0 %v1533
  %1555 = vmatprep.subr.mxu0 0.0
  %1556 = vmatpush1.msra.mxu0 %v1539
  %1557 = vmatprep.subr.mxu0 0.0
  %1558 = vmatpush1.msra.mxu0 0.0
  %1559 = vmatprep.subr.mxu0 0.0
  %1560 = vmatpush1.msra.mxu0 0.0
  %1561 = vmatprep.subr.mxu0 0.0
  %1562 = vmatpush1.msra.mxu0 0.0
  %1563 = vmatprep.subr.mxu0 0.0
  %1564 = vmatpush1.msra.mxu0 0.0
  %1565 = vmatprep.subr.mxu0 0.0
  %1566 = vmatpush1.msra.mxu0 0.0
  %1567 = vmatprep.subr.mxu0 0.0
  %1568 = vmatpush1.msra.mxu0 0.0
  %1569 = vmatprep.subr.mxu0 0.0
  %1570 = vmatpush1.msra.mxu0 0.0
  %1571 = vmatprep.subr.mxu0 0.0
  %1572 = vmatpush1.msra.mxu0 0.0
  %1573 = vmatprep.subr.mxu0 0.0
  %1574 = vmatpush1.msra.mxu0 0.0
  %1575 = vmatprep.subr.mxu0 0.0
  %1576 = vmatpush1.msra.mxu0 0.0
  %1577 = vmatprep.subr.mxu0 0.0
  %1578 = vmatpush1.msra.mxu0 0.0
  %1579 = vmatprep.subr.mxu0 0.0
  %1580 = vmatpush1.msra.mxu0 0.0
  %1581 = vmatprep.subr.mxu0 0.0
  %1582 = vmatpush1.msra.mxu0 0.0
  %1583 = vmatprep.subr.mxu0 0.0
  %1584 = vmatpush1.msra.mxu0 0.0
  %1585 = vmatprep.subr.mxu0 0.0
  %1586 = vmatpush1.msra.mxu0 0.0
  %1587 = vmatprep.subr.mxu0 0.0
  %1588 = vmatpush1.msra.mxu0 0.0
  %1589 = vmatprep.subr.mxu0 0.0
  %1590 = vmatpush1.msra.mxu0 0.0
  %1591 = vmatprep.subr.mxu0 0.0
  %1592 = vmatpush1.msra.mxu0 0.0
  %1593 = vmatprep.subr.mxu0 0.0
  %1594 = vmatpush1.msra.mxu0 0.0
  %1595 = vmatprep.subr.mxu0 0.0
  %1596 = vmatpush1.msra.mxu0 0.0
  %1597 = vmatprep.subr.mxu0 0.0
  %1598 = vmatpush1.msra.mxu0 0.0
  %1599 = vmatprep.subr.mxu0 0.0
  %1600 = vmatpush1.msra.mxu0 0.0
  %1601 = vmatprep.subr.mxu0 0.0
  %1602 = vmatpush1.msra.mxu0 0.0
  %1603 = vmatprep.subr.mxu0 0.0
  %1604 = vmatpush1.msra.mxu0 0.0
  %1605 = vmatprep.mubr.f32.mxu0 0.0
  %1606 = vmatmul.mubr.f32.gmra.mrb[0].mxu0 %v1536
  %v1607 = vpop.f32.mrb[0].mxu0
  %v1608 = vadd.f32 0.0, %v1607
  %v1609 = vpop.f32.mrb[0].mxu0
  %1610 = vdwg.mxu0
  %s1611 = scalar_lea.vmem %s2, 34
  %1612 = vst.msk [vmem:[%s1611] sm:$0x3] %vm98, %v1608
  %s1613 = scalar_lea.vmem %s0, 36
  %v1614 = vld [vmem:[%s1613] sm:$0x3]
  %s1615 = scalar_lea.vmem %s1, 1152
  %v1616 = vld [vmem:[%s1615] sm:$0xff]
  %v1617 = vld [vmem:[%s1615 + $0x8] sm:$0xff]
  %v1618 = vld [vmem:[%s1615 + $0x10] sm:$0xff]
  %v1619 = vld [vmem:[%s1615 + $0x18] sm:$0xff]
  %v1620 = vld [vmem:[%s1615 + $0x20] sm:$0xff]
  %v1621 = vld [vmem:[%s1615 + $0x28] sm:$0xff]
  %v1622 = vld [vmem:[%s1615 + $0x30] sm:$0xff]
  %v1623 = vld [vmem:[%s1615 + $0x38] sm:$0xf]
  %v1625 = vsel %vm20, %v1614, 0
  %v1628 = vsel %vm24, %v1623, 0
  %1630 = vmatprep.subr.mxu0 0.0
  %1631 = vmatpush1.msra.mxu0 %v1616
  %1632 = vmatprep.subr.mxu0 0.0
  %1633 = vmatpush1.msra.mxu0 %v1617
  %1634 = vmatprep.subr.mxu0 0.0
  %1635 = vmatpush1.msra.mxu0 %v1618
  %1636 = vmatprep.subr.mxu0 0.0
  %1637 = vmatpush1.msra.mxu0 %v1619
  %1638 = vmatprep.subr.mxu0 0.0
  %1639 = vmatpush1.msra.mxu0 %v1620
  %1640 = vmatprep.subr.mxu0 0.0
  %1641 = vmatpush1.msra.mxu0 %v1621
  %1642 = vmatprep.subr.mxu0 0.0
  %1643 = vmatpush1.msra.mxu0 %v1622
  %1644 = vmatprep.subr.mxu0 0.0
  %1645 = vmatpush1.msra.mxu0 %v1628
  %1646 = vmatprep.subr.mxu0 0.0
  %1647 = vmatpush1.msra.mxu0 0.0
  %1648 = vmatprep.subr.mxu0 0.0
  %1649 = vmatpush1.msra.mxu0 0.0
  %1650 = vmatprep.subr.mxu0 0.0
  %1651 = vmatpush1.msra.mxu0 0.0
  %1652 = vmatprep.subr.mxu0 0.0
  %1653 = vmatpush1.msra.mxu0 0.0
  %1654 = vmatprep.subr.mxu0 0.0
  %1655 = vmatpush1.msra.mxu0 0.0
  %1656 = vmatprep.subr.mxu0 0.0
  %1657 = vmatpush1.msra.mxu0 0.0
  %1658 = vmatprep.subr.mxu0 0.0
  %1659 = vmatpush1.msra.mxu0 0.0
  %1660 = vmatprep.subr.mxu0 0.0
  %1661 = vmatpush1.msra.mxu0 0.0
  %1662 = vmatprep.subr.mxu0 0.0
  %1663 = vmatpush1.msra.mxu0 0.0
  %1664 = vmatprep.subr.mxu0 0.0
  %1665 = vmatpush1.msra.mxu0 0.0
  %1666 = vmatprep.subr.mxu0 0.0
  %1667 = vmatpush1.msra.mxu0 0.0
  %1668 = vmatprep.subr.mxu0 0.0
  %1669 = vmatpush1.msra.mxu0 0.0
  %1670 = vmatprep.subr.mxu0 0.0
  %1671 = vmatpush1.msra.mxu0 0.0
  %1672 = vmatprep.subr.mxu0 0.0
  %1673 = vmatpush1.msra.mxu0 0.0
  %1674 = vmatprep.subr.mxu0 0.0
  %1675 = vmatpush1.msra.mxu0 0.0
  %1676 = vmatprep.subr.mxu0 0.0
  %1677 = vmatpush1.msra.mxu0 0.0
  %1678 = vmatprep.subr.mxu0 0.0
  %1679 = vmatpush1.msra.mxu0 0.0
  %1680 = vmatprep.subr.mxu0 0.0
  %1681 = vmatpush1.msra.mxu0 0.0
  %1682 = vmatprep.subr.mxu0 0.0
  %1683 = vmatpush1.msra.mxu0 0.0
  %1684 = vmatprep.subr.mxu0 0.0
  %1685 = vmatpush1.msra.mxu0 0.0
  %1686 = vmatprep.subr.mxu0 0.0
  %1687 = vmatpush1.msra.mxu0 0.0
  %1688 = vmatprep.subr.mxu0 0.0
  %1689 = vmatpush1.msra.mxu0 0.0
  %1690 = vmatprep.subr.mxu0 0.0
  %1691 = vmatpush1.msra.mxu0 0.0
  %1692 = vmatprep.subr.mxu0 0.0
  %1693 = vmatpush1.msra.mxu0 0.0
  %1694 = vmatprep.mubr.f32.mxu0 0.0
  %1695 = vmatmul.mubr.f32.gmra.mrb[0].mxu0 %v1625
  %v1696 = vpop.f32.mrb[0].mxu0
  %v1697 = vadd.f32 0.0, %v1696
  %v1698 = vpop.f32.mrb[0].mxu0
  %1699 = vdwg.mxu0
  %s1700 = scalar_lea.vmem %s2, 36
  %1701 = vst.msk [vmem:[%s1700] sm:$0x3] %vm98, %v1697
  %s1702 = scalar_lea.vmem %s0, 38
  %v1703 = vld [vmem:[%s1702] sm:$0x3]
  %s1704 = scalar_lea.vmem %s1, 1216
  %v1705 = vld [vmem:[%s1704] sm:$0xff]
  %v1706 = vld [vmem:[%s1704 + $0x8] sm:$0xff]
  %v1707 = vld [vmem:[%s1704 + $0x10] sm:$0xff]
  %v1708 = vld [vmem:[%s1704 + $0x18] sm:$0xff]
  %v1709 = vld [vmem:[%s1704 + $0x20] sm:$0xff]
  %v1710 = vld [vmem:[%s1704 + $0x28] sm:$0xff]
  %v1711 = vld [vmem:[%s1704 + $0x30] sm:$0xff]
  %v1712 = vld [vmem:[%s1704 + $0x38] sm:$0xf]
  %v1714 = vsel %vm20, %v1703, 0
  %v1717 = vsel %vm24, %v1712, 0
  %1719 = vmatprep.subr.mxu0 0.0
  %1720 = vmatpush1.msra.mxu0 %v1705
  %1721 = vmatprep.subr.mxu0 0.0
  %1722 = vmatpush1.msra.mxu0 %v1706
  %1723 = vmatprep.subr.mxu0 0.0
  %1724 = vmatpush1.msra.mxu0 %v1707
  %1725 = vmatprep.subr.mxu0 0.0
  %1726 = vmatpush1.msra.mxu0 %v1708
  %1727 = vmatprep.subr.mxu0 0.0
  %1728 = vmatpush1.msra.mxu0 %v1709
  %1729 = vmatprep.subr.mxu0 0.0
  %1730 = vmatpush1.msra.mxu0 %v1710
  %1731 = vmatprep.subr.mxu0 0.0
  %1732 = vmatpush1.msra.mxu0 %v1711
  %1733 = vmatprep.subr.mxu0 0.0
  %1734 = vmatpush1.msra.mxu0 %v1717
  %1735 = vmatprep.subr.mxu0 0.0
  %1736 = vmatpush1.msra.mxu0 0.0
  %1737 = vmatprep.subr.mxu0 0.0
  %1738 = vmatpush1.msra.mxu0 0.0
  %1739 = vmatprep.subr.mxu0 0.0
  %1740 = vmatpush1.msra.mxu0 0.0
  %1741 = vmatprep.subr.mxu0 0.0
  %1742 = vmatpush1.msra.mxu0 0.0
  %1743 = vmatprep.subr.mxu0 0.0
  %1744 = vmatpush1.msra.mxu0 0.0
  %1745 = vmatprep.subr.mxu0 0.0
  %1746 = vmatpush1.msra.mxu0 0.0
  %1747 = vmatprep.subr.mxu0 0.0
  %1748 = vmatpush1.msra.mxu0 0.0
  %1749 = vmatprep.subr.mxu0 0.0
  %1750 = vmatpush1.msra.mxu0 0.0
  %1751 = vmatprep.subr.mxu0 0.0
  %1752 = vmatpush1.msra.mxu0 0.0
  %1753 = vmatprep.subr.mxu0 0.0
  %1754 = vmatpush1.msra.mxu0 0.0
  %1755 = vmatprep.subr.mxu0 0.0
  %1756 = vmatpush1.msra.mxu0 0.0
  %1757 = vmatprep.subr.mxu0 0.0
  %1758 = vmatpush1.msra.mxu0 0.0
  %1759 = vmatprep.subr.mxu0 0.0
  %1760 = vmatpush1.msra.mxu0 0.0
  %1761 = vmatprep.subr.mxu0 0.0
  %1762 = vmatpush1.msra.mxu0 0.0
  %1763 = vmatprep.subr.mxu0 0.0
  %1764 = vmatpush1.msra.mxu0 0.0
  %1765 = vmatprep.subr.mxu0 0.0
  %1766 = vmatpush1.msra.mxu0 0.0
  %1767 = vmatprep.subr.mxu0 0.0
  %1768 = vmatpush1.msra.mxu0 0.0
  %1769 = vmatprep.subr.mxu0 0.0
  %1770 = vmatpush1.msra.mxu0 0.0
  %1771 = vmatprep.subr.mxu0 0.0
  %1772 = vmatpush1.msra.mxu0 0.0
  %1773 = vmatprep.subr.mxu0 0.0
  %1774 = vmatpush1.msra.mxu0 0.0
  %1775 = vmatprep.subr.mxu0 0.0
  %1776 = vmatpush1.msra.mxu0 0.0
  %1777 = vmatprep.subr.mxu0 0.0
  %1778 = vmatpush1.msra.mxu0 0.0
  %1779 = vmatprep.subr.mxu0 0.0
  %1780 = vmatpush1.msra.mxu0 0.0
  %1781 = vmatprep.subr.mxu0 0.0
  %1782 = vmatpush1.msra.mxu0 0.0
  %1783 = vmatprep.mubr.f32.mxu0 0.0
  %1784 = vmatmul.mubr.f32.gmra.mrb[0].mxu0 %v1714
  %v1785 = vpop.f32.mrb[0].mxu0
  %v1786 = vadd.f32 0.0, %v1785
  %v1787 = vpop.f32.mrb[0].mxu0
  %1788 = vdwg.mxu0
  %s1789 = scalar_lea.vmem %s2, 38
  %1790 = vst.msk [vmem:[%s1789] sm:$0x3] %vm98, %v1786
  %s1791 = scalar_lea.vmem %s0, 40
  %v1792 = vld [vmem:[%s1791] sm:$0x3]
  %s1793 = scalar_lea.vmem %s1, 1280
  %v1794 = vld [vmem:[%s1793] sm:$0xff]
  %v1795 = vld [vmem:[%s1793 + $0x8] sm:$0xff]
  %v1796 = vld [vmem:[%s1793 + $0x10] sm:$0xff]
  %v1797 = vld [vmem:[%s1793 + $0x18] sm:$0xff]
  %v1798 = vld [vmem:[%s1793 + $0x20] sm:$0xff]
  %v1799 = vld [vmem:[%s1793 + $0x28] sm:$0xff]
  %v1800 = vld [vmem:[%s1793 + $0x30] sm:$0xff]
  %v1801 = vld [vmem:[%s1793 + $0x38] sm:$0xf]
  %v1803 = vsel %vm20, %v1792, 0
  %v1806 = vsel %vm24, %v1801, 0
  %1808 = vmatprep.subr.mxu0 0.0
  %1809 = vmatpush1.msra.mxu0 %v1794
  %1810 = vmatprep.subr.mxu0 0.0
  %1811 = vmatpush1.msra.mxu0 %v1795
  %1812 = vmatprep.subr.mxu0 0.0
  %1813 = vmatpush1.msra.mxu0 %v1796
  %1814 = vmatprep.subr.mxu0 0.0
  %1815 = vmatpush1.msra.mxu0 %v1797
  %1816 = vmatprep.subr.mxu0 0.0
  %1817 = vmatpush1.msra.mxu0 %v1798
  %1818 = vmatprep.subr.mxu0 0.0
  %1819 = vmatpush1.msra.mxu0 %v1799
  %1820 = vmatprep.subr.mxu0 0.0
  %1821 = vmatpush1.msra.mxu0 %v1800
  %1822 = vmatprep.subr.mxu0 0.0
  %1823 = vmatpush1.msra.mxu0 %v1806
  %1824 = vmatprep.subr.mxu0 0.0
  %1825 = vmatpush1.msra.mxu0 0.0
  %1826 = vmatprep.subr.mxu0 0.0
  %1827 = vmatpush1.msra.mxu0 0.0
  %1828 = vmatprep.subr.mxu0 0.0
  %1829 = vmatpush1.msra.mxu0 0.0
  %1830 = vmatprep.subr.mxu0 0.0
  %1831 = vmatpush1.msra.mxu0 0.0
  %1832 = vmatprep.subr.mxu0 0.0
  %1833 = vmatpush1.msra.mxu0 0.0
  %1834 = vmatprep.subr.mxu0 0.0
  %1835 = vmatpush1.msra.mxu0 0.0
  %1836 = vmatprep.subr.mxu0 0.0
  %1837 = vmatpush1.msra.mxu0 0.0
  %1838 = vmatprep.subr.mxu0 0.0
  %1839 = vmatpush1.msra.mxu0 0.0
  %1840 = vmatprep.subr.mxu0 0.0
  %1841 = vmatpush1.msra.mxu0 0.0
  %1842 = vmatprep.subr.mxu0 0.0
  %1843 = vmatpush1.msra.mxu0 0.0
  %1844 = vmatprep.subr.mxu0 0.0
  %1845 = vmatpush1.msra.mxu0 0.0
  %1846 = vmatprep.subr.mxu0 0.0
  %1847 = vmatpush1.msra.mxu0 0.0
  %1848 = vmatprep.subr.mxu0 0.0
  %1849 = vmatpush1.msra.mxu0 0.0
  %1850 = vmatprep.subr.mxu0 0.0
  %1851 = vmatpush1.msra.mxu0 0.0
  %1852 = vmatprep.subr.mxu0 0.0
  %1853 = vmatpush1.msra.mxu0 0.0
  %1854 = vmatprep.subr.mxu0 0.0
  %1855 = vmatpush1.msra.mxu0 0.0
  %1856 = vmatprep.subr.mxu0 0.0
  %1857 = vmatpush1.msra.mxu0 0.0
  %1858 = vmatprep.subr.mxu0 0.0
  %1859 = vmatpush1.msra.mxu0 0.0
  %1860 = vmatprep.subr.mxu0 0.0
  %1861 = vmatpush1.msra.mxu0 0.0
  %1862 = vmatprep.subr.mxu0 0.0
  %1863 = vmatpush1.msra.mxu0 0.0
  %1864 = vmatprep.subr.mxu0 0.0
  %1865 = vmatpush1.msra.mxu0 0.0
  %1866 = vmatprep.subr.mxu0 0.0
  %1867 = vmatpush1.msra.mxu0 0.0
  %1868 = vmatprep.subr.mxu0 0.0
  %1869 = vmatpush1.msra.mxu0 0.0
  %1870 = vmatprep.subr.mxu0 0.0
  %1871 = vmatpush1.msra.mxu0 0.0
  %1872 = vmatprep.mubr.f32.mxu0 0.0
  %1873 = vmatmul.mubr.f32.gmra.mrb[0].mxu0 %v1803
  %v1874 = vpop.f32.mrb[0].mxu0
  %v1875 = vadd.f32 0.0, %v1874
  %v1876 = vpop.f32.mrb[0].mxu0
  %1877 = vdwg.mxu0
  %s1878 = scalar_lea.vmem %s2, 40
  %1879 = vst.msk [vmem:[%s1878] sm:$0x3] %vm98, %v1875
  %s1880 = scalar_lea.vmem %s0, 42
  %v1881 = vld [vmem:[%s1880] sm:$0x3]
  %s1882 = scalar_lea.vmem %s1, 1344
  %v1883 = vld [vmem:[%s1882] sm:$0xff]
  %v1884 = vld [vmem:[%s1882 + $0x8] sm:$0xff]
  %v1885 = vld [vmem:[%s1882 + $0x10] sm:$0xff]
  %v1886 = vld [vmem:[%s1882 + $0x18] sm:$0xff]
  %v1887 = vld [vmem:[%s1882 + $0x20] sm:$0xff]
  %v1888 = vld [vmem:[%s1882 + $0x28] sm:$0xff]
  %v1889 = vld [vmem:[%s1882 + $0x30] sm:$0xff]
  %v1890 = vld [vmem:[%s1882 + $0x38] sm:$0xf]
  %v1892 = vsel %vm20, %v1881, 0
  %v1895 = vsel %vm24, %v1890, 0
  %1897 = vmatprep.subr.mxu0 0.0
  %1898 = vmatpush1.msra.mxu0 %v1883
  %1899 = vmatprep.subr.mxu0 0.0
  %1900 = vmatpush1.msra.mxu0 %v1884
  %1901 = vmatprep.subr.mxu0 0.0
  %1902 = vmatpush1.msra.mxu0 %v1885
  %1903 = vmatprep.subr.mxu0 0.0
  %1904 = vmatpush1.msra.mxu0 %v1886
  %1905 = vmatprep.subr.mxu0 0.0
  %1906 = vmatpush1.msra.mxu0 %v1887
  %1907 = vmatprep.subr.mxu0 0.0
  %1908 = vmatpush1.msra.mxu0 %v1888
  %1909 = vmatprep.subr.mxu0 0.0
  %1910 = vmatpush1.msra.mxu0 %v1889
  %1911 = vmatprep.subr.mxu0 0.0
  %1912 = vmatpush1.msra.mxu0 %v1895
  %1913 = vmatprep.subr.mxu0 0.0
  %1914 = vmatpush1.msra.mxu0 0.0
  %1915 = vmatprep.subr.mxu0 0.0
  %1916 = vmatpush1.msra.mxu0 0.0
  %1917 = vmatprep.subr.mxu0 0.0
  %1918 = vmatpush1.msra.mxu0 0.0
  %1919 = vmatprep.subr.mxu0 0.0
  %1920 = vmatpush1.msra.mxu0 0.0
  %1921 = vmatprep.subr.mxu0 0.0
  %1922 = vmatpush1.msra.mxu0 0.0
  %1923 = vmatprep.subr.mxu0 0.0
  %1924 = vmatpush1.msra.mxu0 0.0
  %1925 = vmatprep.subr.mxu0 0.0
  %1926 = vmatpush1.msra.mxu0 0.0
  %1927 = vmatprep.subr.mxu0 0.0
  %1928 = vmatpush1.msra.mxu0 0.0
  %1929 = vmatprep.subr.mxu0 0.0
  %1930 = vmatpush1.msra.mxu0 0.0
  %1931 = vmatprep.subr.mxu0 0.0
  %1932 = vmatpush1.msra.mxu0 0.0
  %1933 = vmatprep.subr.mxu0 0.0
  %1934 = vmatpush1.msra.mxu0 0.0
  %1935 = vmatprep.subr.mxu0 0.0
  %1936 = vmatpush1.msra.mxu0 0.0
  %1937 = vmatprep.subr.mxu0 0.0
  %1938 = vmatpush1.msra.mxu0 0.0
  %1939 = vmatprep.subr.mxu0 0.0
  %1940 = vmatpush1.msra.mxu0 0.0
  %1941 = vmatprep.subr.mxu0 0.0
  %1942 = vmatpush1.msra.mxu0 0.0
  %1943 = vmatprep.subr.mxu0 0.0
  %1944 = vmatpush1.msra.mxu0 0.0
  %1945 = vmatprep.subr.mxu0 0.0
  %1946 = vmatpush1.msra.mxu0 0.0
  %1947 = vmatprep.subr.mxu0 0.0
  %1948 = vmatpush1.msra.mxu0 0.0
  %1949 = vmatprep.subr.mxu0 0.0
  %1950 = vmatpush1.msra.mxu0 0.0
  %1951 = vmatprep.subr.mxu0 0.0
  %1952 = vmatpush1.msra.mxu0 0.0
  %1953 = vmatprep.subr.mxu0 0.0
  %1954 = vmatpush1.msra.mxu0 0.0
  %1955 = vmatprep.subr.mxu0 0.0
  %1956 = vmatpush1.msra.mxu0 0.0
  %1957 = vmatprep.subr.mxu0 0.0
  %1958 = vmatpush1.msra.mxu0 0.0
  %1959 = vmatprep.subr.mxu0 0.0
  %1960 = vmatpush1.msra.mxu0 0.0
  %1961 = vmatprep.mubr.f32.mxu0 0.0
  %1962 = vmatmul.mubr.f32.gmra.mrb[0].mxu0 %v1892
  %v1963 = vpop.f32.mrb[0].mxu0
  %v1964 = vadd.f32 0.0, %v1963
  %v1965 = vpop.f32.mrb[0].mxu0
  %1966 = vdwg.mxu0
  %s1967 = scalar_lea.vmem %s2, 42
  %1968 = vst.msk [vmem:[%s1967] sm:$0x3] %vm98, %v1964
  %s1969 = scalar_lea.vmem %s0, 44
  %v1970 = vld [vmem:[%s1969] sm:$0x3]
  %s1971 = scalar_lea.vmem %s1, 1408
  %v1972 = vld [vmem:[%s1971] sm:$0xff]
  %v1973 = vld [vmem:[%s1971 + $0x8] sm:$0xff]
  %v1974 = vld [vmem:[%s1971 + $0x10] sm:$0xff]
  %v1975 = vld [vmem:[%s1971 + $0x18] sm:$0xff]
  %v1976 = vld [vmem:[%s1971 + $0x20] sm:$0xff]
  %v1977 = vld [vmem:[%s1971 + $0x28] sm:$0xff]
  %v1978 = vld [vmem:[%s1971 + $0x30] sm:$0xff]
  %v1979 = vld [vmem:[%s1971 + $0x38] sm:$0xf]
  %v1981 = vsel %vm20, %v1970, 0
  %v1984 = vsel %vm24, %v1979, 0
  %1986 = vmatprep.subr.mxu0 0.0
  %1987 = vmatpush1.msra.mxu0 %v1972
  %1988 = vmatprep.subr.mxu0 0.0
  %1989 = vmatpush1.msra.mxu0 %v1973
  %1990 = vmatprep.subr.mxu0 0.0
  %1991 = vmatpush1.msra.mxu0 %v1974
  %1992 = vmatprep.subr.mxu0 0.0
  %1993 = vmatpush1.msra.mxu0 %v1975
  %1994 = vmatprep.subr.mxu0 0.0
  %1995 = vmatpush1.msra.mxu0 %v1976
  %1996 = vmatprep.subr.mxu0 0.0
  %1997 = vmatpush1.msra.mxu0 %v1977
  %1998 = vmatprep.subr.mxu0 0.0
  %1999 = vmatpush1.msra.mxu0 %v1978
  %2000 = vmatprep.subr.mxu0 0.0
  %2001 = vmatpush1.msra.mxu0 %v1984
  %2002 = vmatprep.subr.mxu0 0.0
  %2003 = vmatpush1.msra.mxu0 0.0
  %2004 = vmatprep.subr.mxu0 0.0
  %2005 = vmatpush1.msra.mxu0 0.0
  %2006 = vmatprep.subr.mxu0 0.0
  %2007 = vmatpush1.msra.mxu0 0.0
  %2008 = vmatprep.subr.mxu0 0.0
  %2009 = vmatpush1.msra.mxu0 0.0
  %2010 = vmatprep.subr.mxu0 0.0
  %2011 = vmatpush1.msra.mxu0 0.0
  %2012 = vmatprep.subr.mxu0 0.0
  %2013 = vmatpush1.msra.mxu0 0.0
  %2014 = vmatprep.subr.mxu0 0.0
  %2015 = vmatpush1.msra.mxu0 0.0
  %2016 = vmatprep.subr.mxu0 0.0
  %2017 = vmatpush1.msra.mxu0 0.0
  %2018 = vmatprep.subr.mxu0 0.0
  %2019 = vmatpush1.msra.mxu0 0.0
  %2020 = vmatprep.subr.mxu0 0.0
  %2021 = vmatpush1.msra.mxu0 0.0
  %2022 = vmatprep.subr.mxu0 0.0
  %2023 = vmatpush1.msra.mxu0 0.0
  %2024 = vmatprep.subr.mxu0 0.0
  %2025 = vmatpush1.msra.mxu0 0.0
  %2026 = vmatprep.subr.mxu0 0.0
  %2027 = vmatpush1.msra.mxu0 0.0
  %2028 = vmatprep.subr.mxu0 0.0
  %2029 = vmatpush1.msra.mxu0 0.0
  %2030 = vmatprep.subr.mxu0 0.0
  %2031 = vmatpush1.msra.mxu0 0.0
  %2032 = vmatprep.subr.mxu0 0.0
  %2033 = vmatpush1.msra.mxu0 0.0
  %2034 = vmatprep.subr.mxu0 0.0
  %2035 = vmatpush1.msra.mxu0 0.0
  %2036 = vmatprep.subr.mxu0 0.0
  %2037 = vmatpush1.msra.mxu0 0.0
  %2038 = vmatprep.subr.mxu0 0.0
  %2039 = vmatpush1.msra.mxu0 0.0
  %2040 = vmatprep.subr.mxu0 0.0
  %2041 = vmatpush1.msra.mxu0 0.0
  %2042 = vmatprep.subr.mxu0 0.0
  %2043 = vmatpush1.msra.mxu0 0.0
  %2044 = vmatprep.subr.mxu0 0.0
  %2045 = vmatpush1.msra.mxu0 0.0
  %2046 = vmatprep.subr.mxu0 0.0
  %2047 = vmatpush1.msra.mxu0 0.0
  %2048 = vmatprep.subr.mxu0 0.0
  %2049 = vmatpush1.msra.mxu0 0.0
  %2050 = vmatprep.mubr.f32.mxu0 0.0
  %2051 = vmatmul.mubr.f32.gmra.mrb[0].mxu0 %v1981
  %v2052 = vpop.f32.mrb[0].mxu0
  %v2053 = vadd.f32 0.0, %v2052
  %v2054 = vpop.f32.mrb[0].mxu0
  %2055 = vdwg.mxu0
  %s2056 = scalar_lea.vmem %s2, 44
  %2057 = vst.msk [vmem:[%s2056] sm:$0x3] %vm98, %v2053
  %s2058 = scalar_lea.vmem %s0, 46
  %v2059 = vld [vmem:[%s2058] sm:$0x3]
  %s2060 = scalar_lea.vmem %s1, 1472
  %v2061 = vld [vmem:[%s2060] sm:$0xff]
  %v2062 = vld [vmem:[%s2060 + $0x8] sm:$0xff]
  %v2063 = vld [vmem:[%s2060 + $0x10] sm:$0xff]
  %v2064 = vld [vmem:[%s2060 + $0x18] sm:$0xff]
  %v2065 = vld [vmem:[%s2060 + $0x20] sm:$0xff]
  %v2066 = vld [vmem:[%s2060 + $0x28] sm:$0xff]
  %v2067 = vld [vmem:[%s2060 + $0x30] sm:$0xff]
  %v2068 = vld [vmem:[%s2060 + $0x38] sm:$0xf]
  %v2070 = vsel %vm20, %v2059, 0
  %v2073 = vsel %vm24, %v2068, 0
  %2075 = vmatprep.subr.mxu0 0.0
  %2076 = vmatpush1.msra.mxu0 %v2061
  %2077 = vmatprep.subr.mxu0 0.0
  %2078 = vmatpush1.msra.mxu0 %v2062
  %2079 = vmatprep.subr.mxu0 0.0
  %2080 = vmatpush1.msra.mxu0 %v2063
  %2081 = vmatprep.subr.mxu0 0.0
  %2082 = vmatpush1.msra.mxu0 %v2064
  %2083 = vmatprep.subr.mxu0 0.0
  %2084 = vmatpush1.msra.mxu0 %v2065
  %2085 = vmatprep.subr.mxu0 0.0
  %2086 = vmatpush1.msra.mxu0 %v2066
  %2087 = vmatprep.subr.mxu0 0.0
  %2088 = vmatpush1.msra.mxu0 %v2067
  %2089 = vmatprep.subr.mxu0 0.0
  %2090 = vmatpush1.msra.mxu0 %v2073
  %2091 = vmatprep.subr.mxu0 0.0
  %2092 = vmatpush1.msra.mxu0 0.0
  %2093 = vmatprep.subr.mxu0 0.0
  %2094 = vmatpush1.msra.mxu0 0.0
  %2095 = vmatprep.subr.mxu0 0.0
  %2096 = vmatpush1.msra.mxu0 0.0
  %2097 = vmatprep.subr.mxu0 0.0
  %2098 = vmatpush1.msra.mxu0 0.0
  %2099 = vmatprep.subr.mxu0 0.0
  %2100 = vmatpush1.msra.mxu0 0.0
  %2101 = vmatprep.subr.mxu0 0.0
  %2102 = vmatpush1.msra.mxu0 0.0
  %2103 = vmatprep.subr.mxu0 0.0
  %2104 = vmatpush1.msra.mxu0 0.0
  %2105 = vmatprep.subr.mxu0 0.0
  %2106 = vmatpush1.msra.mxu0 0.0
  %2107 = vmatprep.subr.mxu0 0.0
  %2108 = vmatpush1.msra.mxu0 0.0
  %2109 = vmatprep.subr.mxu0 0.0
  %2110 = vmatpush1.msra.mxu0 0.0
  %2111 = vmatprep.subr.mxu0 0.0
  %2112 = vmatpush1.msra.mxu0 0.0
  %2113 = vmatprep.subr.mxu0 0.0
  %2114 = vmatpush1.msra.mxu0 0.0
  %2115 = vmatprep.subr.mxu0 0.0
  %2116 = vmatpush1.msra.mxu0 0.0
  %2117 = vmatprep.subr.mxu0 0.0
  %2118 = vmatpush1.msra.mxu0 0.0
  %2119 = vmatprep.subr.mxu0 0.0
  %2120 = vmatpush1.msra.mxu0 0.0
  %2121 = vmatprep.subr.mxu0 0.0
  %2122 = vmatpush1.msra.mxu0 0.0
  %2123 = vmatprep.subr.mxu0 0.0
  %2124 = vmatpush1.msra.mxu0 0.0
  %2125 = vmatprep.subr.mxu0 0.0
  %2126 = vmatpush1.msra.mxu0 0.0
  %2127 = vmatprep.subr.mxu0 0.0
  %2128 = vmatpush1.msra.mxu0 0.0
  %2129 = vmatprep.subr.mxu0 0.0
  %2130 = vmatpush1.msra.mxu0 0.0
  %2131 = vmatprep.subr.mxu0 0.0
  %2132 = vmatpush1.msra.mxu0 0.0
  %2133 = vmatprep.subr.mxu0 0.0
  %2134 = vmatpush1.msra.mxu0 0.0
  %2135 = vmatprep.subr.mxu0 0.0
  %2136 = vmatpush1.msra.mxu0 0.0
  %2137 = vmatprep.subr.mxu0 0.0
  %2138 = vmatpush1.msra.mxu0 0.0
  %2139 = vmatprep.mubr.f32.mxu0 0.0
  %2140 = vmatmul.mubr.f32.gmra.mrb[0].mxu0 %v2070
  %v2141 = vpop.f32.mrb[0].mxu0
  %v2142 = vadd.f32 0.0, %v2141
  %v2143 = vpop.f32.mrb[0].mxu0
  %2144 = vdwg.mxu0
  %s2145 = scalar_lea.vmem %s2, 46
  %2146 = vst.msk [vmem:[%s2145] sm:$0x3] %vm98, %v2142
  %s2147 = scalar_lea.vmem %s0, 48
  %v2148 = vld [vmem:[%s2147] sm:$0x3]
  %s2149 = scalar_lea.vmem %s1, 1536
  %v2150 = vld [vmem:[%s2149] sm:$0xff]
  %v2151 = vld [vmem:[%s2149 + $0x8] sm:$0xff]
  %v2152 = vld [vmem:[%s2149 + $0x10] sm:$0xff]
  %v2153 = vld [vmem:[%s2149 + $0x18] sm:$0xff]
  %v2154 = vld [vmem:[%s2149 + $0x20] sm:$0xff]
  %v2155 = vld [vmem:[%s2149 + $0x28] sm:$0xff]
  %v2156 = vld [vmem:[%s2149 + $0x30] sm:$0xff]
  %v2157 = vld [vmem:[%s2149 + $0x38] sm:$0xf]
  %v2159 = vsel %vm20, %v2148, 0
  %v2162 = vsel %vm24, %v2157, 0
  %2164 = vmatprep.subr.mxu0 0.0
  %2165 = vmatpush1.msra.mxu0 %v2150
  %2166 = vmatprep.subr.mxu0 0.0
  %2167 = vmatpush1.msra.mxu0 %v2151
  %2168 = vmatprep.subr.mxu0 0.0
  %2169 = vmatpush1.msra.mxu0 %v2152
  %2170 = vmatprep.subr.mxu0 0.0
  %2171 = vmatpush1.msra.mxu0 %v2153
  %2172 = vmatprep.subr.mxu0 0.0
  %2173 = vmatpush1.msra.mxu0 %v2154
  %2174 = vmatprep.subr.mxu0 0.0
  %2175 = vmatpush1.msra.mxu0 %v2155
  %2176 = vmatprep.subr.mxu0 0.0
  %2177 = vmatpush1.msra.mxu0 %v2156
  %2178 = vmatprep.subr.mxu0 0.0
  %2179 = vmatpush1.msra.mxu0 %v2162
  %2180 = vmatprep.subr.mxu0 0.0
  %2181 = vmatpush1.msra.mxu0 0.0
  %2182 = vmatprep.subr.mxu0 0.0
  %2183 = vmatpush1.msra.mxu0 0.0
  %2184 = vmatprep.subr.mxu0 0.0
  %2185 = vmatpush1.msra.mxu0 0.0
  %2186 = vmatprep.subr.mxu0 0.0
  %2187 = vmatpush1.msra.mxu0 0.0
  %2188 = vmatprep.subr.mxu0 0.0
  %2189 = vmatpush1.msra.mxu0 0.0
  %2190 = vmatprep.subr.mxu0 0.0
  %2191 = vmatpush1.msra.mxu0 0.0
  %2192 = vmatprep.subr.mxu0 0.0
  %2193 = vmatpush1.msra.mxu0 0.0
  %2194 = vmatprep.subr.mxu0 0.0
  %2195 = vmatpush1.msra.mxu0 0.0
  %2196 = vmatprep.subr.mxu0 0.0
  %2197 = vmatpush1.msra.mxu0 0.0
  %2198 = vmatprep.subr.mxu0 0.0
  %2199 = vmatpush1.msra.mxu0 0.0
  %2200 = vmatprep.subr.mxu0 0.0
  %2201 = vmatpush1.msra.mxu0 0.0
  %2202 = vmatprep.subr.mxu0 0.0
  %2203 = vmatpush1.msra.mxu0 0.0
  %2204 = vmatprep.subr.mxu0 0.0
  %2205 = vmatpush1.msra.mxu0 0.0
  %2206 = vmatprep.subr.mxu0 0.0
  %2207 = vmatpush1.msra.mxu0 0.0
  %2208 = vmatprep.subr.mxu0 0.0
  %2209 = vmatpush1.msra.mxu0 0.0
  %2210 = vmatprep.subr.mxu0 0.0
  %2211 = vmatpush1.msra.mxu0 0.0
  %2212 = vmatprep.subr.mxu0 0.0
  %2213 = vmatpush1.msra.mxu0 0.0
  %2214 = vmatprep.subr.mxu0 0.0
  %2215 = vmatpush1.msra.mxu0 0.0
  %2216 = vmatprep.subr.mxu0 0.0
  %2217 = vmatpush1.msra.mxu0 0.0
  %2218 = vmatprep.subr.mxu0 0.0
  %2219 = vmatpush1.msra.mxu0 0.0
  %2220 = vmatprep.subr.mxu0 0.0
  %2221 = vmatpush1.msra.mxu0 0.0
  %2222 = vmatprep.subr.mxu0 0.0
  %2223 = vmatpush1.msra.mxu0 0.0
  %2224 = vmatprep.subr.mxu0 0.0
  %2225 = vmatpush1.msra.mxu0 0.0
  %2226 = vmatprep.subr.mxu0 0.0
  %2227 = vmatpush1.msra.mxu0 0.0
  %2228 = vmatprep.mubr.f32.mxu0 0.0
  %2229 = vmatmul.mubr.f32.gmra.mrb[0].mxu0 %v2159
  %v2230 = vpop.f32.mrb[0].mxu0
  %v2231 = vadd.f32 0.0, %v2230
  %v2232 = vpop.f32.mrb[0].mxu0
  %2233 = vdwg.mxu0
  %s2234 = scalar_lea.vmem %s2, 48
  %2235 = vst.msk [vmem:[%s2234] sm:$0x3] %vm98, %v2231
  %s2236 = scalar_lea.vmem %s0, 50
  %v2237 = vld [vmem:[%s2236] sm:$0x3]
  %s2238 = scalar_lea.vmem %s1, 1600
  %v2239 = vld [vmem:[%s2238] sm:$0xff]
  %v2240 = vld [vmem:[%s2238 + $0x8] sm:$0xff]
  %v2241 = vld [vmem:[%s2238 + $0x10] sm:$0xff]
  %v2242 = vld [vmem:[%s2238 + $0x18] sm:$0xff]
  %v2243 = vld [vmem:[%s2238 + $0x20] sm:$0xff]
  %v2244 = vld [vmem:[%s2238 + $0x28] sm:$0xff]
  %v2245 = vld [vmem:[%s2238 + $0x30] sm:$0xff]
  %v2246 = vld [vmem:[%s2238 + $0x38] sm:$0xf]
  %v2248 = vsel %vm20, %v2237, 0
  %v2251 = vsel %vm24, %v2246, 0
  %2253 = vmatprep.subr.mxu0 0.0
  %2254 = vmatpush1.msra.mxu0 %v2239
  %2255 = vmatprep.subr.mxu0 0.0
  %2256 = vmatpush1.msra.mxu0 %v2240
  %2257 = vmatprep.subr.mxu0 0.0
  %2258 = vmatpush1.msra.mxu0 %v2241
  %2259 = vmatprep.subr.mxu0 0.0
  %2260 = vmatpush1.msra.mxu0 %v2242
  %2261 = vmatprep.subr.mxu0 0.0
  %2262 = vmatpush1.msra.mxu0 %v2243
  %2263 = vmatprep.subr.mxu0 0.0
  %2264 = vmatpush1.msra.mxu0 %v2244
  %2265 = vmatprep.subr.mxu0 0.0
  %2266 = vmatpush1.msra.mxu0 %v2245
  %2267 = vmatprep.subr.mxu0 0.0
  %2268 = vmatpush1.msra.mxu0 %v2251
  %2269 = vmatprep.subr.mxu0 0.0
  %2270 = vmatpush1.msra.mxu0 0.0
  %2271 = vmatprep.subr.mxu0 0.0
  %2272 = vmatpush1.msra.mxu0 0.0
  %2273 = vmatprep.subr.mxu0 0.0
  %2274 = vmatpush1.msra.mxu0 0.0
  %2275 = vmatprep.subr.mxu0 0.0
  %2276 = vmatpush1.msra.mxu0 0.0
  %2277 = vmatprep.subr.mxu0 0.0
  %2278 = vmatpush1.msra.mxu0 0.0
  %2279 = vmatprep.subr.mxu0 0.0
  %2280 = vmatpush1.msra.mxu0 0.0
  %2281 = vmatprep.subr.mxu0 0.0
  %2282 = vmatpush1.msra.mxu0 0.0
  %2283 = vmatprep.subr.mxu0 0.0
  %2284 = vmatpush1.msra.mxu0 0.0
  %2285 = vmatprep.subr.mxu0 0.0
  %2286 = vmatpush1.msra.mxu0 0.0
  %2287 = vmatprep.subr.mxu0 0.0
  %2288 = vmatpush1.msra.mxu0 0.0
  %2289 = vmatprep.subr.mxu0 0.0
  %2290 = vmatpush1.msra.mxu0 0.0
  %2291 = vmatprep.subr.mxu0 0.0
  %2292 = vmatpush1.msra.mxu0 0.0
  %2293 = vmatprep.subr.mxu0 0.0
  %2294 = vmatpush1.msra.mxu0 0.0
  %2295 = vmatprep.subr.mxu0 0.0
  %2296 = vmatpush1.msra.mxu0 0.0
  %2297 = vmatprep.subr.mxu0 0.0
  %2298 = vmatpush1.msra.mxu0 0.0
  %2299 = vmatprep.subr.mxu0 0.0
  %2300 = vmatpush1.msra.mxu0 0.0
  %2301 = vmatprep.subr.mxu0 0.0
  %2302 = vmatpush1.msra.mxu0 0.0
  %2303 = vmatprep.subr.mxu0 0.0
  %2304 = vmatpush1.msra.mxu0 0.0
  %2305 = vmatprep.subr.mxu0 0.0
  %2306 = vmatpush1.msra.mxu0 0.0
  %2307 = vmatprep.subr.mxu0 0.0
  %2308 = vmatpush1.msra.mxu0 0.0
  %2309 = vmatprep.subr.mxu0 0.0
  %2310 = vmatpush1.msra.mxu0 0.0
  %2311 = vmatprep.subr.mxu0 0.0
  %2312 = vmatpush1.msra.mxu0 0.0
  %2313 = vmatprep.subr.mxu0 0.0
  %2314 = vmatpush1.msra.mxu0 0.0
  %2315 = vmatprep.subr.mxu0 0.0
  %2316 = vmatpush1.msra.mxu0 0.0
  %2317 = vmatprep.mubr.f32.mxu0 0.0
  %2318 = vmatmul.mubr.f32.gmra.mrb[0].mxu0 %v2248
  %v2319 = vpop.f32.mrb[0].mxu0
  %v2320 = vadd.f32 0.0, %v2319
  %v2321 = vpop.f32.mrb[0].mxu0
  %2322 = vdwg.mxu0
  %s2323 = scalar_lea.vmem %s2, 50
  %2324 = vst.msk [vmem:[%s2323] sm:$0x3] %vm98, %v2320
  %s2325 = scalar_lea.vmem %s0, 52
  %v2326 = vld [vmem:[%s2325] sm:$0x3]
  %s2327 = scalar_lea.vmem %s1, 1664
  %v2328 = vld [vmem:[%s2327] sm:$0xff]
  %v2329 = vld [vmem:[%s2327 + $0x8] sm:$0xff]
  %v2330 = vld [vmem:[%s2327 + $0x10] sm:$0xff]
  %v2331 = vld [vmem:[%s2327 + $0x18] sm:$0xff]
  %v2332 = vld [vmem:[%s2327 + $0x20] sm:$0xff]
  %v2333 = vld [vmem:[%s2327 + $0x28] sm:$0xff]
  %v2334 = vld [vmem:[%s2327 + $0x30] sm:$0xff]
  %v2335 = vld [vmem:[%s2327 + $0x38] sm:$0xf]
  %v2337 = vsel %vm20, %v2326, 0
  %v2340 = vsel %vm24, %v2335, 0
  %2342 = vmatprep.subr.mxu0 0.0
  %2343 = vmatpush1.msra.mxu0 %v2328
  %2344 = vmatprep.subr.mxu0 0.0
  %2345 = vmatpush1.msra.mxu0 %v2329
  %2346 = vmatprep.subr.mxu0 0.0
  %2347 = vmatpush1.msra.mxu0 %v2330
  %2348 = vmatprep.subr.mxu0 0.0
  %2349 = vmatpush1.msra.mxu0 %v2331
  %2350 = vmatprep.subr.mxu0 0.0
  %2351 = vmatpush1.msra.mxu0 %v2332
  %2352 = vmatprep.subr.mxu0 0.0
  %2353 = vmatpush1.msra.mxu0 %v2333
  %2354 = vmatprep.subr.mxu0 0.0
  %2355 = vmatpush1.msra.mxu0 %v2334
  %2356 = vmatprep.subr.mxu0 0.0
  %2357 = vmatpush1.msra.mxu0 %v2340
  %2358 = vmatprep.subr.mxu0 0.0
  %2359 = vmatpush1.msra.mxu0 0.0
  %2360 = vmatprep.subr.mxu0 0.0
  %2361 = vmatpush1.msra.mxu0 0.0
  %2362 = vmatprep.subr.mxu0 0.0
  %2363 = vmatpush1.msra.mxu0 0.0
  %2364 = vmatprep.subr.mxu0 0.0
  %2365 = vmatpush1.msra.mxu0 0.0
  %2366 = vmatprep.subr.mxu0 0.0
  %2367 = vmatpush1.msra.mxu0 0.0
  %2368 = vmatprep.subr.mxu0 0.0
  %2369 = vmatpush1.msra.mxu0 0.0
  %2370 = vmatprep.subr.mxu0 0.0
  %2371 = vmatpush1.msra.mxu0 0.0
  %2372 = vmatprep.subr.mxu0 0.0
  %2373 = vmatpush1.msra.mxu0 0.0
  %2374 = vmatprep.subr.mxu0 0.0
  %2375 = vmatpush1.msra.mxu0 0.0
  %2376 = vmatprep.subr.mxu0 0.0
  %2377 = vmatpush1.msra.mxu0 0.0
  %2378 = vmatprep.subr.mxu0 0.0
  %2379 = vmatpush1.msra.mxu0 0.0
  %2380 = vmatprep.subr.mxu0 0.0
  %2381 = vmatpush1.msra.mxu0 0.0
  %2382 = vmatprep.subr.mxu0 0.0
  %2383 = vmatpush1.msra.mxu0 0.0
  %2384 = vmatprep.subr.mxu0 0.0
  %2385 = vmatpush1.msra.mxu0 0.0
  %2386 = vmatprep.subr.mxu0 0.0
  %2387 = vmatpush1.msra.mxu0 0.0
  %2388 = vmatprep.subr.mxu0 0.0
  %2389 = vmatpush1.msra.mxu0 0.0
  %2390 = vmatprep.subr.mxu0 0.0
  %2391 = vmatpush1.msra.mxu0 0.0
  %2392 = vmatprep.subr.mxu0 0.0
  %2393 = vmatpush1.msra.mxu0 0.0
  %2394 = vmatprep.subr.mxu0 0.0
  %2395 = vmatpush1.msra.mxu0 0.0
  %2396 = vmatprep.subr.mxu0 0.0
  %2397 = vmatpush1.msra.mxu0 0.0
  %2398 = vmatprep.subr.mxu0 0.0
  %2399 = vmatpush1.msra.mxu0 0.0
  %2400 = vmatprep.subr.mxu0 0.0
  %2401 = vmatpush1.msra.mxu0 0.0
  %2402 = vmatprep.subr.mxu0 0.0
  %2403 = vmatpush1.msra.mxu0 0.0
  %2404 = vmatprep.subr.mxu0 0.0
  %2405 = vmatpush1.msra.mxu0 0.0
  %2406 = vmatprep.mubr.f32.mxu0 0.0
  %2407 = vmatmul.mubr.f32.gmra.mrb[0].mxu0 %v2337
  %v2408 = vpop.f32.mrb[0].mxu0
  %v2409 = vadd.f32 0.0, %v2408
  %v2410 = vpop.f32.mrb[0].mxu0
  %2411 = vdwg.mxu0
  %s2412 = scalar_lea.vmem %s2, 52
  %2413 = vst.msk [vmem:[%s2412] sm:$0x3] %vm98, %v2409
  %s2414 = scalar_lea.vmem %s0, 54
  %v2415 = vld [vmem:[%s2414] sm:$0x3]
  %s2416 = scalar_lea.vmem %s1, 1728
  %v2417 = vld [vmem:[%s2416] sm:$0xff]
  %v2418 = vld [vmem:[%s2416 + $0x8] sm:$0xff]
  %v2419 = vld [vmem:[%s2416 + $0x10] sm:$0xff]
  %v2420 = vld [vmem:[%s2416 + $0x18] sm:$0xff]
  %v2421 = vld [vmem:[%s2416 + $0x20] sm:$0xff]
  %v2422 = vld [vmem:[%s2416 + $0x28] sm:$0xff]
  %v2423 = vld [vmem:[%s2416 + $0x30] sm:$0xff]
  %v2424 = vld [vmem:[%s2416 + $0x38] sm:$0xf]
  %v2426 = vsel %vm20, %v2415, 0
  %v2429 = vsel %vm24, %v2424, 0
  %2431 = vmatprep.subr.mxu0 0.0
  %2432 = vmatpush1.msra.mxu0 %v2417
  %2433 = vmatprep.subr.mxu0 0.0
  %2434 = vmatpush1.msra.mxu0 %v2418
  %2435 = vmatprep.subr.mxu0 0.0
  %2436 = vmatpush1.msra.mxu0 %v2419
  %2437 = vmatprep.subr.mxu0 0.0
  %2438 = vmatpush1.msra.mxu0 %v2420
  %2439 = vmatprep.subr.mxu0 0.0
  %2440 = vmatpush1.msra.mxu0 %v2421
  %2441 = vmatprep.subr.mxu0 0.0
  %2442 = vmatpush1.msra.mxu0 %v2422
  %2443 = vmatprep.subr.mxu0 0.0
  %2444 = vmatpush1.msra.mxu0 %v2423
  %2445 = vmatprep.subr.mxu0 0.0
  %2446 = vmatpush1.msra.mxu0 %v2429
  %2447 = vmatprep.subr.mxu0 0.0
  %2448 = vmatpush1.msra.mxu0 0.0
  %2449 = vmatprep.subr.mxu0 0.0
  %2450 = vmatpush1.msra.mxu0 0.0
  %2451 = vmatprep.subr.mxu0 0.0
  %2452 = vmatpush1.msra.mxu0 0.0
  %2453 = vmatprep.subr.mxu0 0.0
  %2454 = vmatpush1.msra.mxu0 0.0
  %2455 = vmatprep.subr.mxu0 0.0
  %2456 = vmatpush1.msra.mxu0 0.0
  %2457 = vmatprep.subr.mxu0 0.0
  %2458 = vmatpush1.msra.mxu0 0.0
  %2459 = vmatprep.subr.mxu0 0.0
  %2460 = vmatpush1.msra.mxu0 0.0
  %2461 = vmatprep.subr.mxu0 0.0
  %2462 = vmatpush1.msra.mxu0 0.0
  %2463 = vmatprep.subr.mxu0 0.0
  %2464 = vmatpush1.msra.mxu0 0.0
  %2465 = vmatprep.subr.mxu0 0.0
  %2466 = vmatpush1.msra.mxu0 0.0
  %2467 = vmatprep.subr.mxu0 0.0
  %2468 = vmatpush1.msra.mxu0 0.0
  %2469 = vmatprep.subr.mxu0 0.0
  %2470 = vmatpush1.msra.mxu0 0.0
  %2471 = vmatprep.subr.mxu0 0.0
  %2472 = vmatpush1.msra.mxu0 0.0
  %2473 = vmatprep.subr.mxu0 0.0
  %2474 = vmatpush1.msra.mxu0 0.0
  %2475 = vmatprep.subr.mxu0 0.0
  %2476 = vmatpush1.msra.mxu0 0.0
  %2477 = vmatprep.subr.mxu0 0.0
  %2478 = vmatpush1.msra.mxu0 0.0
  %2479 = vmatprep.subr.mxu0 0.0
  %2480 = vmatpush1.msra.mxu0 0.0
  %2481 = vmatprep.subr.mxu0 0.0
  %2482 = vmatpush1.msra.mxu0 0.0
  %2483 = vmatprep.subr.mxu0 0.0
  %2484 = vmatpush1.msra.mxu0 0.0
  %2485 = vmatprep.subr.mxu0 0.0
  %2486 = vmatpush1.msra.mxu0 0.0
  %2487 = vmatprep.subr.mxu0 0.0
  %2488 = vmatpush1.msra.mxu0 0.0
  %2489 = vmatprep.subr.mxu0 0.0
  %2490 = vmatpush1.msra.mxu0 0.0
  %2491 = vmatprep.subr.mxu0 0.0
  %2492 = vmatpush1.msra.mxu0 0.0
  %2493 = vmatprep.subr.mxu0 0.0
  %2494 = vmatpush1.msra.mxu0 0.0
  %2495 = vmatprep.mubr.f32.mxu0 0.0
  %2496 = vmatmul.mubr.f32.gmra.mrb[0].mxu0 %v2426
  %v2497 = vpop.f32.mrb[0].mxu0
  %v2498 = vadd.f32 0.0, %v2497
  %v2499 = vpop.f32.mrb[0].mxu0
  %2500 = vdwg.mxu0
  %s2501 = scalar_lea.vmem %s2, 54
  %2502 = vst.msk [vmem:[%s2501] sm:$0x3] %vm98, %v2498
  %s2503 = scalar_lea.vmem %s0, 56
  %v2504 = vld [vmem:[%s2503] sm:$0x3]
  %s2505 = scalar_lea.vmem %s1, 1792
  %v2506 = vld [vmem:[%s2505] sm:$0xff]
  %v2507 = vld [vmem:[%s2505 + $0x8] sm:$0xff]
  %v2508 = vld [vmem:[%s2505 + $0x10] sm:$0xff]
  %v2509 = vld [vmem:[%s2505 + $0x18] sm:$0xff]
  %v2510 = vld [vmem:[%s2505 + $0x20] sm:$0xff]
  %v2511 = vld [vmem:[%s2505 + $0x28] sm:$0xff]
  %v2512 = vld [vmem:[%s2505 + $0x30] sm:$0xff]
  %v2513 = vld [vmem:[%s2505 + $0x38] sm:$0xf]
  %v2515 = vsel %vm20, %v2504, 0
  %v2518 = vsel %vm24, %v2513, 0
  %2520 = vmatprep.subr.mxu0 0.0
  %2521 = vmatpush1.msra.mxu0 %v2506
  %2522 = vmatprep.subr.mxu0 0.0
  %2523 = vmatpush1.msra.mxu0 %v2507
  %2524 = vmatprep.subr.mxu0 0.0
  %2525 = vmatpush1.msra.mxu0 %v2508
  %2526 = vmatprep.subr.mxu0 0.0
  %2527 = vmatpush1.msra.mxu0 %v2509
  %2528 = vmatprep.subr.mxu0 0.0
  %2529 = vmatpush1.msra.mxu0 %v2510
  %2530 = vmatprep.subr.mxu0 0.0
  %2531 = vmatpush1.msra.mxu0 %v2511
  %2532 = vmatprep.subr.mxu0 0.0
  %2533 = vmatpush1.msra.mxu0 %v2512
  %2534 = vmatprep.subr.mxu0 0.0
  %2535 = vmatpush1.msra.mxu0 %v2518
  %2536 = vmatprep.subr.mxu0 0.0
  %2537 = vmatpush1.msra.mxu0 0.0
  %2538 = vmatprep.subr.mxu0 0.0
  %2539 = vmatpush1.msra.mxu0 0.0
  %2540 = vmatprep.subr.mxu0 0.0
  %2541 = vmatpush1.msra.mxu0 0.0
  %2542 = vmatprep.subr.mxu0 0.0
  %2543 = vmatpush1.msra.mxu0 0.0
  %2544 = vmatprep.subr.mxu0 0.0
  %2545 = vmatpush1.msra.mxu0 0.0
  %2546 = vmatprep.subr.mxu0 0.0
  %2547 = vmatpush1.msra.mxu0 0.0
  %2548 = vmatprep.subr.mxu0 0.0
  %2549 = vmatpush1.msra.mxu0 0.0
  %2550 = vmatprep.subr.mxu0 0.0
  %2551 = vmatpush1.msra.mxu0 0.0
  %2552 = vmatprep.subr.mxu0 0.0
  %2553 = vmatpush1.msra.mxu0 0.0
  %2554 = vmatprep.subr.mxu0 0.0
  %2555 = vmatpush1.msra.mxu0 0.0
  %2556 = vmatprep.subr.mxu0 0.0
  %2557 = vmatpush1.msra.mxu0 0.0
  %2558 = vmatprep.subr.mxu0 0.0
  %2559 = vmatpush1.msra.mxu0 0.0
  %2560 = vmatprep.subr.mxu0 0.0
  %2561 = vmatpush1.msra.mxu0 0.0
  %2562 = vmatprep.subr.mxu0 0.0
  %2563 = vmatpush1.msra.mxu0 0.0
  %2564 = vmatprep.subr.mxu0 0.0
  %2565 = vmatpush1.msra.mxu0 0.0
  %2566 = vmatprep.subr.mxu0 0.0
  %2567 = vmatpush1.msra.mxu0 0.0
  %2568 = vmatprep.subr.mxu0 0.0
  %2569 = vmatpush1.msra.mxu0 0.0
  %2570 = vmatprep.subr.mxu0 0.0
  %2571 = vmatpush1.msra.mxu0 0.0
  %2572 = vmatprep.subr.mxu0 0.0
  %2573 = vmatpush1.msra.mxu0 0.0
  %2574 = vmatprep.subr.mxu0 0.0
  %2575 = vmatpush1.msra.mxu0 0.0
  %2576 = vmatprep.subr.mxu0 0.0
  %2577 = vmatpush1.msra.mxu0 0.0
  %2578 = vmatprep.subr.mxu0 0.0
  %2579 = vmatpush1.msra.mxu0 0.0
  %2580 = vmatprep.subr.mxu0 0.0
  %2581 = vmatpush1.msra.mxu0 0.0
  %2582 = vmatprep.subr.mxu0 0.0
  %2583 = vmatpush1.msra.mxu0 0.0
  %2584 = vmatprep.mubr.f32.mxu0 0.0
  %2585 = vmatmul.mubr.f32.gmra.mrb[0].mxu0 %v2515
  %v2586 = vpop.f32.mrb[0].mxu0
  %v2587 = vadd.f32 0.0, %v2586
  %v2588 = vpop.f32.mrb[0].mxu0
  %2589 = vdwg.mxu0
  %s2590 = scalar_lea.vmem %s2, 56
  %2591 = vst.msk [vmem:[%s2590] sm:$0x3] %vm98, %v2587
  %s2592 = scalar_lea.vmem %s0, 58
  %v2593 = vld [vmem:[%s2592] sm:$0x3]
  %s2594 = scalar_lea.vmem %s1, 1856
  %v2595 = vld [vmem:[%s2594] sm:$0xff]
  %v2596 = vld [vmem:[%s2594 + $0x8] sm:$0xff]
  %v2597 = vld [vmem:[%s2594 + $0x10] sm:$0xff]
  %v2598 = vld [vmem:[%s2594 + $0x18] sm:$0xff]
  %v2599 = vld [vmem:[%s2594 + $0x20] sm:$0xff]
  %v2600 = vld [vmem:[%s2594 + $0x28] sm:$0xff]
  %v2601 = vld [vmem:[%s2594 + $0x30] sm:$0xff]
  %v2602 = vld [vmem:[%s2594 + $0x38] sm:$0xf]
  %v2604 = vsel %vm20, %v2593, 0
  %v2607 = vsel %vm24, %v2602, 0
  %2609 = vmatprep.subr.mxu0 0.0
  %2610 = vmatpush1.msra.mxu0 %v2595
  %2611 = vmatprep.subr.mxu0 0.0
  %2612 = vmatpush1.msra.mxu0 %v2596
  %2613 = vmatprep.subr.mxu0 0.0
  %2614 = vmatpush1.msra.mxu0 %v2597
  %2615 = vmatprep.subr.mxu0 0.0
  %2616 = vmatpush1.msra.mxu0 %v2598
  %2617 = vmatprep.subr.mxu0 0.0
  %2618 = vmatpush1.msra.mxu0 %v2599
  %2619 = vmatprep.subr.mxu0 0.0
  %2620 = vmatpush1.msra.mxu0 %v2600
  %2621 = vmatprep.subr.mxu0 0.0
  %2622 = vmatpush1.msra.mxu0 %v2601
  %2623 = vmatprep.subr.mxu0 0.0
  %2624 = vmatpush1.msra.mxu0 %v2607
  %2625 = vmatprep.subr.mxu0 0.0
  %2626 = vmatpush1.msra.mxu0 0.0
  %2627 = vmatprep.subr.mxu0 0.0
  %2628 = vmatpush1.msra.mxu0 0.0
  %2629 = vmatprep.subr.mxu0 0.0
  %2630 = vmatpush1.msra.mxu0 0.0
  %2631 = vmatprep.subr.mxu0 0.0
  %2632 = vmatpush1.msra.mxu0 0.0
  %2633 = vmatprep.subr.mxu0 0.0
  %2634 = vmatpush1.msra.mxu0 0.0
  %2635 = vmatprep.subr.mxu0 0.0
  %2636 = vmatpush1.msra.mxu0 0.0
  %2637 = vmatprep.subr.mxu0 0.0
  %2638 = vmatpush1.msra.mxu0 0.0
  %2639 = vmatprep.subr.mxu0 0.0
  %2640 = vmatpush1.msra.mxu0 0.0
  %2641 = vmatprep.subr.mxu0 0.0
  %2642 = vmatpush1.msra.mxu0 0.0
  %2643 = vmatprep.subr.mxu0 0.0
  %2644 = vmatpush1.msra.mxu0 0.0
  %2645 = vmatprep.subr.mxu0 0.0
  %2646 = vmatpush1.msra.mxu0 0.0
  %2647 = vmatprep.subr.mxu0 0.0
  %2648 = vmatpush1.msra.mxu0 0.0
  %2649 = vmatprep.subr.mxu0 0.0
  %2650 = vmatpush1.msra.mxu0 0.0
  %2651 = vmatprep.subr.mxu0 0.0
  %2652 = vmatpush1.msra.mxu0 0.0
  %2653 = vmatprep.subr.mxu0 0.0
  %2654 = vmatpush1.msra.mxu0 0.0
  %2655 = vmatprep.subr.mxu0 0.0
  %2656 = vmatpush1.msra.mxu0 0.0
  %2657 = vmatprep.subr.mxu0 0.0
  %2658 = vmatpush1.msra.mxu0 0.0
  %2659 = vmatprep.subr.mxu0 0.0
  %2660 = vmatpush1.msra.mxu0 0.0
  %2661 = vmatprep.subr.mxu0 0.0
  %2662 = vmatpush1.msra.mxu0 0.0
  %2663 = vmatprep.subr.mxu0 0.0
  %2664 = vmatpush1.msra.mxu0 0.0
  %2665 = vmatprep.subr.mxu0 0.0
  %2666 = vmatpush1.msra.mxu0 0.0
  %2667 = vmatprep.subr.mxu0 0.0
  %2668 = vmatpush1.msra.mxu0 0.0
  %2669 = vmatprep.subr.mxu0 0.0
  %2670 = vmatpush1.msra.mxu0 0.0
  %2671 = vmatprep.subr.mxu0 0.0
  %2672 = vmatpush1.msra.mxu0 0.0
  %2673 = vmatprep.mubr.f32.mxu0 0.0
  %2674 = vmatmul.mubr.f32.gmra.mrb[0].mxu0 %v2604
  %v2675 = vpop.f32.mrb[0].mxu0
  %v2676 = vadd.f32 0.0, %v2675
  %v2677 = vpop.f32.mrb[0].mxu0
  %2678 = vdwg.mxu0
  %s2679 = scalar_lea.vmem %s2, 58
  %2680 = vst.msk [vmem:[%s2679] sm:$0x3] %vm98, %v2676
  %s2681 = scalar_lea.vmem %s0, 60
  %v2682 = vld [vmem:[%s2681] sm:$0x3]
  %s2683 = scalar_lea.vmem %s1, 1920
  %v2684 = vld [vmem:[%s2683] sm:$0xff]
  %v2685 = vld [vmem:[%s2683 + $0x8] sm:$0xff]
  %v2686 = vld [vmem:[%s2683 + $0x10] sm:$0xff]
  %v2687 = vld [vmem:[%s2683 + $0x18] sm:$0xff]
  %v2688 = vld [vmem:[%s2683 + $0x20] sm:$0xff]
  %v2689 = vld [vmem:[%s2683 + $0x28] sm:$0xff]
  %v2690 = vld [vmem:[%s2683 + $0x30] sm:$0xff]
  %v2691 = vld [vmem:[%s2683 + $0x38] sm:$0xf]
  %v2693 = vsel %vm20, %v2682, 0
  %v2696 = vsel %vm24, %v2691, 0
  %2698 = vmatprep.subr.mxu0 0.0
  %2699 = vmatpush1.msra.mxu0 %v2684
  %2700 = vmatprep.subr.mxu0 0.0
  %2701 = vmatpush1.msra.mxu0 %v2685
  %2702 = vmatprep.subr.mxu0 0.0
  %2703 = vmatpush1.msra.mxu0 %v2686
  %2704 = vmatprep.subr.mxu0 0.0
  %2705 = vmatpush1.msra.mxu0 %v2687
  %2706 = vmatprep.subr.mxu0 0.0
  %2707 = vmatpush1.msra.mxu0 %v2688
  %2708 = vmatprep.subr.mxu0 0.0
  %2709 = vmatpush1.msra.mxu0 %v2689
  %2710 = vmatprep.subr.mxu0 0.0
  %2711 = vmatpush1.msra.mxu0 %v2690
  %2712 = vmatprep.subr.mxu0 0.0
  %2713 = vmatpush1.msra.mxu0 %v2696
  %2714 = vmatprep.subr.mxu0 0.0
  %2715 = vmatpush1.msra.mxu0 0.0
  %2716 = vmatprep.subr.mxu0 0.0
  %2717 = vmatpush1.msra.mxu0 0.0
  %2718 = vmatprep.subr.mxu0 0.0
  %2719 = vmatpush1.msra.mxu0 0.0
  %2720 = vmatprep.subr.mxu0 0.0
  %2721 = vmatpush1.msra.mxu0 0.0
  %2722 = vmatprep.subr.mxu0 0.0
  %2723 = vmatpush1.msra.mxu0 0.0
  %2724 = vmatprep.subr.mxu0 0.0
  %2725 = vmatpush1.msra.mxu0 0.0
  %2726 = vmatprep.subr.mxu0 0.0
  %2727 = vmatpush1.msra.mxu0 0.0
  %2728 = vmatprep.subr.mxu0 0.0
  %2729 = vmatpush1.msra.mxu0 0.0
  %2730 = vmatprep.subr.mxu0 0.0
  %2731 = vmatpush1.msra.mxu0 0.0
  %2732 = vmatprep.subr.mxu0 0.0
  %2733 = vmatpush1.msra.mxu0 0.0
  %2734 = vmatprep.subr.mxu0 0.0
  %2735 = vmatpush1.msra.mxu0 0.0
  %2736 = vmatprep.subr.mxu0 0.0
  %2737 = vmatpush1.msra.mxu0 0.0
  %2738 = vmatprep.subr.mxu0 0.0
  %2739 = vmatpush1.msra.mxu0 0.0
  %2740 = vmatprep.subr.mxu0 0.0
  %2741 = vmatpush1.msra.mxu0 0.0
  %2742 = vmatprep.subr.mxu0 0.0
  %2743 = vmatpush1.msra.mxu0 0.0
  %2744 = vmatprep.subr.mxu0 0.0
  %2745 = vmatpush1.msra.mxu0 0.0
  %2746 = vmatprep.subr.mxu0 0.0
  %2747 = vmatpush1.msra.mxu0 0.0
  %2748 = vmatprep.subr.mxu0 0.0
  %2749 = vmatpush1.msra.mxu0 0.0
  %2750 = vmatprep.subr.mxu0 0.0
  %2751 = vmatpush1.msra.mxu0 0.0
  %2752 = vmatprep.subr.mxu0 0.0
  %2753 = vmatpush1.msra.mxu0 0.0
  %2754 = vmatprep.subr.mxu0 0.0
  %2755 = vmatpush1.msra.mxu0 0.0
  %2756 = vmatprep.subr.mxu0 0.0
  %2757 = vmatpush1.msra.mxu0 0.0
  %2758 = vmatprep.subr.mxu0 0.0
  %2759 = vmatpush1.msra.mxu0 0.0
  %2760 = vmatprep.subr.mxu0 0.0
  %2761 = vmatpush1.msra.mxu0 0.0
  %2762 = vmatprep.mubr.f32.mxu0 0.0
  %2763 = vmatmul.mubr.f32.gmra.mrb[0].mxu0 %v2693
  %v2764 = vpop.f32.mrb[0].mxu0
  %v2765 = vadd.f32 0.0, %v2764
  %v2766 = vpop.f32.mrb[0].mxu0
  %2767 = vdwg.mxu0
  %s2768 = scalar_lea.vmem %s2, 60
  %2769 = vst.msk [vmem:[%s2768] sm:$0x3] %vm98, %v2765
  %s2770 = scalar_lea.vmem %s0, 62
  %v2771 = vld [vmem:[%s2770] sm:$0x3]
  %s2772 = scalar_lea.vmem %s1, 1984
  %v2773 = vld [vmem:[%s2772] sm:$0xff]
  %v2774 = vld [vmem:[%s2772 + $0x8] sm:$0xff]
  %v2775 = vld [vmem:[%s2772 + $0x10] sm:$0xff]
  %v2776 = vld [vmem:[%s2772 + $0x18] sm:$0xff]
  %v2777 = vld [vmem:[%s2772 + $0x20] sm:$0xff]
  %v2778 = vld [vmem:[%s2772 + $0x28] sm:$0xff]
  %v2779 = vld [vmem:[%s2772 + $0x30] sm:$0xff]
  %v2780 = vld [vmem:[%s2772 + $0x38] sm:$0xf]
  %v2782 = vsel %vm20, %v2771, 0
  %v2785 = vsel %vm24, %v2780, 0
  %2787 = vmatprep.subr.mxu0 0.0
  %2788 = vmatpush1.msra.mxu0 %v2773
  %2789 = vmatprep.subr.mxu0 0.0
  %2790 = vmatpush1.msra.mxu0 %v2774
  %2791 = vmatprep.subr.mxu0 0.0
  %2792 = vmatpush1.msra.mxu0 %v2775
  %2793 = vmatprep.subr.mxu0 0.0
  %2794 = vmatpush1.msra.mxu0 %v2776
  %2795 = vmatprep.subr.mxu0 0.0
  %2796 = vmatpush1.msra.mxu0 %v2777
  %2797 = vmatprep.subr.mxu0 0.0
  %2798 = vmatpush1.msra.mxu0 %v2778
  %2799 = vmatprep.subr.mxu0 0.0
  %2800 = vmatpush1.msra.mxu0 %v2779
  %2801 = vmatprep.subr.mxu0 0.0
  %2802 = vmatpush1.msra.mxu0 %v2785
  %2803 = vmatprep.subr.mxu0 0.0
  %2804 = vmatpush1.msra.mxu0 0.0
  %2805 = vmatprep.subr.mxu0 0.0
  %2806 = vmatpush1.msra.mxu0 0.0
  %2807 = vmatprep.subr.mxu0 0.0
  %2808 = vmatpush1.msra.mxu0 0.0
  %2809 = vmatprep.subr.mxu0 0.0
  %2810 = vmatpush1.msra.mxu0 0.0
  %2811 = vmatprep.subr.mxu0 0.0
  %2812 = vmatpush1.msra.mxu0 0.0
  %2813 = vmatprep.subr.mxu0 0.0
  %2814 = vmatpush1.msra.mxu0 0.0
  %2815 = vmatprep.subr.mxu0 0.0
  %2816 = vmatpush1.msra.mxu0 0.0
  %2817 = vmatprep.subr.mxu0 0.0
  %2818 = vmatpush1.msra.mxu0 0.0
  %2819 = vmatprep.subr.mxu0 0.0
  %2820 = vmatpush1.msra.mxu0 0.0
  %2821 = vmatprep.subr.mxu0 0.0
  %2822 = vmatpush1.msra.mxu0 0.0
  %2823 = vmatprep.subr.mxu0 0.0
  %2824 = vmatpush1.msra.mxu0 0.0
  %2825 = vmatprep.subr.mxu0 0.0
  %2826 = vmatpush1.msra.mxu0 0.0
  %2827 = vmatprep.subr.mxu0 0.0
  %2828 = vmatpush1.msra.mxu0 0.0
  %2829 = vmatprep.subr.mxu0 0.0
  %2830 = vmatpush1.msra.mxu0 0.0
  %2831 = vmatprep.subr.mxu0 0.0
  %2832 = vmatpush1.msra.mxu0 0.0
  %2833 = vmatprep.subr.mxu0 0.0
  %2834 = vmatpush1.msra.mxu0 0.0
  %2835 = vmatprep.subr.mxu0 0.0
  %2836 = vmatpush1.msra.mxu0 0.0
  %2837 = vmatprep.subr.mxu0 0.0
  %2838 = vmatpush1.msra.mxu0 0.0
  %2839 = vmatprep.subr.mxu0 0.0
  %2840 = vmatpush1.msra.mxu0 0.0
  %2841 = vmatprep.subr.mxu0 0.0
  %2842 = vmatpush1.msra.mxu0 0.0
  %2843 = vmatprep.subr.mxu0 0.0
  %2844 = vmatpush1.msra.mxu0 0.0
  %2845 = vmatprep.subr.mxu0 0.0
  %2846 = vmatpush1.msra.mxu0 0.0
  %2847 = vmatprep.subr.mxu0 0.0
  %2848 = vmatpush1.msra.mxu0 0.0
  %2849 = vmatprep.subr.mxu0 0.0
  %2850 = vmatpush1.msra.mxu0 0.0
  %2851 = vmatprep.mubr.f32.mxu0 0.0
  %2852 = vmatmul.mubr.f32.gmra.mrb[0].mxu0 %v2782
  %v2853 = vpop.f32.mrb[0].mxu0
  %v2854 = vadd.f32 0.0, %v2853
  %v2855 = vpop.f32.mrb[0].mxu0
  %2856 = vdwg.mxu0
  %s2857 = scalar_lea.vmem %s2, 62
  %2858 = vst.msk [vmem:[%s2857] sm:$0x3] %vm98, %v2854
  // Predicated region
  $region10: #{_lambda_.11} parent=0 // pred_check
    _
  $region11: #{_lambda_.11} parent=0 // pred_check_branch
    %2860 = sbr.rel (0) target = $region13
  $region12: #{_lambda_.11} parent=0 // pred_region
    _
  $region13: #{_lambda_.11} parent=0 // pred_fallthru
    _
  // Predicated region
  $region14: #{_lambda_.11} parent=0 // pred_check
    _
  $region15: #{_lambda_.11} parent=0 // pred_check_branch
    %2862 = sbr.rel (0) target = $region17
  $region16: #{_lambda_.11} parent=0 // pred_region
    _
  $region17: #{_lambda_.11} parent=0 // pred_fallthru
    _

// kernel: reverse.8
$region0: #{reverse.8}
  #allocation0 [shape = 's32[1]{0}', space=sflag, size = 0x4, scoped, tag = 'scoped memory for reverse.8']
  %s0 = inlined_call_operand.vmem [shape: f32[2,30,16,8], index: 0, kind: input, shape index: {}]
  %s1 = inlined_call_operand.vmem [shape: f32[2,30,16,8], index: 1, kind: output, shape index: {}]
  %s2 = scalar_lea.vmem %s0, 112
  %v3 = vld [vmem:[%s2] sm:$0xff]
  %4 = vst [vmem:[%s1] sm:$0xff] %v3
  %s5 = scalar_lea.vmem %s0, 240
  %v6 = vld [vmem:[%s5] sm:$0xff]
  %s7 = scalar_lea.vmem %s1, 128
  %8 = vst [vmem:[%s7] sm:$0xff] %v6
  %s9 = scalar_lea.vmem %s0, 96
  %v10 = vld [vmem:[%s9] sm:$0xff]
  %s11 = scalar_lea.vmem %s1, 16
  %12 = vst [vmem:[%s11] sm:$0xff] %v10
  %s13 = scalar_lea.vmem %s0, 224
  %v14 = vld [vmem:[%s13] sm:$0xff]
  %s15 = scalar_lea.vmem %s1, 144
  %16 = vst [vmem:[%s15] sm:$0xff] %v14
  %s17 = scalar_lea.vmem %s0, 80
  %v18 = vld [vmem:[%s17] sm:$0xff]
  %s19 = scalar_lea.vmem %s1, 32
  %20 = vst [vmem:[%s19] sm:$0xff] %v18
  %s21 = scalar_lea.vmem %s0, 208
  %v22 = vld [vmem:[%s21] sm:$0xff]
  %s23 = scalar_lea.vmem %s1, 160
  %24 = vst [vmem:[%s23] sm:$0xff] %v22
  %s25 = scalar_lea.vmem %s0, 64
  %v26 = vld [vmem:[%s25] sm:$0xff]
  %s27 = scalar_lea.vmem %s1, 48
  %28 = vst [vmem:[%s27] sm:$0xff] %v26
  %s29 = scalar_lea.vmem %s0, 192
  %v30 = vld [vmem:[%s29] sm:$0xff]
  %s31 = scalar_lea.vmem %s1, 176
  %32 = vst [vmem:[%s31] sm:$0xff] %v30
  %s33 = scalar_lea.vmem %s0, 48
  %v34 = vld [vmem:[%s33] sm:$0xff]
  %s35 = scalar_lea.vmem %s1, 64
  %36 = vst [vmem:[%s35] sm:$0xff] %v34
  %s37 = scalar_lea.vmem %s0, 176
  %v38 = vld [vmem:[%s37] sm:$0xff]
  %s39 = scalar_lea.vmem %s1, 192
  %40 = vst [vmem:[%s39] sm:$0xff] %v38
  %s41 = scalar_lea.vmem %s0, 32
  %v42 = vld [vmem:[%s41] sm:$0xff]
  %s43 = scalar_lea.vmem %s1, 80
  %44 = vst [vmem:[%s43] sm:$0xff] %v42
  %s45 = scalar_lea.vmem %s0, 160
  %v46 = vld [vmem:[%s45] sm:$0xff]
  %s47 = scalar_lea.vmem %s1, 208
  %48 = vst [vmem:[%s47] sm:$0xff] %v46
  %s49 = scalar_lea.vmem %s0, 16
  %v50 = vld [vmem:[%s49] sm:$0xff]
  %s51 = scalar_lea.vmem %s1, 96
  %52 = vst [vmem:[%s51] sm:$0xff] %v50
  %s53 = scalar_lea.vmem %s0, 144
  %v54 = vld [vmem:[%s53] sm:$0xff]
  %s55 = scalar_lea.vmem %s1, 224
  %56 = vst [vmem:[%s55] sm:$0xff] %v54
  %v57 = vld [vmem:[%s0] sm:$0xff]
  %s58 = scalar_lea.vmem %s1, 112
  %59 = vst [vmem:[%s58] sm:$0xff] %v57
  %s60 = scalar_lea.vmem %s0, 128
  %v61 = vld [vmem:[%s60] sm:$0xff]
  %s62 = scalar_lea.vmem %s1, 240
  %63 = vst [vmem:[%s62] sm:$0xff] %v61
  %s64 = scalar_lea.vmem %s0, 120
  %v65 = vld [vmem:[%s64] sm:$0xff]
  %s66 = scalar_lea.vmem %s1, 8
  %67 = vst [vmem:[%s66] sm:$0xff] %v65
  %s68 = scalar_lea.vmem %s0, 248
  %v69 = vld [vmem:[%s68] sm:$0xff]
  %s70 = scalar_lea.vmem %s1, 136
  %71 = vst [vmem:[%s70] sm:$0xff] %v69
  %s72 = scalar_lea.vmem %s0, 104
  %v73 = vld [vmem:[%s72] sm:$0xff]
  %s74 = scalar_lea.vmem %s1, 24
  %75 = vst [vmem:[%s74] sm:$0xff] %v73
  %s76 = scalar_lea.vmem %s0, 232
  %v77 = vld [vmem:[%s76] sm:$0xff]
  %s78 = scalar_lea.vmem %s1, 152
  %79 = vst [vmem:[%s78] sm:$0xff] %v77
  %s80 = scalar_lea.vmem %s0, 88
  %v81 = vld [vmem:[%s80] sm:$0xff]
  %s82 = scalar_lea.vmem %s1, 40
  %83 = vst [vmem:[%s82] sm:$0xff] %v81
  %s84 = scalar_lea.vmem %s0, 216
  %v85 = vld [vmem:[%s84] sm:$0xff]
  %s86 = scalar_lea.vmem %s1, 168
  %87 = vst [vmem:[%s86] sm:$0xff] %v85
  %s88 = scalar_lea.vmem %s0, 72
  %v89 = vld [vmem:[%s88] sm:$0xff]
  %s90 = scalar_lea.vmem %s1, 56
  %91 = vst [vmem:[%s90] sm:$0xff] %v89
  %s92 = scalar_lea.vmem %s0, 200
  %v93 = vld [vmem:[%s92] sm:$0xff]
  %s94 = scalar_lea.vmem %s1, 184
  %95 = vst [vmem:[%s94] sm:$0xff] %v93
  %s96 = scalar_lea.vmem %s0, 56
  %v97 = vld [vmem:[%s96] sm:$0xff]
  %s98 = scalar_lea.vmem %s1, 72
  %99 = vst [vmem:[%s98] sm:$0xff] %v97
  %s100 = scalar_lea.vmem %s0, 184
  %v101 = vld [vmem:[%s100] sm:$0xff]
  %s102 = scalar_lea.vmem %s1, 200
  %103 = vst [vmem:[%s102] sm:$0xff] %v101
  %s104 = scalar_lea.vmem %s0, 40
  %v105 = vld [vmem:[%s104] sm:$0xff]
  %s106 = scalar_lea.vmem %s1, 88
  %107 = vst [vmem:[%s106] sm:$0xff] %v105
  %s108 = scalar_lea.vmem %s0, 168
  %v109 = vld [vmem:[%s108] sm:$0xff]
  %s110 = scalar_lea.vmem %s1, 216
  %111 = vst [vmem:[%s110] sm:$0xff] %v109
  %s112 = scalar_lea.vmem %s0, 24
  %v113 = vld [vmem:[%s112] sm:$0xff]
  %s114 = scalar_lea.vmem %s1, 104
  %115 = vst [vmem:[%s114] sm:$0xff] %v113
  %s116 = scalar_lea.vmem %s0, 152
  %v117 = vld [vmem:[%s116] sm:$0xff]
  %s118 = scalar_lea.vmem %s1, 232
  %119 = vst [vmem:[%s118] sm:$0xff] %v117
  %s120 = scalar_lea.vmem %s0, 8
  %v121 = vld [vmem:[%s120] sm:$0xff]
  %s122 = scalar_lea.vmem %s1, 120
  %123 = vst [vmem:[%s122] sm:$0xff] %v121
  %s124 = scalar_lea.vmem %s0, 136
  %v125 = vld [vmem:[%s124] sm:$0xff]
  %s126 = scalar_lea.vmem %s1, 248
  %127 = vst [vmem:[%s126] sm:$0xff] %v125

// kernel: _lambda_.12
$region0: #{_lambda_.12}
  #allocation0 [shape = 'u32[]', space=smem, size = 0x4, offset = 0x4, fixed_abs, tag = 'smem constant byte address 0x4 - core index']
  #allocation1 [shape = 'u32[144,128]{1,0:T(1,128)}', space=vmem, size = 0x12000, scoped, tag = 'internal scratch']
  %s0 = inlined_call_operand.vmem [shape: f32[576,30], index: 0, kind: input, shape index: {}]
  %s1 = inlined_call_operand.vmem [shape: f32[30,30], index: 1, kind: input, shape index: {}]
  %s2 = inlined_call_operand.vmem [shape: f32[1,30], index: 2, kind: input, shape index: {}]
  %s3 = inlined_call_operand.vmem [shape: f32[576,30], index: 3, kind: input, shape index: {}]
  %s4 = inlined_call_operand.vmem [shape: f32[576,30], index: 4, kind: output, shape index: {}]
  %s5 = sld [smem:[#allocation0]]
  $region26: #{_lambda_.12} parent=0
    _
  %s7 = ssub.s32 1, %s5
  %s8 = scalar_select 0, %s7, %s5
  // Predicated region
  $region2: #{_lambda_.12} parent=0 // pred_check
    _
  $region3: #{_lambda_.12} parent=0 // pred_check_branch
    %10 = sbr.rel (0) target = $region5
  $region4: #{_lambda_.12} parent=0 // pred_region
    _
  $region5: #{_lambda_.12} parent=0 // pred_fallthru
    _
  // Predicated region
  $region6: #{_lambda_.12} parent=0 // pred_check
    _
  $region7: #{_lambda_.12} parent=0 // pred_check_branch
    %12 = sbr.rel (0) target = $region9
  $region8: #{_lambda_.12} parent=0 // pred_region
    _
  $region9: #{_lambda_.12} parent=0 // pred_fallthru
    _
  // Predicated region
  $region10: #{_lambda_.12} parent=0 // pred_check
    _
  $region11: #{_lambda_.12} parent=0 // pred_check_branch
    %14 = sbr.rel (0) target = $region13
  $region12: #{_lambda_.12} parent=0 // pred_region
    _
  $region13: #{_lambda_.12} parent=0 // pred_fallthru
    _
  // Predicated region
  $region14: #{_lambda_.12} parent=0 // pred_check
    _
  $region15: #{_lambda_.12} parent=0 // pred_check_branch
    %16 = sbr.rel (0) target = $region17
  $region16: #{_lambda_.12} parent=0 // pred_region
    _
  $region17: #{_lambda_.12} parent=0 // pred_fallthru
    _
  %v17 = vld [vmem:[%s0] sm:$0xff]
  %v18 = vld [vmem:[%s0 + $0x8] sm:$0xff]
  %v19 = vld [vmem:[%s0 + $0x10] sm:$0xff]
  %v20 = vld [vmem:[%s0 + $0x18] sm:$0xff]
  %v21 = vld [vmem:[%s0 + $0x20] sm:$0xff]
  %v22 = vld [vmem:[%s0 + $0x28] sm:$0xff]
  %v23 = vld [vmem:[%s0 + $0x30] sm:$0xff]
  %v24 = vld [vmem:[%s0 + $0x38] sm:$0xff]
  %v25 = vld [vmem:[%s0 + $0x40] sm:$0xff]
  %v26 = vld [vmem:[%s0 + $0x48] sm:$0xff]
  %v27 = vld [vmem:[%s0 + $0x50] sm:$0xff]
  %v28 = vld [vmem:[%s0 + $0x58] sm:$0xff]
  %v29 = vld [vmem:[%s0 + $0x60] sm:$0xff]
  %v30 = vld [vmem:[%s0 + $0x68] sm:$0xff]
  %v31 = vld [vmem:[%s0 + $0x70] sm:$0xff]
  %v32 = vld [vmem:[%s0 + $0x78] sm:$0xff]
  %v33 = vld [vmem:[%s0 + $0x80] sm:$0xff]
  %v34 = vld [vmem:[%s0 + $0x88] sm:$0xff]
  %v35 = vld [vmem:[%s0 + $0x90] sm:$0xff]
  %v36 = vld [vmem:[%s0 + $0x98] sm:$0xff]
  %v37 = vld [vmem:[%s0 + $0xa0] sm:$0xff]
  %v38 = vld [vmem:[%s0 + $0xa8] sm:$0xff]
  %v39 = vld [vmem:[%s0 + $0xb0] sm:$0xff]
  %v40 = vld [vmem:[%s0 + $0xb8] sm:$0xff]
  %v41 = vld [vmem:[%s0 + $0xc0] sm:$0xff]
  %v42 = vld [vmem:[%s0 + $0xc8] sm:$0xff]
  %v43 = vld [vmem:[%s0 + $0xd0] sm:$0xff]
  %v44 = vld [vmem:[%s0 + $0xd8] sm:$0xff]
  %v45 = vld [vmem:[%s0 + $0xe0] sm:$0xff]
  %v46 = vld [vmem:[%s0 + $0xe8] sm:$0xff]
  %v47 = vld [vmem:[%s0 + $0xf0] sm:$0xff]
  %v48 = vld [vmem:[%s0 + $0xf8] sm:$0xff]
  %v49 = vld [vmem:[%s0 + $0x100] sm:$0xff]
  %v50 = vld [vmem:[%s0 + $0x108] sm:$0xff]
  %v51 = vld [vmem:[%s0 + $0x110] sm:$0xff]
  %v52 = vld [vmem:[%s0 + $0x118] sm:$0xff]
  %v53 = vld [vmem:[%s0 + $0x120] sm:$0xff]
  %v54 = vld [vmem:[%s0 + $0x128] sm:$0xff]
  %v55 = vld [vmem:[%s0 + $0x130] sm:$0xff]
  %v56 = vld [vmem:[%s0 + $0x138] sm:$0xff]
  %v57 = vld [vmem:[%s0 + $0x140] sm:$0xff]
  %v58 = vld [vmem:[%s0 + $0x148] sm:$0xff]
  %v59 = vld [vmem:[%s0 + $0x150] sm:$0xff]
  %v60 = vld [vmem:[%s0 + $0x158] sm:$0xff]
  %v61 = vld [vmem:[%s0 + $0x160] sm:$0xff]
  %v62 = vld [vmem:[%s0 + $0x168] sm:$0xff]
  %v63 = vld [vmem:[%s0 + $0x170] sm:$0xff]
  %v64 = vld [vmem:[%s0 + $0x178] sm:$0xff]
  %v65 = vld [vmem:[%s0 + $0x180] sm:$0xff]
  %v66 = vld [vmem:[%s0 + $0x188] sm:$0xff]
  %v67 = vld [vmem:[%s0 + $0x190] sm:$0xff]
  %v68 = vld [vmem:[%s0 + $0x198] sm:$0xff]
  %v69 = vld [vmem:[%s0 + $0x1a0] sm:$0xff]
  %v70 = vld [vmem:[%s0 + $0x1a8] sm:$0xff]
  %v71 = vld [vmem:[%s0 + $0x1b0] sm:$0xff]
  %v72 = vld [vmem:[%s0 + $0x1b8] sm:$0xff]
  %v73 = vld [vmem:[%s0 + $0x1c0] sm:$0xff]
  %v74 = vld [vmem:[%s0 + $0x1c8] sm:$0xff]
  %v75 = vld [vmem:[%s0 + $0x1d0] sm:$0xff]
  %v76 = vld [vmem:[%s0 + $0x1d8] sm:$0xff]
  %v77 = vld [vmem:[%s0 + $0x1e0] sm:$0xff]
  %v78 = vld [vmem:[%s0 + $0x1e8] sm:$0xff]
  %v79 = vld [vmem:[%s0 + $0x1f0] sm:$0xff]
  %v80 = vld [vmem:[%s0 + $0x1f8] sm:$0xff]
  %v81 = vld [vmem:[%s0 + $0x200] sm:$0xff]
  %v82 = vld [vmem:[%s0 + $0x208] sm:$0xff]
  %v83 = vld [vmem:[%s0 + $0x210] sm:$0xff]
  %v84 = vld [vmem:[%s0 + $0x218] sm:$0xff]
  %v85 = vld [vmem:[%s0 + $0x220] sm:$0xff]
  %v86 = vld [vmem:[%s0 + $0x228] sm:$0xff]
  %v87 = vld [vmem:[%s0 + $0x230] sm:$0xff]
  %v88 = vld [vmem:[%s0 + $0x238] sm:$0xff]
  %v89 = vld [vmem:[%s1] sm:$0xff]
  %v90 = vld [vmem:[%s1 + $0x8] sm:$0xff]
  %v91 = vld [vmem:[%s1 + $0x10] sm:$0xff]
  %v92 = vld [vmem:[%s1 + $0x18] sm:$0x3f]
  %v93 = vld [vmem:[%s2] sm:$0x1]
  %v95 = vlaneseq
  %v96 = vshrl.u32 %v95, 7
  %v97 = vsub.s32 0, %v96
  %v98 = vrot.slane %v93, %v97
  %vm100 = vcmask 244736
  %v102 = vsel %vm100, %v17, 0
  %v105 = vsel %vm100, %v18, 0
  %v108 = vsel %vm100, %v19, 0
  %v111 = vsel %vm100, %v20, 0
  %v114 = vsel %vm100, %v21, 0
  %v117 = vsel %vm100, %v22, 0
  %v120 = vsel %vm100, %v23, 0
  %v123 = vsel %vm100, %v24, 0
  %v126 = vsel %vm100, %v25, 0
  %v129 = vsel %vm100, %v26, 0
  %v132 = vsel %vm100, %v27, 0
  %v135 = vsel %vm100, %v28, 0
  %v138 = vsel %vm100, %v29, 0
  %v141 = vsel %vm100, %v30, 0
  %v144 = vsel %vm100, %v31, 0
  %v147 = vsel %vm100, %v32, 0
  %v150 = vsel %vm100, %v33, 0
  %v153 = vsel %vm100, %v34, 0
  %v156 = vsel %vm100, %v35, 0
  %v159 = vsel %vm100, %v36, 0
  %v162 = vsel %vm100, %v37, 0
  %v165 = vsel %vm100, %v38, 0
  %v168 = vsel %vm100, %v39, 0
  %v171 = vsel %vm100, %v40, 0
  %v174 = vsel %vm100, %v41, 0
  %v177 = vsel %vm100, %v42, 0
  %v180 = vsel %vm100, %v43, 0
  %v183 = vsel %vm100, %v44, 0
  %v186 = vsel %vm100, %v45, 0
  %v189 = vsel %vm100, %v46, 0
  %v192 = vsel %vm100, %v47, 0
  %v195 = vsel %vm100, %v48, 0
  %v198 = vsel %vm100, %v49, 0
  %v201 = vsel %vm100, %v50, 0
  %v204 = vsel %vm100, %v51, 0
  %v207 = vsel %vm100, %v52, 0
  %v210 = vsel %vm100, %v53, 0
  %v213 = vsel %vm100, %v54, 0
  %v216 = vsel %vm100, %v55, 0
  %v219 = vsel %vm100, %v56, 0
  %v222 = vsel %vm100, %v57, 0
  %v225 = vsel %vm100, %v58, 0
  %v228 = vsel %vm100, %v59, 0
  %v231 = vsel %vm100, %v60, 0
  %v234 = vsel %vm100, %v61, 0
  %v237 = vsel %vm100, %v62, 0
  %v240 = vsel %vm100, %v63, 0
  %v243 = vsel %vm100, %v64, 0
  %v246 = vsel %vm100, %v65, 0
  %v249 = vsel %vm100, %v66, 0
  %v252 = vsel %vm100, %v67, 0
  %v255 = vsel %vm100, %v68, 0
  %v258 = vsel %vm100, %v69, 0
  %v261 = vsel %vm100, %v70, 0
  %v264 = vsel %vm100, %v71, 0
  %v267 = vsel %vm100, %v72, 0
  %v270 = vsel %vm100, %v73, 0
  %v273 = vsel %vm100, %v74, 0
  %v276 = vsel %vm100, %v75, 0
  %v279 = vsel %vm100, %v76, 0
  %v282 = vsel %vm100, %v77, 0
  %v285 = vsel %vm100, %v78, 0
  %v288 = vsel %vm100, %v79, 0
  %v291 = vsel %vm100, %v80, 0
  %v294 = vsel %vm100, %v81, 0
  %v297 = vsel %vm100, %v82, 0
  %v300 = vsel %vm100, %v83, 0
  %v303 = vsel %vm100, %v84, 0
  %v306 = vsel %vm100, %v85, 0
  %v309 = vsel %vm100, %v86, 0
  %v312 = vsel %vm100, %v87, 0
  %v315 = vsel %vm100, %v88, 0
  %vm317 = vcmask 1045504
  %v319 = vsel %vm317, %v92, 0
  %321 = vmatprep.subr.mxu0 0.0
  %322 = vmatpush1.msra.mxu0 %v89
  %323 = vmatprep.subr.mxu0 0.0
  %324 = vmatpush1.msra.mxu0 %v90
  %325 = vmatprep.subr.mxu0 0.0
  %326 = vmatpush1.msra.mxu0 %v91
  %327 = vmatprep.subr.mxu0 0.0
  %328 = vmatpush1.msra.mxu0 %v319
  %329 = vmatprep.subr.mxu0 0.0
  %330 = vmatpush1.msra.mxu0 0.0
  %331 = vmatprep.subr.mxu0 0.0
  %332 = vmatpush1.msra.mxu0 0.0
  %333 = vmatprep.subr.mxu0 0.0
  %334 = vmatpush1.msra.mxu0 0.0
  %335 = vmatprep.subr.mxu0 0.0
  %336 = vmatpush1.msra.mxu0 0.0
  %337 = vmatprep.subr.mxu0 0.0
  %338 = vmatpush1.msra.mxu0 0.0
  %339 = vmatprep.subr.mxu0 0.0
  %340 = vmatpush1.msra.mxu0 0.0
  %341 = vmatprep.subr.mxu0 0.0
  %342 = vmatpush1.msra.mxu0 0.0
  %343 = vmatprep.subr.mxu0 0.0
  %344 = vmatpush1.msra.mxu0 0.0
  %345 = vmatprep.subr.mxu0 0.0
  %346 = vmatpush1.msra.mxu0 0.0
  %347 = vmatprep.subr.mxu0 0.0
  %348 = vmatpush1.msra.mxu0 0.0
  %349 = vmatprep.subr.mxu0 0.0
  %350 = vmatpush1.msra.mxu0 0.0
  %351 = vmatprep.subr.mxu0 0.0
  %352 = vmatpush1.msra.mxu0 0.0
  %353 = vmatprep.subr.mxu0 0.0
  %354 = vmatpush1.msra.mxu0 0.0
  %355 = vmatprep.subr.mxu0 0.0
  %356 = vmatpush1.msra.mxu0 0.0
  %357 = vmatprep.subr.mxu0 0.0
  %358 = vmatpush1.msra.mxu0 0.0
  %359 = vmatprep.subr.mxu0 0.0
  %360 = vmatpush1.msra.mxu0 0.0
  %361 = vmatprep.subr.mxu0 0.0
  %362 = vmatpush1.msra.mxu0 0.0
  %363 = vmatprep.subr.mxu0 0.0
  %364 = vmatpush1.msra.mxu0 0.0
  %365 = vmatprep.subr.mxu0 0.0
  %366 = vmatpush1.msra.mxu0 0.0
  %367 = vmatprep.subr.mxu0 0.0
  %368 = vmatpush1.msra.mxu0 0.0
  %369 = vmatprep.subr.mxu0 0.0
  %370 = vmatpush1.msra.mxu0 0.0
  %371 = vmatprep.subr.mxu0 0.0
  %372 = vmatpush1.msra.mxu0 0.0
  %373 = vmatprep.subr.mxu0 0.0
  %374 = vmatpush1.msra.mxu0 0.0
  %375 = vmatprep.subr.mxu0 0.0
  %376 = vmatpush1.msra.mxu0 0.0
  %377 = vmatprep.subr.mxu0 0.0
  %378 = vmatpush1.msra.mxu0 0.0
  %379 = vmatprep.subr.mxu0 0.0
  %380 = vmatpush1.msra.mxu0 0.0
  %381 = vmatprep.subr.mxu0 0.0
  %382 = vmatpush1.msra.mxu0 0.0
  %383 = vmatprep.subr.mxu0 0.0
  %384 = vmatpush1.msra.mxu0 0.0
  %385 = vmatprep.mubr.f32.mxu0 0.0
  %386 = vmatmul.mubr.f32.gmra.mrb[0].mxu0 %v102
  %v387 = vpop.f32.mrb[0].mxu0
  %v388 = vadd.f32 %v98, %v387
  %v389 = vpop.f32.mrb[0].mxu0
  %390 = vmatprep.mubr.f32.mxu0 0.0
  %391 = vmatmul.mubr.f32.gmra.mrb[0].mxu0 %v105
  %v392 = vpop.f32.mrb[0].mxu0
  %v393 = vadd.f32 %v98, %v392
  %v394 = vpop.f32.mrb[0].mxu0
  %395 = vmatprep.mubr.f32.mxu0 0.0
  %396 = vmatmul.mubr.f32.gmra.mrb[0].mxu0 %v108
  %v397 = vpop.f32.mrb[0].mxu0
  %v398 = vadd.f32 %v98, %v397
  %v399 = vpop.f32.mrb[0].mxu0
  %400 = vmatprep.mubr.f32.mxu0 0.0
  %401 = vmatmul.mubr.f32.gmra.mrb[0].mxu0 %v111
  %v402 = vpop.f32.mrb[0].mxu0
  %v403 = vadd.f32 %v98, %v402
  %v404 = vpop.f32.mrb[0].mxu0
  %405 = vmatprep.mubr.f32.mxu0 0.0
  %406 = vmatmul.mubr.f32.gmra.mrb[0].mxu0 %v114
  %v407 = vpop.f32.mrb[0].mxu0
  %v408 = vadd.f32 %v98, %v407
  %v409 = vpop.f32.mrb[0].mxu0
  %410 = vmatprep.mubr.f32.mxu0 0.0
  %411 = vmatmul.mubr.f32.gmra.mrb[0].mxu0 %v117
  %v412 = vpop.f32.mrb[0].mxu0
  %v413 = vadd.f32 %v98, %v412
  %v414 = vpop.f32.mrb[0].mxu0
  %415 = vmatprep.mubr.f32.mxu0 0.0
  %416 = vmatmul.mubr.f32.gmra.mrb[0].mxu0 %v120
  %v417 = vpop.f32.mrb[0].mxu0
  %v418 = vadd.f32 %v98, %v417
  %v419 = vpop.f32.mrb[0].mxu0
  %420 = vmatprep.mubr.f32.mxu0 0.0
  %421 = vmatmul.mubr.f32.gmra.mrb[0].mxu0 %v123
  %v422 = vpop.f32.mrb[0].mxu0
  %v423 = vadd.f32 %v98, %v422
  %v424 = vpop.f32.mrb[0].mxu0
  %425 = vmatprep.mubr.f32.mxu0 0.0
  %426 = vmatmul.mubr.f32.gmra.mrb[0].mxu0 %v126
  %v427 = vpop.f32.mrb[0].mxu0
  %v428 = vadd.f32 %v98, %v427
  %v429 = vpop.f32.mrb[0].mxu0
  %430 = vmatprep.mubr.f32.mxu0 0.0
  %431 = vmatmul.mubr.f32.gmra.mrb[0].mxu0 %v129
  %v432 = vpop.f32.mrb[0].mxu0
  %v433 = vadd.f32 %v98, %v432
  %v434 = vpop.f32.mrb[0].mxu0
  %435 = vmatprep.mubr.f32.mxu0 0.0
  %436 = vmatmul.mubr.f32.gmra.mrb[0].mxu0 %v132
  %v437 = vpop.f32.mrb[0].mxu0
  %v438 = vadd.f32 %v98, %v437
  %v439 = vpop.f32.mrb[0].mxu0
  %440 = vmatprep.mubr.f32.mxu0 0.0
  %441 = vmatmul.mubr.f32.gmra.mrb[0].mxu0 %v135
  %v442 = vpop.f32.mrb[0].mxu0
  %v443 = vadd.f32 %v98, %v442
  %v444 = vpop.f32.mrb[0].mxu0
  %445 = vmatprep.mubr.f32.mxu0 0.0
  %446 = vmatmul.mubr.f32.gmra.mrb[0].mxu0 %v138
  %v447 = vpop.f32.mrb[0].mxu0
  %v448 = vadd.f32 %v98, %v447
  %v449 = vpop.f32.mrb[0].mxu0
  %450 = vmatprep.mubr.f32.mxu0 0.0
  %451 = vmatmul.mubr.f32.gmra.mrb[0].mxu0 %v141
  %v452 = vpop.f32.mrb[0].mxu0
  %v453 = vadd.f32 %v98, %v452
  %v454 = vpop.f32.mrb[0].mxu0
  %455 = vmatprep.mubr.f32.mxu0 0.0
  %456 = vmatmul.mubr.f32.gmra.mrb[0].mxu0 %v144
  %v457 = vpop.f32.mrb[0].mxu0
  %v458 = vadd.f32 %v98, %v457
  %v459 = vpop.f32.mrb[0].mxu0
  %460 = vmatprep.mubr.f32.mxu0 0.0
  %461 = vmatmul.mubr.f32.gmra.mrb[0].mxu0 %v147
  %v462 = vpop.f32.mrb[0].mxu0
  %v463 = vadd.f32 %v98, %v462
  %v464 = vpop.f32.mrb[0].mxu0
  %465 = vmatprep.mubr.f32.mxu0 0.0
  %466 = vmatmul.mubr.f32.gmra.mrb[0].mxu0 %v150
  %v467 = vpop.f32.mrb[0].mxu0
  %v468 = vadd.f32 %v98, %v467
  %v469 = vpop.f32.mrb[0].mxu0
  %470 = vmatprep.mubr.f32.mxu0 0.0
  %471 = vmatmul.mubr.f32.gmra.mrb[0].mxu0 %v153
  %v472 = vpop.f32.mrb[0].mxu0
  %v473 = vadd.f32 %v98, %v472
  %v474 = vpop.f32.mrb[0].mxu0
  %475 = vmatprep.mubr.f32.mxu0 0.0
  %476 = vmatmul.mubr.f32.gmra.mrb[0].mxu0 %v156
  %v477 = vpop.f32.mrb[0].mxu0
  %v478 = vadd.f32 %v98, %v477
  %v479 = vpop.f32.mrb[0].mxu0
  %480 = vmatprep.mubr.f32.mxu0 0.0
  %481 = vmatmul.mubr.f32.gmra.mrb[0].mxu0 %v159
  %v482 = vpop.f32.mrb[0].mxu0
  %v483 = vadd.f32 %v98, %v482
  %v484 = vpop.f32.mrb[0].mxu0
  %485 = vmatprep.mubr.f32.mxu0 0.0
  %486 = vmatmul.mubr.f32.gmra.mrb[0].mxu0 %v162
  %v487 = vpop.f32.mrb[0].mxu0
  %v488 = vadd.f32 %v98, %v487
  %v489 = vpop.f32.mrb[0].mxu0
  %490 = vmatprep.mubr.f32.mxu0 0.0
  %491 = vmatmul.mubr.f32.gmra.mrb[0].mxu0 %v165
  %v492 = vpop.f32.mrb[0].mxu0
  %v493 = vadd.f32 %v98, %v492
  %v494 = vpop.f32.mrb[0].mxu0
  %495 = vmatprep.mubr.f32.mxu0 0.0
  %496 = vmatmul.mubr.f32.gmra.mrb[0].mxu0 %v168
  %v497 = vpop.f32.mrb[0].mxu0
  %v498 = vadd.f32 %v98, %v497
  %v499 = vpop.f32.mrb[0].mxu0
  %500 = vmatprep.mubr.f32.mxu0 0.0
  %501 = vmatmul.mubr.f32.gmra.mrb[0].mxu0 %v171
  %v502 = vpop.f32.mrb[0].mxu0
  %v503 = vadd.f32 %v98, %v502
  %v504 = vpop.f32.mrb[0].mxu0
  %505 = vmatprep.mubr.f32.mxu0 0.0
  %506 = vmatmul.mubr.f32.gmra.mrb[0].mxu0 %v174
  %v507 = vpop.f32.mrb[0].mxu0
  %v508 = vadd.f32 %v98, %v507
  %v509 = vpop.f32.mrb[0].mxu0
  %510 = vmatprep.mubr.f32.mxu0 0.0
  %511 = vmatmul.mubr.f32.gmra.mrb[0].mxu0 %v177
  %v512 = vpop.f32.mrb[0].mxu0
  %v513 = vadd.f32 %v98, %v512
  %v514 = vpop.f32.mrb[0].mxu0
  %515 = vmatprep.mubr.f32.mxu0 0.0
  %516 = vmatmul.mubr.f32.gmra.mrb[0].mxu0 %v180
  %v517 = vpop.f32.mrb[0].mxu0
  %v518 = vadd.f32 %v98, %v517
  %v519 = vpop.f32.mrb[0].mxu0
  %520 = vmatprep.mubr.f32.mxu0 0.0
  %521 = vmatmul.mubr.f32.gmra.mrb[0].mxu0 %v183
  %v522 = vpop.f32.mrb[0].mxu0
  %v523 = vadd.f32 %v98, %v522
  %v524 = vpop.f32.mrb[0].mxu0
  %525 = vmatprep.mubr.f32.mxu0 0.0
  %526 = vmatmul.mubr.f32.gmra.mrb[0].mxu0 %v186
  %v527 = vpop.f32.mrb[0].mxu0
  %v528 = vadd.f32 %v98, %v527
  %v529 = vpop.f32.mrb[0].mxu0
  %530 = vmatprep.mubr.f32.mxu0 0.0
  %531 = vmatmul.mubr.f32.gmra.mrb[0].mxu0 %v189
  %v532 = vpop.f32.mrb[0].mxu0
  %v533 = vadd.f32 %v98, %v532
  %v534 = vpop.f32.mrb[0].mxu0
  %535 = vmatprep.mubr.f32.mxu0 0.0
  %536 = vmatmul.mubr.f32.gmra.mrb[0].mxu0 %v192
  %v537 = vpop.f32.mrb[0].mxu0
  %v538 = vadd.f32 %v98, %v537
  %v539 = vpop.f32.mrb[0].mxu0
  %540 = vmatprep.mubr.f32.mxu0 0.0
  %541 = vmatmul.mubr.f32.gmra.mrb[0].mxu0 %v195
  %v542 = vpop.f32.mrb[0].mxu0
  %v543 = vadd.f32 %v98, %v542
  %v544 = vpop.f32.mrb[0].mxu0
  %545 = vmatprep.mubr.f32.mxu0 0.0
  %546 = vmatmul.mubr.f32.gmra.mrb[0].mxu0 %v198
  %v547 = vpop.f32.mrb[0].mxu0
  %v548 = vadd.f32 %v98, %v547
  %v549 = vpop.f32.mrb[0].mxu0
  %550 = vmatprep.mubr.f32.mxu0 0.0
  %551 = vmatmul.mubr.f32.gmra.mrb[0].mxu0 %v201
  %v552 = vpop.f32.mrb[0].mxu0
  %v553 = vadd.f32 %v98, %v552
  %v554 = vpop.f32.mrb[0].mxu0
  %555 = vmatprep.mubr.f32.mxu0 0.0
  %556 = vmatmul.mubr.f32.gmra.mrb[0].mxu0 %v204
  %v557 = vpop.f32.mrb[0].mxu0
  %v558 = vadd.f32 %v98, %v557
  %v559 = vpop.f32.mrb[0].mxu0
  %560 = vmatprep.mubr.f32.mxu0 0.0
  %561 = vmatmul.mubr.f32.gmra.mrb[0].mxu0 %v207
  %v562 = vpop.f32.mrb[0].mxu0
  %v563 = vadd.f32 %v98, %v562
  %v564 = vpop.f32.mrb[0].mxu0
  %565 = vmatprep.mubr.f32.mxu0 0.0
  %566 = vmatmul.mubr.f32.gmra.mrb[0].mxu0 %v210
  %v567 = vpop.f32.mrb[0].mxu0
  %v568 = vadd.f32 %v98, %v567
  %v569 = vpop.f32.mrb[0].mxu0
  %570 = vmatprep.mubr.f32.mxu0 0.0
  %571 = vmatmul.mubr.f32.gmra.mrb[0].mxu0 %v213
  %v572 = vpop.f32.mrb[0].mxu0
  %v573 = vadd.f32 %v98, %v572
  %v574 = vpop.f32.mrb[0].mxu0
  %575 = vmatprep.mubr.f32.mxu0 0.0
  %576 = vmatmul.mubr.f32.gmra.mrb[0].mxu0 %v216
  %v577 = vpop.f32.mrb[0].mxu0
  %v578 = vadd.f32 %v98, %v577
  %v579 = vpop.f32.mrb[0].mxu0
  %580 = vmatprep.mubr.f32.mxu0 0.0
  %581 = vmatmul.mubr.f32.gmra.mrb[0].mxu0 %v219
  %v582 = vpop.f32.mrb[0].mxu0
  %v583 = vadd.f32 %v98, %v582
  %v584 = vpop.f32.mrb[0].mxu0
  %585 = vmatprep.mubr.f32.mxu0 0.0
  %586 = vmatmul.mubr.f32.gmra.mrb[0].mxu0 %v222
  %v587 = vpop.f32.mrb[0].mxu0
  %v588 = vadd.f32 %v98, %v587
  %v589 = vpop.f32.mrb[0].mxu0
  %590 = vmatprep.mubr.f32.mxu0 0.0
  %591 = vmatmul.mubr.f32.gmra.mrb[0].mxu0 %v225
  %v592 = vpop.f32.mrb[0].mxu0
  %v593 = vadd.f32 %v98, %v592
  %v594 = vpop.f32.mrb[0].mxu0
  %595 = vmatprep.mubr.f32.mxu0 0.0
  %596 = vmatmul.mubr.f32.gmra.mrb[0].mxu0 %v228
  %v597 = vpop.f32.mrb[0].mxu0
  %v598 = vadd.f32 %v98, %v597
  %v599 = vpop.f32.mrb[0].mxu0
  %600 = vmatprep.mubr.f32.mxu0 0.0
  %601 = vmatmul.mubr.f32.gmra.mrb[0].mxu0 %v231
  %v602 = vpop.f32.mrb[0].mxu0
  %v603 = vadd.f32 %v98, %v602
  %v604 = vpop.f32.mrb[0].mxu0
  %605 = vmatprep.mubr.f32.mxu0 0.0
  %606 = vmatmul.mubr.f32.gmra.mrb[0].mxu0 %v234
  %v607 = vpop.f32.mrb[0].mxu0
  %v608 = vadd.f32 %v98, %v607
  %v609 = vpop.f32.mrb[0].mxu0
  %610 = vmatprep.mubr.f32.mxu0 0.0
  %611 = vmatmul.mubr.f32.gmra.mrb[0].mxu0 %v237
  %v612 = vpop.f32.mrb[0].mxu0
  %v613 = vadd.f32 %v98, %v612
  %v614 = vpop.f32.mrb[0].mxu0
  %615 = vmatprep.mubr.f32.mxu0 0.0
  %616 = vmatmul.mubr.f32.gmra.mrb[0].mxu0 %v240
  %v617 = vpop.f32.mrb[0].mxu0
  %v618 = vadd.f32 %v98, %v617
  %v619 = vpop.f32.mrb[0].mxu0
  %620 = vmatprep.mubr.f32.mxu0 0.0
  %621 = vmatmul.mubr.f32.gmra.mrb[0].mxu0 %v243
  %v622 = vpop.f32.mrb[0].mxu0
  %v623 = vadd.f32 %v98, %v622
  %v624 = vpop.f32.mrb[0].mxu0
  %625 = vmatprep.mubr.f32.mxu0 0.0
  %626 = vmatmul.mubr.f32.gmra.mrb[0].mxu0 %v246
  %v627 = vpop.f32.mrb[0].mxu0
  %v628 = vadd.f32 %v98, %v627
  %v629 = vpop.f32.mrb[0].mxu0
  %630 = vmatprep.mubr.f32.mxu0 0.0
  %631 = vmatmul.mubr.f32.gmra.mrb[0].mxu0 %v249
  %v632 = vpop.f32.mrb[0].mxu0
  %v633 = vadd.f32 %v98, %v632
  %v634 = vpop.f32.mrb[0].mxu0
  %635 = vmatprep.mubr.f32.mxu0 0.0
  %636 = vmatmul.mubr.f32.gmra.mrb[0].mxu0 %v252
  %v637 = vpop.f32.mrb[0].mxu0
  %v638 = vadd.f32 %v98, %v637
  %v639 = vpop.f32.mrb[0].mxu0
  %640 = vmatprep.mubr.f32.mxu0 0.0
  %641 = vmatmul.mubr.f32.gmra.mrb[0].mxu0 %v255
  %v642 = vpop.f32.mrb[0].mxu0
  %v643 = vadd.f32 %v98, %v642
  %v644 = vpop.f32.mrb[0].mxu0
  %645 = vmatprep.mubr.f32.mxu0 0.0
  %646 = vmatmul.mubr.f32.gmra.mrb[0].mxu0 %v258
  %v647 = vpop.f32.mrb[0].mxu0
  %v648 = vadd.f32 %v98, %v647
  %v649 = vpop.f32.mrb[0].mxu0
  %650 = vmatprep.mubr.f32.mxu0 0.0
  %651 = vmatmul.mubr.f32.gmra.mrb[0].mxu0 %v261
  %v652 = vpop.f32.mrb[0].mxu0
  %v653 = vadd.f32 %v98, %v652
  %v654 = vpop.f32.mrb[0].mxu0
  %655 = vmatprep.mubr.f32.mxu0 0.0
  %656 = vmatmul.mubr.f32.gmra.mrb[0].mxu0 %v264
  %v657 = vpop.f32.mrb[0].mxu0
  %v658 = vadd.f32 %v98, %v657
  %v659 = vpop.f32.mrb[0].mxu0
  %660 = vmatprep.mubr.f32.mxu0 0.0
  %661 = vmatmul.mubr.f32.gmra.mrb[0].mxu0 %v267
  %v662 = vpop.f32.mrb[0].mxu0
  %v663 = vadd.f32 %v98, %v662
  %v664 = vpop.f32.mrb[0].mxu0
  %665 = vmatprep.mubr.f32.mxu0 0.0
  %666 = vmatmul.mubr.f32.gmra.mrb[0].mxu0 %v270
  %v667 = vpop.f32.mrb[0].mxu0
  %v668 = vadd.f32 %v98, %v667
  %v669 = vpop.f32.mrb[0].mxu0
  %670 = vmatprep.mubr.f32.mxu0 0.0
  %671 = vmatmul.mubr.f32.gmra.mrb[0].mxu0 %v273
  %v672 = vpop.f32.mrb[0].mxu0
  %v673 = vadd.f32 %v98, %v672
  %v674 = vpop.f32.mrb[0].mxu0
  %675 = vmatprep.mubr.f32.mxu0 0.0
  %676 = vmatmul.mubr.f32.gmra.mrb[0].mxu0 %v276
  %v677 = vpop.f32.mrb[0].mxu0
  %v678 = vadd.f32 %v98, %v677
  %v679 = vpop.f32.mrb[0].mxu0
  %680 = vmatprep.mubr.f32.mxu0 0.0
  %681 = vmatmul.mubr.f32.gmra.mrb[0].mxu0 %v279
  %v682 = vpop.f32.mrb[0].mxu0
  %v683 = vadd.f32 %v98, %v682
  %v684 = vpop.f32.mrb[0].mxu0
  %685 = vmatprep.mubr.f32.mxu0 0.0
  %686 = vmatmul.mubr.f32.gmra.mrb[0].mxu0 %v282
  %v687 = vpop.f32.mrb[0].mxu0
  %v688 = vadd.f32 %v98, %v687
  %v689 = vpop.f32.mrb[0].mxu0
  %690 = vmatprep.mubr.f32.mxu0 0.0
  %691 = vmatmul.mubr.f32.gmra.mrb[0].mxu0 %v285
  %v692 = vpop.f32.mrb[0].mxu0
  %v693 = vadd.f32 %v98, %v692
  %v694 = vpop.f32.mrb[0].mxu0
  %695 = vmatprep.mubr.f32.mxu0 0.0
  %696 = vmatmul.mubr.f32.gmra.mrb[0].mxu0 %v288
  %v697 = vpop.f32.mrb[0].mxu0
  %v698 = vadd.f32 %v98, %v697
  %v699 = vpop.f32.mrb[0].mxu0
  %700 = vmatprep.mubr.f32.mxu0 0.0
  %701 = vmatmul.mubr.f32.gmra.mrb[0].mxu0 %v291
  %v702 = vpop.f32.mrb[0].mxu0
  %v703 = vadd.f32 %v98, %v702
  %v704 = vpop.f32.mrb[0].mxu0
  %705 = vmatprep.mubr.f32.mxu0 0.0
  %706 = vmatmul.mubr.f32.gmra.mrb[0].mxu0 %v294
  %v707 = vpop.f32.mrb[0].mxu0
  %v708 = vadd.f32 %v98, %v707
  %v709 = vpop.f32.mrb[0].mxu0
  %710 = vmatprep.mubr.f32.mxu0 0.0
  %711 = vmatmul.mubr.f32.gmra.mrb[0].mxu0 %v297
  %v712 = vpop.f32.mrb[0].mxu0
  %v713 = vadd.f32 %v98, %v712
  %v714 = vpop.f32.mrb[0].mxu0
  %715 = vmatprep.mubr.f32.mxu0 0.0
  %716 = vmatmul.mubr.f32.gmra.mrb[0].mxu0 %v300
  %v717 = vpop.f32.mrb[0].mxu0
  %v718 = vadd.f32 %v98, %v717
  %v719 = vpop.f32.mrb[0].mxu0
  %720 = vmatprep.mubr.f32.mxu0 0.0
  %721 = vmatmul.mubr.f32.gmra.mrb[0].mxu0 %v303
  %v722 = vpop.f32.mrb[0].mxu0
  %v723 = vadd.f32 %v98, %v722
  %v724 = vpop.f32.mrb[0].mxu0
  %725 = vmatprep.mubr.f32.mxu0 0.0
  %726 = vmatmul.mubr.f32.gmra.mrb[0].mxu0 %v306
  %v727 = vpop.f32.mrb[0].mxu0
  %v728 = vadd.f32 %v98, %v727
  %v729 = vpop.f32.mrb[0].mxu0
  %730 = vmatprep.mubr.f32.mxu0 0.0
  %731 = vmatmul.mubr.f32.gmra.mrb[0].mxu0 %v309
  %v732 = vpop.f32.mrb[0].mxu0
  %v733 = vadd.f32 %v98, %v732
  %v734 = vpop.f32.mrb[0].mxu0
  %735 = vmatprep.mubr.f32.mxu0 0.0
  %736 = vmatmul.mubr.f32.gmra.mrb[0].mxu0 %v312
  %v737 = vpop.f32.mrb[0].mxu0
  %v738 = vadd.f32 %v98, %v737
  %v739 = vpop.f32.mrb[0].mxu0
  %740 = vmatprep.mubr.f32.mxu0 0.0
  %741 = vmatmul.mubr.f32.gmra.mrb[0].mxu0 %v315
  %v742 = vpop.f32.mrb[0].mxu0
  %v743 = vadd.f32 %v98, %v742
  %v744 = vpop.f32.mrb[0].mxu0
  %745 = vdwg.mxu0
  %v746 = vld [vmem:[%s3] sm:$0xff]
  %v747 = vld [vmem:[%s3 + $0x8] sm:$0xff]
  %v748 = vld [vmem:[%s3 + $0x10] sm:$0xff]
  %v749 = vld [vmem:[%s3 + $0x18] sm:$0xff]
  %v750 = vld [vmem:[%s3 + $0x20] sm:$0xff]
  %v751 = vld [vmem:[%s3 + $0x28] sm:$0xff]
  %v752 = vld [vmem:[%s3 + $0x30] sm:$0xff]
  %v753 = vld [vmem:[%s3 + $0x38] sm:$0xff]
  %v754 = vld [vmem:[%s3 + $0x40] sm:$0xff]
  %v755 = vld [vmem:[%s3 + $0x48] sm:$0xff]
  %v756 = vld [vmem:[%s3 + $0x50] sm:$0xff]
  %v757 = vld [vmem:[%s3 + $0x58] sm:$0xff]
  %v758 = vld [vmem:[%s3 + $0x60] sm:$0xff]
  %v759 = vld [vmem:[%s3 + $0x68] sm:$0xff]
  %v760 = vld [vmem:[%s3 + $0x70] sm:$0xff]
  %v761 = vld [vmem:[%s3 + $0x78] sm:$0xff]
  %v762 = vld [vmem:[%s3 + $0x80] sm:$0xff]
  %v763 = vld [vmem:[%s3 + $0x88] sm:$0xff]
  %v764 = vld [vmem:[%s3 + $0x90] sm:$0xff]
  %v765 = vld [vmem:[%s3 + $0x98] sm:$0xff]
  %v766 = vld [vmem:[%s3 + $0xa0] sm:$0xff]
  %v767 = vld [vmem:[%s3 + $0xa8] sm:$0xff]
  %v768 = vld [vmem:[%s3 + $0xb0] sm:$0xff]
  %v769 = vld [vmem:[%s3 + $0xb8] sm:$0xff]
  %v770 = vld [vmem:[%s3 + $0xc0] sm:$0xff]
  %v771 = vld [vmem:[%s3 + $0xc8] sm:$0xff]
  %v772 = vld [vmem:[%s3 + $0xd0] sm:$0xff]
  %v773 = vld [vmem:[%s3 + $0xd8] sm:$0xff]
  %v774 = vld [vmem:[%s3 + $0xe0] sm:$0xff]
  %v775 = vld [vmem:[%s3 + $0xe8] sm:$0xff]
  %v776 = vld [vmem:[%s3 + $0xf0] sm:$0xff]
  %v777 = vld [vmem:[%s3 + $0xf8] sm:$0xff]
  %v778 = vld [vmem:[%s3 + $0x100] sm:$0xff]
  %v779 = vld [vmem:[%s3 + $0x108] sm:$0xff]
  %v780 = vld [vmem:[%s3 + $0x110] sm:$0xff]
  %v781 = vld [vmem:[%s3 + $0x118] sm:$0xff]
  %v782 = vld [vmem:[%s3 + $0x120] sm:$0xff]
  %v783 = vld [vmem:[%s3 + $0x128] sm:$0xff]
  %v784 = vld [vmem:[%s3 + $0x130] sm:$0xff]
  %v785 = vld [vmem:[%s3 + $0x138] sm:$0xff]
  %v786 = vld [vmem:[%s3 + $0x140] sm:$0xff]
  %v787 = vld [vmem:[%s3 + $0x148] sm:$0xff]
  %v788 = vld [vmem:[%s3 + $0x150] sm:$0xff]
  %v789 = vld [vmem:[%s3 + $0x158] sm:$0xff]
  %v790 = vld [vmem:[%s3 + $0x160] sm:$0xff]
  %v791 = vld [vmem:[%s3 + $0x168] sm:$0xff]
  %v792 = vld [vmem:[%s3 + $0x170] sm:$0xff]
  %v793 = vld [vmem:[%s3 + $0x178] sm:$0xff]
  %v794 = vld [vmem:[%s3 + $0x180] sm:$0xff]
  %v795 = vld [vmem:[%s3 + $0x188] sm:$0xff]
  %v796 = vld [vmem:[%s3 + $0x190] sm:$0xff]
  %v797 = vld [vmem:[%s3 + $0x198] sm:$0xff]
  %v798 = vld [vmem:[%s3 + $0x1a0] sm:$0xff]
  %v799 = vld [vmem:[%s3 + $0x1a8] sm:$0xff]
  %v800 = vld [vmem:[%s3 + $0x1b0] sm:$0xff]
  %v801 = vld [vmem:[%s3 + $0x1b8] sm:$0xff]
  %v802 = vld [vmem:[%s3 + $0x1c0] sm:$0xff]
  %v803 = vld [vmem:[%s3 + $0x1c8] sm:$0xff]
  %v804 = vld [vmem:[%s3 + $0x1d0] sm:$0xff]
  %v805 = vld [vmem:[%s3 + $0x1d8] sm:$0xff]
  %v806 = vld [vmem:[%s3 + $0x1e0] sm:$0xff]
  %v807 = vld [vmem:[%s3 + $0x1e8] sm:$0xff]
  %v808 = vld [vmem:[%s3 + $0x1f0] sm:$0xff]
  %v809 = vld [vmem:[%s3 + $0x1f8] sm:$0xff]
  %v810 = vld [vmem:[%s3 + $0x200] sm:$0xff]
  %v811 = vld [vmem:[%s3 + $0x208] sm:$0xff]
  %v812 = vld [vmem:[%s3 + $0x210] sm:$0xff]
  %v813 = vld [vmem:[%s3 + $0x218] sm:$0xff]
  %v814 = vld [vmem:[%s3 + $0x220] sm:$0xff]
  %v815 = vld [vmem:[%s3 + $0x228] sm:$0xff]
  %v816 = vld [vmem:[%s3 + $0x230] sm:$0xff]
  %v817 = vld [vmem:[%s3 + $0x238] sm:$0xff]
  %v818 = vadd.f32 %v388, %v746
  %v819 = vadd.f32 %v393, %v747
  %v820 = vadd.f32 %v398, %v748
  %v821 = vadd.f32 %v403, %v749
  %v822 = vadd.f32 %v408, %v750
  %v823 = vadd.f32 %v413, %v751
  %v824 = vadd.f32 %v418, %v752
  %v825 = vadd.f32 %v423, %v753
  %v826 = vadd.f32 %v428, %v754
  %v827 = vadd.f32 %v433, %v755
  %v828 = vadd.f32 %v438, %v756
  %v829 = vadd.f32 %v443, %v757
  %v830 = vadd.f32 %v448, %v758
  %v831 = vadd.f32 %v453, %v759
  %v832 = vadd.f32 %v458, %v760
  %v833 = vadd.f32 %v463, %v761
  %v834 = vadd.f32 %v468, %v762
  %v835 = vadd.f32 %v473, %v763
  %v836 = vadd.f32 %v478, %v764
  %v837 = vadd.f32 %v483, %v765
  %v838 = vadd.f32 %v488, %v766
  %v839 = vadd.f32 %v493, %v767
  %v840 = vadd.f32 %v498, %v768
  %v841 = vadd.f32 %v503, %v769
  %v842 = vadd.f32 %v508, %v770
  %v843 = vadd.f32 %v513, %v771
  %v844 = vadd.f32 %v518, %v772
  %v845 = vadd.f32 %v523, %v773
  %v846 = vadd.f32 %v528, %v774
  %v847 = vadd.f32 %v533, %v775
  %v848 = vadd.f32 %v538, %v776
  %v849 = vadd.f32 %v543, %v777
  %v850 = vadd.f32 %v548, %v778
  %v851 = vadd.f32 %v553, %v779
  %v852 = vadd.f32 %v558, %v780
  %v853 = vadd.f32 %v563, %v781
  %v854 = vadd.f32 %v568, %v782
  %v855 = vadd.f32 %v573, %v783
  %v856 = vadd.f32 %v578, %v784
  %v857 = vadd.f32 %v583, %v785
  %v858 = vadd.f32 %v588, %v786
  %v859 = vadd.f32 %v593, %v787
  %v860 = vadd.f32 %v598, %v788
  %v861 = vadd.f32 %v603, %v789
  %v862 = vadd.f32 %v608, %v790
  %v863 = vadd.f32 %v613, %v791
  %v864 = vadd.f32 %v618, %v792
  %v865 = vadd.f32 %v623, %v793
  %v866 = vadd.f32 %v628, %v794
  %v867 = vadd.f32 %v633, %v795
  %v868 = vadd.f32 %v638, %v796
  %v869 = vadd.f32 %v643, %v797
  %v870 = vadd.f32 %v648, %v798
  %v871 = vadd.f32 %v653, %v799
  %v872 = vadd.f32 %v658, %v800
  %v873 = vadd.f32 %v663, %v801
  %v874 = vadd.f32 %v668, %v802
  %v875 = vadd.f32 %v673, %v803
  %v876 = vadd.f32 %v678, %v804
  %v877 = vadd.f32 %v683, %v805
  %v878 = vadd.f32 %v688, %v806
  %v879 = vadd.f32 %v693, %v807
  %v880 = vadd.f32 %v698, %v808
  %v881 = vadd.f32 %v703, %v809
  %v882 = vadd.f32 %v708, %v810
  %v883 = vadd.f32 %v713, %v811
  %v884 = vadd.f32 %v718, %v812
  %v885 = vadd.f32 %v723, %v813
  %v886 = vadd.f32 %v728, %v814
  %v887 = vadd.f32 %v733, %v815
  %v888 = vadd.f32 %v738, %v816
  %v889 = vadd.f32 %v743, %v817
  %v890 = vmul.f32 %v818, 0.5
  %v891 = vmul.f32 %v819, 0.5
  %v892 = vmul.f32 %v820, 0.5
  %v893 = vmul.f32 %v821, 0.5
  %v894 = vmul.f32 %v822, 0.5
  %v895 = vmul.f32 %v823, 0.5
  %v896 = vmul.f32 %v824, 0.5
  %v897 = vmul.f32 %v825, 0.5
  %v898 = vmul.f32 %v826, 0.5
  %v899 = vmul.f32 %v827, 0.5
  %v900 = vmul.f32 %v828, 0.5
  %v901 = vmul.f32 %v829, 0.5
  %v902 = vmul.f32 %v830, 0.5
  %v903 = vmul.f32 %v831, 0.5
  %v904 = vmul.f32 %v832, 0.5
  %v905 = vmul.f32 %v833, 0.5
  %v906 = vmul.f32 %v834, 0.5
  %v907 = vmul.f32 %v835, 0.5
  %v908 = vmul.f32 %v836, 0.5
  %v909 = vmul.f32 %v837, 0.5
  %v910 = vmul.f32 %v838, 0.5
  %v911 = vmul.f32 %v839, 0.5
  %v912 = vmul.f32 %v840, 0.5
  %v913 = vmul.f32 %v841, 0.5
  %v914 = vmul.f32 %v842, 0.5
  %v915 = vmul.f32 %v843, 0.5
  %v916 = vmul.f32 %v844, 0.5
  %v917 = vmul.f32 %v845, 0.5
  %v918 = vmul.f32 %v846, 0.5
  %v919 = vmul.f32 %v847, 0.5
  %v920 = vmul.f32 %v848, 0.5
  %v921 = vmul.f32 %v849, 0.5
  %v922 = vmul.f32 %v850, 0.5
  %v923 = vmul.f32 %v851, 0.5
  %v924 = vmul.f32 %v852, 0.5
  %v925 = vmul.f32 %v853, 0.5
  %v926 = vmul.f32 %v854, 0.5
  %v927 = vmul.f32 %v855, 0.5
  %v928 = vmul.f32 %v856, 0.5
  %v929 = vmul.f32 %v857, 0.5
  %v930 = vmul.f32 %v858, 0.5
  %v931 = vmul.f32 %v859, 0.5
  %v932 = vmul.f32 %v860, 0.5
  %v933 = vmul.f32 %v861, 0.5
  %v934 = vmul.f32 %v862, 0.5
  %v935 = vmul.f32 %v863, 0.5
  %v936 = vmul.f32 %v864, 0.5
  %v937 = vmul.f32 %v865, 0.5
  %v938 = vmul.f32 %v866, 0.5
  %v939 = vmul.f32 %v867, 0.5
  %v940 = vmul.f32 %v868, 0.5
  %v941 = vmul.f32 %v869, 0.5
  %v942 = vmul.f32 %v870, 0.5
  %v943 = vmul.f32 %v871, 0.5
  %v944 = vmul.f32 %v872, 0.5
  %v945 = vmul.f32 %v873, 0.5
  %v946 = vmul.f32 %v874, 0.5
  %v947 = vmul.f32 %v875, 0.5
  %v948 = vmul.f32 %v876, 0.5
  %v949 = vmul.f32 %v877, 0.5
  %v950 = vmul.f32 %v878, 0.5
  %v951 = vmul.f32 %v879, 0.5
  %v952 = vmul.f32 %v880, 0.5
  %v953 = vmul.f32 %v881, 0.5
  %v954 = vmul.f32 %v882, 0.5
  %v955 = vmul.f32 %v883, 0.5
  %v956 = vmul.f32 %v884, 0.5
  %v957 = vmul.f32 %v885, 0.5
  %v958 = vmul.f32 %v886, 0.5
  %v959 = vmul.f32 %v887, 0.5
  %v960 = vmul.f32 %v888, 0.5
  %v961 = vmul.f32 %v889, 0.5
  %v962 = vmul.f32 %v818, 0.70710677
  %v963 = vmul.f32 %v819, 0.70710677
  %v964 = vmul.f32 %v820, 0.70710677
  %v965 = vmul.f32 %v821, 0.70710677
  %v966 = vmul.f32 %v822, 0.70710677
  %v967 = vmul.f32 %v823, 0.70710677
  %v968 = vmul.f32 %v824, 0.70710677
  %v969 = vmul.f32 %v825, 0.70710677
  %v970 = vmul.f32 %v826, 0.70710677
  %v971 = vmul.f32 %v827, 0.70710677
  %v972 = vmul.f32 %v828, 0.70710677
  %v973 = vmul.f32 %v829, 0.70710677
  %v974 = vmul.f32 %v830, 0.70710677
  %v975 = vmul.f32 %v831, 0.70710677
  %v976 = vmul.f32 %v832, 0.70710677
  %v977 = vmul.f32 %v833, 0.70710677
  %v978 = vmul.f32 %v834, 0.70710677
  %v979 = vmul.f32 %v835, 0.70710677
  %v980 = vmul.f32 %v836, 0.70710677
  %v981 = vmul.f32 %v837, 0.70710677
  %v982 = vmul.f32 %v838, 0.70710677
  %v983 = vmul.f32 %v839, 0.70710677
  %v984 = vmul.f32 %v840, 0.70710677
  %v985 = vmul.f32 %v841, 0.70710677
  %v986 = vmul.f32 %v842, 0.70710677
  %v987 = vmul.f32 %v843, 0.70710677
  %v988 = vmul.f32 %v844, 0.70710677
  %v989 = vmul.f32 %v845, 0.70710677
  %v990 = vmul.f32 %v846, 0.70710677
  %v991 = vmul.f32 %v847, 0.70710677
  %v992 = vmul.f32 %v848, 0.70710677
  %v993 = vmul.f32 %v849, 0.70710677
  %v994 = vmul.f32 %v850, 0.70710677
  %v995 = vmul.f32 %v851, 0.70710677
  %v996 = vmul.f32 %v852, 0.70710677
  %v997 = vmul.f32 %v853, 0.70710677
  %v998 = vmul.f32 %v854, 0.70710677
  %v999 = vmul.f32 %v855, 0.70710677
  %v1000 = vmul.f32 %v856, 0.70710677
  %v1001 = vmul.f32 %v857, 0.70710677
  %v1002 = vmul.f32 %v858, 0.70710677
  %v1003 = vmul.f32 %v859, 0.70710677
  %v1004 = vmul.f32 %v860, 0.70710677
  %v1005 = vmul.f32 %v861, 0.70710677
  %v1006 = vmul.f32 %v862, 0.70710677
  %v1007 = vmul.f32 %v863, 0.70710677
  %v1008 = vmul.f32 %v864, 0.70710677
  %v1009 = vmul.f32 %v865, 0.70710677
  %v1010 = vmul.f32 %v866, 0.70710677
  %v1011 = vmul.f32 %v867, 0.70710677
  %v1012 = vmul.f32 %v868, 0.70710677
  %v1013 = vmul.f32 %v869, 0.70710677
  %v1014 = vmul.f32 %v870, 0.70710677
  %v1015 = vmul.f32 %v871, 0.70710677
  %v1016 = vmul.f32 %v872, 0.70710677
  %v1017 = vmul.f32 %v873, 0.70710677
  %v1018 = vmul.f32 %v874, 0.70710677
  %v1019 = vmul.f32 %v875, 0.70710677
  %v1020 = vmul.f32 %v876, 0.70710677
  %v1021 = vmul.f32 %v877, 0.70710677
  %v1022 = vmul.f32 %v878, 0.70710677
  %v1023 = vmul.f32 %v879, 0.70710677
  %v1024 = vmul.f32 %v880, 0.70710677
  %v1025 = vmul.f32 %v881, 0.70710677
  %v1026 = vmul.f32 %v882, 0.70710677
  %v1027 = vmul.f32 %v883, 0.70710677
  %v1028 = vmul.f32 %v884, 0.70710677
  %v1029 = vmul.f32 %v885, 0.70710677
  %v1030 = vmul.f32 %v886, 0.70710677
  %v1031 = vmul.f32 %v887, 0.70710677
  %v1032 = vmul.f32 %v888, 0.70710677
  %v1033 = vmul.f32 %v889, 0.70710677
  %v1034 = vand.u32 2147483647, %v962
  %v1035 = vand.u32 2147483647, %v963
  %v1036 = vand.u32 2147483647, %v964
  %v1037 = vand.u32 2147483647, %v965
  %v1038 = vand.u32 2147483647, %v966
  %v1039 = vand.u32 2147483647, %v967
  %v1040 = vand.u32 2147483647, %v968
  %v1041 = vand.u32 2147483647, %v969
  %v1042 = vand.u32 2147483647, %v970
  %v1043 = vand.u32 2147483647, %v971
  %v1044 = vand.u32 2147483647, %v972
  %v1045 = vand.u32 2147483647, %v973
  %v1046 = vand.u32 2147483647, %v974
  %v1047 = vand.u32 2147483647, %v975
  %v1048 = vand.u32 2147483647, %v976
  %v1049 = vand.u32 2147483647, %v977
  %v1050 = vand.u32 2147483647, %v978
  %v1051 = vand.u32 2147483647, %v979
  %v1052 = vand.u32 2147483647, %v980
  %v1053 = vand.u32 2147483647, %v981
  %v1054 = vand.u32 2147483647, %v982
  %v1055 = vand.u32 2147483647, %v983
  %v1056 = vand.u32 2147483647, %v984
  %v1057 = vand.u32 2147483647, %v985
  %v1058 = vand.u32 2147483647, %v986
  %v1059 = vand.u32 2147483647, %v987
  %v1060 = vand.u32 2147483647, %v988
  %v1061 = vand.u32 2147483647, %v989
  %v1062 = vand.u32 2147483647, %v990
  %v1063 = vand.u32 2147483647, %v991
  %v1064 = vand.u32 2147483647, %v992
  %v1065 = vand.u32 2147483647, %v993
  %v1066 = vand.u32 2147483647, %v994
  %v1067 = vand.u32 2147483647, %v995
  %v1068 = vand.u32 2147483647, %v996
  %v1069 = vand.u32 2147483647, %v997
  %v1070 = vand.u32 2147483647, %v998
  %v1071 = vand.u32 2147483647, %v999
  %v1072 = vand.u32 2147483647, %v1000
  %v1073 = vand.u32 2147483647, %v1001
  %v1074 = vand.u32 2147483647, %v1002
  %v1075 = vand.u32 2147483647, %v1003
  %v1076 = vand.u32 2147483647, %v1004
  %v1077 = vand.u32 2147483647, %v1005
  %v1078 = vand.u32 2147483647, %v1006
  %v1079 = vand.u32 2147483647, %v1007
  %v1080 = vand.u32 2147483647, %v1008
  %v1081 = vand.u32 2147483647, %v1009
  %v1082 = vand.u32 2147483647, %v1010
  %v1083 = vand.u32 2147483647, %v1011
  %v1084 = vand.u32 2147483647, %v1012
  %v1085 = vand.u32 2147483647, %v1013
  %v1086 = vand.u32 2147483647, %v1014
  %v1087 = vand.u32 2147483647, %v1015
  %v1088 = vand.u32 2147483647, %v1016
  %v1089 = vand.u32 2147483647, %v1017
  %v1090 = vand.u32 2147483647, %v1018
  %v1091 = vand.u32 2147483647, %v1019
  %v1092 = vand.u32 2147483647, %v1020
  %v1093 = vand.u32 2147483647, %v1021
  %v1094 = vand.u32 2147483647, %v1022
  %v1095 = vand.u32 2147483647, %v1023
  %v1096 = vand.u32 2147483647, %v1024
  %v1097 = vand.u32 2147483647, %v1025
  %v1098 = vand.u32 2147483647, %v1026
  %v1099 = vand.u32 2147483647, %v1027
  %v1100 = vand.u32 2147483647, %v1028
  %v1101 = vand.u32 2147483647, %v1029
  %v1102 = vand.u32 2147483647, %v1030
  %v1103 = vand.u32 2147483647, %v1031
  %v1104 = vand.u32 2147483647, %v1032
  %v1105 = vand.u32 2147483647, %v1033
  %v1106 = vmul.f32 %v1034, 0.3275911
  %v1107 = vmul.f32 %v1035, 0.3275911
  %v1108 = vmul.f32 %v1036, 0.3275911
  %v1109 = vmul.f32 %v1037, 0.3275911
  %v1110 = vmul.f32 %v1038, 0.3275911
  %v1111 = vmul.f32 %v1039, 0.3275911
  %v1112 = vmul.f32 %v1040, 0.3275911
  %v1113 = vmul.f32 %v1041, 0.3275911
  %v1114 = vmul.f32 %v1042, 0.3275911
  %v1115 = vmul.f32 %v1043, 0.3275911
  %v1116 = vmul.f32 %v1044, 0.3275911
  %v1117 = vmul.f32 %v1045, 0.3275911
  %v1118 = vmul.f32 %v1046, 0.3275911
  %v1119 = vmul.f32 %v1047, 0.3275911
  %v1120 = vmul.f32 %v1048, 0.3275911
  %v1121 = vmul.f32 %v1049, 0.3275911
  %v1122 = vmul.f32 %v1050, 0.3275911
  %v1123 = vmul.f32 %v1051, 0.3275911
  %v1124 = vmul.f32 %v1052, 0.3275911
  %v1125 = vmul.f32 %v1053, 0.3275911
  %v1126 = vmul.f32 %v1054, 0.3275911
  %v1127 = vmul.f32 %v1055, 0.3275911
  %v1128 = vmul.f32 %v1056, 0.3275911
  %v1129 = vmul.f32 %v1057, 0.3275911
  %v1130 = vmul.f32 %v1058, 0.3275911
  %v1131 = vmul.f32 %v1059, 0.3275911
  %v1132 = vmul.f32 %v1060, 0.3275911
  %v1133 = vmul.f32 %v1061, 0.3275911
  %v1134 = vmul.f32 %v1062, 0.3275911
  %v1135 = vmul.f32 %v1063, 0.3275911
  %v1136 = vmul.f32 %v1064, 0.3275911
  %v1137 = vmul.f32 %v1065, 0.3275911
  %v1138 = vmul.f32 %v1066, 0.3275911
  %v1139 = vmul.f32 %v1067, 0.3275911
  %v1140 = vmul.f32 %v1068, 0.3275911
  %v1141 = vmul.f32 %v1069, 0.3275911
  %v1142 = vmul.f32 %v1070, 0.3275911
  %v1143 = vmul.f32 %v1071, 0.3275911
  %v1144 = vmul.f32 %v1072, 0.3275911
  %v1145 = vmul.f32 %v1073, 0.3275911
  %v1146 = vmul.f32 %v1074, 0.3275911
  %v1147 = vmul.f32 %v1075, 0.3275911
  %v1148 = vmul.f32 %v1076, 0.3275911
  %v1149 = vmul.f32 %v1077, 0.3275911
  %v1150 = vmul.f32 %v1078, 0.3275911
  %v1151 = vmul.f32 %v1079, 0.3275911
  %v1152 = vmul.f32 %v1080, 0.3275911
  %v1153 = vmul.f32 %v1081, 0.3275911
  %v1154 = vmul.f32 %v1082, 0.3275911
  %v1155 = vmul.f32 %v1083, 0.3275911
  %v1156 = vmul.f32 %v1084, 0.3275911
  %v1157 = vmul.f32 %v1085, 0.3275911
  %v1158 = vmul.f32 %v1086, 0.3275911
  %v1159 = vmul.f32 %v1087, 0.3275911
  %v1160 = vmul.f32 %v1088, 0.3275911
  %v1161 = vmul.f32 %v1089, 0.3275911
  %v1162 = vmul.f32 %v1090, 0.3275911
  %v1163 = vmul.f32 %v1091, 0.3275911
  %v1164 = vmul.f32 %v1092, 0.3275911
  %v1165 = vmul.f32 %v1093, 0.3275911
  %v1166 = vmul.f32 %v1094, 0.3275911
  %v1167 = vmul.f32 %v1095, 0.3275911
  %v1168 = vmul.f32 %v1096, 0.3275911
  %v1169 = vmul.f32 %v1097, 0.3275911
  %v1170 = vmul.f32 %v1098, 0.3275911
  %v1171 = vmul.f32 %v1099, 0.3275911
  %v1172 = vmul.f32 %v1100, 0.3275911
  %v1173 = vmul.f32 %v1101, 0.3275911
  %v1174 = vmul.f32 %v1102, 0.3275911
  %v1175 = vmul.f32 %v1103, 0.3275911
  %v1176 = vmul.f32 %v1104, 0.3275911
  %v1177 = vmul.f32 %v1105, 0.3275911
  %v1178 = vadd.f32 %v1106, 1.0
  %v1179 = vadd.f32 %v1107, 1.0
  %v1180 = vadd.f32 %v1108, 1.0
  %v1181 = vadd.f32 %v1109, 1.0
  %v1182 = vadd.f32 %v1110, 1.0
  %v1183 = vadd.f32 %v1111, 1.0
  %v1184 = vadd.f32 %v1112, 1.0
  %v1185 = vadd.f32 %v1113, 1.0
  %v1186 = vadd.f32 %v1114, 1.0
  %v1187 = vadd.f32 %v1115, 1.0
  %v1188 = vadd.f32 %v1116, 1.0
  %v1189 = vadd.f32 %v1117, 1.0
  %v1190 = vadd.f32 %v1118, 1.0
  %v1191 = vadd.f32 %v1119, 1.0
  %v1192 = vadd.f32 %v1120, 1.0
  %v1193 = vadd.f32 %v1121, 1.0
  %v1194 = vadd.f32 %v1122, 1.0
  %v1195 = vadd.f32 %v1123, 1.0
  %v1196 = vadd.f32 %v1124, 1.0
  %v1197 = vadd.f32 %v1125, 1.0
  %v1198 = vadd.f32 %v1126, 1.0
  %v1199 = vadd.f32 %v1127, 1.0
  %v1200 = vadd.f32 %v1128, 1.0
  %v1201 = vadd.f32 %v1129, 1.0
  %v1202 = vadd.f32 %v1130, 1.0
  %v1203 = vadd.f32 %v1131, 1.0
  %v1204 = vadd.f32 %v1132, 1.0
  %v1205 = vadd.f32 %v1133, 1.0
  %v1206 = vadd.f32 %v1134, 1.0
  %v1207 = vadd.f32 %v1135, 1.0
  %v1208 = vadd.f32 %v1136, 1.0
  %v1209 = vadd.f32 %v1137, 1.0
  %v1210 = vadd.f32 %v1138, 1.0
  %v1211 = vadd.f32 %v1139, 1.0
  %v1212 = vadd.f32 %v1140, 1.0
  %v1213 = vadd.f32 %v1141, 1.0
  %v1214 = vadd.f32 %v1142, 1.0
  %v1215 = vadd.f32 %v1143, 1.0
  %v1216 = vadd.f32 %v1144, 1.0
  %v1217 = vadd.f32 %v1145, 1.0
  %v1218 = vadd.f32 %v1146, 1.0
  %v1219 = vadd.f32 %v1147, 1.0
  %v1220 = vadd.f32 %v1148, 1.0
  %v1221 = vadd.f32 %v1149, 1.0
  %v1222 = vadd.f32 %v1150, 1.0
  %v1223 = vadd.f32 %v1151, 1.0
  %v1224 = vadd.f32 %v1152, 1.0
  %v1225 = vadd.f32 %v1153, 1.0
  %v1226 = vadd.f32 %v1154, 1.0
  %v1227 = vadd.f32 %v1155, 1.0
  %v1228 = vadd.f32 %v1156, 1.0
  %v1229 = vadd.f32 %v1157, 1.0
  %v1230 = vadd.f32 %v1158, 1.0
  %v1231 = vadd.f32 %v1159, 1.0
  %v1232 = vadd.f32 %v1160, 1.0
  %v1233 = vadd.f32 %v1161, 1.0
  %v1234 = vadd.f32 %v1162, 1.0
  %v1235 = vadd.f32 %v1163, 1.0
  %v1236 = vadd.f32 %v1164, 1.0
  %v1237 = vadd.f32 %v1165, 1.0
  %v1238 = vadd.f32 %v1166, 1.0
  %v1239 = vadd.f32 %v1167, 1.0
  %v1240 = vadd.f32 %v1168, 1.0
  %v1241 = vadd.f32 %v1169, 1.0
  %v1242 = vadd.f32 %v1170, 1.0
  %v1243 = vadd.f32 %v1171, 1.0
  %v1244 = vadd.f32 %v1172, 1.0
  %v1245 = vadd.f32 %v1173, 1.0
  %v1246 = vadd.f32 %v1174, 1.0
  %v1247 = vadd.f32 %v1175, 1.0
  %v1248 = vadd.f32 %v1176, 1.0
  %v1249 = vadd.f32 %v1177, 1.0
  %v1250 = vrcp.pop %v1178
  %v1251 = vmul.f32 1.0, %v1250
  %v1252 = vrcp.pop %v1179
  %v1253 = vmul.f32 1.0, %v1252
  %v1254 = vrcp.pop %v1180
  %v1255 = vmul.f32 1.0, %v1254
  %v1256 = vrcp.pop %v1181
  %v1257 = vmul.f32 1.0, %v1256
  %v1258 = vrcp.pop %v1182
  %v1259 = vmul.f32 1.0, %v1258
  %v1260 = vrcp.pop %v1183
  %v1261 = vmul.f32 1.0, %v1260
  %v1262 = vrcp.pop %v1184
  %v1263 = vmul.f32 1.0, %v1262
  %v1264 = vrcp.pop %v1185
  %v1265 = vmul.f32 1.0, %v1264
  %v1266 = vrcp.pop %v1186
  %v1267 = vmul.f32 1.0, %v1266
  %v1268 = vrcp.pop %v1187
  %v1269 = vmul.f32 1.0, %v1268
  %v1270 = vrcp.pop %v1188
  %v1271 = vmul.f32 1.0, %v1270
  %v1272 = vrcp.pop %v1189
  %v1273 = vmul.f32 1.0, %v1272
  %v1274 = vrcp.pop %v1190
  %v1275 = vmul.f32 1.0, %v1274
  %v1276 = vrcp.pop %v1191
  %v1277 = vmul.f32 1.0, %v1276
  %v1278 = vrcp.pop %v1192
  %v1279 = vmul.f32 1.0, %v1278
  %v1280 = vrcp.pop %v1193
  %v1281 = vmul.f32 1.0, %v1280
  %v1282 = vrcp.pop %v1194
  %v1283 = vmul.f32 1.0, %v1282
  %v1284 = vrcp.pop %v1195
  %v1285 = vmul.f32 1.0, %v1284
  %v1286 = vrcp.pop %v1196
  %v1287 = vmul.f32 1.0, %v1286
  %v1288 = vrcp.pop %v1197
  %v1289 = vmul.f32 1.0, %v1288
  %v1290 = vrcp.pop %v1198
  %v1291 = vmul.f32 1.0, %v1290
  %v1292 = vrcp.pop %v1199
  %v1293 = vmul.f32 1.0, %v1292
  %v1294 = vrcp.pop %v1200
  %v1295 = vmul.f32 1.0, %v1294
  %v1296 = vrcp.pop %v1201
  %v1297 = vmul.f32 1.0, %v1296
  %v1298 = vrcp.pop %v1202
  %v1299 = vmul.f32 1.0, %v1298
  %v1300 = vrcp.pop %v1203
  %v1301 = vmul.f32 1.0, %v1300
  %v1302 = vrcp.pop %v1204
  %v1303 = vmul.f32 1.0, %v1302
  %v1304 = vrcp.pop %v1205
  %v1305 = vmul.f32 1.0, %v1304
  %v1306 = vrcp.pop %v1206
  %v1307 = vmul.f32 1.0, %v1306
  %v1308 = vrcp.pop %v1207
  %v1309 = vmul.f32 1.0, %v1308
  %v1310 = vrcp.pop %v1208
  %v1311 = vmul.f32 1.0, %v1310
  %v1312 = vrcp.pop %v1209
  %v1313 = vmul.f32 1.0, %v1312
  %v1314 = vrcp.pop %v1210
  %v1315 = vmul.f32 1.0, %v1314
  %v1316 = vrcp.pop %v1211
  %v1317 = vmul.f32 1.0, %v1316
  %v1318 = vrcp.pop %v1212
  %v1319 = vmul.f32 1.0, %v1318
  %v1320 = vrcp.pop %v1213
  %v1321 = vmul.f32 1.0, %v1320
  %v1322 = vrcp.pop %v1214
  %v1323 = vmul.f32 1.0, %v1322
  %v1324 = vrcp.pop %v1215
  %v1325 = vmul.f32 1.0, %v1324
  %v1326 = vrcp.pop %v1216
  %v1327 = vmul.f32 1.0, %v1326
  %v1328 = vrcp.pop %v1217
  %v1329 = vmul.f32 1.0, %v1328
  %v1330 = vrcp.pop %v1218
  %v1331 = vmul.f32 1.0, %v1330
  %v1332 = vrcp.pop %v1219
  %v1333 = vmul.f32 1.0, %v1332
  %v1334 = vrcp.pop %v1220
  %v1335 = vmul.f32 1.0, %v1334
  %v1336 = vrcp.pop %v1221
  %v1337 = vmul.f32 1.0, %v1336
  %v1338 = vrcp.pop %v1222
  %v1339 = vmul.f32 1.0, %v1338
  %v1340 = vrcp.pop %v1223
  %v1341 = vmul.f32 1.0, %v1340
  %v1342 = vrcp.pop %v1224
  %v1343 = vmul.f32 1.0, %v1342
  %v1344 = vrcp.pop %v1225
  %v1345 = vmul.f32 1.0, %v1344
  %v1346 = vrcp.pop %v1226
  %v1347 = vmul.f32 1.0, %v1346
  %v1348 = vrcp.pop %v1227
  %v1349 = vmul.f32 1.0, %v1348
  %v1350 = vrcp.pop %v1228
  %v1351 = vmul.f32 1.0, %v1350
  %v1352 = vrcp.pop %v1229
  %v1353 = vmul.f32 1.0, %v1352
  %v1354 = vrcp.pop %v1230
  %v1355 = vmul.f32 1.0, %v1354
  %v1356 = vrcp.pop %v1231
  %v1357 = vmul.f32 1.0, %v1356
  %v1358 = vrcp.pop %v1232
  %v1359 = vmul.f32 1.0, %v1358
  %v1360 = vrcp.pop %v1233
  %v1361 = vmul.f32 1.0, %v1360
  %v1362 = vrcp.pop %v1234
  %v1363 = vmul.f32 1.0, %v1362
  %v1364 = vrcp.pop %v1235
  %v1365 = vmul.f32 1.0, %v1364
  %v1366 = vrcp.pop %v1236
  %v1367 = vmul.f32 1.0, %v1366
  %v1368 = vrcp.pop %v1237
  %v1369 = vmul.f32 1.0, %v1368
  %v1370 = vrcp.pop %v1238
  %v1371 = vmul.f32 1.0, %v1370
  %v1372 = vrcp.pop %v1239
  %v1373 = vmul.f32 1.0, %v1372
  %v1374 = vrcp.pop %v1240
  %v1375 = vmul.f32 1.0, %v1374
  %v1376 = vrcp.pop %v1241
  %v1377 = vmul.f32 1.0, %v1376
  %v1378 = vrcp.pop %v1242
  %v1379 = vmul.f32 1.0, %v1378
  %v1380 = vrcp.pop %v1243
  %v1381 = vmul.f32 1.0, %v1380
  %v1382 = vrcp.pop %v1244
  %v1383 = vmul.f32 1.0, %v1382
  %v1384 = vrcp.pop %v1245
  %v1385 = vmul.f32 1.0, %v1384
  %v1386 = vrcp.pop %v1246
  %v1387 = vmul.f32 1.0, %v1386
  %v1388 = vrcp.pop %v1247
  %v1389 = vmul.f32 1.0, %v1388
  %v1390 = vrcp.pop %v1248
  %v1391 = vmul.f32 1.0, %v1390
  %v1392 = vrcp.pop %v1249
  %v1393 = vmul.f32 1.0, %v1392
  %v1394 = vmul.f32 %v1251, 1.0614054
  %v1395 = vmul.f32 %v1253, 1.0614054
  %v1396 = vmul.f32 %v1255, 1.0614054
  %v1397 = vmul.f32 %v1257, 1.0614054
  %v1398 = vmul.f32 %v1259, 1.0614054
  %v1399 = vmul.f32 %v1261, 1.0614054
  %v1400 = vmul.f32 %v1263, 1.0614054
  %v1401 = vmul.f32 %v1265, 1.0614054
  %v1402 = vmul.f32 %v1267, 1.0614054
  %v1403 = vmul.f32 %v1269, 1.0614054
  %v1404 = vmul.f32 %v1271, 1.0614054
  %v1405 = vmul.f32 %v1273, 1.0614054
  %v1406 = vmul.f32 %v1275, 1.0614054
  %v1407 = vmul.f32 %v1277, 1.0614054
  %v1408 = vmul.f32 %v1279, 1.0614054
  %v1409 = vmul.f32 %v1281, 1.0614054
  %v1410 = vmul.f32 %v1283, 1.0614054
  %v1411 = vmul.f32 %v1285, 1.0614054
  %v1412 = vmul.f32 %v1287, 1.0614054
  %v1413 = vmul.f32 %v1289, 1.0614054
  %v1414 = vmul.f32 %v1291, 1.0614054
  %v1415 = vmul.f32 %v1293, 1.0614054
  %v1416 = vmul.f32 %v1295, 1.0614054
  %v1417 = vmul.f32 %v1297, 1.0614054
  %v1418 = vmul.f32 %v1299, 1.0614054
  %v1419 = vmul.f32 %v1301, 1.0614054
  %v1420 = vmul.f32 %v1303, 1.0614054
  %v1421 = vmul.f32 %v1305, 1.0614054
  %v1422 = vmul.f32 %v1307, 1.0614054
  %v1423 = vmul.f32 %v1309, 1.0614054
  %v1424 = vmul.f32 %v1311, 1.0614054
  %v1425 = vmul.f32 %v1313, 1.0614054
  %v1426 = vmul.f32 %v1315, 1.0614054
  %v1427 = vmul.f32 %v1317, 1.0614054
  %v1428 = vmul.f32 %v1319, 1.0614054
  %v1429 = vmul.f32 %v1321, 1.0614054
  %v1430 = vmul.f32 %v1323, 1.0614054
  %v1431 = vmul.f32 %v1325, 1.0614054
  %v1432 = vmul.f32 %v1327, 1.0614054
  %v1433 = vmul.f32 %v1329, 1.0614054
  %v1434 = vmul.f32 %v1331, 1.0614054
  %v1435 = vmul.f32 %v1333, 1.0614054
  %v1436 = vmul.f32 %v1335, 1.0614054
  %v1437 = vmul.f32 %v1337, 1.0614054
  %v1438 = vmul.f32 %v1339, 1.0614054
  %v1439 = vmul.f32 %v1341, 1.0614054
  %v1440 = vmul.f32 %v1343, 1.0614054
  %v1441 = vmul.f32 %v1345, 1.0614054
  %v1442 = vmul.f32 %v1347, 1.0614054
  %v1443 = vmul.f32 %v1349, 1.0614054
  %v1444 = vmul.f32 %v1351, 1.0614054
  %v1445 = vmul.f32 %v1353, 1.0614054
  %v1446 = vmul.f32 %v1355, 1.0614054
  %v1447 = vmul.f32 %v1357, 1.0614054
  %v1448 = vmul.f32 %v1359, 1.0614054
  %v1449 = vmul.f32 %v1361, 1.0614054
  %v1450 = vmul.f32 %v1363, 1.0614054
  %v1451 = vmul.f32 %v1365, 1.0614054
  %v1452 = vmul.f32 %v1367, 1.0614054
  %v1453 = vmul.f32 %v1369, 1.0614054
  %v1454 = vmul.f32 %v1371, 1.0614054
  %v1455 = vmul.f32 %v1373, 1.0614054
  %v1456 = vmul.f32 %v1375, 1.0614054
  %v1457 = vmul.f32 %v1377, 1.0614054
  %v1458 = vmul.f32 %v1379, 1.0614054
  %v1459 = vmul.f32 %v1381, 1.0614054
  %v1460 = vmul.f32 %v1383, 1.0614054
  %v1461 = vmul.f32 %v1385, 1.0614054
  %v1462 = vmul.f32 %v1387, 1.0614054
  %v1463 = vmul.f32 %v1389, 1.0614054
  %v1464 = vmul.f32 %v1391, 1.0614054
  %v1465 = vmul.f32 %v1393, 1.0614054
  %v1466 = vadd.f32 %v1394, -1.4531521
  %v1467 = vadd.f32 %v1395, -1.4531521
  %v1468 = vadd.f32 %v1396, -1.4531521
  %v1469 = vadd.f32 %v1397, -1.4531521
  %v1470 = vadd.f32 %v1398, -1.4531521
  %v1471 = vadd.f32 %v1399, -1.4531521
  %v1472 = vadd.f32 %v1400, -1.4531521
  %v1473 = vadd.f32 %v1401, -1.4531521
  %v1474 = vadd.f32 %v1402, -1.4531521
  %v1475 = vadd.f32 %v1403, -1.4531521
  %v1476 = vadd.f32 %v1404, -1.4531521
  %v1477 = vadd.f32 %v1405, -1.4531521
  %v1478 = vadd.f32 %v1406, -1.4531521
  %v1479 = vadd.f32 %v1407, -1.4531521
  %v1480 = vadd.f32 %v1408, -1.4531521
  %v1481 = vadd.f32 %v1409, -1.4531521
  %v1482 = vadd.f32 %v1410, -1.4531521
  %v1483 = vadd.f32 %v1411, -1.4531521
  %v1484 = vadd.f32 %v1412, -1.4531521
  %v1485 = vadd.f32 %v1413, -1.4531521
  %v1486 = vadd.f32 %v1414, -1.4531521
  %v1487 = vadd.f32 %v1415, -1.4531521
  %v1488 = vadd.f32 %v1416, -1.4531521
  %v1489 = vadd.f32 %v1417, -1.4531521
  %v1490 = vadd.f32 %v1418, -1.4531521
  %v1491 = vadd.f32 %v1419, -1.4531521
  %v1492 = vadd.f32 %v1420, -1.4531521
  %v1493 = vadd.f32 %v1421, -1.4531521
  %v1494 = vadd.f32 %v1422, -1.4531521
  %v1495 = vadd.f32 %v1423, -1.4531521
  %v1496 = vadd.f32 %v1424, -1.4531521
  %v1497 = vadd.f32 %v1425, -1.4531521
  %v1498 = vadd.f32 %v1426, -1.4531521
  %v1499 = vadd.f32 %v1427, -1.4531521
  %v1500 = vadd.f32 %v1428, -1.4531521
  %v1501 = vadd.f32 %v1429, -1.4531521
  %v1502 = vadd.f32 %v1430, -1.4531521
  %v1503 = vadd.f32 %v1431, -1.4531521
  %v1504 = vadd.f32 %v1432, -1.4531521
  %v1505 = vadd.f32 %v1433, -1.4531521
  %v1506 = vadd.f32 %v1434, -1.4531521
  %v1507 = vadd.f32 %v1435, -1.4531521
  %v1508 = vadd.f32 %v1436, -1.4531521
  %v1509 = vadd.f32 %v1437, -1.4531521
  %v1510 = vadd.f32 %v1438, -1.4531521
  %v1511 = vadd.f32 %v1439, -1.4531521
  %v1512 = vadd.f32 %v1440, -1.4531521
  %v1513 = vadd.f32 %v1441, -1.4531521
  %v1514 = vadd.f32 %v1442, -1.4531521
  %v1515 = vadd.f32 %v1443, -1.4531521
  %v1516 = vadd.f32 %v1444, -1.4531521
  %v1517 = vadd.f32 %v1445, -1.4531521
  %v1518 = vadd.f32 %v1446, -1.4531521
  %v1519 = vadd.f32 %v1447, -1.4531521
  %v1520 = vadd.f32 %v1448, -1.4531521
  %v1521 = vadd.f32 %v1449, -1.4531521
  %v1522 = vadd.f32 %v1450, -1.4531521
  %v1523 = vadd.f32 %v1451, -1.4531521
  %v1524 = vadd.f32 %v1452, -1.4531521
  %v1525 = vadd.f32 %v1453, -1.4531521
  %v1526 = vadd.f32 %v1454, -1.4531521
  %v1527 = vadd.f32 %v1455, -1.4531521
  %v1528 = vadd.f32 %v1456, -1.4531521
  %v1529 = vadd.f32 %v1457, -1.4531521
  %v1530 = vadd.f32 %v1458, -1.4531521
  %v1531 = vadd.f32 %v1459, -1.4531521
  %v1532 = vadd.f32 %v1460, -1.4531521
  %v1533 = vadd.f32 %v1461, -1.4531521
  %v1534 = vadd.f32 %v1462, -1.4531521
  %v1535 = vadd.f32 %v1463, -1.4531521
  %v1536 = vadd.f32 %v1464, -1.4531521
  %v1537 = vadd.f32 %v1465, -1.4531521
  %v1538 = vmul.f32 %v1466, %v1251
  %v1539 = vmul.f32 %v1467, %v1253
  %v1540 = vmul.f32 %v1468, %v1255
  %v1541 = vmul.f32 %v1469, %v1257
  %v1542 = vmul.f32 %v1470, %v1259
  %v1543 = vmul.f32 %v1471, %v1261
  %v1544 = vmul.f32 %v1472, %v1263
  %v1545 = vmul.f32 %v1473, %v1265
  %v1546 = vmul.f32 %v1474, %v1267
  %v1547 = vmul.f32 %v1475, %v1269
  %v1548 = vmul.f32 %v1476, %v1271
  %v1549 = vmul.f32 %v1477, %v1273
  %v1550 = vmul.f32 %v1478, %v1275
  %v1551 = vmul.f32 %v1479, %v1277
  %v1552 = vmul.f32 %v1480, %v1279
  %v1553 = vmul.f32 %v1481, %v1281
  %v1554 = vmul.f32 %v1482, %v1283
  %v1555 = vmul.f32 %v1483, %v1285
  %v1556 = vmul.f32 %v1484, %v1287
  %v1557 = vmul.f32 %v1485, %v1289
  %v1558 = vmul.f32 %v1486, %v1291
  %v1559 = vmul.f32 %v1487, %v1293
  %v1560 = vmul.f32 %v1488, %v1295
  %v1561 = vmul.f32 %v1489, %v1297
  %v1562 = vmul.f32 %v1490, %v1299
  %v1563 = vmul.f32 %v1491, %v1301
  %v1564 = vmul.f32 %v1492, %v1303
  %v1565 = vmul.f32 %v1493, %v1305
  %v1566 = vmul.f32 %v1494, %v1307
  %v1567 = vmul.f32 %v1495, %v1309
  %v1568 = vmul.f32 %v1496, %v1311
  %v1569 = vmul.f32 %v1497, %v1313
  %v1570 = vmul.f32 %v1498, %v1315
  %v1571 = vmul.f32 %v1499, %v1317
  %v1572 = vmul.f32 %v1500, %v1319
  %v1573 = vmul.f32 %v1501, %v1321
  %v1574 = vmul.f32 %v1502, %v1323
  %v1575 = vmul.f32 %v1503, %v1325
  %v1576 = vmul.f32 %v1504, %v1327
  %v1577 = vmul.f32 %v1505, %v1329
  %v1578 = vmul.f32 %v1506, %v1331
  %v1579 = vmul.f32 %v1507, %v1333
  %v1580 = vmul.f32 %v1508, %v1335
  %v1581 = vmul.f32 %v1509, %v1337
  %v1582 = vmul.f32 %v1510, %v1339
  %v1583 = vmul.f32 %v1511, %v1341
  %v1584 = vmul.f32 %v1512, %v1343
  %v1585 = vmul.f32 %v1513, %v1345
  %v1586 = vmul.f32 %v1514, %v1347
  %v1587 = vmul.f32 %v1515, %v1349
  %v1588 = vmul.f32 %v1516, %v1351
  %v1589 = vmul.f32 %v1517, %v1353
  %v1590 = vmul.f32 %v1518, %v1355
  %v1591 = vmul.f32 %v1519, %v1357
  %v1592 = vmul.f32 %v1520, %v1359
  %v1593 = vmul.f32 %v1521, %v1361
  %v1594 = vmul.f32 %v1522, %v1363
  %v1595 = vmul.f32 %v1523, %v1365
  %v1596 = vmul.f32 %v1524, %v1367
  %v1597 = vmul.f32 %v1525, %v1369
  %v1598 = vmul.f32 %v1526, %v1371
  %v1599 = vmul.f32 %v1527, %v1373
  %v1600 = vmul.f32 %v1528, %v1375
  %v1601 = vmul.f32 %v1529, %v1377
  %v1602 = vmul.f32 %v1530, %v1379
  %v1603 = vmul.f32 %v1531, %v1381
  %v1604 = vmul.f32 %v1532, %v1383
  %v1605 = vmul.f32 %v1533, %v1385
  %v1606 = vmul.f32 %v1534, %v1387
  %v1607 = vmul.f32 %v1535, %v1389
  %v1608 = vmul.f32 %v1536, %v1391
  %v1609 = vmul.f32 %v1537, %v1393
  %v1610 = vadd.f32 %v1538, 1.4214138
  %v1611 = vadd.f32 %v1539, 1.4214138
  %v1612 = vadd.f32 %v1540, 1.4214138
  %v1613 = vadd.f32 %v1541, 1.4214138
  %v1614 = vadd.f32 %v1542, 1.4214138
  %v1615 = vadd.f32 %v1543, 1.4214138
  %v1616 = vadd.f32 %v1544, 1.4214138
  %v1617 = vadd.f32 %v1545, 1.4214138
  %v1618 = vadd.f32 %v1546, 1.4214138
  %v1619 = vadd.f32 %v1547, 1.4214138
  %v1620 = vadd.f32 %v1548, 1.4214138
  %v1621 = vadd.f32 %v1549, 1.4214138
  %v1622 = vadd.f32 %v1550, 1.4214138
  %v1623 = vadd.f32 %v1551, 1.4214138
  %v1624 = vadd.f32 %v1552, 1.4214138
  %v1625 = vadd.f32 %v1553, 1.4214138
  %v1626 = vadd.f32 %v1554, 1.4214138
  %v1627 = vadd.f32 %v1555, 1.4214138
  %v1628 = vadd.f32 %v1556, 1.4214138
  %v1629 = vadd.f32 %v1557, 1.4214138
  %v1630 = vadd.f32 %v1558, 1.4214138
  %v1631 = vadd.f32 %v1559, 1.4214138
  %v1632 = vadd.f32 %v1560, 1.4214138
  %v1633 = vadd.f32 %v1561, 1.4214138
  %v1634 = vadd.f32 %v1562, 1.4214138
  %v1635 = vadd.f32 %v1563, 1.4214138
  %v1636 = vadd.f32 %v1564, 1.4214138
  %v1637 = vadd.f32 %v1565, 1.4214138
  %v1638 = vadd.f32 %v1566, 1.4214138
  %v1639 = vadd.f32 %v1567, 1.4214138
  %v1640 = vadd.f32 %v1568, 1.4214138
  %v1641 = vadd.f32 %v1569, 1.4214138
  %v1642 = vadd.f32 %v1570, 1.4214138
  %v1643 = vadd.f32 %v1571, 1.4214138
  %v1644 = vadd.f32 %v1572, 1.4214138
  %v1645 = vadd.f32 %v1573, 1.4214138
  %v1646 = vadd.f32 %v1574, 1.4214138
  %v1647 = vadd.f32 %v1575, 1.4214138
  %v1648 = vadd.f32 %v1576, 1.4214138
  %v1649 = vadd.f32 %v1577, 1.4214138
  %v1650 = vadd.f32 %v1578, 1.4214138
  %v1651 = vadd.f32 %v1579, 1.4214138
  %v1652 = vadd.f32 %v1580, 1.4214138
  %v1653 = vadd.f32 %v1581, 1.4214138
  %v1654 = vadd.f32 %v1582, 1.4214138
  %v1655 = vadd.f32 %v1583, 1.4214138
  %v1656 = vadd.f32 %v1584, 1.4214138
  %v1657 = vadd.f32 %v1585, 1.4214138
  %v1658 = vadd.f32 %v1586, 1.4214138
  %v1659 = vadd.f32 %v1587, 1.4214138
  %v1660 = vadd.f32 %v1588, 1.4214138
  %v1661 = vadd.f32 %v1589, 1.4214138
  %v1662 = vadd.f32 %v1590, 1.4214138
  %v1663 = vadd.f32 %v1591, 1.4214138
  %v1664 = vadd.f32 %v1592, 1.4214138
  %v1665 = vadd.f32 %v1593, 1.4214138
  %v1666 = vadd.f32 %v1594, 1.4214138
  %v1667 = vadd.f32 %v1595, 1.4214138
  %v1668 = vadd.f32 %v1596, 1.4214138
  %v1669 = vadd.f32 %v1597, 1.4214138
  %v1670 = vadd.f32 %v1598, 1.4214138
  %v1671 = vadd.f32 %v1599, 1.4214138
  %v1672 = vadd.f32 %v1600, 1.4214138
  %v1673 = vadd.f32 %v1601, 1.4214138
  %v1674 = vadd.f32 %v1602, 1.4214138
  %v1675 = vadd.f32 %v1603, 1.4214138
  %v1676 = vadd.f32 %v1604, 1.4214138
  %v1677 = vadd.f32 %v1605, 1.4214138
  %v1678 = vadd.f32 %v1606, 1.4214138
  %v1679 = vadd.f32 %v1607, 1.4214138
  %v1680 = vadd.f32 %v1608, 1.4214138
  %v1681 = vadd.f32 %v1609, 1.4214138
  %v1682 = vmul.f32 %v1610, %v1251
  %v1683 = vmul.f32 %v1611, %v1253
  %v1684 = vmul.f32 %v1612, %v1255
  %v1685 = vmul.f32 %v1613, %v1257
  %v1686 = vmul.f32 %v1614, %v1259
  %v1687 = vmul.f32 %v1615, %v1261
  %v1688 = vmul.f32 %v1616, %v1263
  %v1689 = vmul.f32 %v1617, %v1265
  %v1690 = vmul.f32 %v1618, %v1267
  %v1691 = vmul.f32 %v1619, %v1269
  %v1692 = vmul.f32 %v1620, %v1271
  %v1693 = vmul.f32 %v1621, %v1273
  %v1694 = vmul.f32 %v1622, %v1275
  %v1695 = vmul.f32 %v1623, %v1277
  %v1696 = vmul.f32 %v1624, %v1279
  %v1697 = vmul.f32 %v1625, %v1281
  %v1698 = vmul.f32 %v1626, %v1283
  %v1699 = vmul.f32 %v1627, %v1285
  %v1700 = vmul.f32 %v1628, %v1287
  %v1701 = vmul.f32 %v1629, %v1289
  %v1702 = vmul.f32 %v1630, %v1291
  %v1703 = vmul.f32 %v1631, %v1293
  %v1704 = vmul.f32 %v1632, %v1295
  %v1705 = vmul.f32 %v1633, %v1297
  %v1706 = vmul.f32 %v1634, %v1299
  %v1707 = vmul.f32 %v1635, %v1301
  %v1708 = vmul.f32 %v1636, %v1303
  %v1709 = vmul.f32 %v1637, %v1305
  %v1710 = vmul.f32 %v1638, %v1307
  %v1711 = vmul.f32 %v1639, %v1309
  %v1712 = vmul.f32 %v1640, %v1311
  %v1713 = vmul.f32 %v1641, %v1313
  %v1714 = vmul.f32 %v1642, %v1315
  %v1715 = vmul.f32 %v1643, %v1317
  %v1716 = vmul.f32 %v1644, %v1319
  %v1717 = vmul.f32 %v1645, %v1321
  %v1718 = vmul.f32 %v1646, %v1323
  %v1719 = vmul.f32 %v1647, %v1325
  %v1720 = vmul.f32 %v1648, %v1327
  %v1721 = vmul.f32 %v1649, %v1329
  %v1722 = vmul.f32 %v1650, %v1331
  %v1723 = vmul.f32 %v1651, %v1333
  %v1724 = vmul.f32 %v1652, %v1335
  %v1725 = vmul.f32 %v1653, %v1337
  %v1726 = vmul.f32 %v1654, %v1339
  %v1727 = vmul.f32 %v1655, %v1341
  %v1728 = vmul.f32 %v1656, %v1343
  %v1729 = vmul.f32 %v1657, %v1345
  %v1730 = vmul.f32 %v1658, %v1347
  %v1731 = vmul.f32 %v1659, %v1349
  %v1732 = vmul.f32 %v1660, %v1351
  %v1733 = vmul.f32 %v1661, %v1353
  %v1734 = vmul.f32 %v1662, %v1355
  %v1735 = vmul.f32 %v1663, %v1357
  %v1736 = vmul.f32 %v1664, %v1359
  %v1737 = vmul.f32 %v1665, %v1361
  %v1738 = vmul.f32 %v1666, %v1363
  %v1739 = vmul.f32 %v1667, %v1365
  %v1740 = vmul.f32 %v1668, %v1367
  %v1741 = vmul.f32 %v1669, %v1369
  %v1742 = vmul.f32 %v1670, %v1371
  %v1743 = vmul.f32 %v1671, %v1373
  %v1744 = vmul.f32 %v1672, %v1375
  %v1745 = vmul.f32 %v1673, %v1377
  %v1746 = vmul.f32 %v1674, %v1379
  %v1747 = vmul.f32 %v1675, %v1381
  %v1748 = vmul.f32 %v1676, %v1383
  %v1749 = vmul.f32 %v1677, %v1385
  %v1750 = vmul.f32 %v1678, %v1387
  %v1751 = vmul.f32 %v1679, %v1389
  %v1752 = vmul.f32 %v1680, %v1391
  %v1753 = vmul.f32 %v1681, %v1393
  %v1754 = vadd.f32 %v1682, -0.28449672
  %v1755 = vadd.f32 %v1683, -0.28449672
  %v1756 = vadd.f32 %v1684, -0.28449672
  %v1757 = vadd.f32 %v1685, -0.28449672
  %v1758 = vadd.f32 %v1686, -0.28449672
  %v1759 = vadd.f32 %v1687, -0.28449672
  %v1760 = vadd.f32 %v1688, -0.28449672
  %v1761 = vadd.f32 %v1689, -0.28449672
  %v1762 = vadd.f32 %v1690, -0.28449672
  %v1763 = vadd.f32 %v1691, -0.28449672
  %v1764 = vadd.f32 %v1692, -0.28449672
  %v1765 = vadd.f32 %v1693, -0.28449672
  %v1766 = vadd.f32 %v1694, -0.28449672
  %v1767 = vadd.f32 %v1695, -0.28449672
  %v1768 = vadd.f32 %v1696, -0.28449672
  %v1769 = vadd.f32 %v1697, -0.28449672
  %v1770 = vadd.f32 %v1698, -0.28449672
  %v1771 = vadd.f32 %v1699, -0.28449672
  %v1772 = vadd.f32 %v1700, -0.28449672
  %v1773 = vadd.f32 %v1701, -0.28449672
  %v1774 = vadd.f32 %v1702, -0.28449672
  %v1775 = vadd.f32 %v1703, -0.28449672
  %v1776 = vadd.f32 %v1704, -0.28449672
  %v1777 = vadd.f32 %v1705, -0.28449672
  %v1778 = vadd.f32 %v1706, -0.28449672
  %v1779 = vadd.f32 %v1707, -0.28449672
  %v1780 = vadd.f32 %v1708, -0.28449672
  %v1781 = vadd.f32 %v1709, -0.28449672
  %v1782 = vadd.f32 %v1710, -0.28449672
  %v1783 = vadd.f32 %v1711, -0.28449672
  %v1784 = vadd.f32 %v1712, -0.28449672
  %v1785 = vadd.f32 %v1713, -0.28449672
  %v1786 = vadd.f32 %v1714, -0.28449672
  %v1787 = vadd.f32 %v1715, -0.28449672
  %v1788 = vadd.f32 %v1716, -0.28449672
  %v1789 = vadd.f32 %v1717, -0.28449672
  %v1790 = vadd.f32 %v1718, -0.28449672
  %v1791 = vadd.f32 %v1719, -0.28449672
  %v1792 = vadd.f32 %v1720, -0.28449672
  %v1793 = vadd.f32 %v1721, -0.28449672
  %v1794 = vadd.f32 %v1722, -0.28449672
  %v1795 = vadd.f32 %v1723, -0.28449672
  %v1796 = vadd.f32 %v1724, -0.28449672
  %v1797 = vadd.f32 %v1725, -0.28449672
  %v1798 = vadd.f32 %v1726, -0.28449672
  %v1799 = vadd.f32 %v1727, -0.28449672
  %v1800 = vadd.f32 %v1728, -0.28449672
  %v1801 = vadd.f32 %v1729, -0.28449672
  %v1802 = vadd.f32 %v1730, -0.28449672
  %v1803 = vadd.f32 %v1731, -0.28449672
  %v1804 = vadd.f32 %v1732, -0.28449672
  %v1805 = vadd.f32 %v1733, -0.28449672
  %v1806 = vadd.f32 %v1734, -0.28449672
  %v1807 = vadd.f32 %v1735, -0.28449672
  %v1808 = vadd.f32 %v1736, -0.28449672
  %v1809 = vadd.f32 %v1737, -0.28449672
  %v1810 = vadd.f32 %v1738, -0.28449672
  %v1811 = vadd.f32 %v1739, -0.28449672
  %v1812 = vadd.f32 %v1740, -0.28449672
  %v1813 = vadd.f32 %v1741, -0.28449672
  %v1814 = vadd.f32 %v1742, -0.28449672
  %v1815 = vadd.f32 %v1743, -0.28449672
  %v1816 = vadd.f32 %v1744, -0.28449672
  %v1817 = vadd.f32 %v1745, -0.28449672
  %v1818 = vadd.f32 %v1746, -0.28449672
  %v1819 = vadd.f32 %v1747, -0.28449672
  %v1820 = vadd.f32 %v1748, -0.28449672
  %v1821 = vadd.f32 %v1749, -0.28449672
  %v1822 = vadd.f32 %v1750, -0.28449672
  %v1823 = vadd.f32 %v1751, -0.28449672
  %v1824 = vadd.f32 %v1752, -0.28449672
  %v1825 = vadd.f32 %v1753, -0.28449672
  %v1826 = vmul.f32 %v1754, %v1251
  %v1827 = vmul.f32 %v1755, %v1253
  %v1828 = vmul.f32 %v1756, %v1255
  %v1829 = vmul.f32 %v1757, %v1257
  %v1830 = vmul.f32 %v1758, %v1259
  %v1831 = vmul.f32 %v1759, %v1261
  %v1832 = vmul.f32 %v1760, %v1263
  %v1833 = vmul.f32 %v1761, %v1265
  %v1834 = vmul.f32 %v1762, %v1267
  %v1835 = vmul.f32 %v1763, %v1269
  %v1836 = vmul.f32 %v1764, %v1271
  %v1837 = vmul.f32 %v1765, %v1273
  %v1838 = vmul.f32 %v1766, %v1275
  %v1839 = vmul.f32 %v1767, %v1277
  %v1840 = vmul.f32 %v1768, %v1279
  %v1841 = vmul.f32 %v1769, %v1281
  %v1842 = vmul.f32 %v1770, %v1283
  %v1843 = vmul.f32 %v1771, %v1285
  %v1844 = vmul.f32 %v1772, %v1287
  %v1845 = vmul.f32 %v1773, %v1289
  %v1846 = vmul.f32 %v1774, %v1291
  %v1847 = vmul.f32 %v1775, %v1293
  %v1848 = vmul.f32 %v1776, %v1295
  %v1849 = vmul.f32 %v1777, %v1297
  %v1850 = vmul.f32 %v1778, %v1299
  %v1851 = vmul.f32 %v1779, %v1301
  %v1852 = vmul.f32 %v1780, %v1303
  %v1853 = vmul.f32 %v1781, %v1305
  %v1854 = vmul.f32 %v1782, %v1307
  %v1855 = vmul.f32 %v1783, %v1309
  %v1856 = vmul.f32 %v1784, %v1311
  %v1857 = vmul.f32 %v1785, %v1313
  %v1858 = vmul.f32 %v1786, %v1315
  %v1859 = vmul.f32 %v1787, %v1317
  %v1860 = vmul.f32 %v1788, %v1319
  %v1861 = vmul.f32 %v1789, %v1321
  %v1862 = vmul.f32 %v1790, %v1323
  %v1863 = vmul.f32 %v1791, %v1325
  %v1864 = vmul.f32 %v1792, %v1327
  %v1865 = vmul.f32 %v1793, %v1329
  %v1866 = vmul.f32 %v1794, %v1331
  %v1867 = vmul.f32 %v1795, %v1333
  %v1868 = vmul.f32 %v1796, %v1335
  %v1869 = vmul.f32 %v1797, %v1337
  %v1870 = vmul.f32 %v1798, %v1339
  %v1871 = vmul.f32 %v1799, %v1341
  %v1872 = vmul.f32 %v1800, %v1343
  %v1873 = vmul.f32 %v1801, %v1345
  %v1874 = vmul.f32 %v1802, %v1347
  %v1875 = vmul.f32 %v1803, %v1349
  %v1876 = vmul.f32 %v1804, %v1351
  %v1877 = vmul.f32 %v1805, %v1353
  %v1878 = vmul.f32 %v1806, %v1355
  %v1879 = vmul.f32 %v1807, %v1357
  %v1880 = vmul.f32 %v1808, %v1359
  %v1881 = vmul.f32 %v1809, %v1361
  %v1882 = vmul.f32 %v1810, %v1363
  %v1883 = vmul.f32 %v1811, %v1365
  %v1884 = vmul.f32 %v1812, %v1367
  %v1885 = vmul.f32 %v1813, %v1369
  %v1886 = vmul.f32 %v1814, %v1371
  %v1887 = vmul.f32 %v1815, %v1373
  %v1888 = vmul.f32 %v1816, %v1375
  %v1889 = vmul.f32 %v1817, %v1377
  %v1890 = vmul.f32 %v1818, %v1379
  %v1891 = vmul.f32 %v1819, %v1381
  %v1892 = vmul.f32 %v1820, %v1383
  %v1893 = vmul.f32 %v1821, %v1385
  %v1894 = vmul.f32 %v1822, %v1387
  %v1895 = vmul.f32 %v1823, %v1389
  %v1896 = vmul.f32 %v1824, %v1391
  %v1897 = vmul.f32 %v1825, %v1393
  %v1898 = vadd.f32 %v1826, 0.2548296
  %v1899 = vadd.f32 %v1827, 0.2548296
  %v1900 = vadd.f32 %v1828, 0.2548296
  %v1901 = vadd.f32 %v1829, 0.2548296
  %v1902 = vadd.f32 %v1830, 0.2548296
  %v1903 = vadd.f32 %v1831, 0.2548296
  %v1904 = vadd.f32 %v1832, 0.2548296
  %v1905 = vadd.f32 %v1833, 0.2548296
  %v1906 = vadd.f32 %v1834, 0.2548296
  %v1907 = vadd.f32 %v1835, 0.2548296
  %v1908 = vadd.f32 %v1836, 0.2548296
  %v1909 = vadd.f32 %v1837, 0.2548296
  %v1910 = vadd.f32 %v1838, 0.2548296
  %v1911 = vadd.f32 %v1839, 0.2548296
  %v1912 = vadd.f32 %v1840, 0.2548296
  %v1913 = vadd.f32 %v1841, 0.2548296
  %v1914 = vadd.f32 %v1842, 0.2548296
  %v1915 = vadd.f32 %v1843, 0.2548296
  %v1916 = vadd.f32 %v1844, 0.2548296
  %v1917 = vadd.f32 %v1845, 0.2548296
  %v1918 = vadd.f32 %v1846, 0.2548296
  %v1919 = vadd.f32 %v1847, 0.2548296
  %v1920 = vadd.f32 %v1848, 0.2548296
  %v1921 = vadd.f32 %v1849, 0.2548296
  %v1922 = vadd.f32 %v1850, 0.2548296
  %v1923 = vadd.f32 %v1851, 0.2548296
  %v1924 = vadd.f32 %v1852, 0.2548296
  %v1925 = vadd.f32 %v1853, 0.2548296
  %v1926 = vadd.f32 %v1854, 0.2548296
  %v1927 = vadd.f32 %v1855, 0.2548296
  %v1928 = vadd.f32 %v1856, 0.2548296
  %v1929 = vadd.f32 %v1857, 0.2548296
  %v1930 = vadd.f32 %v1858, 0.2548296
  %v1931 = vadd.f32 %v1859, 0.2548296
  %v1932 = vadd.f32 %v1860, 0.2548296
  %v1933 = vadd.f32 %v1861, 0.2548296
  %v1934 = vadd.f32 %v1862, 0.2548296
  %v1935 = vadd.f32 %v1863, 0.2548296
  %v1936 = vadd.f32 %v1864, 0.2548296
  %v1937 = vadd.f32 %v1865, 0.2548296
  %v1938 = vadd.f32 %v1866, 0.2548296
  %v1939 = vadd.f32 %v1867, 0.2548296
  %v1940 = vadd.f32 %v1868, 0.2548296
  %v1941 = vadd.f32 %v1869, 0.2548296
  %v1942 = vadd.f32 %v1870, 0.2548296
  %v1943 = vadd.f32 %v1871, 0.2548296
  %v1944 = vadd.f32 %v1872, 0.2548296
  %v1945 = vadd.f32 %v1873, 0.2548296
  %v1946 = vadd.f32 %v1874, 0.2548296
  %v1947 = vadd.f32 %v1875, 0.2548296
  %v1948 = vadd.f32 %v1876, 0.2548296
  %v1949 = vadd.f32 %v1877, 0.2548296
  %v1950 = vadd.f32 %v1878, 0.2548296
  %v1951 = vadd.f32 %v1879, 0.2548296
  %v1952 = vadd.f32 %v1880, 0.2548296
  %v1953 = vadd.f32 %v1881, 0.2548296
  %v1954 = vadd.f32 %v1882, 0.2548296
  %v1955 = vadd.f32 %v1883, 0.2548296
  %v1956 = vadd.f32 %v1884, 0.2548296
  %v1957 = vadd.f32 %v1885, 0.2548296
  %v1958 = vadd.f32 %v1886, 0.2548296
  %v1959 = vadd.f32 %v1887, 0.2548296
  %v1960 = vadd.f32 %v1888, 0.2548296
  %v1961 = vadd.f32 %v1889, 0.2548296
  %v1962 = vadd.f32 %v1890, 0.2548296
  %v1963 = vadd.f32 %v1891, 0.2548296
  %v1964 = vadd.f32 %v1892, 0.2548296
  %v1965 = vadd.f32 %v1893, 0.2548296
  %v1966 = vadd.f32 %v1894, 0.2548296
  %v1967 = vadd.f32 %v1895, 0.2548296
  %v1968 = vadd.f32 %v1896, 0.2548296
  %v1969 = vadd.f32 %v1897, 0.2548296
  %v1970 = vmul.f32 %v1898, %v1251
  %v1971 = vmul.f32 %v1899, %v1253
  %v1972 = vmul.f32 %v1900, %v1255
  %v1973 = vmul.f32 %v1901, %v1257
  %v1974 = vmul.f32 %v1902, %v1259
  %v1975 = vmul.f32 %v1903, %v1261
  %v1976 = vmul.f32 %v1904, %v1263
  %v1977 = vmul.f32 %v1905, %v1265
  %v1978 = vmul.f32 %v1906, %v1267
  %v1979 = vmul.f32 %v1907, %v1269
  %v1980 = vmul.f32 %v1908, %v1271
  %v1981 = vmul.f32 %v1909, %v1273
  %v1982 = vmul.f32 %v1910, %v1275
  %v1983 = vmul.f32 %v1911, %v1277
  %v1984 = vmul.f32 %v1912, %v1279
  %v1985 = vmul.f32 %v1913, %v1281
  %v1986 = vmul.f32 %v1914, %v1283
  %v1987 = vmul.f32 %v1915, %v1285
  %v1988 = vmul.f32 %v1916, %v1287
  %v1989 = vmul.f32 %v1917, %v1289
  %v1990 = vmul.f32 %v1918, %v1291
  %v1991 = vmul.f32 %v1919, %v1293
  %v1992 = vmul.f32 %v1920, %v1295
  %v1993 = vmul.f32 %v1921, %v1297
  %v1994 = vmul.f32 %v1922, %v1299
  %v1995 = vmul.f32 %v1923, %v1301
  %v1996 = vmul.f32 %v1924, %v1303
  %v1997 = vmul.f32 %v1925, %v1305
  %v1998 = vmul.f32 %v1926, %v1307
  %v1999 = vmul.f32 %v1927, %v1309
  %v2000 = vmul.f32 %v1928, %v1311
  %v2001 = vmul.f32 %v1929, %v1313
  %v2002 = vmul.f32 %v1930, %v1315
  %v2003 = vmul.f32 %v1931, %v1317
  %v2004 = vmul.f32 %v1932, %v1319
  %v2005 = vmul.f32 %v1933, %v1321
  %v2006 = vmul.f32 %v1934, %v1323
  %v2007 = vmul.f32 %v1935, %v1325
  %v2008 = vmul.f32 %v1936, %v1327
  %v2009 = vmul.f32 %v1937, %v1329
  %v2010 = vmul.f32 %v1938, %v1331
  %v2011 = vmul.f32 %v1939, %v1333
  %v2012 = vmul.f32 %v1940, %v1335
  %v2013 = vmul.f32 %v1941, %v1337
  %v2014 = vmul.f32 %v1942, %v1339
  %v2015 = vmul.f32 %v1943, %v1341
  %v2016 = vmul.f32 %v1944, %v1343
  %v2017 = vmul.f32 %v1945, %v1345
  %v2018 = vmul.f32 %v1946, %v1347
  %v2019 = vmul.f32 %v1947, %v1349
  %v2020 = vmul.f32 %v1948, %v1351
  %v2021 = vmul.f32 %v1949, %v1353
  %v2022 = vmul.f32 %v1950, %v1355
  %v2023 = vmul.f32 %v1951, %v1357
  %v2024 = vmul.f32 %v1952, %v1359
  %v2025 = vmul.f32 %v1953, %v1361
  %v2026 = vmul.f32 %v1954, %v1363
  %v2027 = vmul.f32 %v1955, %v1365
  %v2028 = vmul.f32 %v1956, %v1367
  %v2029 = vmul.f32 %v1957, %v1369
  %v2030 = vmul.f32 %v1958, %v1371
  %v2031 = vmul.f32 %v1959, %v1373
  %v2032 = vmul.f32 %v1960, %v1375
  %v2033 = vmul.f32 %v1961, %v1377
  %v2034 = vmul.f32 %v1962, %v1379
  %v2035 = vmul.f32 %v1963, %v1381
  %v2036 = vmul.f32 %v1964, %v1383
  %v2037 = vmul.f32 %v1965, %v1385
  %v2038 = vmul.f32 %v1966, %v1387
  %v2039 = vmul.f32 %v1967, %v1389
  %v2040 = vmul.f32 %v1968, %v1391
  %v2041 = vmul.f32 %v1969, %v1393
  %v2042 = vsub.f32 0.0, %v1034
  %v2043 = vsub.f32 0.0, %v1035
  %v2044 = vsub.f32 0.0, %v1036
  %v2045 = vsub.f32 0.0, %v1037
  %v2046 = vsub.f32 0.0, %v1038
  %v2047 = vsub.f32 0.0, %v1039
  %v2048 = vsub.f32 0.0, %v1040
  %v2049 = vsub.f32 0.0, %v1041
  %v2050 = vsub.f32 0.0, %v1042
  %v2051 = vsub.f32 0.0, %v1043
  %v2052 = vsub.f32 0.0, %v1044
  %v2053 = vsub.f32 0.0, %v1045
  %v2054 = vsub.f32 0.0, %v1046
  %v2055 = vsub.f32 0.0, %v1047
  %v2056 = vsub.f32 0.0, %v1048
  %v2057 = vsub.f32 0.0, %v1049
  %v2058 = vsub.f32 0.0, %v1050
  %v2059 = vsub.f32 0.0, %v1051
  %v2060 = vsub.f32 0.0, %v1052
  %v2061 = vsub.f32 0.0, %v1053
  %v2062 = vsub.f32 0.0, %v1054
  %v2063 = vsub.f32 0.0, %v1055
  %v2064 = vsub.f32 0.0, %v1056
  %v2065 = vsub.f32 0.0, %v1057
  %v2066 = vsub.f32 0.0, %v1058
  %v2067 = vsub.f32 0.0, %v1059
  %v2068 = vsub.f32 0.0, %v1060
  %v2069 = vsub.f32 0.0, %v1061
  %v2070 = vsub.f32 0.0, %v1062
  %v2071 = vsub.f32 0.0, %v1063
  %v2072 = vsub.f32 0.0, %v1064
  %v2073 = vsub.f32 0.0, %v1065
  %v2074 = vsub.f32 0.0, %v1066
  %v2075 = vsub.f32 0.0, %v1067
  %v2076 = vsub.f32 0.0, %v1068
  %v2077 = vsub.f32 0.0, %v1069
  %v2078 = vsub.f32 0.0, %v1070
  %v2079 = vsub.f32 0.0, %v1071
  %v2080 = vsub.f32 0.0, %v1072
  %v2081 = vsub.f32 0.0, %v1073
  %v2082 = vsub.f32 0.0, %v1074
  %v2083 = vsub.f32 0.0, %v1075
  %v2084 = vsub.f32 0.0, %v1076
  %v2085 = vsub.f32 0.0, %v1077
  %v2086 = vsub.f32 0.0, %v1078
  %v2087 = vsub.f32 0.0, %v1079
  %v2088 = vsub.f32 0.0, %v1080
  %v2089 = vsub.f32 0.0, %v1081
  %v2090 = vsub.f32 0.0, %v1082
  %v2091 = vsub.f32 0.0, %v1083
  %v2092 = vsub.f32 0.0, %v1084
  %v2093 = vsub.f32 0.0, %v1085
  %v2094 = vsub.f32 0.0, %v1086
  %v2095 = vsub.f32 0.0, %v1087
  %v2096 = vsub.f32 0.0, %v1088
  %v2097 = vsub.f32 0.0, %v1089
  %v2098 = vsub.f32 0.0, %v1090
  %v2099 = vsub.f32 0.0, %v1091
  %v2100 = vsub.f32 0.0, %v1092
  %v2101 = vsub.f32 0.0, %v1093
  %v2102 = vsub.f32 0.0, %v1094
  %v2103 = vsub.f32 0.0, %v1095
  %v2104 = vsub.f32 0.0, %v1096
  %v2105 = vsub.f32 0.0, %v1097
  %v2106 = vsub.f32 0.0, %v1098
  %v2107 = vsub.f32 0.0, %v1099
  %v2108 = vsub.f32 0.0, %v1100
  %v2109 = vsub.f32 0.0, %v1101
  %v2110 = vsub.f32 0.0, %v1102
  %v2111 = vsub.f32 0.0, %v1103
  %v2112 = vsub.f32 0.0, %v1104
  %v2113 = vsub.f32 0.0, %v1105
  %v2114 = vmul.f32 %v2042, %v1034
  %v2115 = vmul.f32 %v2043, %v1035
  %v2116 = vmul.f32 %v2044, %v1036
  %v2117 = vmul.f32 %v2045, %v1037
  %v2118 = vmul.f32 %v2046, %v1038
  %v2119 = vmul.f32 %v2047, %v1039
  %v2120 = vmul.f32 %v2048, %v1040
  %v2121 = vmul.f32 %v2049, %v1041
  %v2122 = vmul.f32 %v2050, %v1042
  %v2123 = vmul.f32 %v2051, %v1043
  %v2124 = vmul.f32 %v2052, %v1044
  %v2125 = vmul.f32 %v2053, %v1045
  %v2126 = vmul.f32 %v2054, %v1046
  %v2127 = vmul.f32 %v2055, %v1047
  %v2128 = vmul.f32 %v2056, %v1048
  %v2129 = vmul.f32 %v2057, %v1049
  %v2130 = vmul.f32 %v2058, %v1050
  %v2131 = vmul.f32 %v2059, %v1051
  %v2132 = vmul.f32 %v2060, %v1052
  %v2133 = vmul.f32 %v2061, %v1053
  %v2134 = vmul.f32 %v2062, %v1054
  %v2135 = vmul.f32 %v2063, %v1055
  %v2136 = vmul.f32 %v2064, %v1056
  %v2137 = vmul.f32 %v2065, %v1057
  %v2138 = vmul.f32 %v2066, %v1058
  %v2139 = vmul.f32 %v2067, %v1059
  %v2140 = vmul.f32 %v2068, %v1060
  %v2141 = vmul.f32 %v2069, %v1061
  %v2142 = vmul.f32 %v2070, %v1062
  %v2143 = vmul.f32 %v2071, %v1063
  %v2144 = vmul.f32 %v2072, %v1064
  %v2145 = vmul.f32 %v2073, %v1065
  %v2146 = vmul.f32 %v2074, %v1066
  %v2147 = vmul.f32 %v2075, %v1067
  %v2148 = vmul.f32 %v2076, %v1068
  %v2149 = vmul.f32 %v2077, %v1069
  %v2150 = vmul.f32 %v2078, %v1070
  %v2151 = vmul.f32 %v2079, %v1071
  %v2152 = vmul.f32 %v2080, %v1072
  %v2153 = vmul.f32 %v2081, %v1073
  %v2154 = vmul.f32 %v2082, %v1074
  %v2155 = vmul.f32 %v2083, %v1075
  %v2156 = vmul.f32 %v2084, %v1076
  %v2157 = vmul.f32 %v2085, %v1077
  %v2158 = vmul.f32 %v2086, %v1078
  %v2159 = vmul.f32 %v2087, %v1079
  %v2160 = vmul.f32 %v2088, %v1080
  %v2161 = vmul.f32 %v2089, %v1081
  %v2162 = vmul.f32 %v2090, %v1082
  %v2163 = vmul.f32 %v2091, %v1083
  %v2164 = vmul.f32 %v2092, %v1084
  %v2165 = vmul.f32 %v2093, %v1085
  %v2166 = vmul.f32 %v2094, %v1086
  %v2167 = vmul.f32 %v2095, %v1087
  %v2168 = vmul.f32 %v2096, %v1088
  %v2169 = vmul.f32 %v2097, %v1089
  %v2170 = vmul.f32 %v2098, %v1090
  %v2171 = vmul.f32 %v2099, %v1091
  %v2172 = vmul.f32 %v2100, %v1092
  %v2173 = vmul.f32 %v2101, %v1093
  %v2174 = vmul.f32 %v2102, %v1094
  %v2175 = vmul.f32 %v2103, %v1095
  %v2176 = vmul.f32 %v2104, %v1096
  %v2177 = vmul.f32 %v2105, %v1097
  %v2178 = vmul.f32 %v2106, %v1098
  %v2179 = vmul.f32 %v2107, %v1099
  %v2180 = vmul.f32 %v2108, %v1100
  %v2181 = vmul.f32 %v2109, %v1101
  %v2182 = vmul.f32 %v2110, %v1102
  %v2183 = vmul.f32 %v2111, %v1103
  %v2184 = vmul.f32 %v2112, %v1104
  %v2185 = vmul.f32 %v2113, %v1105
  %v2186 = vmul.f32 %v2114, 1.442695
  %v2187 = vpow.pop %v2186
  %v2188 = vmul.f32 %v2115, 1.442695
  %v2189 = vpow.pop %v2188
  %v2190 = vmul.f32 %v2116, 1.442695
  %v2191 = vpow.pop %v2190
  %v2192 = vmul.f32 %v2117, 1.442695
  %v2193 = vpow.pop %v2192
  %v2194 = vmul.f32 %v2118, 1.442695
  %v2195 = vpow.pop %v2194
  %v2196 = vmul.f32 %v2119, 1.442695
  %v2197 = vpow.pop %v2196
  %v2198 = vmul.f32 %v2120, 1.442695
  %v2199 = vpow.pop %v2198
  %v2200 = vmul.f32 %v2121, 1.442695
  %v2201 = vpow.pop %v2200
  %v2202 = vmul.f32 %v2122, 1.442695
  %v2203 = vpow.pop %v2202
  %v2204 = vmul.f32 %v2123, 1.442695
  %v2205 = vpow.pop %v2204
  %v2206 = vmul.f32 %v2124, 1.442695
  %v2207 = vpow.pop %v2206
  %v2208 = vmul.f32 %v2125, 1.442695
  %v2209 = vpow.pop %v2208
  %v2210 = vmul.f32 %v2126, 1.442695
  %v2211 = vpow.pop %v2210
  %v2212 = vmul.f32 %v2127, 1.442695
  %v2213 = vpow.pop %v2212
  %v2214 = vmul.f32 %v2128, 1.442695
  %v2215 = vpow.pop %v2214
  %v2216 = vmul.f32 %v2129, 1.442695
  %v2217 = vpow.pop %v2216
  %v2218 = vmul.f32 %v2130, 1.442695
  %v2219 = vpow.pop %v2218
  %v2220 = vmul.f32 %v2131, 1.442695
  %v2221 = vpow.pop %v2220
  %v2222 = vmul.f32 %v2132, 1.442695
  %v2223 = vpow.pop %v2222
  %v2224 = vmul.f32 %v2133, 1.442695
  %v2225 = vpow.pop %v2224
  %v2226 = vmul.f32 %v2134, 1.442695
  %v2227 = vpow.pop %v2226
  %v2228 = vmul.f32 %v2135, 1.442695
  %v2229 = vpow.pop %v2228
  %v2230 = vmul.f32 %v2136, 1.442695
  %v2231 = vpow.pop %v2230
  %v2232 = vmul.f32 %v2137, 1.442695
  %v2233 = vpow.pop %v2232
  %v2234 = vmul.f32 %v2138, 1.442695
  %v2235 = vpow.pop %v2234
  %v2236 = vmul.f32 %v2139, 1.442695
  %v2237 = vpow.pop %v2236
  %v2238 = vmul.f32 %v2140, 1.442695
  %v2239 = vpow.pop %v2238
  %v2240 = vmul.f32 %v2141, 1.442695
  %v2241 = vpow.pop %v2240
  %v2242 = vmul.f32 %v2142, 1.442695
  %v2243 = vpow.pop %v2242
  %v2244 = vmul.f32 %v2143, 1.442695
  %v2245 = vpow.pop %v2244
  %v2246 = vmul.f32 %v2144, 1.442695
  %v2247 = vpow.pop %v2246
  %v2248 = vmul.f32 %v2145, 1.442695
  %v2249 = vpow.pop %v2248
  %v2250 = vmul.f32 %v2146, 1.442695
  %v2251 = vpow.pop %v2250
  %v2252 = vmul.f32 %v2147, 1.442695
  %v2253 = vpow.pop %v2252
  %v2254 = vmul.f32 %v2148, 1.442695
  %v2255 = vpow.pop %v2254
  %v2256 = vmul.f32 %v2149, 1.442695
  %v2257 = vpow.pop %v2256
  %v2258 = vmul.f32 %v2150, 1.442695
  %v2259 = vpow.pop %v2258
  %v2260 = vmul.f32 %v2151, 1.442695
  %v2261 = vpow.pop %v2260
  %v2262 = vmul.f32 %v2152, 1.442695
  %v2263 = vpow.pop %v2262
  %v2264 = vmul.f32 %v2153, 1.442695
  %v2265 = vpow.pop %v2264
  %v2266 = vmul.f32 %v2154, 1.442695
  %v2267 = vpow.pop %v2266
  %v2268 = vmul.f32 %v2155, 1.442695
  %v2269 = vpow.pop %v2268
  %v2270 = vmul.f32 %v2156, 1.442695
  %v2271 = vpow.pop %v2270
  %v2272 = vmul.f32 %v2157, 1.442695
  %v2273 = vpow.pop %v2272
  %v2274 = vmul.f32 %v2158, 1.442695
  %v2275 = vpow.pop %v2274
  %v2276 = vmul.f32 %v2159, 1.442695
  %v2277 = vpow.pop %v2276
  %v2278 = vmul.f32 %v2160, 1.442695
  %v2279 = vpow.pop %v2278
  %v2280 = vmul.f32 %v2161, 1.442695
  %v2281 = vpow.pop %v2280
  %v2282 = vmul.f32 %v2162, 1.442695
  %v2283 = vpow.pop %v2282
  %v2284 = vmul.f32 %v2163, 1.442695
  %v2285 = vpow.pop %v2284
  %v2286 = vmul.f32 %v2164, 1.442695
  %v2287 = vpow.pop %v2286
  %v2288 = vmul.f32 %v2165, 1.442695
  %v2289 = vpow.pop %v2288
  %v2290 = vmul.f32 %v2166, 1.442695
  %v2291 = vpow.pop %v2290
  %v2292 = vmul.f32 %v2167, 1.442695
  %v2293 = vpow.pop %v2292
  %v2294 = vmul.f32 %v2168, 1.442695
  %v2295 = vpow.pop %v2294
  %v2296 = vmul.f32 %v2169, 1.442695
  %v2297 = vpow.pop %v2296
  %v2298 = vmul.f32 %v2170, 1.442695
  %v2299 = vpow.pop %v2298
  %v2300 = vmul.f32 %v2171, 1.442695
  %v2301 = vpow.pop %v2300
  %v2302 = vmul.f32 %v2172, 1.442695
  %v2303 = vpow.pop %v2302
  %v2304 = vmul.f32 %v2173, 1.442695
  %v2305 = vpow.pop %v2304
  %v2306 = vmul.f32 %v2174, 1.442695
  %v2307 = vpow.pop %v2306
  %v2308 = vmul.f32 %v2175, 1.442695
  %v2309 = vpow.pop %v2308
  %v2310 = vmul.f32 %v2176, 1.442695
  %v2311 = vpow.pop %v2310
  %v2312 = vmul.f32 %v2177, 1.442695
  %v2313 = vpow.pop %v2312
  %v2314 = vmul.f32 %v2178, 1.442695
  %v2315 = vpow.pop %v2314
  %v2316 = vmul.f32 %v2179, 1.442695
  %v2317 = vpow.pop %v2316
  %v2318 = vmul.f32 %v2180, 1.442695
  %v2319 = vpow.pop %v2318
  %v2320 = vmul.f32 %v2181, 1.442695
  %v2321 = vpow.pop %v2320
  %v2322 = vmul.f32 %v2182, 1.442695
  %v2323 = vpow.pop %v2322
  %v2324 = vmul.f32 %v2183, 1.442695
  %v2325 = vpow.pop %v2324
  %v2326 = vmul.f32 %v2184, 1.442695
  %v2327 = vpow.pop %v2326
  %v2328 = vmul.f32 %v2185, 1.442695
  %v2329 = vpow.pop %v2328
  %v2330 = vmul.f32 %v1970, %v2187
  %v2331 = vmul.f32 %v1971, %v2189
  %v2332 = vmul.f32 %v1972, %v2191
  %v2333 = vmul.f32 %v1973, %v2193
  %v2334 = vmul.f32 %v1974, %v2195
  %v2335 = vmul.f32 %v1975, %v2197
  %v2336 = vmul.f32 %v1976, %v2199
  %v2337 = vmul.f32 %v1977, %v2201
  %v2338 = vmul.f32 %v1978, %v2203
  %v2339 = vmul.f32 %v1979, %v2205
  %v2340 = vmul.f32 %v1980, %v2207
  %v2341 = vmul.f32 %v1981, %v2209
  %v2342 = vmul.f32 %v1982, %v2211
  %v2343 = vmul.f32 %v1983, %v2213
  %v2344 = vmul.f32 %v1984, %v2215
  %v2345 = vmul.f32 %v1985, %v2217
  %v2346 = vmul.f32 %v1986, %v2219
  %v2347 = vmul.f32 %v1987, %v2221
  %v2348 = vmul.f32 %v1988, %v2223
  %v2349 = vmul.f32 %v1989, %v2225
  %v2350 = vmul.f32 %v1990, %v2227
  %v2351 = vmul.f32 %v1991, %v2229
  %v2352 = vmul.f32 %v1992, %v2231
  %v2353 = vmul.f32 %v1993, %v2233
  %v2354 = vmul.f32 %v1994, %v2235
  %v2355 = vmul.f32 %v1995, %v2237
  %v2356 = vmul.f32 %v1996, %v2239
  %v2357 = vmul.f32 %v1997, %v2241
  %v2358 = vmul.f32 %v1998, %v2243
  %v2359 = vmul.f32 %v1999, %v2245
  %v2360 = vmul.f32 %v2000, %v2247
  %v2361 = vmul.f32 %v2001, %v2249
  %v2362 = vmul.f32 %v2002, %v2251
  %v2363 = vmul.f32 %v2003, %v2253
  %v2364 = vmul.f32 %v2004, %v2255
  %v2365 = vmul.f32 %v2005, %v2257
  %v2366 = vmul.f32 %v2006, %v2259
  %v2367 = vmul.f32 %v2007, %v2261
  %v2368 = vmul.f32 %v2008, %v2263
  %v2369 = vmul.f32 %v2009, %v2265
  %v2370 = vmul.f32 %v2010, %v2267
  %v2371 = vmul.f32 %v2011, %v2269
  %v2372 = vmul.f32 %v2012, %v2271
  %v2373 = vmul.f32 %v2013, %v2273
  %v2374 = vmul.f32 %v2014, %v2275
  %v2375 = vmul.f32 %v2015, %v2277
  %v2376 = vmul.f32 %v2016, %v2279
  %v2377 = vmul.f32 %v2017, %v2281
  %v2378 = vmul.f32 %v2018, %v2283
  %v2379 = vmul.f32 %v2019, %v2285
  %v2380 = vmul.f32 %v2020, %v2287
  %v2381 = vmul.f32 %v2021, %v2289
  %v2382 = vmul.f32 %v2022, %v2291
  %v2383 = vmul.f32 %v2023, %v2293
  %v2384 = vmul.f32 %v2024, %v2295
  %v2385 = vmul.f32 %v2025, %v2297
  %v2386 = vmul.f32 %v2026, %v2299
  %v2387 = vmul.f32 %v2027, %v2301
  %v2388 = vmul.f32 %v2028, %v2303
  %v2389 = vmul.f32 %v2029, %v2305
  %v2390 = vmul.f32 %v2030, %v2307
  %v2391 = vmul.f32 %v2031, %v2309
  %v2392 = vmul.f32 %v2032, %v2311
  %v2393 = vmul.f32 %v2033, %v2313
  %v2394 = vmul.f32 %v2034, %v2315
  %v2395 = vmul.f32 %v2035, %v2317
  %v2396 = vmul.f32 %v2036, %v2319
  %v2397 = vmul.f32 %v2037, %v2321
  %v2398 = vmul.f32 %v2038, %v2323
  %v2399 = vmul.f32 %v2039, %v2325
  %v2400 = vmul.f32 %v2040, %v2327
  %v2401 = vmul.f32 %v2041, %v2329
  %v2402 = vsub.f32 1.0, %v2330
  %v2403 = vsub.f32 1.0, %v2331
  %v2404 = vsub.f32 1.0, %v2332
  %v2405 = vsub.f32 1.0, %v2333
  %v2406 = vsub.f32 1.0, %v2334
  %v2407 = vsub.f32 1.0, %v2335
  %v2408 = vsub.f32 1.0, %v2336
  %v2409 = vsub.f32 1.0, %v2337
  %v2410 = vsub.f32 1.0, %v2338
  %v2411 = vsub.f32 1.0, %v2339
  %v2412 = vsub.f32 1.0, %v2340
  %v2413 = vsub.f32 1.0, %v2341
  %v2414 = vsub.f32 1.0, %v2342
  %v2415 = vsub.f32 1.0, %v2343
  %v2416 = vsub.f32 1.0, %v2344
  %v2417 = vsub.f32 1.0, %v2345
  %v2418 = vsub.f32 1.0, %v2346
  %v2419 = vsub.f32 1.0, %v2347
  %v2420 = vsub.f32 1.0, %v2348
  %v2421 = vsub.f32 1.0, %v2349
  %v2422 = vsub.f32 1.0, %v2350
  %v2423 = vsub.f32 1.0, %v2351
  %v2424 = vsub.f32 1.0, %v2352
  %v2425 = vsub.f32 1.0, %v2353
  %v2426 = vsub.f32 1.0, %v2354
  %v2427 = vsub.f32 1.0, %v2355
  %v2428 = vsub.f32 1.0, %v2356
  %v2429 = vsub.f32 1.0, %v2357
  %v2430 = vsub.f32 1.0, %v2358
  %v2431 = vsub.f32 1.0, %v2359
  %v2432 = vsub.f32 1.0, %v2360
  %v2433 = vsub.f32 1.0, %v2361
  %v2434 = vsub.f32 1.0, %v2362
  %v2435 = vsub.f32 1.0, %v2363
  %v2436 = vsub.f32 1.0, %v2364
  %v2437 = vsub.f32 1.0, %v2365
  %v2438 = vsub.f32 1.0, %v2366
  %v2439 = vsub.f32 1.0, %v2367
  %v2440 = vsub.f32 1.0, %v2368
  %v2441 = vsub.f32 1.0, %v2369
  %v2442 = vsub.f32 1.0, %v2370
  %v2443 = vsub.f32 1.0, %v2371
  %v2444 = vsub.f32 1.0, %v2372
  %v2445 = vsub.f32 1.0, %v2373
  %v2446 = vsub.f32 1.0, %v2374
  %v2447 = vsub.f32 1.0, %v2375
  %v2448 = vsub.f32 1.0, %v2376
  %v2449 = vsub.f32 1.0, %v2377
  %v2450 = vsub.f32 1.0, %v2378
  %v2451 = vsub.f32 1.0, %v2379
  %v2452 = vsub.f32 1.0, %v2380
  %v2453 = vsub.f32 1.0, %v2381
  %v2454 = vsub.f32 1.0, %v2382
  %v2455 = vsub.f32 1.0, %v2383
  %v2456 = vsub.f32 1.0, %v2384
  %v2457 = vsub.f32 1.0, %v2385
  %v2458 = vsub.f32 1.0, %v2386
  %v2459 = vsub.f32 1.0, %v2387
  %v2460 = vsub.f32 1.0, %v2388
  %v2461 = vsub.f32 1.0, %v2389
  %v2462 = vsub.f32 1.0, %v2390
  %v2463 = vsub.f32 1.0, %v2391
  %v2464 = vsub.f32 1.0, %v2392
  %v2465 = vsub.f32 1.0, %v2393
  %v2466 = vsub.f32 1.0, %v2394
  %v2467 = vsub.f32 1.0, %v2395
  %v2468 = vsub.f32 1.0, %v2396
  %v2469 = vsub.f32 1.0, %v2397
  %v2470 = vsub.f32 1.0, %v2398
  %v2471 = vsub.f32 1.0, %v2399
  %v2472 = vsub.f32 1.0, %v2400
  %v2473 = vsub.f32 1.0, %v2401
  %vm2474 = vcmp.lt.f32.partialorder %v962, 0.0
  %vm2475 = vcmp.lt.f32.partialorder %v963, 0.0
  %vm2476 = vcmp.lt.f32.partialorder %v964, 0.0
  %vm2477 = vcmp.lt.f32.partialorder %v965, 0.0
  %vm2478 = vcmp.lt.f32.partialorder %v966, 0.0
  %vm2479 = vcmp.lt.f32.partialorder %v967, 0.0
  %vm2480 = vcmp.lt.f32.partialorder %v968, 0.0
  %vm2481 = vcmp.lt.f32.partialorder %v969, 0.0
  %vm2482 = vcmp.lt.f32.partialorder %v970, 0.0
  %vm2483 = vcmp.lt.f32.partialorder %v971, 0.0
  %vm2484 = vcmp.lt.f32.partialorder %v972, 0.0
  %vm2485 = vcmp.lt.f32.partialorder %v973, 0.0
  %vm2486 = vcmp.lt.f32.partialorder %v974, 0.0
  %vm2487 = vcmp.lt.f32.partialorder %v975, 0.0
  %vm2488 = vcmp.lt.f32.partialorder %v976, 0.0
  %vm2489 = vcmp.lt.f32.partialorder %v977, 0.0
  %vm2490 = vcmp.lt.f32.partialorder %v978, 0.0
  %vm2491 = vcmp.lt.f32.partialorder %v979, 0.0
  %vm2492 = vcmp.lt.f32.partialorder %v980, 0.0
  %vm2493 = vcmp.lt.f32.partialorder %v981, 0.0
  %vm2494 = vcmp.lt.f32.partialorder %v982, 0.0
  %vm2495 = vcmp.lt.f32.partialorder %v983, 0.0
  %vm2496 = vcmp.lt.f32.partialorder %v984, 0.0
  %vm2497 = vcmp.lt.f32.partialorder %v985, 0.0
  %vm2498 = vcmp.lt.f32.partialorder %v986, 0.0
  %vm2499 = vcmp.lt.f32.partialorder %v987, 0.0
  %vm2500 = vcmp.lt.f32.partialorder %v988, 0.0
  %vm2501 = vcmp.lt.f32.partialorder %v989, 0.0
  %vm2502 = vcmp.lt.f32.partialorder %v990, 0.0
  %vm2503 = vcmp.lt.f32.partialorder %v991, 0.0
  %vm2504 = vcmp.lt.f32.partialorder %v992, 0.0
  %vm2505 = vcmp.lt.f32.partialorder %v993, 0.0
  %vm2506 = vcmp.lt.f32.partialorder %v994, 0.0
  %vm2507 = vcmp.lt.f32.partialorder %v995, 0.0
  %vm2508 = vcmp.lt.f32.partialorder %v996, 0.0
  %vm2509 = vcmp.lt.f32.partialorder %v997, 0.0
  %vm2510 = vcmp.lt.f32.partialorder %v998, 0.0
  %vm2511 = vcmp.lt.f32.partialorder %v999, 0.0
  %vm2512 = vcmp.lt.f32.partialorder %v1000, 0.0
  %vm2513 = vcmp.lt.f32.partialorder %v1001, 0.0
  %vm2514 = vcmp.lt.f32.partialorder %v1002, 0.0
  %vm2515 = vcmp.lt.f32.partialorder %v1003, 0.0
  %vm2516 = vcmp.lt.f32.partialorder %v1004, 0.0
  %vm2517 = vcmp.lt.f32.partialorder %v1005, 0.0
  %vm2518 = vcmp.lt.f32.partialorder %v1006, 0.0
  %vm2519 = vcmp.lt.f32.partialorder %v1007, 0.0
  %vm2520 = vcmp.lt.f32.partialorder %v1008, 0.0
  %vm2521 = vcmp.lt.f32.partialorder %v1009, 0.0
  %vm2522 = vcmp.lt.f32.partialorder %v1010, 0.0
  %vm2523 = vcmp.lt.f32.partialorder %v1011, 0.0
  %vm2524 = vcmp.lt.f32.partialorder %v1012, 0.0
  %vm2525 = vcmp.lt.f32.partialorder %v1013, 0.0
  %vm2526 = vcmp.lt.f32.partialorder %v1014, 0.0
  %vm2527 = vcmp.lt.f32.partialorder %v1015, 0.0
  %vm2528 = vcmp.lt.f32.partialorder %v1016, 0.0
  %vm2529 = vcmp.lt.f32.partialorder %v1017, 0.0
  %vm2530 = vcmp.lt.f32.partialorder %v1018, 0.0
  %vm2531 = vcmp.lt.f32.partialorder %v1019, 0.0
  %vm2532 = vcmp.lt.f32.partialorder %v1020, 0.0
  %vm2533 = vcmp.lt.f32.partialorder %v1021, 0.0
  %vm2534 = vcmp.lt.f32.partialorder %v1022, 0.0
  %vm2535 = vcmp.lt.f32.partialorder %v1023, 0.0
  %vm2536 = vcmp.lt.f32.partialorder %v1024, 0.0
  %vm2537 = vcmp.lt.f32.partialorder %v1025, 0.0
  %vm2538 = vcmp.lt.f32.partialorder %v1026, 0.0
  %vm2539 = vcmp.lt.f32.partialorder %v1027, 0.0
  %vm2540 = vcmp.lt.f32.partialorder %v1028, 0.0
  %vm2541 = vcmp.lt.f32.partialorder %v1029, 0.0
  %vm2542 = vcmp.lt.f32.partialorder %v1030, 0.0
  %vm2543 = vcmp.lt.f32.partialorder %v1031, 0.0
  %vm2544 = vcmp.lt.f32.partialorder %v1032, 0.0
  %vm2545 = vcmp.lt.f32.partialorder %v1033, 0.0
  %v2546 = vsub.f32 0.0, %v2402
  %v2547 = vsub.f32 0.0, %v2403
  %v2548 = vsub.f32 0.0, %v2404
  %v2549 = vsub.f32 0.0, %v2405
  %v2550 = vsub.f32 0.0, %v2406
  %v2551 = vsub.f32 0.0, %v2407
  %v2552 = vsub.f32 0.0, %v2408
  %v2553 = vsub.f32 0.0, %v2409
  %v2554 = vsub.f32 0.0, %v2410
  %v2555 = vsub.f32 0.0, %v2411
  %v2556 = vsub.f32 0.0, %v2412
  %v2557 = vsub.f32 0.0, %v2413
  %v2558 = vsub.f32 0.0, %v2414
  %v2559 = vsub.f32 0.0, %v2415
  %v2560 = vsub.f32 0.0, %v2416
  %v2561 = vsub.f32 0.0, %v2417
  %v2562 = vsub.f32 0.0, %v2418
  %v2563 = vsub.f32 0.0, %v2419
  %v2564 = vsub.f32 0.0, %v2420
  %v2565 = vsub.f32 0.0, %v2421
  %v2566 = vsub.f32 0.0, %v2422
  %v2567 = vsub.f32 0.0, %v2423
  %v2568 = vsub.f32 0.0, %v2424
  %v2569 = vsub.f32 0.0, %v2425
  %v2570 = vsub.f32 0.0, %v2426
  %v2571 = vsub.f32 0.0, %v2427
  %v2572 = vsub.f32 0.0, %v2428
  %v2573 = vsub.f32 0.0, %v2429
  %v2574 = vsub.f32 0.0, %v2430
  %v2575 = vsub.f32 0.0, %v2431
  %v2576 = vsub.f32 0.0, %v2432
  %v2577 = vsub.f32 0.0, %v2433
  %v2578 = vsub.f32 0.0, %v2434
  %v2579 = vsub.f32 0.0, %v2435
  %v2580 = vsub.f32 0.0, %v2436
  %v2581 = vsub.f32 0.0, %v2437
  %v2582 = vsub.f32 0.0, %v2438
  %v2583 = vsub.f32 0.0, %v2439
  %v2584 = vsub.f32 0.0, %v2440
  %v2585 = vsub.f32 0.0, %v2441
  %v2586 = vsub.f32 0.0, %v2442
  %v2587 = vsub.f32 0.0, %v2443
  %v2588 = vsub.f32 0.0, %v2444
  %v2589 = vsub.f32 0.0, %v2445
  %v2590 = vsub.f32 0.0, %v2446
  %v2591 = vsub.f32 0.0, %v2447
  %v2592 = vsub.f32 0.0, %v2448
  %v2593 = vsub.f32 0.0, %v2449
  %v2594 = vsub.f32 0.0, %v2450
  %v2595 = vsub.f32 0.0, %v2451
  %v2596 = vsub.f32 0.0, %v2452
  %v2597 = vsub.f32 0.0, %v2453
  %v2598 = vsub.f32 0.0, %v2454
  %v2599 = vsub.f32 0.0, %v2455
  %v2600 = vsub.f32 0.0, %v2456
  %v2601 = vsub.f32 0.0, %v2457
  %v2602 = vsub.f32 0.0, %v2458
  %v2603 = vsub.f32 0.0, %v2459
  %v2604 = vsub.f32 0.0, %v2460
  %v2605 = vsub.f32 0.0, %v2461
  %v2606 = vsub.f32 0.0, %v2462
  %v2607 = vsub.f32 0.0, %v2463
  %v2608 = vsub.f32 0.0, %v2464
  %v2609 = vsub.f32 0.0, %v2465
  %v2610 = vsub.f32 0.0, %v2466
  %v2611 = vsub.f32 0.0, %v2467
  %v2612 = vsub.f32 0.0, %v2468
  %v2613 = vsub.f32 0.0, %v2469
  %v2614 = vsub.f32 0.0, %v2470
  %v2615 = vsub.f32 0.0, %v2471
  %v2616 = vsub.f32 0.0, %v2472
  %v2617 = vsub.f32 0.0, %v2473
  %v2618 = vsel %vm2474, %v2546, %v2402
  %v2619 = vsel %vm2475, %v2547, %v2403
  %v2620 = vsel %vm2476, %v2548, %v2404
  %v2621 = vsel %vm2477, %v2549, %v2405
  %v2622 = vsel %vm2478, %v2550, %v2406
  %v2623 = vsel %vm2479, %v2551, %v2407
  %v2624 = vsel %vm2480, %v2552, %v2408
  %v2625 = vsel %vm2481, %v2553, %v2409
  %v2626 = vsel %vm2482, %v2554, %v2410
  %v2627 = vsel %vm2483, %v2555, %v2411
  %v2628 = vsel %vm2484, %v2556, %v2412
  %v2629 = vsel %vm2485, %v2557, %v2413
  %v2630 = vsel %vm2486, %v2558, %v2414
  %v2631 = vsel %vm2487, %v2559, %v2415
  %v2632 = vsel %vm2488, %v2560, %v2416
  %v2633 = vsel %vm2489, %v2561, %v2417
  %v2634 = vsel %vm2490, %v2562, %v2418
  %v2635 = vsel %vm2491, %v2563, %v2419
  %v2636 = vsel %vm2492, %v2564, %v2420
  %v2637 = vsel %vm2493, %v2565, %v2421
  %v2638 = vsel %vm2494, %v2566, %v2422
  %v2639 = vsel %vm2495, %v2567, %v2423
  %v2640 = vsel %vm2496, %v2568, %v2424
  %v2641 = vsel %vm2497, %v2569, %v2425
  %v2642 = vsel %vm2498, %v2570, %v2426
  %v2643 = vsel %vm2499, %v2571, %v2427
  %v2644 = vsel %vm2500, %v2572, %v2428
  %v2645 = vsel %vm2501, %v2573, %v2429
  %v2646 = vsel %vm2502, %v2574, %v2430
  %v2647 = vsel %vm2503, %v2575, %v2431
  %v2648 = vsel %vm2504, %v2576, %v2432
  %v2649 = vsel %vm2505, %v2577, %v2433
  %v2650 = vsel %vm2506, %v2578, %v2434
  %v2651 = vsel %vm2507, %v2579, %v2435
  %v2652 = vsel %vm2508, %v2580, %v2436
  %v2653 = vsel %vm2509, %v2581, %v2437
  %v2654 = vsel %vm2510, %v2582, %v2438
  %v2655 = vsel %vm2511, %v2583, %v2439
  %v2656 = vsel %vm2512, %v2584, %v2440
  %v2657 = vsel %vm2513, %v2585, %v2441
  %v2658 = vsel %vm2514, %v2586, %v2442
  %v2659 = vsel %vm2515, %v2587, %v2443
  %v2660 = vsel %vm2516, %v2588, %v2444
  %v2661 = vsel %vm2517, %v2589, %v2445
  %v2662 = vsel %vm2518, %v2590, %v2446
  %v2663 = vsel %vm2519, %v2591, %v2447
  %v2664 = vsel %vm2520, %v2592, %v2448
  %v2665 = vsel %vm2521, %v2593, %v2449
  %v2666 = vsel %vm2522, %v2594, %v2450
  %v2667 = vsel %vm2523, %v2595, %v2451
  %v2668 = vsel %vm2524, %v2596, %v2452
  %v2669 = vsel %vm2525, %v2597, %v2453
  %v2670 = vsel %vm2526, %v2598, %v2454
  %v2671 = vsel %vm2527, %v2599, %v2455
  %v2672 = vsel %vm2528, %v2600, %v2456
  %v2673 = vsel %vm2529, %v2601, %v2457
  %v2674 = vsel %vm2530, %v2602, %v2458
  %v2675 = vsel %vm2531, %v2603, %v2459
  %v2676 = vsel %vm2532, %v2604, %v2460
  %v2677 = vsel %vm2533, %v2605, %v2461
  %v2678 = vsel %vm2534, %v2606, %v2462
  %v2679 = vsel %vm2535, %v2607, %v2463
  %v2680 = vsel %vm2536, %v2608, %v2464
  %v2681 = vsel %vm2537, %v2609, %v2465
  %v2682 = vsel %vm2538, %v2610, %v2466
  %v2683 = vsel %vm2539, %v2611, %v2467
  %v2684 = vsel %vm2540, %v2612, %v2468
  %v2685 = vsel %vm2541, %v2613, %v2469
  %v2686 = vsel %vm2542, %v2614, %v2470
  %v2687 = vsel %vm2543, %v2615, %v2471
  %v2688 = vsel %vm2544, %v2616, %v2472
  %v2689 = vsel %vm2545, %v2617, %v2473
  %v2690 = vadd.f32 %v2618, 1.0
  %v2691 = vadd.f32 %v2619, 1.0
  %v2692 = vadd.f32 %v2620, 1.0
  %v2693 = vadd.f32 %v2621, 1.0
  %v2694 = vadd.f32 %v2622, 1.0
  %v2695 = vadd.f32 %v2623, 1.0
  %v2696 = vadd.f32 %v2624, 1.0
  %v2697 = vadd.f32 %v2625, 1.0
  %v2698 = vadd.f32 %v2626, 1.0
  %v2699 = vadd.f32 %v2627, 1.0
  %v2700 = vadd.f32 %v2628, 1.0
  %v2701 = vadd.f32 %v2629, 1.0
  %v2702 = vadd.f32 %v2630, 1.0
  %v2703 = vadd.f32 %v2631, 1.0
  %v2704 = vadd.f32 %v2632, 1.0
  %v2705 = vadd.f32 %v2633, 1.0
  %v2706 = vadd.f32 %v2634, 1.0
  %v2707 = vadd.f32 %v2635, 1.0
  %v2708 = vadd.f32 %v2636, 1.0
  %v2709 = vadd.f32 %v2637, 1.0
  %v2710 = vadd.f32 %v2638, 1.0
  %v2711 = vadd.f32 %v2639, 1.0
  %v2712 = vadd.f32 %v2640, 1.0
  %v2713 = vadd.f32 %v2641, 1.0
  %v2714 = vadd.f32 %v2642, 1.0
  %v2715 = vadd.f32 %v2643, 1.0
  %v2716 = vadd.f32 %v2644, 1.0
  %v2717 = vadd.f32 %v2645, 1.0
  %v2718 = vadd.f32 %v2646, 1.0
  %v2719 = vadd.f32 %v2647, 1.0
  %v2720 = vadd.f32 %v2648, 1.0
  %v2721 = vadd.f32 %v2649, 1.0
  %v2722 = vadd.f32 %v2650, 1.0
  %v2723 = vadd.f32 %v2651, 1.0
  %v2724 = vadd.f32 %v2652, 1.0
  %v2725 = vadd.f32 %v2653, 1.0
  %v2726 = vadd.f32 %v2654, 1.0
  %v2727 = vadd.f32 %v2655, 1.0
  %v2728 = vadd.f32 %v2656, 1.0
  %v2729 = vadd.f32 %v2657, 1.0
  %v2730 = vadd.f32 %v2658, 1.0
  %v2731 = vadd.f32 %v2659, 1.0
  %v2732 = vadd.f32 %v2660, 1.0
  %v2733 = vadd.f32 %v2661, 1.0
  %v2734 = vadd.f32 %v2662, 1.0
  %v2735 = vadd.f32 %v2663, 1.0
  %v2736 = vadd.f32 %v2664, 1.0
  %v2737 = vadd.f32 %v2665, 1.0
  %v2738 = vadd.f32 %v2666, 1.0
  %v2739 = vadd.f32 %v2667, 1.0
  %v2740 = vadd.f32 %v2668, 1.0
  %v2741 = vadd.f32 %v2669, 1.0
  %v2742 = vadd.f32 %v2670, 1.0
  %v2743 = vadd.f32 %v2671, 1.0
  %v2744 = vadd.f32 %v2672, 1.0
  %v2745 = vadd.f32 %v2673, 1.0
  %v2746 = vadd.f32 %v2674, 1.0
  %v2747 = vadd.f32 %v2675, 1.0
  %v2748 = vadd.f32 %v2676, 1.0
  %v2749 = vadd.f32 %v2677, 1.0
  %v2750 = vadd.f32 %v2678, 1.0
  %v2751 = vadd.f32 %v2679, 1.0
  %v2752 = vadd.f32 %v2680, 1.0
  %v2753 = vadd.f32 %v2681, 1.0
  %v2754 = vadd.f32 %v2682, 1.0
  %v2755 = vadd.f32 %v2683, 1.0
  %v2756 = vadd.f32 %v2684, 1.0
  %v2757 = vadd.f32 %v2685, 1.0
  %v2758 = vadd.f32 %v2686, 1.0
  %v2759 = vadd.f32 %v2687, 1.0
  %v2760 = vadd.f32 %v2688, 1.0
  %v2761 = vadd.f32 %v2689, 1.0
  %v2762 = vmul.f32 %v890, %v2690
  %v2763 = vmul.f32 %v891, %v2691
  %v2764 = vmul.f32 %v892, %v2692
  %v2765 = vmul.f32 %v893, %v2693
  %v2766 = vmul.f32 %v894, %v2694
  %v2767 = vmul.f32 %v895, %v2695
  %v2768 = vmul.f32 %v896, %v2696
  %v2769 = vmul.f32 %v897, %v2697
  %v2770 = vmul.f32 %v898, %v2698
  %v2771 = vmul.f32 %v899, %v2699
  %v2772 = vmul.f32 %v900, %v2700
  %v2773 = vmul.f32 %v901, %v2701
  %v2774 = vmul.f32 %v902, %v2702
  %v2775 = vmul.f32 %v903, %v2703
  %v2776 = vmul.f32 %v904, %v2704
  %v2777 = vmul.f32 %v905, %v2705
  %v2778 = vmul.f32 %v906, %v2706
  %v2779 = vmul.f32 %v907, %v2707
  %v2780 = vmul.f32 %v908, %v2708
  %v2781 = vmul.f32 %v909, %v2709
  %v2782 = vmul.f32 %v910, %v2710
  %v2783 = vmul.f32 %v911, %v2711
  %v2784 = vmul.f32 %v912, %v2712
  %v2785 = vmul.f32 %v913, %v2713
  %v2786 = vmul.f32 %v914, %v2714
  %v2787 = vmul.f32 %v915, %v2715
  %v2788 = vmul.f32 %v916, %v2716
  %v2789 = vmul.f32 %v917, %v2717
  %v2790 = vmul.f32 %v918, %v2718
  %v2791 = vmul.f32 %v919, %v2719
  %v2792 = vmul.f32 %v920, %v2720
  %v2793 = vmul.f32 %v921, %v2721
  %v2794 = vmul.f32 %v922, %v2722
  %v2795 = vmul.f32 %v923, %v2723
  %v2796 = vmul.f32 %v924, %v2724
  %v2797 = vmul.f32 %v925, %v2725
  %v2798 = vmul.f32 %v926, %v2726
  %v2799 = vmul.f32 %v927, %v2727
  %v2800 = vmul.f32 %v928, %v2728
  %v2801 = vmul.f32 %v929, %v2729
  %v2802 = vmul.f32 %v930, %v2730
  %v2803 = vmul.f32 %v931, %v2731
  %v2804 = vmul.f32 %v932, %v2732
  %v2805 = vmul.f32 %v933, %v2733
  %v2806 = vmul.f32 %v934, %v2734
  %v2807 = vmul.f32 %v935, %v2735
  %v2808 = vmul.f32 %v936, %v2736
  %v2809 = vmul.f32 %v937, %v2737
  %v2810 = vmul.f32 %v938, %v2738
  %v2811 = vmul.f32 %v939, %v2739
  %v2812 = vmul.f32 %v940, %v2740
  %v2813 = vmul.f32 %v941, %v2741
  %v2814 = vmul.f32 %v942, %v2742
  %v2815 = vmul.f32 %v943, %v2743
  %v2816 = vmul.f32 %v944, %v2744
  %v2817 = vmul.f32 %v945, %v2745
  %v2818 = vmul.f32 %v946, %v2746
  %v2819 = vmul.f32 %v947, %v2747
  %v2820 = vmul.f32 %v948, %v2748
  %v2821 = vmul.f32 %v949, %v2749
  %v2822 = vmul.f32 %v950, %v2750
  %v2823 = vmul.f32 %v951, %v2751
  %v2824 = vmul.f32 %v952, %v2752
  %v2825 = vmul.f32 %v953, %v2753
  %v2826 = vmul.f32 %v954, %v2754
  %v2827 = vmul.f32 %v955, %v2755
  %v2828 = vmul.f32 %v956, %v2756
  %v2829 = vmul.f32 %v957, %v2757
  %v2830 = vmul.f32 %v958, %v2758
  %v2831 = vmul.f32 %v959, %v2759
  %v2832 = vmul.f32 %v960, %v2760
  %v2833 = vmul.f32 %v961, %v2761
  %2834 = vst.msk [vmem:[%s4] sm:$0xff] %vm100, %v2762
  %2835 = vst.msk [vmem:[%s4 + $0x8] sm:$0xff] %vm100, %v2763
  %2836 = vst.msk [vmem:[%s4 + $0x10] sm:$0xff] %vm100, %v2764
  %2837 = vst.msk [vmem:[%s4 + $0x18] sm:$0xff] %vm100, %v2765
  %2838 = vst.msk [vmem:[%s4 + $0x20] sm:$0xff] %vm100, %v2766
  %2839 = vst.msk [vmem:[%s4 + $0x28] sm:$0xff] %vm100, %v2767
  %2840 = vst.msk [vmem:[%s4 + $0x30] sm:$0xff] %vm100, %v2768
  %2841 = vst.msk [vmem:[%s4 + $0x38] sm:$0xff] %vm100, %v2769
  %2842 = vst.msk [vmem:[%s4 + $0x40] sm:$0xff] %vm100, %v2770
  %2843 = vst.msk [vmem:[%s4 + $0x48] sm:$0xff] %vm100, %v2771
  %2844 = vst.msk [vmem:[%s4 + $0x50] sm:$0xff] %vm100, %v2772
  %2845 = vst.msk [vmem:[%s4 + $0x58] sm:$0xff] %vm100, %v2773
  %2846 = vst.msk [vmem:[%s4 + $0x60] sm:$0xff] %vm100, %v2774
  %2847 = vst.msk [vmem:[%s4 + $0x68] sm:$0xff] %vm100, %v2775
  %2848 = vst.msk [vmem:[%s4 + $0x70] sm:$0xff] %vm100, %v2776
  %2849 = vst.msk [vmem:[%s4 + $0x78] sm:$0xff] %vm100, %v2777
  %2850 = vst.msk [vmem:[%s4 + $0x80] sm:$0xff] %vm100, %v2778
  %2851 = vst.msk [vmem:[%s4 + $0x88] sm:$0xff] %vm100, %v2779
  %2852 = vst.msk [vmem:[%s4 + $0x90] sm:$0xff] %vm100, %v2780
  %2853 = vst.msk [vmem:[%s4 + $0x98] sm:$0xff] %vm100, %v2781
  %2854 = vst.msk [vmem:[%s4 + $0xa0] sm:$0xff] %vm100, %v2782
  %2855 = vst.msk [vmem:[%s4 + $0xa8] sm:$0xff] %vm100, %v2783
  %2856 = vst.msk [vmem:[%s4 + $0xb0] sm:$0xff] %vm100, %v2784
  %2857 = vst.msk [vmem:[%s4 + $0xb8] sm:$0xff] %vm100, %v2785
  %2858 = vst.msk [vmem:[%s4 + $0xc0] sm:$0xff] %vm100, %v2786
  %2859 = vst.msk [vmem:[%s4 + $0xc8] sm:$0xff] %vm100, %v2787
  %2860 = vst.msk [vmem:[%s4 + $0xd0] sm:$0xff] %vm100, %v2788
  %2861 = vst.msk [vmem:[%s4 + $0xd8] sm:$0xff] %vm100, %v2789
  %2862 = vst.msk [vmem:[%s4 + $0xe0] sm:$0xff] %vm100, %v2790
  %2863 = vst.msk [vmem:[%s4 + $0xe8] sm:$0xff] %vm100, %v2791
  %2864 = vst.msk [vmem:[%s4 + $0xf0] sm:$0xff] %vm100, %v2792
  %2865 = vst.msk [vmem:[%s4 + $0xf8] sm:$0xff] %vm100, %v2793
  %2866 = vst.msk [vmem:[%s4 + $0x100] sm:$0xff] %vm100, %v2794
  %2867 = vst.msk [vmem:[%s4 + $0x108] sm:$0xff] %vm100, %v2795
  %2868 = vst.msk [vmem:[%s4 + $0x110] sm:$0xff] %vm100, %v2796
  %2869 = vst.msk [vmem:[%s4 + $0x118] sm:$0xff] %vm100, %v2797
  %2870 = vst.msk [vmem:[%s4 + $0x120] sm:$0xff] %vm100, %v2798
  %2871 = vst.msk [vmem:[%s4 + $0x128] sm:$0xff] %vm100, %v2799
  %2872 = vst.msk [vmem:[%s4 + $0x130] sm:$0xff] %vm100, %v2800
  %2873 = vst.msk [vmem:[%s4 + $0x138] sm:$0xff] %vm100, %v2801
  %2874 = vst.msk [vmem:[%s4 + $0x140] sm:$0xff] %vm100, %v2802
  %2875 = vst.msk [vmem:[%s4 + $0x148] sm:$0xff] %vm100, %v2803
  %2876 = vst.msk [vmem:[%s4 + $0x150] sm:$0xff] %vm100, %v2804
  %2877 = vst.msk [vmem:[%s4 + $0x158] sm:$0xff] %vm100, %v2805
  %2878 = vst.msk [vmem:[%s4 + $0x160] sm:$0xff] %vm100, %v2806
  %2879 = vst.msk [vmem:[%s4 + $0x168] sm:$0xff] %vm100, %v2807
  %2880 = vst.msk [vmem:[%s4 + $0x170] sm:$0xff] %vm100, %v2808
  %2881 = vst.msk [vmem:[%s4 + $0x178] sm:$0xff] %vm100, %v2809
  %2882 = vst.msk [vmem:[%s4 + $0x180] sm:$0xff] %vm100, %v2810
  %2883 = vst.msk [vmem:[%s4 + $0x188] sm:$0xff] %vm100, %v2811
  %2884 = vst.msk [vmem:[%s4 + $0x190] sm:$0xff] %vm100, %v2812
  %2885 = vst.msk [vmem:[%s4 + $0x198] sm:$0xff] %vm100, %v2813
  %2886 = vst.msk [vmem:[%s4 + $0x1a0] sm:$0xff] %vm100, %v2814
  %2887 = vst.msk [vmem:[%s4 + $0x1a8] sm:$0xff] %vm100, %v2815
  %2888 = vst.msk [vmem:[%s4 + $0x1b0] sm:$0xff] %vm100, %v2816
  %2889 = vst.msk [vmem:[%s4 + $0x1b8] sm:$0xff] %vm100, %v2817
  %2890 = vst.msk [vmem:[%s4 + $0x1c0] sm:$0xff] %vm100, %v2818
  %2891 = vst.msk [vmem:[%s4 + $0x1c8] sm:$0xff] %vm100, %v2819
  %2892 = vst.msk [vmem:[%s4 + $0x1d0] sm:$0xff] %vm100, %v2820
  %2893 = vst.msk [vmem:[%s4 + $0x1d8] sm:$0xff] %vm100, %v2821
  %2894 = vst.msk [vmem:[%s4 + $0x1e0] sm:$0xff] %vm100, %v2822
  %2895 = vst.msk [vmem:[%s4 + $0x1e8] sm:$0xff] %vm100, %v2823
  %2896 = vst.msk [vmem:[%s4 + $0x1f0] sm:$0xff] %vm100, %v2824
  %2897 = vst.msk [vmem:[%s4 + $0x1f8] sm:$0xff] %vm100, %v2825
  %2898 = vst.msk [vmem:[%s4 + $0x200] sm:$0xff] %vm100, %v2826
  %2899 = vst.msk [vmem:[%s4 + $0x208] sm:$0xff] %vm100, %v2827
  %2900 = vst.msk [vmem:[%s4 + $0x210] sm:$0xff] %vm100, %v2828
  %2901 = vst.msk [vmem:[%s4 + $0x218] sm:$0xff] %vm100, %v2829
  %2902 = vst.msk [vmem:[%s4 + $0x220] sm:$0xff] %vm100, %v2830
  %2903 = vst.msk [vmem:[%s4 + $0x228] sm:$0xff] %vm100, %v2831
  %2904 = vst.msk [vmem:[%s4 + $0x230] sm:$0xff] %vm100, %v2832
  %2905 = vst.msk [vmem:[%s4 + $0x238] sm:$0xff] %vm100, %v2833
  // Predicated region
  $region18: #{_lambda_.12} parent=0 // pred_check
    _
  $region19: #{_lambda_.12} parent=0 // pred_check_branch
    %2907 = sbr.rel (0) target = $region21
  $region20: #{_lambda_.12} parent=0 // pred_region
    _
  $region21: #{_lambda_.12} parent=0 // pred_fallthru
    _
  // Predicated region
  $region22: #{_lambda_.12} parent=0 // pred_check
    _
  $region23: #{_lambda_.12} parent=0 // pred_check_branch
    %2909 = sbr.rel (0) target = $region25
  $region24: #{_lambda_.12} parent=0 // pred_region
    _
  $region25: #{_lambda_.12} parent=0 // pred_fallthru
    _

// kernel: _lambda_.18
$region0: #{_lambda_.18}
  #allocation0 [shape = 'u32[]', space=smem, size = 0x4, offset = 0x4, fixed_abs, tag = 'smem constant byte address 0x4 - core index']
  #allocation1 [shape = 'u32[144,128]{1,0:T(1,128)}', space=vmem, size = 0x12000, scoped, tag = 'internal scratch']
  %s0 = inlined_call_operand.vmem [shape: f32[576,30], index: 0, kind: input, shape index: {}]
  %s1 = inlined_call_operand.vmem [shape: f32[30,30], index: 1, kind: input, shape index: {}]
  %s2 = inlined_call_operand.vmem [shape: f32[1,30], index: 2, kind: input, shape index: {}]
  %s3 = inlined_call_operand.vmem [shape: f32[576,30], index: 3, kind: input, shape index: {}]
  %s4 = inlined_call_operand.vmem [shape: f32[576,30], index: 4, kind: output, shape index: {}]
  %s5 = sld [smem:[#allocation0]]
  $region26: #{_lambda_.18} parent=0
    _
  %s7 = ssub.s32 1, %s5
  %s8 = scalar_select 0, %s7, %s5
  // Predicated region
  $region2: #{_lambda_.18} parent=0 // pred_check
    _
  $region3: #{_lambda_.18} parent=0 // pred_check_branch
    %10 = sbr.rel (0) target = $region5
  $region4: #{_lambda_.18} parent=0 // pred_region
    _
  $region5: #{_lambda_.18} parent=0 // pred_fallthru
    _
  // Predicated region
  $region6: #{_lambda_.18} parent=0 // pred_check
    _
  $region7: #{_lambda_.18} parent=0 // pred_check_branch
    %12 = sbr.rel (0) target = $region9
  $region8: #{_lambda_.18} parent=0 // pred_region
    _
  $region9: #{_lambda_.18} parent=0 // pred_fallthru
    _
  // Predicated region
  $region10: #{_lambda_.18} parent=0 // pred_check
    _
  $region11: #{_lambda_.18} parent=0 // pred_check_branch
    %14 = sbr.rel (0) target = $region13
  $region12: #{_lambda_.18} parent=0 // pred_region
    _
  $region13: #{_lambda_.18} parent=0 // pred_fallthru
    _
  // Predicated region
  $region14: #{_lambda_.18} parent=0 // pred_check
    _
  $region15: #{_lambda_.18} parent=0 // pred_check_branch
    %16 = sbr.rel (0) target = $region17
  $region16: #{_lambda_.18} parent=0 // pred_region
    _
  $region17: #{_lambda_.18} parent=0 // pred_fallthru
    _
  %v17 = vld [vmem:[%s0] sm:$0xff]
  %v18 = vld [vmem:[%s0 + $0x8] sm:$0xff]
  %v19 = vld [vmem:[%s0 + $0x10] sm:$0xff]
  %v20 = vld [vmem:[%s0 + $0x18] sm:$0xff]
  %v21 = vld [vmem:[%s0 + $0x20] sm:$0xff]
  %v22 = vld [vmem:[%s0 + $0x28] sm:$0xff]
  %v23 = vld [vmem:[%s0 + $0x30] sm:$0xff]
  %v24 = vld [vmem:[%s0 + $0x38] sm:$0xff]
  %v25 = vld [vmem:[%s0 + $0x40] sm:$0xff]
  %v26 = vld [vmem:[%s0 + $0x48] sm:$0xff]
  %v27 = vld [vmem:[%s0 + $0x50] sm:$0xff]
  %v28 = vld [vmem:[%s0 + $0x58] sm:$0xff]
  %v29 = vld [vmem:[%s0 + $0x60] sm:$0xff]
  %v30 = vld [vmem:[%s0 + $0x68] sm:$0xff]
  %v31 = vld [vmem:[%s0 + $0x70] sm:$0xff]
  %v32 = vld [vmem:[%s0 + $0x78] sm:$0xff]
  %v33 = vld [vmem:[%s0 + $0x80] sm:$0xff]
  %v34 = vld [vmem:[%s0 + $0x88] sm:$0xff]
  %v35 = vld [vmem:[%s0 + $0x90] sm:$0xff]
  %v36 = vld [vmem:[%s0 + $0x98] sm:$0xff]
  %v37 = vld [vmem:[%s0 + $0xa0] sm:$0xff]
  %v38 = vld [vmem:[%s0 + $0xa8] sm:$0xff]
  %v39 = vld [vmem:[%s0 + $0xb0] sm:$0xff]
  %v40 = vld [vmem:[%s0 + $0xb8] sm:$0xff]
  %v41 = vld [vmem:[%s0 + $0xc0] sm:$0xff]
  %v42 = vld [vmem:[%s0 + $0xc8] sm:$0xff]
  %v43 = vld [vmem:[%s0 + $0xd0] sm:$0xff]
  %v44 = vld [vmem:[%s0 + $0xd8] sm:$0xff]
  %v45 = vld [vmem:[%s0 + $0xe0] sm:$0xff]
  %v46 = vld [vmem:[%s0 + $0xe8] sm:$0xff]
  %v47 = vld [vmem:[%s0 + $0xf0] sm:$0xff]
  %v48 = vld [vmem:[%s0 + $0xf8] sm:$0xff]
  %v49 = vld [vmem:[%s0 + $0x100] sm:$0xff]
  %v50 = vld [vmem:[%s0 + $0x108] sm:$0xff]
  %v51 = vld [vmem:[%s0 + $0x110] sm:$0xff]
  %v52 = vld [vmem:[%s0 + $0x118] sm:$0xff]
  %v53 = vld [vmem:[%s0 + $0x120] sm:$0xff]
  %v54 = vld [vmem:[%s0 + $0x128] sm:$0xff]
  %v55 = vld [vmem:[%s0 + $0x130] sm:$0xff]
  %v56 = vld [vmem:[%s0 + $0x138] sm:$0xff]
  %v57 = vld [vmem:[%s0 + $0x140] sm:$0xff]
  %v58 = vld [vmem:[%s0 + $0x148] sm:$0xff]
  %v59 = vld [vmem:[%s0 + $0x150] sm:$0xff]
  %v60 = vld [vmem:[%s0 + $0x158] sm:$0xff]
  %v61 = vld [vmem:[%s0 + $0x160] sm:$0xff]
  %v62 = vld [vmem:[%s0 + $0x168] sm:$0xff]
  %v63 = vld [vmem:[%s0 + $0x170] sm:$0xff]
  %v64 = vld [vmem:[%s0 + $0x178] sm:$0xff]
  %v65 = vld [vmem:[%s0 + $0x180] sm:$0xff]
  %v66 = vld [vmem:[%s0 + $0x188] sm:$0xff]
  %v67 = vld [vmem:[%s0 + $0x190] sm:$0xff]
  %v68 = vld [vmem:[%s0 + $0x198] sm:$0xff]
  %v69 = vld [vmem:[%s0 + $0x1a0] sm:$0xff]
  %v70 = vld [vmem:[%s0 + $0x1a8] sm:$0xff]
  %v71 = vld [vmem:[%s0 + $0x1b0] sm:$0xff]
  %v72 = vld [vmem:[%s0 + $0x1b8] sm:$0xff]
  %v73 = vld [vmem:[%s0 + $0x1c0] sm:$0xff]
  %v74 = vld [vmem:[%s0 + $0x1c8] sm:$0xff]
  %v75 = vld [vmem:[%s0 + $0x1d0] sm:$0xff]
  %v76 = vld [vmem:[%s0 + $0x1d8] sm:$0xff]
  %v77 = vld [vmem:[%s0 + $0x1e0] sm:$0xff]
  %v78 = vld [vmem:[%s0 + $0x1e8] sm:$0xff]
  %v79 = vld [vmem:[%s0 + $0x1f0] sm:$0xff]
  %v80 = vld [vmem:[%s0 + $0x1f8] sm:$0xff]
  %v81 = vld [vmem:[%s0 + $0x200] sm:$0xff]
  %v82 = vld [vmem:[%s0 + $0x208] sm:$0xff]
  %v83 = vld [vmem:[%s0 + $0x210] sm:$0xff]
  %v84 = vld [vmem:[%s0 + $0x218] sm:$0xff]
  %v85 = vld [vmem:[%s0 + $0x220] sm:$0xff]
  %v86 = vld [vmem:[%s0 + $0x228] sm:$0xff]
  %v87 = vld [vmem:[%s0 + $0x230] sm:$0xff]
  %v88 = vld [vmem:[%s0 + $0x238] sm:$0xff]
  %v89 = vld [vmem:[%s1] sm:$0xff]
  %v90 = vld [vmem:[%s1 + $0x8] sm:$0xff]
  %v91 = vld [vmem:[%s1 + $0x10] sm:$0xff]
  %v92 = vld [vmem:[%s1 + $0x18] sm:$0x3f]
  %v93 = vld [vmem:[%s2] sm:$0x1]
  %v95 = vlaneseq
  %v96 = vshrl.u32 %v95, 7
  %v97 = vsub.s32 0, %v96
  %v98 = vrot.slane %v93, %v97
  %vm100 = vcmask 244736
  %v102 = vsel %vm100, %v17, 0
  %v105 = vsel %vm100, %v18, 0
  %v108 = vsel %vm100, %v19, 0
  %v111 = vsel %vm100, %v20, 0
  %v114 = vsel %vm100, %v21, 0
  %v117 = vsel %vm100, %v22, 0
  %v120 = vsel %vm100, %v23, 0
  %v123 = vsel %vm100, %v24, 0
  %v126 = vsel %vm100, %v25, 0
  %v129 = vsel %vm100, %v26, 0
  %v132 = vsel %vm100, %v27, 0
  %v135 = vsel %vm100, %v28, 0
  %v138 = vsel %vm100, %v29, 0
  %v141 = vsel %vm100, %v30, 0
  %v144 = vsel %vm100, %v31, 0
  %v147 = vsel %vm100, %v32, 0
  %v150 = vsel %vm100, %v33, 0
  %v153 = vsel %vm100, %v34, 0
  %v156 = vsel %vm100, %v35, 0
  %v159 = vsel %vm100, %v36, 0
  %v162 = vsel %vm100, %v37, 0
  %v165 = vsel %vm100, %v38, 0
  %v168 = vsel %vm100, %v39, 0
  %v171 = vsel %vm100, %v40, 0
  %v174 = vsel %vm100, %v41, 0
  %v177 = vsel %vm100, %v42, 0
  %v180 = vsel %vm100, %v43, 0
  %v183 = vsel %vm100, %v44, 0
  %v186 = vsel %vm100, %v45, 0
  %v189 = vsel %vm100, %v46, 0
  %v192 = vsel %vm100, %v47, 0
  %v195 = vsel %vm100, %v48, 0
  %v198 = vsel %vm100, %v49, 0
  %v201 = vsel %vm100, %v50, 0
  %v204 = vsel %vm100, %v51, 0
  %v207 = vsel %vm100, %v52, 0
  %v210 = vsel %vm100, %v53, 0
  %v213 = vsel %vm100, %v54, 0
  %v216 = vsel %vm100, %v55, 0
  %v219 = vsel %vm100, %v56, 0
  %v222 = vsel %vm100, %v57, 0
  %v225 = vsel %vm100, %v58, 0
  %v228 = vsel %vm100, %v59, 0
  %v231 = vsel %vm100, %v60, 0
  %v234 = vsel %vm100, %v61, 0
  %v237 = vsel %vm100, %v62, 0
  %v240 = vsel %vm100, %v63, 0
  %v243 = vsel %vm100, %v64, 0
  %v246 = vsel %vm100, %v65, 0
  %v249 = vsel %vm100, %v66, 0
  %v252 = vsel %vm100, %v67, 0
  %v255 = vsel %vm100, %v68, 0
  %v258 = vsel %vm100, %v69, 0
  %v261 = vsel %vm100, %v70, 0
  %v264 = vsel %vm100, %v71, 0
  %v267 = vsel %vm100, %v72, 0
  %v270 = vsel %vm100, %v73, 0
  %v273 = vsel %vm100, %v74, 0
  %v276 = vsel %vm100, %v75, 0
  %v279 = vsel %vm100, %v76, 0
  %v282 = vsel %vm100, %v77, 0
  %v285 = vsel %vm100, %v78, 0
  %v288 = vsel %vm100, %v79, 0
  %v291 = vsel %vm100, %v80, 0
  %v294 = vsel %vm100, %v81, 0
  %v297 = vsel %vm100, %v82, 0
  %v300 = vsel %vm100, %v83, 0
  %v303 = vsel %vm100, %v84, 0
  %v306 = vsel %vm100, %v85, 0
  %v309 = vsel %vm100, %v86, 0
  %v312 = vsel %vm100, %v87, 0
  %v315 = vsel %vm100, %v88, 0
  %vm317 = vcmask 1045504
  %v319 = vsel %vm317, %v92, 0
  %321 = vmatprep.subr.mxu0 0.0
  %322 = vmatpush1.msra.mxu0 %v89
  %323 = vmatprep.subr.mxu0 0.0
  %324 = vmatpush1.msra.mxu0 %v90
  %325 = vmatprep.subr.mxu0 0.0
  %326 = vmatpush1.msra.mxu0 %v91
  %327 = vmatprep.subr.mxu0 0.0
  %328 = vmatpush1.msra.mxu0 %v319
  %329 = vmatprep.subr.mxu0 0.0
  %330 = vmatpush1.msra.mxu0 0.0
  %331 = vmatprep.subr.mxu0 0.0
  %332 = vmatpush1.msra.mxu0 0.0
  %333 = vmatprep.subr.mxu0 0.0
  %334 = vmatpush1.msra.mxu0 0.0
  %335 = vmatprep.subr.mxu0 0.0
  %336 = vmatpush1.msra.mxu0 0.0
  %337 = vmatprep.subr.mxu0 0.0
  %338 = vmatpush1.msra.mxu0 0.0
  %339 = vmatprep.subr.mxu0 0.0
  %340 = vmatpush1.msra.mxu0 0.0
  %341 = vmatprep.subr.mxu0 0.0
  %342 = vmatpush1.msra.mxu0 0.0
  %343 = vmatprep.subr.mxu0 0.0
  %344 = vmatpush1.msra.mxu0 0.0
  %345 = vmatprep.subr.mxu0 0.0
  %346 = vmatpush1.msra.mxu0 0.0
  %347 = vmatprep.subr.mxu0 0.0
  %348 = vmatpush1.msra.mxu0 0.0
  %349 = vmatprep.subr.mxu0 0.0
  %350 = vmatpush1.msra.mxu0 0.0
  %351 = vmatprep.subr.mxu0 0.0
  %352 = vmatpush1.msra.mxu0 0.0
  %353 = vmatprep.subr.mxu0 0.0
  %354 = vmatpush1.msra.mxu0 0.0
  %355 = vmatprep.subr.mxu0 0.0
  %356 = vmatpush1.msra.mxu0 0.0
  %357 = vmatprep.subr.mxu0 0.0
  %358 = vmatpush1.msra.mxu0 0.0
  %359 = vmatprep.subr.mxu0 0.0
  %360 = vmatpush1.msra.mxu0 0.0
  %361 = vmatprep.subr.mxu0 0.0
  %362 = vmatpush1.msra.mxu0 0.0
  %363 = vmatprep.subr.mxu0 0.0
  %364 = vmatpush1.msra.mxu0 0.0
  %365 = vmatprep.subr.mxu0 0.0
  %366 = vmatpush1.msra.mxu0 0.0
  %367 = vmatprep.subr.mxu0 0.0
  %368 = vmatpush1.msra.mxu0 0.0
  %369 = vmatprep.subr.mxu0 0.0
  %370 = vmatpush1.msra.mxu0 0.0
  %371 = vmatprep.subr.mxu0 0.0
  %372 = vmatpush1.msra.mxu0 0.0
  %373 = vmatprep.subr.mxu0 0.0
  %374 = vmatpush1.msra.mxu0 0.0
  %375 = vmatprep.subr.mxu0 0.0
  %376 = vmatpush1.msra.mxu0 0.0
  %377 = vmatprep.subr.mxu0 0.0
  %378 = vmatpush1.msra.mxu0 0.0
  %379 = vmatprep.subr.mxu0 0.0
  %380 = vmatpush1.msra.mxu0 0.0
  %381 = vmatprep.subr.mxu0 0.0
  %382 = vmatpush1.msra.mxu0 0.0
  %383 = vmatprep.subr.mxu0 0.0
  %384 = vmatpush1.msra.mxu0 0.0
  %385 = vmatprep.mubr.f32.mxu0 0.0
  %386 = vmatmul.mubr.f32.gmra.mrb[0].mxu0 %v102
  %v387 = vpop.f32.mrb[0].mxu0
  %v388 = vadd.f32 %v98, %v387
  %v389 = vpop.f32.mrb[0].mxu0
  %390 = vmatprep.mubr.f32.mxu0 0.0
  %391 = vmatmul.mubr.f32.gmra.mrb[0].mxu0 %v105
  %v392 = vpop.f32.mrb[0].mxu0
  %v393 = vadd.f32 %v98, %v392
  %v394 = vpop.f32.mrb[0].mxu0
  %395 = vmatprep.mubr.f32.mxu0 0.0
  %396 = vmatmul.mubr.f32.gmra.mrb[0].mxu0 %v108
  %v397 = vpop.f32.mrb[0].mxu0
  %v398 = vadd.f32 %v98, %v397
  %v399 = vpop.f32.mrb[0].mxu0
  %400 = vmatprep.mubr.f32.mxu0 0.0
  %401 = vmatmul.mubr.f32.gmra.mrb[0].mxu0 %v111
  %v402 = vpop.f32.mrb[0].mxu0
  %v403 = vadd.f32 %v98, %v402
  %v404 = vpop.f32.mrb[0].mxu0
  %405 = vmatprep.mubr.f32.mxu0 0.0
  %406 = vmatmul.mubr.f32.gmra.mrb[0].mxu0 %v114
  %v407 = vpop.f32.mrb[0].mxu0
  %v408 = vadd.f32 %v98, %v407
  %v409 = vpop.f32.mrb[0].mxu0
  %410 = vmatprep.mubr.f32.mxu0 0.0
  %411 = vmatmul.mubr.f32.gmra.mrb[0].mxu0 %v117
  %v412 = vpop.f32.mrb[0].mxu0
  %v413 = vadd.f32 %v98, %v412
  %v414 = vpop.f32.mrb[0].mxu0
  %415 = vmatprep.mubr.f32.mxu0 0.0
  %416 = vmatmul.mubr.f32.gmra.mrb[0].mxu0 %v120
  %v417 = vpop.f32.mrb[0].mxu0
  %v418 = vadd.f32 %v98, %v417
  %v419 = vpop.f32.mrb[0].mxu0
  %420 = vmatprep.mubr.f32.mxu0 0.0
  %421 = vmatmul.mubr.f32.gmra.mrb[0].mxu0 %v123
  %v422 = vpop.f32.mrb[0].mxu0
  %v423 = vadd.f32 %v98, %v422
  %v424 = vpop.f32.mrb[0].mxu0
  %425 = vmatprep.mubr.f32.mxu0 0.0
  %426 = vmatmul.mubr.f32.gmra.mrb[0].mxu0 %v126
  %v427 = vpop.f32.mrb[0].mxu0
  %v428 = vadd.f32 %v98, %v427
  %v429 = vpop.f32.mrb[0].mxu0
  %430 = vmatprep.mubr.f32.mxu0 0.0
  %431 = vmatmul.mubr.f32.gmra.mrb[0].mxu0 %v129
  %v432 = vpop.f32.mrb[0].mxu0
  %v433 = vadd.f32 %v98, %v432
  %v434 = vpop.f32.mrb[0].mxu0
  %435 = vmatprep.mubr.f32.mxu0 0.0
  %436 = vmatmul.mubr.f32.gmra.mrb[0].mxu0 %v132
  %v437 = vpop.f32.mrb[0].mxu0
  %v438 = vadd.f32 %v98, %v437
  %v439 = vpop.f32.mrb[0].mxu0
  %440 = vmatprep.mubr.f32.mxu0 0.0
  %441 = vmatmul.mubr.f32.gmra.mrb[0].mxu0 %v135
  %v442 = vpop.f32.mrb[0].mxu0
  %v443 = vadd.f32 %v98, %v442
  %v444 = vpop.f32.mrb[0].mxu0
  %445 = vmatprep.mubr.f32.mxu0 0.0
  %446 = vmatmul.mubr.f32.gmra.mrb[0].mxu0 %v138
  %v447 = vpop.f32.mrb[0].mxu0
  %v448 = vadd.f32 %v98, %v447
  %v449 = vpop.f32.mrb[0].mxu0
  %450 = vmatprep.mubr.f32.mxu0 0.0
  %451 = vmatmul.mubr.f32.gmra.mrb[0].mxu0 %v141
  %v452 = vpop.f32.mrb[0].mxu0
  %v453 = vadd.f32 %v98, %v452
  %v454 = vpop.f32.mrb[0].mxu0
  %455 = vmatprep.mubr.f32.mxu0 0.0
  %456 = vmatmul.mubr.f32.gmra.mrb[0].mxu0 %v144
  %v457 = vpop.f32.mrb[0].mxu0
  %v458 = vadd.f32 %v98, %v457
  %v459 = vpop.f32.mrb[0].mxu0
  %460 = vmatprep.mubr.f32.mxu0 0.0
  %461 = vmatmul.mubr.f32.gmra.mrb[0].mxu0 %v147
  %v462 = vpop.f32.mrb[0].mxu0
  %v463 = vadd.f32 %v98, %v462
  %v464 = vpop.f32.mrb[0].mxu0
  %465 = vmatprep.mubr.f32.mxu0 0.0
  %466 = vmatmul.mubr.f32.gmra.mrb[0].mxu0 %v150
  %v467 = vpop.f32.mrb[0].mxu0
  %v468 = vadd.f32 %v98, %v467
  %v469 = vpop.f32.mrb[0].mxu0
  %470 = vmatprep.mubr.f32.mxu0 0.0
  %471 = vmatmul.mubr.f32.gmra.mrb[0].mxu0 %v153
  %v472 = vpop.f32.mrb[0].mxu0
  %v473 = vadd.f32 %v98, %v472
  %v474 = vpop.f32.mrb[0].mxu0
  %475 = vmatprep.mubr.f32.mxu0 0.0
  %476 = vmatmul.mubr.f32.gmra.mrb[0].mxu0 %v156
  %v477 = vpop.f32.mrb[0].mxu0
  %v478 = vadd.f32 %v98, %v477
  %v479 = vpop.f32.mrb[0].mxu0
  %480 = vmatprep.mubr.f32.mxu0 0.0
  %481 = vmatmul.mubr.f32.gmra.mrb[0].mxu0 %v159
  %v482 = vpop.f32.mrb[0].mxu0
  %v483 = vadd.f32 %v98, %v482
  %v484 = vpop.f32.mrb[0].mxu0
  %485 = vmatprep.mubr.f32.mxu0 0.0
  %486 = vmatmul.mubr.f32.gmra.mrb[0].mxu0 %v162
  %v487 = vpop.f32.mrb[0].mxu0
  %v488 = vadd.f32 %v98, %v487
  %v489 = vpop.f32.mrb[0].mxu0
  %490 = vmatprep.mubr.f32.mxu0 0.0
  %491 = vmatmul.mubr.f32.gmra.mrb[0].mxu0 %v165
  %v492 = vpop.f32.mrb[0].mxu0
  %v493 = vadd.f32 %v98, %v492
  %v494 = vpop.f32.mrb[0].mxu0
  %495 = vmatprep.mubr.f32.mxu0 0.0
  %496 = vmatmul.mubr.f32.gmra.mrb[0].mxu0 %v168
  %v497 = vpop.f32.mrb[0].mxu0
  %v498 = vadd.f32 %v98, %v497
  %v499 = vpop.f32.mrb[0].mxu0
  %500 = vmatprep.mubr.f32.mxu0 0.0
  %501 = vmatmul.mubr.f32.gmra.mrb[0].mxu0 %v171
  %v502 = vpop.f32.mrb[0].mxu0
  %v503 = vadd.f32 %v98, %v502
  %v504 = vpop.f32.mrb[0].mxu0
  %505 = vmatprep.mubr.f32.mxu0 0.0
  %506 = vmatmul.mubr.f32.gmra.mrb[0].mxu0 %v174
  %v507 = vpop.f32.mrb[0].mxu0
  %v508 = vadd.f32 %v98, %v507
  %v509 = vpop.f32.mrb[0].mxu0
  %510 = vmatprep.mubr.f32.mxu0 0.0
  %511 = vmatmul.mubr.f32.gmra.mrb[0].mxu0 %v177
  %v512 = vpop.f32.mrb[0].mxu0
  %v513 = vadd.f32 %v98, %v512
  %v514 = vpop.f32.mrb[0].mxu0
  %515 = vmatprep.mubr.f32.mxu0 0.0
  %516 = vmatmul.mubr.f32.gmra.mrb[0].mxu0 %v180
  %v517 = vpop.f32.mrb[0].mxu0
  %v518 = vadd.f32 %v98, %v517
  %v519 = vpop.f32.mrb[0].mxu0
  %520 = vmatprep.mubr.f32.mxu0 0.0
  %521 = vmatmul.mubr.f32.gmra.mrb[0].mxu0 %v183
  %v522 = vpop.f32.mrb[0].mxu0
  %v523 = vadd.f32 %v98, %v522
  %v524 = vpop.f32.mrb[0].mxu0
  %525 = vmatprep.mubr.f32.mxu0 0.0
  %526 = vmatmul.mubr.f32.gmra.mrb[0].mxu0 %v186
  %v527 = vpop.f32.mrb[0].mxu0
  %v528 = vadd.f32 %v98, %v527
  %v529 = vpop.f32.mrb[0].mxu0
  %530 = vmatprep.mubr.f32.mxu0 0.0
  %531 = vmatmul.mubr.f32.gmra.mrb[0].mxu0 %v189
  %v532 = vpop.f32.mrb[0].mxu0
  %v533 = vadd.f32 %v98, %v532
  %v534 = vpop.f32.mrb[0].mxu0
  %535 = vmatprep.mubr.f32.mxu0 0.0
  %536 = vmatmul.mubr.f32.gmra.mrb[0].mxu0 %v192
  %v537 = vpop.f32.mrb[0].mxu0
  %v538 = vadd.f32 %v98, %v537
  %v539 = vpop.f32.mrb[0].mxu0
  %540 = vmatprep.mubr.f32.mxu0 0.0
  %541 = vmatmul.mubr.f32.gmra.mrb[0].mxu0 %v195
  %v542 = vpop.f32.mrb[0].mxu0
  %v543 = vadd.f32 %v98, %v542
  %v544 = vpop.f32.mrb[0].mxu0
  %545 = vmatprep.mubr.f32.mxu0 0.0
  %546 = vmatmul.mubr.f32.gmra.mrb[0].mxu0 %v198
  %v547 = vpop.f32.mrb[0].mxu0
  %v548 = vadd.f32 %v98, %v547
  %v549 = vpop.f32.mrb[0].mxu0
  %550 = vmatprep.mubr.f32.mxu0 0.0
  %551 = vmatmul.mubr.f32.gmra.mrb[0].mxu0 %v201
  %v552 = vpop.f32.mrb[0].mxu0
  %v553 = vadd.f32 %v98, %v552
  %v554 = vpop.f32.mrb[0].mxu0
  %555 = vmatprep.mubr.f32.mxu0 0.0
  %556 = vmatmul.mubr.f32.gmra.mrb[0].mxu0 %v204
  %v557 = vpop.f32.mrb[0].mxu0
  %v558 = vadd.f32 %v98, %v557
  %v559 = vpop.f32.mrb[0].mxu0
  %560 = vmatprep.mubr.f32.mxu0 0.0
  %561 = vmatmul.mubr.f32.gmra.mrb[0].mxu0 %v207
  %v562 = vpop.f32.mrb[0].mxu0
  %v563 = vadd.f32 %v98, %v562
  %v564 = vpop.f32.mrb[0].mxu0
  %565 = vmatprep.mubr.f32.mxu0 0.0
  %566 = vmatmul.mubr.f32.gmra.mrb[0].mxu0 %v210
  %v567 = vpop.f32.mrb[0].mxu0
  %v568 = vadd.f32 %v98, %v567
  %v569 = vpop.f32.mrb[0].mxu0
  %570 = vmatprep.mubr.f32.mxu0 0.0
  %571 = vmatmul.mubr.f32.gmra.mrb[0].mxu0 %v213
  %v572 = vpop.f32.mrb[0].mxu0
  %v573 = vadd.f32 %v98, %v572
  %v574 = vpop.f32.mrb[0].mxu0
  %575 = vmatprep.mubr.f32.mxu0 0.0
  %576 = vmatmul.mubr.f32.gmra.mrb[0].mxu0 %v216
  %v577 = vpop.f32.mrb[0].mxu0
  %v578 = vadd.f32 %v98, %v577
  %v579 = vpop.f32.mrb[0].mxu0
  %580 = vmatprep.mubr.f32.mxu0 0.0
  %581 = vmatmul.mubr.f32.gmra.mrb[0].mxu0 %v219
  %v582 = vpop.f32.mrb[0].mxu0
  %v583 = vadd.f32 %v98, %v582
  %v584 = vpop.f32.mrb[0].mxu0
  %585 = vmatprep.mubr.f32.mxu0 0.0
  %586 = vmatmul.mubr.f32.gmra.mrb[0].mxu0 %v222
  %v587 = vpop.f32.mrb[0].mxu0
  %v588 = vadd.f32 %v98, %v587
  %v589 = vpop.f32.mrb[0].mxu0
  %590 = vmatprep.mubr.f32.mxu0 0.0
  %591 = vmatmul.mubr.f32.gmra.mrb[0].mxu0 %v225
  %v592 = vpop.f32.mrb[0].mxu0
  %v593 = vadd.f32 %v98, %v592
  %v594 = vpop.f32.mrb[0].mxu0
  %595 = vmatprep.mubr.f32.mxu0 0.0
  %596 = vmatmul.mubr.f32.gmra.mrb[0].mxu0 %v228
  %v597 = vpop.f32.mrb[0].mxu0
  %v598 = vadd.f32 %v98, %v597
  %v599 = vpop.f32.mrb[0].mxu0
  %600 = vmatprep.mubr.f32.mxu0 0.0
  %601 = vmatmul.mubr.f32.gmra.mrb[0].mxu0 %v231
  %v602 = vpop.f32.mrb[0].mxu0
  %v603 = vadd.f32 %v98, %v602
  %v604 = vpop.f32.mrb[0].mxu0
  %605 = vmatprep.mubr.f32.mxu0 0.0
  %606 = vmatmul.mubr.f32.gmra.mrb[0].mxu0 %v234
  %v607 = vpop.f32.mrb[0].mxu0
  %v608 = vadd.f32 %v98, %v607
  %v609 = vpop.f32.mrb[0].mxu0
  %610 = vmatprep.mubr.f32.mxu0 0.0
  %611 = vmatmul.mubr.f32.gmra.mrb[0].mxu0 %v237
  %v612 = vpop.f32.mrb[0].mxu0
  %v613 = vadd.f32 %v98, %v612
  %v614 = vpop.f32.mrb[0].mxu0
  %615 = vmatprep.mubr.f32.mxu0 0.0
  %616 = vmatmul.mubr.f32.gmra.mrb[0].mxu0 %v240
  %v617 = vpop.f32.mrb[0].mxu0
  %v618 = vadd.f32 %v98, %v617
  %v619 = vpop.f32.mrb[0].mxu0
  %620 = vmatprep.mubr.f32.mxu0 0.0
  %621 = vmatmul.mubr.f32.gmra.mrb[0].mxu0 %v243
  %v622 = vpop.f32.mrb[0].mxu0
  %v623 = vadd.f32 %v98, %v622
  %v624 = vpop.f32.mrb[0].mxu0
  %625 = vmatprep.mubr.f32.mxu0 0.0
  %626 = vmatmul.mubr.f32.gmra.mrb[0].mxu0 %v246
  %v627 = vpop.f32.mrb[0].mxu0
  %v628 = vadd.f32 %v98, %v627
  %v629 = vpop.f32.mrb[0].mxu0
  %630 = vmatprep.mubr.f32.mxu0 0.0
  %631 = vmatmul.mubr.f32.gmra.mrb[0].mxu0 %v249
  %v632 = vpop.f32.mrb[0].mxu0
  %v633 = vadd.f32 %v98, %v632
  %v634 = vpop.f32.mrb[0].mxu0
  %635 = vmatprep.mubr.f32.mxu0 0.0
  %636 = vmatmul.mubr.f32.gmra.mrb[0].mxu0 %v252
  %v637 = vpop.f32.mrb[0].mxu0
  %v638 = vadd.f32 %v98, %v637
  %v639 = vpop.f32.mrb[0].mxu0
  %640 = vmatprep.mubr.f32.mxu0 0.0
  %641 = vmatmul.mubr.f32.gmra.mrb[0].mxu0 %v255
  %v642 = vpop.f32.mrb[0].mxu0
  %v643 = vadd.f32 %v98, %v642
  %v644 = vpop.f32.mrb[0].mxu0
  %645 = vmatprep.mubr.f32.mxu0 0.0
  %646 = vmatmul.mubr.f32.gmra.mrb[0].mxu0 %v258
  %v647 = vpop.f32.mrb[0].mxu0
  %v648 = vadd.f32 %v98, %v647
  %v649 = vpop.f32.mrb[0].mxu0
  %650 = vmatprep.mubr.f32.mxu0 0.0
  %651 = vmatmul.mubr.f32.gmra.mrb[0].mxu0 %v261
  %v652 = vpop.f32.mrb[0].mxu0
  %v653 = vadd.f32 %v98, %v652
  %v654 = vpop.f32.mrb[0].mxu0
  %655 = vmatprep.mubr.f32.mxu0 0.0
  %656 = vmatmul.mubr.f32.gmra.mrb[0].mxu0 %v264
  %v657 = vpop.f32.mrb[0].mxu0
  %v658 = vadd.f32 %v98, %v657
  %v659 = vpop.f32.mrb[0].mxu0
  %660 = vmatprep.mubr.f32.mxu0 0.0
  %661 = vmatmul.mubr.f32.gmra.mrb[0].mxu0 %v267
  %v662 = vpop.f32.mrb[0].mxu0
  %v663 = vadd.f32 %v98, %v662
  %v664 = vpop.f32.mrb[0].mxu0
  %665 = vmatprep.mubr.f32.mxu0 0.0
  %666 = vmatmul.mubr.f32.gmra.mrb[0].mxu0 %v270
  %v667 = vpop.f32.mrb[0].mxu0
  %v668 = vadd.f32 %v98, %v667
  %v669 = vpop.f32.mrb[0].mxu0
  %670 = vmatprep.mubr.f32.mxu0 0.0
  %671 = vmatmul.mubr.f32.gmra.mrb[0].mxu0 %v273
  %v672 = vpop.f32.mrb[0].mxu0
  %v673 = vadd.f32 %v98, %v672
  %v674 = vpop.f32.mrb[0].mxu0
  %675 = vmatprep.mubr.f32.mxu0 0.0
  %676 = vmatmul.mubr.f32.gmra.mrb[0].mxu0 %v276
  %v677 = vpop.f32.mrb[0].mxu0
  %v678 = vadd.f32 %v98, %v677
  %v679 = vpop.f32.mrb[0].mxu0
  %680 = vmatprep.mubr.f32.mxu0 0.0
  %681 = vmatmul.mubr.f32.gmra.mrb[0].mxu0 %v279
  %v682 = vpop.f32.mrb[0].mxu0
  %v683 = vadd.f32 %v98, %v682
  %v684 = vpop.f32.mrb[0].mxu0
  %685 = vmatprep.mubr.f32.mxu0 0.0
  %686 = vmatmul.mubr.f32.gmra.mrb[0].mxu0 %v282
  %v687 = vpop.f32.mrb[0].mxu0
  %v688 = vadd.f32 %v98, %v687
  %v689 = vpop.f32.mrb[0].mxu0
  %690 = vmatprep.mubr.f32.mxu0 0.0
  %691 = vmatmul.mubr.f32.gmra.mrb[0].mxu0 %v285
  %v692 = vpop.f32.mrb[0].mxu0
  %v693 = vadd.f32 %v98, %v692
  %v694 = vpop.f32.mrb[0].mxu0
  %695 = vmatprep.mubr.f32.mxu0 0.0
  %696 = vmatmul.mubr.f32.gmra.mrb[0].mxu0 %v288
  %v697 = vpop.f32.mrb[0].mxu0
  %v698 = vadd.f32 %v98, %v697
  %v699 = vpop.f32.mrb[0].mxu0
  %700 = vmatprep.mubr.f32.mxu0 0.0
  %701 = vmatmul.mubr.f32.gmra.mrb[0].mxu0 %v291
  %v702 = vpop.f32.mrb[0].mxu0
  %v703 = vadd.f32 %v98, %v702
  %v704 = vpop.f32.mrb[0].mxu0
  %705 = vmatprep.mubr.f32.mxu0 0.0
  %706 = vmatmul.mubr.f32.gmra.mrb[0].mxu0 %v294
  %v707 = vpop.f32.mrb[0].mxu0
  %v708 = vadd.f32 %v98, %v707
  %v709 = vpop.f32.mrb[0].mxu0
  %710 = vmatprep.mubr.f32.mxu0 0.0
  %711 = vmatmul.mubr.f32.gmra.mrb[0].mxu0 %v297
  %v712 = vpop.f32.mrb[0].mxu0
  %v713 = vadd.f32 %v98, %v712
  %v714 = vpop.f32.mrb[0].mxu0
  %715 = vmatprep.mubr.f32.mxu0 0.0
  %716 = vmatmul.mubr.f32.gmra.mrb[0].mxu0 %v300
  %v717 = vpop.f32.mrb[0].mxu0
  %v718 = vadd.f32 %v98, %v717
  %v719 = vpop.f32.mrb[0].mxu0
  %720 = vmatprep.mubr.f32.mxu0 0.0
  %721 = vmatmul.mubr.f32.gmra.mrb[0].mxu0 %v303
  %v722 = vpop.f32.mrb[0].mxu0
  %v723 = vadd.f32 %v98, %v722
  %v724 = vpop.f32.mrb[0].mxu0
  %725 = vmatprep.mubr.f32.mxu0 0.0
  %726 = vmatmul.mubr.f32.gmra.mrb[0].mxu0 %v306
  %v727 = vpop.f32.mrb[0].mxu0
  %v728 = vadd.f32 %v98, %v727
  %v729 = vpop.f32.mrb[0].mxu0
  %730 = vmatprep.mubr.f32.mxu0 0.0
  %731 = vmatmul.mubr.f32.gmra.mrb[0].mxu0 %v309
  %v732 = vpop.f32.mrb[0].mxu0
  %v733 = vadd.f32 %v98, %v732
  %v734 = vpop.f32.mrb[0].mxu0
  %735 = vmatprep.mubr.f32.mxu0 0.0
  %736 = vmatmul.mubr.f32.gmra.mrb[0].mxu0 %v312
  %v737 = vpop.f32.mrb[0].mxu0
  %v738 = vadd.f32 %v98, %v737
  %v739 = vpop.f32.mrb[0].mxu0
  %740 = vmatprep.mubr.f32.mxu0 0.0
  %741 = vmatmul.mubr.f32.gmra.mrb[0].mxu0 %v315
  %v742 = vpop.f32.mrb[0].mxu0
  %v743 = vadd.f32 %v98, %v742
  %v744 = vpop.f32.mrb[0].mxu0
  %745 = vdwg.mxu0
  %v746 = vld [vmem:[%s3] sm:$0xff]
  %v747 = vld [vmem:[%s3 + $0x8] sm:$0xff]
  %v748 = vld [vmem:[%s3 + $0x10] sm:$0xff]
  %v749 = vld [vmem:[%s3 + $0x18] sm:$0xff]
  %v750 = vld [vmem:[%s3 + $0x20] sm:$0xff]
  %v751 = vld [vmem:[%s3 + $0x28] sm:$0xff]
  %v752 = vld [vmem:[%s3 + $0x30] sm:$0xff]
  %v753 = vld [vmem:[%s3 + $0x38] sm:$0xff]
  %v754 = vld [vmem:[%s3 + $0x40] sm:$0xff]
  %v755 = vld [vmem:[%s3 + $0x48] sm:$0xff]
  %v756 = vld [vmem:[%s3 + $0x50] sm:$0xff]
  %v757 = vld [vmem:[%s3 + $0x58] sm:$0xff]
  %v758 = vld [vmem:[%s3 + $0x60] sm:$0xff]
  %v759 = vld [vmem:[%s3 + $0x68] sm:$0xff]
  %v760 = vld [vmem:[%s3 + $0x70] sm:$0xff]
  %v761 = vld [vmem:[%s3 + $0x78] sm:$0xff]
  %v762 = vld [vmem:[%s3 + $0x80] sm:$0xff]
  %v763 = vld [vmem:[%s3 + $0x88] sm:$0xff]
  %v764 = vld [vmem:[%s3 + $0x90] sm:$0xff]
  %v765 = vld [vmem:[%s3 + $0x98] sm:$0xff]
  %v766 = vld [vmem:[%s3 + $0xa0] sm:$0xff]
  %v767 = vld [vmem:[%s3 + $0xa8] sm:$0xff]
  %v768 = vld [vmem:[%s3 + $0xb0] sm:$0xff]
  %v769 = vld [vmem:[%s3 + $0xb8] sm:$0xff]
  %v770 = vld [vmem:[%s3 + $0xc0] sm:$0xff]
  %v771 = vld [vmem:[%s3 + $0xc8] sm:$0xff]
  %v772 = vld [vmem:[%s3 + $0xd0] sm:$0xff]
  %v773 = vld [vmem:[%s3 + $0xd8] sm:$0xff]
  %v774 = vld [vmem:[%s3 + $0xe0] sm:$0xff]
  %v775 = vld [vmem:[%s3 + $0xe8] sm:$0xff]
  %v776 = vld [vmem:[%s3 + $0xf0] sm:$0xff]
  %v777 = vld [vmem:[%s3 + $0xf8] sm:$0xff]
  %v778 = vld [vmem:[%s3 + $0x100] sm:$0xff]
  %v779 = vld [vmem:[%s3 + $0x108] sm:$0xff]
  %v780 = vld [vmem:[%s3 + $0x110] sm:$0xff]
  %v781 = vld [vmem:[%s3 + $0x118] sm:$0xff]
  %v782 = vld [vmem:[%s3 + $0x120] sm:$0xff]
  %v783 = vld [vmem:[%s3 + $0x128] sm:$0xff]
  %v784 = vld [vmem:[%s3 + $0x130] sm:$0xff]
  %v785 = vld [vmem:[%s3 + $0x138] sm:$0xff]
  %v786 = vld [vmem:[%s3 + $0x140] sm:$0xff]
  %v787 = vld [vmem:[%s3 + $0x148] sm:$0xff]
  %v788 = vld [vmem:[%s3 + $0x150] sm:$0xff]
  %v789 = vld [vmem:[%s3 + $0x158] sm:$0xff]
  %v790 = vld [vmem:[%s3 + $0x160] sm:$0xff]
  %v791 = vld [vmem:[%s3 + $0x168] sm:$0xff]
  %v792 = vld [vmem:[%s3 + $0x170] sm:$0xff]
  %v793 = vld [vmem:[%s3 + $0x178] sm:$0xff]
  %v794 = vld [vmem:[%s3 + $0x180] sm:$0xff]
  %v795 = vld [vmem:[%s3 + $0x188] sm:$0xff]
  %v796 = vld [vmem:[%s3 + $0x190] sm:$0xff]
  %v797 = vld [vmem:[%s3 + $0x198] sm:$0xff]
  %v798 = vld [vmem:[%s3 + $0x1a0] sm:$0xff]
  %v799 = vld [vmem:[%s3 + $0x1a8] sm:$0xff]
  %v800 = vld [vmem:[%s3 + $0x1b0] sm:$0xff]
  %v801 = vld [vmem:[%s3 + $0x1b8] sm:$0xff]
  %v802 = vld [vmem:[%s3 + $0x1c0] sm:$0xff]
  %v803 = vld [vmem:[%s3 + $0x1c8] sm:$0xff]
  %v804 = vld [vmem:[%s3 + $0x1d0] sm:$0xff]
  %v805 = vld [vmem:[%s3 + $0x1d8] sm:$0xff]
  %v806 = vld [vmem:[%s3 + $0x1e0] sm:$0xff]
  %v807 = vld [vmem:[%s3 + $0x1e8] sm:$0xff]
  %v808 = vld [vmem:[%s3 + $0x1f0] sm:$0xff]
  %v809 = vld [vmem:[%s3 + $0x1f8] sm:$0xff]
  %v810 = vld [vmem:[%s3 + $0x200] sm:$0xff]
  %v811 = vld [vmem:[%s3 + $0x208] sm:$0xff]
  %v812 = vld [vmem:[%s3 + $0x210] sm:$0xff]
  %v813 = vld [vmem:[%s3 + $0x218] sm:$0xff]
  %v814 = vld [vmem:[%s3 + $0x220] sm:$0xff]
  %v815 = vld [vmem:[%s3 + $0x228] sm:$0xff]
  %v816 = vld [vmem:[%s3 + $0x230] sm:$0xff]
  %v817 = vld [vmem:[%s3 + $0x238] sm:$0xff]
  %v818 = vadd.f32 %v388, %v746
  %v819 = vadd.f32 %v393, %v747
  %v820 = vadd.f32 %v398, %v748
  %v821 = vadd.f32 %v403, %v749
  %v822 = vadd.f32 %v408, %v750
  %v823 = vadd.f32 %v413, %v751
  %v824 = vadd.f32 %v418, %v752
  %v825 = vadd.f32 %v423, %v753
  %v826 = vadd.f32 %v428, %v754
  %v827 = vadd.f32 %v433, %v755
  %v828 = vadd.f32 %v438, %v756
  %v829 = vadd.f32 %v443, %v757
  %v830 = vadd.f32 %v448, %v758
  %v831 = vadd.f32 %v453, %v759
  %v832 = vadd.f32 %v458, %v760
  %v833 = vadd.f32 %v463, %v761
  %v834 = vadd.f32 %v468, %v762
  %v835 = vadd.f32 %v473, %v763
  %v836 = vadd.f32 %v478, %v764
  %v837 = vadd.f32 %v483, %v765
  %v838 = vadd.f32 %v488, %v766
  %v839 = vadd.f32 %v493, %v767
  %v840 = vadd.f32 %v498, %v768
  %v841 = vadd.f32 %v503, %v769
  %v842 = vadd.f32 %v508, %v770
  %v843 = vadd.f32 %v513, %v771
  %v844 = vadd.f32 %v518, %v772
  %v845 = vadd.f32 %v523, %v773
  %v846 = vadd.f32 %v528, %v774
  %v847 = vadd.f32 %v533, %v775
  %v848 = vadd.f32 %v538, %v776
  %v849 = vadd.f32 %v543, %v777
  %v850 = vadd.f32 %v548, %v778
  %v851 = vadd.f32 %v553, %v779
  %v852 = vadd.f32 %v558, %v780
  %v853 = vadd.f32 %v563, %v781
  %v854 = vadd.f32 %v568, %v782
  %v855 = vadd.f32 %v573, %v783
  %v856 = vadd.f32 %v578, %v784
  %v857 = vadd.f32 %v583, %v785
  %v858 = vadd.f32 %v588, %v786
  %v859 = vadd.f32 %v593, %v787
  %v860 = vadd.f32 %v598, %v788
  %v861 = vadd.f32 %v603, %v789
  %v862 = vadd.f32 %v608, %v790
  %v863 = vadd.f32 %v613, %v791
  %v864 = vadd.f32 %v618, %v792
  %v865 = vadd.f32 %v623, %v793
  %v866 = vadd.f32 %v628, %v794
  %v867 = vadd.f32 %v633, %v795
  %v868 = vadd.f32 %v638, %v796
  %v869 = vadd.f32 %v643, %v797
  %v870 = vadd.f32 %v648, %v798
  %v871 = vadd.f32 %v653, %v799
  %v872 = vadd.f32 %v658, %v800
  %v873 = vadd.f32 %v663, %v801
  %v874 = vadd.f32 %v668, %v802
  %v875 = vadd.f32 %v673, %v803
  %v876 = vadd.f32 %v678, %v804
  %v877 = vadd.f32 %v683, %v805
  %v878 = vadd.f32 %v688, %v806
  %v879 = vadd.f32 %v693, %v807
  %v880 = vadd.f32 %v698, %v808
  %v881 = vadd.f32 %v703, %v809
  %v882 = vadd.f32 %v708, %v810
  %v883 = vadd.f32 %v713, %v811
  %v884 = vadd.f32 %v718, %v812
  %v885 = vadd.f32 %v723, %v813
  %v886 = vadd.f32 %v728, %v814
  %v887 = vadd.f32 %v733, %v815
  %v888 = vadd.f32 %v738, %v816
  %v889 = vadd.f32 %v743, %v817
  %890 = vst.msk [vmem:[%s4] sm:$0xff] %vm100, %v818
  %891 = vst.msk [vmem:[%s4 + $0x8] sm:$0xff] %vm100, %v819
  %892 = vst.msk [vmem:[%s4 + $0x10] sm:$0xff] %vm100, %v820
  %893 = vst.msk [vmem:[%s4 + $0x18] sm:$0xff] %vm100, %v821
  %894 = vst.msk [vmem:[%s4 + $0x20] sm:$0xff] %vm100, %v822
  %895 = vst.msk [vmem:[%s4 + $0x28] sm:$0xff] %vm100, %v823
  %896 = vst.msk [vmem:[%s4 + $0x30] sm:$0xff] %vm100, %v824
  %897 = vst.msk [vmem:[%s4 + $0x38] sm:$0xff] %vm100, %v825
  %898 = vst.msk [vmem:[%s4 + $0x40] sm:$0xff] %vm100, %v826
  %899 = vst.msk [vmem:[%s4 + $0x48] sm:$0xff] %vm100, %v827
  %900 = vst.msk [vmem:[%s4 + $0x50] sm:$0xff] %vm100, %v828
  %901 = vst.msk [vmem:[%s4 + $0x58] sm:$0xff] %vm100, %v829
  %902 = vst.msk [vmem:[%s4 + $0x60] sm:$0xff] %vm100, %v830
  %903 = vst.msk [vmem:[%s4 + $0x68] sm:$0xff] %vm100, %v831
  %904 = vst.msk [vmem:[%s4 + $0x70] sm:$0xff] %vm100, %v832
  %905 = vst.msk [vmem:[%s4 + $0x78] sm:$0xff] %vm100, %v833
  %906 = vst.msk [vmem:[%s4 + $0x80] sm:$0xff] %vm100, %v834
  %907 = vst.msk [vmem:[%s4 + $0x88] sm:$0xff] %vm100, %v835
  %908 = vst.msk [vmem:[%s4 + $0x90] sm:$0xff] %vm100, %v836
  %909 = vst.msk [vmem:[%s4 + $0x98] sm:$0xff] %vm100, %v837
  %910 = vst.msk [vmem:[%s4 + $0xa0] sm:$0xff] %vm100, %v838
  %911 = vst.msk [vmem:[%s4 + $0xa8] sm:$0xff] %vm100, %v839
  %912 = vst.msk [vmem:[%s4 + $0xb0] sm:$0xff] %vm100, %v840
  %913 = vst.msk [vmem:[%s4 + $0xb8] sm:$0xff] %vm100, %v841
  %914 = vst.msk [vmem:[%s4 + $0xc0] sm:$0xff] %vm100, %v842
  %915 = vst.msk [vmem:[%s4 + $0xc8] sm:$0xff] %vm100, %v843
  %916 = vst.msk [vmem:[%s4 + $0xd0] sm:$0xff] %vm100, %v844
  %917 = vst.msk [vmem:[%s4 + $0xd8] sm:$0xff] %vm100, %v845
  %918 = vst.msk [vmem:[%s4 + $0xe0] sm:$0xff] %vm100, %v846
  %919 = vst.msk [vmem:[%s4 + $0xe8] sm:$0xff] %vm100, %v847
  %920 = vst.msk [vmem:[%s4 + $0xf0] sm:$0xff] %vm100, %v848
  %921 = vst.msk [vmem:[%s4 + $0xf8] sm:$0xff] %vm100, %v849
  %922 = vst.msk [vmem:[%s4 + $0x100] sm:$0xff] %vm100, %v850
  %923 = vst.msk [vmem:[%s4 + $0x108] sm:$0xff] %vm100, %v851
  %924 = vst.msk [vmem:[%s4 + $0x110] sm:$0xff] %vm100, %v852
  %925 = vst.msk [vmem:[%s4 + $0x118] sm:$0xff] %vm100, %v853
  %926 = vst.msk [vmem:[%s4 + $0x120] sm:$0xff] %vm100, %v854
  %927 = vst.msk [vmem:[%s4 + $0x128] sm:$0xff] %vm100, %v855
  %928 = vst.msk [vmem:[%s4 + $0x130] sm:$0xff] %vm100, %v856
  %929 = vst.msk [vmem:[%s4 + $0x138] sm:$0xff] %vm100, %v857
  %930 = vst.msk [vmem:[%s4 + $0x140] sm:$0xff] %vm100, %v858
  %931 = vst.msk [vmem:[%s4 + $0x148] sm:$0xff] %vm100, %v859
  %932 = vst.msk [vmem:[%s4 + $0x150] sm:$0xff] %vm100, %v860
  %933 = vst.msk [vmem:[%s4 + $0x158] sm:$0xff] %vm100, %v861
  %934 = vst.msk [vmem:[%s4 + $0x160] sm:$0xff] %vm100, %v862
  %935 = vst.msk [vmem:[%s4 + $0x168] sm:$0xff] %vm100, %v863
  %936 = vst.msk [vmem:[%s4 + $0x170] sm:$0xff] %vm100, %v864
  %937 = vst.msk [vmem:[%s4 + $0x178] sm:$0xff] %vm100, %v865
  %938 = vst.msk [vmem:[%s4 + $0x180] sm:$0xff] %vm100, %v866
  %939 = vst.msk [vmem:[%s4 + $0x188] sm:$0xff] %vm100, %v867
  %940 = vst.msk [vmem:[%s4 + $0x190] sm:$0xff] %vm100, %v868
  %941 = vst.msk [vmem:[%s4 + $0x198] sm:$0xff] %vm100, %v869
  %942 = vst.msk [vmem:[%s4 + $0x1a0] sm:$0xff] %vm100, %v870
  %943 = vst.msk [vmem:[%s4 + $0x1a8] sm:$0xff] %vm100, %v871
  %944 = vst.msk [vmem:[%s4 + $0x1b0] sm:$0xff] %vm100, %v872
  %945 = vst.msk [vmem:[%s4 + $0x1b8] sm:$0xff] %vm100, %v873
  %946 = vst.msk [vmem:[%s4 + $0x1c0] sm:$0xff] %vm100, %v874
  %947 = vst.msk [vmem:[%s4 + $0x1c8] sm:$0xff] %vm100, %v875
  %948 = vst.msk [vmem:[%s4 + $0x1d0] sm:$0xff] %vm100, %v876
  %949 = vst.msk [vmem:[%s4 + $0x1d8] sm:$0xff] %vm100, %v877
  %950 = vst.msk [vmem:[%s4 + $0x1e0] sm:$0xff] %vm100, %v878
  %951 = vst.msk [vmem:[%s4 + $0x1e8] sm:$0xff] %vm100, %v879
  %952 = vst.msk [vmem:[%s4 + $0x1f0] sm:$0xff] %vm100, %v880
  %953 = vst.msk [vmem:[%s4 + $0x1f8] sm:$0xff] %vm100, %v881
  %954 = vst.msk [vmem:[%s4 + $0x200] sm:$0xff] %vm100, %v882
  %955 = vst.msk [vmem:[%s4 + $0x208] sm:$0xff] %vm100, %v883
  %956 = vst.msk [vmem:[%s4 + $0x210] sm:$0xff] %vm100, %v884
  %957 = vst.msk [vmem:[%s4 + $0x218] sm:$0xff] %vm100, %v885
  %958 = vst.msk [vmem:[%s4 + $0x220] sm:$0xff] %vm100, %v886
  %959 = vst.msk [vmem:[%s4 + $0x228] sm:$0xff] %vm100, %v887
  %960 = vst.msk [vmem:[%s4 + $0x230] sm:$0xff] %vm100, %v888
  %961 = vst.msk [vmem:[%s4 + $0x238] sm:$0xff] %vm100, %v889
  // Predicated region
  $region18: #{_lambda_.18} parent=0 // pred_check
    _
  $region19: #{_lambda_.18} parent=0 // pred_check_branch
    %963 = sbr.rel (0) target = $region21
  $region20: #{_lambda_.18} parent=0 // pred_region
    _
  $region21: #{_lambda_.18} parent=0 // pred_fallthru
    _
  // Predicated region
  $region22: #{_lambda_.18} parent=0 // pred_check
    _
  $region23: #{_lambda_.18} parent=0 // pred_check_branch
    %965 = sbr.rel (0) target = $region25
  $region24: #{_lambda_.18} parent=0 // pred_region
    _
  $region25: #{_lambda_.18} parent=0 // pred_fallthru
    _

// kernel: _lambda_.19
$region0: #{_lambda_.19}
  #allocation0 [shape = 'u32[]', space=smem, size = 0x4, offset = 0x4, fixed_abs, tag = 'smem constant byte address 0x4 - core index']
  #allocation1 [shape = 'u32[144,128]{1,0:T(1,128)}', space=vmem, size = 0x12000, scoped, tag = 'internal scratch']
  #allocation2 [shape = 'f32[1,1]{1,0:T(1,128)S(1)}', space=vmem, size = 0x200, scoped, tag = 'scoped memory for _lambda_.19']
  %s0 = inlined_call_operand.vmem [shape: f32[512,30], index: 0, kind: input, shape index: {}]
  %s1 = inlined_call_operand.vmem [shape: f32[30,128], index: 1, kind: input, shape index: {}]
  %s2 = inlined_call_operand.vmem [shape: f32[1,128], index: 2, kind: input, shape index: {}]
  %s3 = inlined_call_operand.vmem [shape: f32[128,1], index: 3, kind: input, shape index: {}]
  %s4 = inlined_call_operand.<no memory space> [shape: f32[1,1], index: 4, kind: input, shape index: {}]
  %s5 = inlined_call_operand.vmem [shape: f32[512,1], index: 5, kind: output, shape index: {}]
  %s6 = sld [smem:[#allocation0]]
  $region30: #{_lambda_.19} parent=0
    _
  %s8 = ssub.s32 1, %s6
  %s9 = scalar_select 0, %s8, %s6
  %v10 = vstv %s4
  %11 = vst [vmem:[#allocation2] sm:$0x1] %v10
  // Predicated region
  $region2: #{_lambda_.19} parent=0 // pred_check
    _
  $region3: #{_lambda_.19} parent=0 // pred_check_branch
    %13 = sbr.rel (0) target = $region5
  $region4: #{_lambda_.19} parent=0 // pred_region
    _
  $region5: #{_lambda_.19} parent=0 // pred_fallthru
    _
  // Predicated region
  $region6: #{_lambda_.19} parent=0 // pred_check
    _
  $region7: #{_lambda_.19} parent=0 // pred_check_branch
    %15 = sbr.rel (0) target = $region9
  $region8: #{_lambda_.19} parent=0 // pred_region
    _
  $region9: #{_lambda_.19} parent=0 // pred_fallthru
    _
  // Predicated region
  $region10: #{_lambda_.19} parent=0 // pred_check
    _
  $region11: #{_lambda_.19} parent=0 // pred_check_branch
    %17 = sbr.rel (0) target = $region13
  $region12: #{_lambda_.19} parent=0 // pred_region
    _
  $region13: #{_lambda_.19} parent=0 // pred_fallthru
    _
  // Predicated region
  $region14: #{_lambda_.19} parent=0 // pred_check
    _
  $region15: #{_lambda_.19} parent=0 // pred_check_branch
    %19 = sbr.rel (0) target = $region17
  $region16: #{_lambda_.19} parent=0 // pred_region
    _
  $region17: #{_lambda_.19} parent=0 // pred_fallthru
    _
  // Predicated region
  $region18: #{_lambda_.19} parent=0 // pred_check
    _
  $region19: #{_lambda_.19} parent=0 // pred_check_branch
    %21 = sbr.rel (0) target = $region21
  $region20: #{_lambda_.19} parent=0 // pred_region
    _
  $region21: #{_lambda_.19} parent=0 // pred_fallthru
    _
  %v22 = vld [vmem:[%s0] sm:$0xff]
  %v23 = vld [vmem:[%s0 + $0x8] sm:$0xff]
  %v24 = vld [vmem:[%s0 + $0x10] sm:$0xff]
  %v25 = vld [vmem:[%s0 + $0x18] sm:$0xff]
  %v26 = vld [vmem:[%s0 + $0x20] sm:$0xff]
  %v27 = vld [vmem:[%s0 + $0x28] sm:$0xff]
  %v28 = vld [vmem:[%s0 + $0x30] sm:$0xff]
  %v29 = vld [vmem:[%s0 + $0x38] sm:$0xff]
  %v30 = vld [vmem:[%s0 + $0x40] sm:$0xff]
  %v31 = vld [vmem:[%s0 + $0x48] sm:$0xff]
  %v32 = vld [vmem:[%s0 + $0x50] sm:$0xff]
  %v33 = vld [vmem:[%s0 + $0x58] sm:$0xff]
  %v34 = vld [vmem:[%s0 + $0x60] sm:$0xff]
  %v35 = vld [vmem:[%s0 + $0x68] sm:$0xff]
  %v36 = vld [vmem:[%s0 + $0x70] sm:$0xff]
  %v37 = vld [vmem:[%s0 + $0x78] sm:$0xff]
  %v38 = vld [vmem:[%s0 + $0x80] sm:$0xff]
  %v39 = vld [vmem:[%s0 + $0x88] sm:$0xff]
  %v40 = vld [vmem:[%s0 + $0x90] sm:$0xff]
  %v41 = vld [vmem:[%s0 + $0x98] sm:$0xff]
  %v42 = vld [vmem:[%s0 + $0xa0] sm:$0xff]
  %v43 = vld [vmem:[%s0 + $0xa8] sm:$0xff]
  %v44 = vld [vmem:[%s0 + $0xb0] sm:$0xff]
  %v45 = vld [vmem:[%s0 + $0xb8] sm:$0xff]
  %v46 = vld [vmem:[%s0 + $0xc0] sm:$0xff]
  %v47 = vld [vmem:[%s0 + $0xc8] sm:$0xff]
  %v48 = vld [vmem:[%s0 + $0xd0] sm:$0xff]
  %v49 = vld [vmem:[%s0 + $0xd8] sm:$0xff]
  %v50 = vld [vmem:[%s0 + $0xe0] sm:$0xff]
  %v51 = vld [vmem:[%s0 + $0xe8] sm:$0xff]
  %v52 = vld [vmem:[%s0 + $0xf0] sm:$0xff]
  %v53 = vld [vmem:[%s0 + $0xf8] sm:$0xff]
  %v54 = vld [vmem:[%s0 + $0x100] sm:$0xff]
  %v55 = vld [vmem:[%s0 + $0x108] sm:$0xff]
  %v56 = vld [vmem:[%s0 + $0x110] sm:$0xff]
  %v57 = vld [vmem:[%s0 + $0x118] sm:$0xff]
  %v58 = vld [vmem:[%s0 + $0x120] sm:$0xff]
  %v59 = vld [vmem:[%s0 + $0x128] sm:$0xff]
  %v60 = vld [vmem:[%s0 + $0x130] sm:$0xff]
  %v61 = vld [vmem:[%s0 + $0x138] sm:$0xff]
  %v62 = vld [vmem:[%s0 + $0x140] sm:$0xff]
  %v63 = vld [vmem:[%s0 + $0x148] sm:$0xff]
  %v64 = vld [vmem:[%s0 + $0x150] sm:$0xff]
  %v65 = vld [vmem:[%s0 + $0x158] sm:$0xff]
  %v66 = vld [vmem:[%s0 + $0x160] sm:$0xff]
  %v67 = vld [vmem:[%s0 + $0x168] sm:$0xff]
  %v68 = vld [vmem:[%s0 + $0x170] sm:$0xff]
  %v69 = vld [vmem:[%s0 + $0x178] sm:$0xff]
  %v70 = vld [vmem:[%s0 + $0x180] sm:$0xff]
  %v71 = vld [vmem:[%s0 + $0x188] sm:$0xff]
  %v72 = vld [vmem:[%s0 + $0x190] sm:$0xff]
  %v73 = vld [vmem:[%s0 + $0x198] sm:$0xff]
  %v74 = vld [vmem:[%s0 + $0x1a0] sm:$0xff]
  %v75 = vld [vmem:[%s0 + $0x1a8] sm:$0xff]
  %v76 = vld [vmem:[%s0 + $0x1b0] sm:$0xff]
  %v77 = vld [vmem:[%s0 + $0x1b8] sm:$0xff]
  %v78 = vld [vmem:[%s0 + $0x1c0] sm:$0xff]
  %v79 = vld [vmem:[%s0 + $0x1c8] sm:$0xff]
  %v80 = vld [vmem:[%s0 + $0x1d0] sm:$0xff]
  %v81 = vld [vmem:[%s0 + $0x1d8] sm:$0xff]
  %v82 = vld [vmem:[%s0 + $0x1e0] sm:$0xff]
  %v83 = vld [vmem:[%s0 + $0x1e8] sm:$0xff]
  %v84 = vld [vmem:[%s0 + $0x1f0] sm:$0xff]
  %v85 = vld [vmem:[%s0 + $0x1f8] sm:$0xff]
  %v86 = vld [vmem:[%s1] sm:$0xff]
  %v87 = vld [vmem:[%s1 + $0x8] sm:$0xff]
  %v88 = vld [vmem:[%s1 + $0x10] sm:$0xff]
  %v89 = vld [vmem:[%s1 + $0x18] sm:$0x3f]
  %v90 = vld [vmem:[%s2] sm:$0x1]
  %v92 = vlaneseq
  %v93 = vshrl.u32 %v92, 7
  %v94 = vsub.s32 0, %v93
  %v95 = vrot.slane %v90, %v94
  %vm97 = vcmask 244736
  %v99 = vsel %vm97, %v22, 0
  %v102 = vsel %vm97, %v23, 0
  %v105 = vsel %vm97, %v24, 0
  %v108 = vsel %vm97, %v25, 0
  %v111 = vsel %vm97, %v26, 0
  %v114 = vsel %vm97, %v27, 0
  %v117 = vsel %vm97, %v28, 0
  %v120 = vsel %vm97, %v29, 0
  %v123 = vsel %vm97, %v30, 0
  %v126 = vsel %vm97, %v31, 0
  %v129 = vsel %vm97, %v32, 0
  %v132 = vsel %vm97, %v33, 0
  %v135 = vsel %vm97, %v34, 0
  %v138 = vsel %vm97, %v35, 0
  %v141 = vsel %vm97, %v36, 0
  %v144 = vsel %vm97, %v37, 0
  %v147 = vsel %vm97, %v38, 0
  %v150 = vsel %vm97, %v39, 0
  %v153 = vsel %vm97, %v40, 0
  %v156 = vsel %vm97, %v41, 0
  %v159 = vsel %vm97, %v42, 0
  %v162 = vsel %vm97, %v43, 0
  %v165 = vsel %vm97, %v44, 0
  %v168 = vsel %vm97, %v45, 0
  %v171 = vsel %vm97, %v46, 0
  %v174 = vsel %vm97, %v47, 0
  %v177 = vsel %vm97, %v48, 0
  %v180 = vsel %vm97, %v49, 0
  %v183 = vsel %vm97, %v50, 0
  %v186 = vsel %vm97, %v51, 0
  %v189 = vsel %vm97, %v52, 0
  %v192 = vsel %vm97, %v53, 0
  %v195 = vsel %vm97, %v54, 0
  %v198 = vsel %vm97, %v55, 0
  %v201 = vsel %vm97, %v56, 0
  %v204 = vsel %vm97, %v57, 0
  %v207 = vsel %vm97, %v58, 0
  %v210 = vsel %vm97, %v59, 0
  %v213 = vsel %vm97, %v60, 0
  %v216 = vsel %vm97, %v61, 0
  %v219 = vsel %vm97, %v62, 0
  %v222 = vsel %vm97, %v63, 0
  %v225 = vsel %vm97, %v64, 0
  %v228 = vsel %vm97, %v65, 0
  %v231 = vsel %vm97, %v66, 0
  %v234 = vsel %vm97, %v67, 0
  %v237 = vsel %vm97, %v68, 0
  %v240 = vsel %vm97, %v69, 0
  %v243 = vsel %vm97, %v70, 0
  %v246 = vsel %vm97, %v71, 0
  %v249 = vsel %vm97, %v72, 0
  %v252 = vsel %vm97, %v73, 0
  %v255 = vsel %vm97, %v74, 0
  %v258 = vsel %vm97, %v75, 0
  %v261 = vsel %vm97, %v76, 0
  %v264 = vsel %vm97, %v77, 0
  %v267 = vsel %vm97, %v78, 0
  %v270 = vsel %vm97, %v79, 0
  %v273 = vsel %vm97, %v80, 0
  %v276 = vsel %vm97, %v81, 0
  %v279 = vsel %vm97, %v82, 0
  %v282 = vsel %vm97, %v83, 0
  %v285 = vsel %vm97, %v84, 0
  %v288 = vsel %vm97, %v85, 0
  %vm290 = vcmask 1045504
  %v292 = vsel %vm290, %v89, 0
  %294 = vmatprep.subr.mxu0 0.0
  %295 = vmatpush1.msra.mxu0 %v86
  %296 = vmatprep.subr.mxu0 0.0
  %297 = vmatpush1.msra.mxu0 %v87
  %298 = vmatprep.subr.mxu0 0.0
  %299 = vmatpush1.msra.mxu0 %v88
  %300 = vmatprep.subr.mxu0 0.0
  %301 = vmatpush1.msra.mxu0 %v292
  %302 = vmatprep.subr.mxu0 0.0
  %303 = vmatpush1.msra.mxu0 0.0
  %304 = vmatprep.subr.mxu0 0.0
  %305 = vmatpush1.msra.mxu0 0.0
  %306 = vmatprep.subr.mxu0 0.0
  %307 = vmatpush1.msra.mxu0 0.0
  %308 = vmatprep.subr.mxu0 0.0
  %309 = vmatpush1.msra.mxu0 0.0
  %310 = vmatprep.subr.mxu0 0.0
  %311 = vmatpush1.msra.mxu0 0.0
  %312 = vmatprep.subr.mxu0 0.0
  %313 = vmatpush1.msra.mxu0 0.0
  %314 = vmatprep.subr.mxu0 0.0
  %315 = vmatpush1.msra.mxu0 0.0
  %316 = vmatprep.subr.mxu0 0.0
  %317 = vmatpush1.msra.mxu0 0.0
  %318 = vmatprep.subr.mxu0 0.0
  %319 = vmatpush1.msra.mxu0 0.0
  %320 = vmatprep.subr.mxu0 0.0
  %321 = vmatpush1.msra.mxu0 0.0
  %322 = vmatprep.subr.mxu0 0.0
  %323 = vmatpush1.msra.mxu0 0.0
  %324 = vmatprep.subr.mxu0 0.0
  %325 = vmatpush1.msra.mxu0 0.0
  %326 = vmatprep.subr.mxu0 0.0
  %327 = vmatpush1.msra.mxu0 0.0
  %328 = vmatprep.subr.mxu0 0.0
  %329 = vmatpush1.msra.mxu0 0.0
  %330 = vmatprep.subr.mxu0 0.0
  %331 = vmatpush1.msra.mxu0 0.0
  %332 = vmatprep.subr.mxu0 0.0
  %333 = vmatpush1.msra.mxu0 0.0
  %334 = vmatprep.subr.mxu0 0.0
  %335 = vmatpush1.msra.mxu0 0.0
  %336 = vmatprep.subr.mxu0 0.0
  %337 = vmatpush1.msra.mxu0 0.0
  %338 = vmatprep.subr.mxu0 0.0
  %339 = vmatpush1.msra.mxu0 0.0
  %340 = vmatprep.subr.mxu0 0.0
  %341 = vmatpush1.msra.mxu0 0.0
  %342 = vmatprep.subr.mxu0 0.0
  %343 = vmatpush1.msra.mxu0 0.0
  %344 = vmatprep.subr.mxu0 0.0
  %345 = vmatpush1.msra.mxu0 0.0
  %346 = vmatprep.subr.mxu0 0.0
  %347 = vmatpush1.msra.mxu0 0.0
  %348 = vmatprep.subr.mxu0 0.0
  %349 = vmatpush1.msra.mxu0 0.0
  %350 = vmatprep.subr.mxu0 0.0
  %351 = vmatpush1.msra.mxu0 0.0
  %352 = vmatprep.subr.mxu0 0.0
  %353 = vmatpush1.msra.mxu0 0.0
  %354 = vmatprep.subr.mxu0 0.0
  %355 = vmatpush1.msra.mxu0 0.0
  %356 = vmatprep.subr.mxu0 0.0
  %357 = vmatpush1.msra.mxu0 0.0
  %358 = vmatprep.mubr.f32.mxu0 0.0
  %359 = vmatmul.mubr.f32.gmra.mrb[0].mxu0 %v99
  %v360 = vpop.f32.mrb[0].mxu0
  %v361 = vadd.f32 %v95, %v360
  %v362 = vpop.f32.mrb[0].mxu0
  %363 = vmatprep.mubr.f32.mxu0 0.0
  %364 = vmatmul.mubr.f32.gmra.mrb[0].mxu0 %v102
  %v365 = vpop.f32.mrb[0].mxu0
  %v366 = vadd.f32 %v95, %v365
  %v367 = vpop.f32.mrb[0].mxu0
  %368 = vmatprep.mubr.f32.mxu0 0.0
  %369 = vmatmul.mubr.f32.gmra.mrb[0].mxu0 %v105
  %v370 = vpop.f32.mrb[0].mxu0
  %v371 = vadd.f32 %v95, %v370
  %v372 = vpop.f32.mrb[0].mxu0
  %373 = vmatprep.mubr.f32.mxu0 0.0
  %374 = vmatmul.mubr.f32.gmra.mrb[0].mxu0 %v108
  %v375 = vpop.f32.mrb[0].mxu0
  %v376 = vadd.f32 %v95, %v375
  %v377 = vpop.f32.mrb[0].mxu0
  %378 = vmatprep.mubr.f32.mxu0 0.0
  %379 = vmatmul.mubr.f32.gmra.mrb[0].mxu0 %v111
  %v380 = vpop.f32.mrb[0].mxu0
  %v381 = vadd.f32 %v95, %v380
  %v382 = vpop.f32.mrb[0].mxu0
  %383 = vmatprep.mubr.f32.mxu0 0.0
  %384 = vmatmul.mubr.f32.gmra.mrb[0].mxu0 %v114
  %v385 = vpop.f32.mrb[0].mxu0
  %v386 = vadd.f32 %v95, %v385
  %v387 = vpop.f32.mrb[0].mxu0
  %388 = vmatprep.mubr.f32.mxu0 0.0
  %389 = vmatmul.mubr.f32.gmra.mrb[0].mxu0 %v117
  %v390 = vpop.f32.mrb[0].mxu0
  %v391 = vadd.f32 %v95, %v390
  %v392 = vpop.f32.mrb[0].mxu0
  %393 = vmatprep.mubr.f32.mxu0 0.0
  %394 = vmatmul.mubr.f32.gmra.mrb[0].mxu0 %v120
  %v395 = vpop.f32.mrb[0].mxu0
  %v396 = vadd.f32 %v95, %v395
  %v397 = vpop.f32.mrb[0].mxu0
  %398 = vmatprep.mubr.f32.mxu0 0.0
  %399 = vmatmul.mubr.f32.gmra.mrb[0].mxu0 %v123
  %v400 = vpop.f32.mrb[0].mxu0
  %v401 = vadd.f32 %v95, %v400
  %v402 = vpop.f32.mrb[0].mxu0
  %403 = vmatprep.mubr.f32.mxu0 0.0
  %404 = vmatmul.mubr.f32.gmra.mrb[0].mxu0 %v126
  %v405 = vpop.f32.mrb[0].mxu0
  %v406 = vadd.f32 %v95, %v405
  %v407 = vpop.f32.mrb[0].mxu0
  %408 = vmatprep.mubr.f32.mxu0 0.0
  %409 = vmatmul.mubr.f32.gmra.mrb[0].mxu0 %v129
  %v410 = vpop.f32.mrb[0].mxu0
  %v411 = vadd.f32 %v95, %v410
  %v412 = vpop.f32.mrb[0].mxu0
  %413 = vmatprep.mubr.f32.mxu0 0.0
  %414 = vmatmul.mubr.f32.gmra.mrb[0].mxu0 %v132
  %v415 = vpop.f32.mrb[0].mxu0
  %v416 = vadd.f32 %v95, %v415
  %v417 = vpop.f32.mrb[0].mxu0
  %418 = vmatprep.mubr.f32.mxu0 0.0
  %419 = vmatmul.mubr.f32.gmra.mrb[0].mxu0 %v135
  %v420 = vpop.f32.mrb[0].mxu0
  %v421 = vadd.f32 %v95, %v420
  %v422 = vpop.f32.mrb[0].mxu0
  %423 = vmatprep.mubr.f32.mxu0 0.0
  %424 = vmatmul.mubr.f32.gmra.mrb[0].mxu0 %v138
  %v425 = vpop.f32.mrb[0].mxu0
  %v426 = vadd.f32 %v95, %v425
  %v427 = vpop.f32.mrb[0].mxu0
  %428 = vmatprep.mubr.f32.mxu0 0.0
  %429 = vmatmul.mubr.f32.gmra.mrb[0].mxu0 %v141
  %v430 = vpop.f32.mrb[0].mxu0
  %v431 = vadd.f32 %v95, %v430
  %v432 = vpop.f32.mrb[0].mxu0
  %433 = vmatprep.mubr.f32.mxu0 0.0
  %434 = vmatmul.mubr.f32.gmra.mrb[0].mxu0 %v144
  %v435 = vpop.f32.mrb[0].mxu0
  %v436 = vadd.f32 %v95, %v435
  %v437 = vpop.f32.mrb[0].mxu0
  %438 = vmatprep.mubr.f32.mxu0 0.0
  %439 = vmatmul.mubr.f32.gmra.mrb[0].mxu0 %v147
  %v440 = vpop.f32.mrb[0].mxu0
  %v441 = vadd.f32 %v95, %v440
  %v442 = vpop.f32.mrb[0].mxu0
  %443 = vmatprep.mubr.f32.mxu0 0.0
  %444 = vmatmul.mubr.f32.gmra.mrb[0].mxu0 %v150
  %v445 = vpop.f32.mrb[0].mxu0
  %v446 = vadd.f32 %v95, %v445
  %v447 = vpop.f32.mrb[0].mxu0
  %448 = vmatprep.mubr.f32.mxu0 0.0
  %449 = vmatmul.mubr.f32.gmra.mrb[0].mxu0 %v153
  %v450 = vpop.f32.mrb[0].mxu0
  %v451 = vadd.f32 %v95, %v450
  %v452 = vpop.f32.mrb[0].mxu0
  %453 = vmatprep.mubr.f32.mxu0 0.0
  %454 = vmatmul.mubr.f32.gmra.mrb[0].mxu0 %v156
  %v455 = vpop.f32.mrb[0].mxu0
  %v456 = vadd.f32 %v95, %v455
  %v457 = vpop.f32.mrb[0].mxu0
  %458 = vmatprep.mubr.f32.mxu0 0.0
  %459 = vmatmul.mubr.f32.gmra.mrb[0].mxu0 %v159
  %v460 = vpop.f32.mrb[0].mxu0
  %v461 = vadd.f32 %v95, %v460
  %v462 = vpop.f32.mrb[0].mxu0
  %463 = vmatprep.mubr.f32.mxu0 0.0
  %464 = vmatmul.mubr.f32.gmra.mrb[0].mxu0 %v162
  %v465 = vpop.f32.mrb[0].mxu0
  %v466 = vadd.f32 %v95, %v465
  %v467 = vpop.f32.mrb[0].mxu0
  %468 = vmatprep.mubr.f32.mxu0 0.0
  %469 = vmatmul.mubr.f32.gmra.mrb[0].mxu0 %v165
  %v470 = vpop.f32.mrb[0].mxu0
  %v471 = vadd.f32 %v95, %v470
  %v472 = vpop.f32.mrb[0].mxu0
  %473 = vmatprep.mubr.f32.mxu0 0.0
  %474 = vmatmul.mubr.f32.gmra.mrb[0].mxu0 %v168
  %v475 = vpop.f32.mrb[0].mxu0
  %v476 = vadd.f32 %v95, %v475
  %v477 = vpop.f32.mrb[0].mxu0
  %478 = vmatprep.mubr.f32.mxu0 0.0
  %479 = vmatmul.mubr.f32.gmra.mrb[0].mxu0 %v171
  %v480 = vpop.f32.mrb[0].mxu0
  %v481 = vadd.f32 %v95, %v480
  %v482 = vpop.f32.mrb[0].mxu0
  %483 = vmatprep.mubr.f32.mxu0 0.0
  %484 = vmatmul.mubr.f32.gmra.mrb[0].mxu0 %v174
  %v485 = vpop.f32.mrb[0].mxu0
  %v486 = vadd.f32 %v95, %v485
  %v487 = vpop.f32.mrb[0].mxu0
  %488 = vmatprep.mubr.f32.mxu0 0.0
  %489 = vmatmul.mubr.f32.gmra.mrb[0].mxu0 %v177
  %v490 = vpop.f32.mrb[0].mxu0
  %v491 = vadd.f32 %v95, %v490
  %v492 = vpop.f32.mrb[0].mxu0
  %493 = vmatprep.mubr.f32.mxu0 0.0
  %494 = vmatmul.mubr.f32.gmra.mrb[0].mxu0 %v180
  %v495 = vpop.f32.mrb[0].mxu0
  %v496 = vadd.f32 %v95, %v495
  %v497 = vpop.f32.mrb[0].mxu0
  %498 = vmatprep.mubr.f32.mxu0 0.0
  %499 = vmatmul.mubr.f32.gmra.mrb[0].mxu0 %v183
  %v500 = vpop.f32.mrb[0].mxu0
  %v501 = vadd.f32 %v95, %v500
  %v502 = vpop.f32.mrb[0].mxu0
  %503 = vmatprep.mubr.f32.mxu0 0.0
  %504 = vmatmul.mubr.f32.gmra.mrb[0].mxu0 %v186
  %v505 = vpop.f32.mrb[0].mxu0
  %v506 = vadd.f32 %v95, %v505
  %v507 = vpop.f32.mrb[0].mxu0
  %508 = vmatprep.mubr.f32.mxu0 0.0
  %509 = vmatmul.mubr.f32.gmra.mrb[0].mxu0 %v189
  %v510 = vpop.f32.mrb[0].mxu0
  %v511 = vadd.f32 %v95, %v510
  %v512 = vpop.f32.mrb[0].mxu0
  %513 = vmatprep.mubr.f32.mxu0 0.0
  %514 = vmatmul.mubr.f32.gmra.mrb[0].mxu0 %v192
  %v515 = vpop.f32.mrb[0].mxu0
  %v516 = vadd.f32 %v95, %v515
  %v517 = vpop.f32.mrb[0].mxu0
  %518 = vmatprep.mubr.f32.mxu0 0.0
  %519 = vmatmul.mubr.f32.gmra.mrb[0].mxu0 %v195
  %v520 = vpop.f32.mrb[0].mxu0
  %v521 = vadd.f32 %v95, %v520
  %v522 = vpop.f32.mrb[0].mxu0
  %523 = vmatprep.mubr.f32.mxu0 0.0
  %524 = vmatmul.mubr.f32.gmra.mrb[0].mxu0 %v198
  %v525 = vpop.f32.mrb[0].mxu0
  %v526 = vadd.f32 %v95, %v525
  %v527 = vpop.f32.mrb[0].mxu0
  %528 = vmatprep.mubr.f32.mxu0 0.0
  %529 = vmatmul.mubr.f32.gmra.mrb[0].mxu0 %v201
  %v530 = vpop.f32.mrb[0].mxu0
  %v531 = vadd.f32 %v95, %v530
  %v532 = vpop.f32.mrb[0].mxu0
  %533 = vmatprep.mubr.f32.mxu0 0.0
  %534 = vmatmul.mubr.f32.gmra.mrb[0].mxu0 %v204
  %v535 = vpop.f32.mrb[0].mxu0
  %v536 = vadd.f32 %v95, %v535
  %v537 = vpop.f32.mrb[0].mxu0
  %538 = vmatprep.mubr.f32.mxu0 0.0
  %539 = vmatmul.mubr.f32.gmra.mrb[0].mxu0 %v207
  %v540 = vpop.f32.mrb[0].mxu0
  %v541 = vadd.f32 %v95, %v540
  %v542 = vpop.f32.mrb[0].mxu0
  %543 = vmatprep.mubr.f32.mxu0 0.0
  %544 = vmatmul.mubr.f32.gmra.mrb[0].mxu0 %v210
  %v545 = vpop.f32.mrb[0].mxu0
  %v546 = vadd.f32 %v95, %v545
  %v547 = vpop.f32.mrb[0].mxu0
  %548 = vmatprep.mubr.f32.mxu0 0.0
  %549 = vmatmul.mubr.f32.gmra.mrb[0].mxu0 %v213
  %v550 = vpop.f32.mrb[0].mxu0
  %v551 = vadd.f32 %v95, %v550
  %v552 = vpop.f32.mrb[0].mxu0
  %553 = vmatprep.mubr.f32.mxu0 0.0
  %554 = vmatmul.mubr.f32.gmra.mrb[0].mxu0 %v216
  %v555 = vpop.f32.mrb[0].mxu0
  %v556 = vadd.f32 %v95, %v555
  %v557 = vpop.f32.mrb[0].mxu0
  %558 = vmatprep.mubr.f32.mxu0 0.0
  %559 = vmatmul.mubr.f32.gmra.mrb[0].mxu0 %v219
  %v560 = vpop.f32.mrb[0].mxu0
  %v561 = vadd.f32 %v95, %v560
  %v562 = vpop.f32.mrb[0].mxu0
  %563 = vmatprep.mubr.f32.mxu0 0.0
  %564 = vmatmul.mubr.f32.gmra.mrb[0].mxu0 %v222
  %v565 = vpop.f32.mrb[0].mxu0
  %v566 = vadd.f32 %v95, %v565
  %v567 = vpop.f32.mrb[0].mxu0
  %568 = vmatprep.mubr.f32.mxu0 0.0
  %569 = vmatmul.mubr.f32.gmra.mrb[0].mxu0 %v225
  %v570 = vpop.f32.mrb[0].mxu0
  %v571 = vadd.f32 %v95, %v570
  %v572 = vpop.f32.mrb[0].mxu0
  %573 = vmatprep.mubr.f32.mxu0 0.0
  %574 = vmatmul.mubr.f32.gmra.mrb[0].mxu0 %v228
  %v575 = vpop.f32.mrb[0].mxu0
  %v576 = vadd.f32 %v95, %v575
  %v577 = vpop.f32.mrb[0].mxu0
  %578 = vmatprep.mubr.f32.mxu0 0.0
  %579 = vmatmul.mubr.f32.gmra.mrb[0].mxu0 %v231
  %v580 = vpop.f32.mrb[0].mxu0
  %v581 = vadd.f32 %v95, %v580
  %v582 = vpop.f32.mrb[0].mxu0
  %583 = vmatprep.mubr.f32.mxu0 0.0
  %584 = vmatmul.mubr.f32.gmra.mrb[0].mxu0 %v234
  %v585 = vpop.f32.mrb[0].mxu0
  %v586 = vadd.f32 %v95, %v585
  %v587 = vpop.f32.mrb[0].mxu0
  %588 = vmatprep.mubr.f32.mxu0 0.0
  %589 = vmatmul.mubr.f32.gmra.mrb[0].mxu0 %v237
  %v590 = vpop.f32.mrb[0].mxu0
  %v591 = vadd.f32 %v95, %v590
  %v592 = vpop.f32.mrb[0].mxu0
  %593 = vmatprep.mubr.f32.mxu0 0.0
  %594 = vmatmul.mubr.f32.gmra.mrb[0].mxu0 %v240
  %v595 = vpop.f32.mrb[0].mxu0
  %v596 = vadd.f32 %v95, %v595
  %v597 = vpop.f32.mrb[0].mxu0
  %598 = vmatprep.mubr.f32.mxu0 0.0
  %599 = vmatmul.mubr.f32.gmra.mrb[0].mxu0 %v243
  %v600 = vpop.f32.mrb[0].mxu0
  %v601 = vadd.f32 %v95, %v600
  %v602 = vpop.f32.mrb[0].mxu0
  %603 = vmatprep.mubr.f32.mxu0 0.0
  %604 = vmatmul.mubr.f32.gmra.mrb[0].mxu0 %v246
  %v605 = vpop.f32.mrb[0].mxu0
  %v606 = vadd.f32 %v95, %v605
  %v607 = vpop.f32.mrb[0].mxu0
  %608 = vmatprep.mubr.f32.mxu0 0.0
  %609 = vmatmul.mubr.f32.gmra.mrb[0].mxu0 %v249
  %v610 = vpop.f32.mrb[0].mxu0
  %v611 = vadd.f32 %v95, %v610
  %v612 = vpop.f32.mrb[0].mxu0
  %613 = vmatprep.mubr.f32.mxu0 0.0
  %614 = vmatmul.mubr.f32.gmra.mrb[0].mxu0 %v252
  %v615 = vpop.f32.mrb[0].mxu0
  %v616 = vadd.f32 %v95, %v615
  %v617 = vpop.f32.mrb[0].mxu0
  %618 = vmatprep.mubr.f32.mxu0 0.0
  %619 = vmatmul.mubr.f32.gmra.mrb[0].mxu0 %v255
  %v620 = vpop.f32.mrb[0].mxu0
  %v621 = vadd.f32 %v95, %v620
  %v622 = vpop.f32.mrb[0].mxu0
  %623 = vmatprep.mubr.f32.mxu0 0.0
  %624 = vmatmul.mubr.f32.gmra.mrb[0].mxu0 %v258
  %v625 = vpop.f32.mrb[0].mxu0
  %v626 = vadd.f32 %v95, %v625
  %v627 = vpop.f32.mrb[0].mxu0
  %628 = vmatprep.mubr.f32.mxu0 0.0
  %629 = vmatmul.mubr.f32.gmra.mrb[0].mxu0 %v261
  %v630 = vpop.f32.mrb[0].mxu0
  %v631 = vadd.f32 %v95, %v630
  %v632 = vpop.f32.mrb[0].mxu0
  %633 = vmatprep.mubr.f32.mxu0 0.0
  %634 = vmatmul.mubr.f32.gmra.mrb[0].mxu0 %v264
  %v635 = vpop.f32.mrb[0].mxu0
  %v636 = vadd.f32 %v95, %v635
  %v637 = vpop.f32.mrb[0].mxu0
  %638 = vmatprep.mubr.f32.mxu0 0.0
  %639 = vmatmul.mubr.f32.gmra.mrb[0].mxu0 %v267
  %v640 = vpop.f32.mrb[0].mxu0
  %v641 = vadd.f32 %v95, %v640
  %v642 = vpop.f32.mrb[0].mxu0
  %643 = vmatprep.mubr.f32.mxu0 0.0
  %644 = vmatmul.mubr.f32.gmra.mrb[0].mxu0 %v270
  %v645 = vpop.f32.mrb[0].mxu0
  %v646 = vadd.f32 %v95, %v645
  %v647 = vpop.f32.mrb[0].mxu0
  %648 = vmatprep.mubr.f32.mxu0 0.0
  %649 = vmatmul.mubr.f32.gmra.mrb[0].mxu0 %v273
  %v650 = vpop.f32.mrb[0].mxu0
  %v651 = vadd.f32 %v95, %v650
  %v652 = vpop.f32.mrb[0].mxu0
  %653 = vmatprep.mubr.f32.mxu0 0.0
  %654 = vmatmul.mubr.f32.gmra.mrb[0].mxu0 %v276
  %v655 = vpop.f32.mrb[0].mxu0
  %v656 = vadd.f32 %v95, %v655
  %v657 = vpop.f32.mrb[0].mxu0
  %658 = vmatprep.mubr.f32.mxu0 0.0
  %659 = vmatmul.mubr.f32.gmra.mrb[0].mxu0 %v279
  %v660 = vpop.f32.mrb[0].mxu0
  %v661 = vadd.f32 %v95, %v660
  %v662 = vpop.f32.mrb[0].mxu0
  %663 = vmatprep.mubr.f32.mxu0 0.0
  %664 = vmatmul.mubr.f32.gmra.mrb[0].mxu0 %v282
  %v665 = vpop.f32.mrb[0].mxu0
  %v666 = vadd.f32 %v95, %v665
  %v667 = vpop.f32.mrb[0].mxu0
  %668 = vmatprep.mubr.f32.mxu0 0.0
  %669 = vmatmul.mubr.f32.gmra.mrb[0].mxu0 %v285
  %v670 = vpop.f32.mrb[0].mxu0
  %v671 = vadd.f32 %v95, %v670
  %v672 = vpop.f32.mrb[0].mxu0
  %673 = vmatprep.mubr.f32.mxu0 0.0
  %674 = vmatmul.mubr.f32.gmra.mrb[0].mxu0 %v288
  %v675 = vpop.f32.mrb[0].mxu0
  %v676 = vadd.f32 %v95, %v675
  %v677 = vpop.f32.mrb[0].mxu0
  %678 = vdwg.mxu0
  %v679 = vmul.f32 %v361, 0.5
  %v680 = vmul.f32 %v366, 0.5
  %v681 = vmul.f32 %v371, 0.5
  %v682 = vmul.f32 %v376, 0.5
  %v683 = vmul.f32 %v381, 0.5
  %v684 = vmul.f32 %v386, 0.5
  %v685 = vmul.f32 %v391, 0.5
  %v686 = vmul.f32 %v396, 0.5
  %v687 = vmul.f32 %v401, 0.5
  %v688 = vmul.f32 %v406, 0.5
  %v689 = vmul.f32 %v411, 0.5
  %v690 = vmul.f32 %v416, 0.5
  %v691 = vmul.f32 %v421, 0.5
  %v692 = vmul.f32 %v426, 0.5
  %v693 = vmul.f32 %v431, 0.5
  %v694 = vmul.f32 %v436, 0.5
  %v695 = vmul.f32 %v441, 0.5
  %v696 = vmul.f32 %v446, 0.5
  %v697 = vmul.f32 %v451, 0.5
  %v698 = vmul.f32 %v456, 0.5
  %v699 = vmul.f32 %v461, 0.5
  %v700 = vmul.f32 %v466, 0.5
  %v701 = vmul.f32 %v471, 0.5
  %v702 = vmul.f32 %v476, 0.5
  %v703 = vmul.f32 %v481, 0.5
  %v704 = vmul.f32 %v486, 0.5
  %v705 = vmul.f32 %v491, 0.5
  %v706 = vmul.f32 %v496, 0.5
  %v707 = vmul.f32 %v501, 0.5
  %v708 = vmul.f32 %v506, 0.5
  %v709 = vmul.f32 %v511, 0.5
  %v710 = vmul.f32 %v516, 0.5
  %v711 = vmul.f32 %v521, 0.5
  %v712 = vmul.f32 %v526, 0.5
  %v713 = vmul.f32 %v531, 0.5
  %v714 = vmul.f32 %v536, 0.5
  %v715 = vmul.f32 %v541, 0.5
  %v716 = vmul.f32 %v546, 0.5
  %v717 = vmul.f32 %v551, 0.5
  %v718 = vmul.f32 %v556, 0.5
  %v719 = vmul.f32 %v561, 0.5
  %v720 = vmul.f32 %v566, 0.5
  %v721 = vmul.f32 %v571, 0.5
  %v722 = vmul.f32 %v576, 0.5
  %v723 = vmul.f32 %v581, 0.5
  %v724 = vmul.f32 %v586, 0.5
  %v725 = vmul.f32 %v591, 0.5
  %v726 = vmul.f32 %v596, 0.5
  %v727 = vmul.f32 %v601, 0.5
  %v728 = vmul.f32 %v606, 0.5
  %v729 = vmul.f32 %v611, 0.5
  %v730 = vmul.f32 %v616, 0.5
  %v731 = vmul.f32 %v621, 0.5
  %v732 = vmul.f32 %v626, 0.5
  %v733 = vmul.f32 %v631, 0.5
  %v734 = vmul.f32 %v636, 0.5
  %v735 = vmul.f32 %v641, 0.5
  %v736 = vmul.f32 %v646, 0.5
  %v737 = vmul.f32 %v651, 0.5
  %v738 = vmul.f32 %v656, 0.5
  %v739 = vmul.f32 %v661, 0.5
  %v740 = vmul.f32 %v666, 0.5
  %v741 = vmul.f32 %v671, 0.5
  %v742 = vmul.f32 %v676, 0.5
  %v743 = vmul.f32 %v361, 0.70710677
  %v744 = vmul.f32 %v366, 0.70710677
  %v745 = vmul.f32 %v371, 0.70710677
  %v746 = vmul.f32 %v376, 0.70710677
  %v747 = vmul.f32 %v381, 0.70710677
  %v748 = vmul.f32 %v386, 0.70710677
  %v749 = vmul.f32 %v391, 0.70710677
  %v750 = vmul.f32 %v396, 0.70710677
  %v751 = vmul.f32 %v401, 0.70710677
  %v752 = vmul.f32 %v406, 0.70710677
  %v753 = vmul.f32 %v411, 0.70710677
  %v754 = vmul.f32 %v416, 0.70710677
  %v755 = vmul.f32 %v421, 0.70710677
  %v756 = vmul.f32 %v426, 0.70710677
  %v757 = vmul.f32 %v431, 0.70710677
  %v758 = vmul.f32 %v436, 0.70710677
  %v759 = vmul.f32 %v441, 0.70710677
  %v760 = vmul.f32 %v446, 0.70710677
  %v761 = vmul.f32 %v451, 0.70710677
  %v762 = vmul.f32 %v456, 0.70710677
  %v763 = vmul.f32 %v461, 0.70710677
  %v764 = vmul.f32 %v466, 0.70710677
  %v765 = vmul.f32 %v471, 0.70710677
  %v766 = vmul.f32 %v476, 0.70710677
  %v767 = vmul.f32 %v481, 0.70710677
  %v768 = vmul.f32 %v486, 0.70710677
  %v769 = vmul.f32 %v491, 0.70710677
  %v770 = vmul.f32 %v496, 0.70710677
  %v771 = vmul.f32 %v501, 0.70710677
  %v772 = vmul.f32 %v506, 0.70710677
  %v773 = vmul.f32 %v511, 0.70710677
  %v774 = vmul.f32 %v516, 0.70710677
  %v775 = vmul.f32 %v521, 0.70710677
  %v776 = vmul.f32 %v526, 0.70710677
  %v777 = vmul.f32 %v531, 0.70710677
  %v778 = vmul.f32 %v536, 0.70710677
  %v779 = vmul.f32 %v541, 0.70710677
  %v780 = vmul.f32 %v546, 0.70710677
  %v781 = vmul.f32 %v551, 0.70710677
  %v782 = vmul.f32 %v556, 0.70710677
  %v783 = vmul.f32 %v561, 0.70710677
  %v784 = vmul.f32 %v566, 0.70710677
  %v785 = vmul.f32 %v571, 0.70710677
  %v786 = vmul.f32 %v576, 0.70710677
  %v787 = vmul.f32 %v581, 0.70710677
  %v788 = vmul.f32 %v586, 0.70710677
  %v789 = vmul.f32 %v591, 0.70710677
  %v790 = vmul.f32 %v596, 0.70710677
  %v791 = vmul.f32 %v601, 0.70710677
  %v792 = vmul.f32 %v606, 0.70710677
  %v793 = vmul.f32 %v611, 0.70710677
  %v794 = vmul.f32 %v616, 0.70710677
  %v795 = vmul.f32 %v621, 0.70710677
  %v796 = vmul.f32 %v626, 0.70710677
  %v797 = vmul.f32 %v631, 0.70710677
  %v798 = vmul.f32 %v636, 0.70710677
  %v799 = vmul.f32 %v641, 0.70710677
  %v800 = vmul.f32 %v646, 0.70710677
  %v801 = vmul.f32 %v651, 0.70710677
  %v802 = vmul.f32 %v656, 0.70710677
  %v803 = vmul.f32 %v661, 0.70710677
  %v804 = vmul.f32 %v666, 0.70710677
  %v805 = vmul.f32 %v671, 0.70710677
  %v806 = vmul.f32 %v676, 0.70710677
  %v807 = vand.u32 2147483647, %v743
  %v808 = vand.u32 2147483647, %v744
  %v809 = vand.u32 2147483647, %v745
  %v810 = vand.u32 2147483647, %v746
  %v811 = vand.u32 2147483647, %v747
  %v812 = vand.u32 2147483647, %v748
  %v813 = vand.u32 2147483647, %v749
  %v814 = vand.u32 2147483647, %v750
  %v815 = vand.u32 2147483647, %v751
  %v816 = vand.u32 2147483647, %v752
  %v817 = vand.u32 2147483647, %v753
  %v818 = vand.u32 2147483647, %v754
  %v819 = vand.u32 2147483647, %v755
  %v820 = vand.u32 2147483647, %v756
  %v821 = vand.u32 2147483647, %v757
  %v822 = vand.u32 2147483647, %v758
  %v823 = vand.u32 2147483647, %v759
  %v824 = vand.u32 2147483647, %v760
  %v825 = vand.u32 2147483647, %v761
  %v826 = vand.u32 2147483647, %v762
  %v827 = vand.u32 2147483647, %v763
  %v828 = vand.u32 2147483647, %v764
  %v829 = vand.u32 2147483647, %v765
  %v830 = vand.u32 2147483647, %v766
  %v831 = vand.u32 2147483647, %v767
  %v832 = vand.u32 2147483647, %v768
  %v833 = vand.u32 2147483647, %v769
  %v834 = vand.u32 2147483647, %v770
  %v835 = vand.u32 2147483647, %v771
  %v836 = vand.u32 2147483647, %v772
  %v837 = vand.u32 2147483647, %v773
  %v838 = vand.u32 2147483647, %v774
  %v839 = vand.u32 2147483647, %v775
  %v840 = vand.u32 2147483647, %v776
  %v841 = vand.u32 2147483647, %v777
  %v842 = vand.u32 2147483647, %v778
  %v843 = vand.u32 2147483647, %v779
  %v844 = vand.u32 2147483647, %v780
  %v845 = vand.u32 2147483647, %v781
  %v846 = vand.u32 2147483647, %v782
  %v847 = vand.u32 2147483647, %v783
  %v848 = vand.u32 2147483647, %v784
  %v849 = vand.u32 2147483647, %v785
  %v850 = vand.u32 2147483647, %v786
  %v851 = vand.u32 2147483647, %v787
  %v852 = vand.u32 2147483647, %v788
  %v853 = vand.u32 2147483647, %v789
  %v854 = vand.u32 2147483647, %v790
  %v855 = vand.u32 2147483647, %v791
  %v856 = vand.u32 2147483647, %v792
  %v857 = vand.u32 2147483647, %v793
  %v858 = vand.u32 2147483647, %v794
  %v859 = vand.u32 2147483647, %v795
  %v860 = vand.u32 2147483647, %v796
  %v861 = vand.u32 2147483647, %v797
  %v862 = vand.u32 2147483647, %v798
  %v863 = vand.u32 2147483647, %v799
  %v864 = vand.u32 2147483647, %v800
  %v865 = vand.u32 2147483647, %v801
  %v866 = vand.u32 2147483647, %v802
  %v867 = vand.u32 2147483647, %v803
  %v868 = vand.u32 2147483647, %v804
  %v869 = vand.u32 2147483647, %v805
  %v870 = vand.u32 2147483647, %v806
  %v871 = vmul.f32 %v807, 0.3275911
  %v872 = vmul.f32 %v808, 0.3275911
  %v873 = vmul.f32 %v809, 0.3275911
  %v874 = vmul.f32 %v810, 0.3275911
  %v875 = vmul.f32 %v811, 0.3275911
  %v876 = vmul.f32 %v812, 0.3275911
  %v877 = vmul.f32 %v813, 0.3275911
  %v878 = vmul.f32 %v814, 0.3275911
  %v879 = vmul.f32 %v815, 0.3275911
  %v880 = vmul.f32 %v816, 0.3275911
  %v881 = vmul.f32 %v817, 0.3275911
  %v882 = vmul.f32 %v818, 0.3275911
  %v883 = vmul.f32 %v819, 0.3275911
  %v884 = vmul.f32 %v820, 0.3275911
  %v885 = vmul.f32 %v821, 0.3275911
  %v886 = vmul.f32 %v822, 0.3275911
  %v887 = vmul.f32 %v823, 0.3275911
  %v888 = vmul.f32 %v824, 0.3275911
  %v889 = vmul.f32 %v825, 0.3275911
  %v890 = vmul.f32 %v826, 0.3275911
  %v891 = vmul.f32 %v827, 0.3275911
  %v892 = vmul.f32 %v828, 0.3275911
  %v893 = vmul.f32 %v829, 0.3275911
  %v894 = vmul.f32 %v830, 0.3275911
  %v895 = vmul.f32 %v831, 0.3275911
  %v896 = vmul.f32 %v832, 0.3275911
  %v897 = vmul.f32 %v833, 0.3275911
  %v898 = vmul.f32 %v834, 0.3275911
  %v899 = vmul.f32 %v835, 0.3275911
  %v900 = vmul.f32 %v836, 0.3275911
  %v901 = vmul.f32 %v837, 0.3275911
  %v902 = vmul.f32 %v838, 0.3275911
  %v903 = vmul.f32 %v839, 0.3275911
  %v904 = vmul.f32 %v840, 0.3275911
  %v905 = vmul.f32 %v841, 0.3275911
  %v906 = vmul.f32 %v842, 0.3275911
  %v907 = vmul.f32 %v843, 0.3275911
  %v908 = vmul.f32 %v844, 0.3275911
  %v909 = vmul.f32 %v845, 0.3275911
  %v910 = vmul.f32 %v846, 0.3275911
  %v911 = vmul.f32 %v847, 0.3275911
  %v912 = vmul.f32 %v848, 0.3275911
  %v913 = vmul.f32 %v849, 0.3275911
  %v914 = vmul.f32 %v850, 0.3275911
  %v915 = vmul.f32 %v851, 0.3275911
  %v916 = vmul.f32 %v852, 0.3275911
  %v917 = vmul.f32 %v853, 0.3275911
  %v918 = vmul.f32 %v854, 0.3275911
  %v919 = vmul.f32 %v855, 0.3275911
  %v920 = vmul.f32 %v856, 0.3275911
  %v921 = vmul.f32 %v857, 0.3275911
  %v922 = vmul.f32 %v858, 0.3275911
  %v923 = vmul.f32 %v859, 0.3275911
  %v924 = vmul.f32 %v860, 0.3275911
  %v925 = vmul.f32 %v861, 0.3275911
  %v926 = vmul.f32 %v862, 0.3275911
  %v927 = vmul.f32 %v863, 0.3275911
  %v928 = vmul.f32 %v864, 0.3275911
  %v929 = vmul.f32 %v865, 0.3275911
  %v930 = vmul.f32 %v866, 0.3275911
  %v931 = vmul.f32 %v867, 0.3275911
  %v932 = vmul.f32 %v868, 0.3275911
  %v933 = vmul.f32 %v869, 0.3275911
  %v934 = vmul.f32 %v870, 0.3275911
  %v935 = vadd.f32 %v871, 1.0
  %v936 = vadd.f32 %v872, 1.0
  %v937 = vadd.f32 %v873, 1.0
  %v938 = vadd.f32 %v874, 1.0
  %v939 = vadd.f32 %v875, 1.0
  %v940 = vadd.f32 %v876, 1.0
  %v941 = vadd.f32 %v877, 1.0
  %v942 = vadd.f32 %v878, 1.0
  %v943 = vadd.f32 %v879, 1.0
  %v944 = vadd.f32 %v880, 1.0
  %v945 = vadd.f32 %v881, 1.0
  %v946 = vadd.f32 %v882, 1.0
  %v947 = vadd.f32 %v883, 1.0
  %v948 = vadd.f32 %v884, 1.0
  %v949 = vadd.f32 %v885, 1.0
  %v950 = vadd.f32 %v886, 1.0
  %v951 = vadd.f32 %v887, 1.0
  %v952 = vadd.f32 %v888, 1.0
  %v953 = vadd.f32 %v889, 1.0
  %v954 = vadd.f32 %v890, 1.0
  %v955 = vadd.f32 %v891, 1.0
  %v956 = vadd.f32 %v892, 1.0
  %v957 = vadd.f32 %v893, 1.0
  %v958 = vadd.f32 %v894, 1.0
  %v959 = vadd.f32 %v895, 1.0
  %v960 = vadd.f32 %v896, 1.0
  %v961 = vadd.f32 %v897, 1.0
  %v962 = vadd.f32 %v898, 1.0
  %v963 = vadd.f32 %v899, 1.0
  %v964 = vadd.f32 %v900, 1.0
  %v965 = vadd.f32 %v901, 1.0
  %v966 = vadd.f32 %v902, 1.0
  %v967 = vadd.f32 %v903, 1.0
  %v968 = vadd.f32 %v904, 1.0
  %v969 = vadd.f32 %v905, 1.0
  %v970 = vadd.f32 %v906, 1.0
  %v971 = vadd.f32 %v907, 1.0
  %v972 = vadd.f32 %v908, 1.0
  %v973 = vadd.f32 %v909, 1.0
  %v974 = vadd.f32 %v910, 1.0
  %v975 = vadd.f32 %v911, 1.0
  %v976 = vadd.f32 %v912, 1.0
  %v977 = vadd.f32 %v913, 1.0
  %v978 = vadd.f32 %v914, 1.0
  %v979 = vadd.f32 %v915, 1.0
  %v980 = vadd.f32 %v916, 1.0
  %v981 = vadd.f32 %v917, 1.0
  %v982 = vadd.f32 %v918, 1.0
  %v983 = vadd.f32 %v919, 1.0
  %v984 = vadd.f32 %v920, 1.0
  %v985 = vadd.f32 %v921, 1.0
  %v986 = vadd.f32 %v922, 1.0
  %v987 = vadd.f32 %v923, 1.0
  %v988 = vadd.f32 %v924, 1.0
  %v989 = vadd.f32 %v925, 1.0
  %v990 = vadd.f32 %v926, 1.0
  %v991 = vadd.f32 %v927, 1.0
  %v992 = vadd.f32 %v928, 1.0
  %v993 = vadd.f32 %v929, 1.0
  %v994 = vadd.f32 %v930, 1.0
  %v995 = vadd.f32 %v931, 1.0
  %v996 = vadd.f32 %v932, 1.0
  %v997 = vadd.f32 %v933, 1.0
  %v998 = vadd.f32 %v934, 1.0
  %v999 = vrcp.pop %v935
  %v1000 = vmul.f32 1.0, %v999
  %v1001 = vrcp.pop %v936
  %v1002 = vmul.f32 1.0, %v1001
  %v1003 = vrcp.pop %v937
  %v1004 = vmul.f32 1.0, %v1003
  %v1005 = vrcp.pop %v938
  %v1006 = vmul.f32 1.0, %v1005
  %v1007 = vrcp.pop %v939
  %v1008 = vmul.f32 1.0, %v1007
  %v1009 = vrcp.pop %v940
  %v1010 = vmul.f32 1.0, %v1009
  %v1011 = vrcp.pop %v941
  %v1012 = vmul.f32 1.0, %v1011
  %v1013 = vrcp.pop %v942
  %v1014 = vmul.f32 1.0, %v1013
  %v1015 = vrcp.pop %v943
  %v1016 = vmul.f32 1.0, %v1015
  %v1017 = vrcp.pop %v944
  %v1018 = vmul.f32 1.0, %v1017
  %v1019 = vrcp.pop %v945
  %v1020 = vmul.f32 1.0, %v1019
  %v1021 = vrcp.pop %v946
  %v1022 = vmul.f32 1.0, %v1021
  %v1023 = vrcp.pop %v947
  %v1024 = vmul.f32 1.0, %v1023
  %v1025 = vrcp.pop %v948
  %v1026 = vmul.f32 1.0, %v1025
  %v1027 = vrcp.pop %v949
  %v1028 = vmul.f32 1.0, %v1027
  %v1029 = vrcp.pop %v950
  %v1030 = vmul.f32 1.0, %v1029
  %v1031 = vrcp.pop %v951
  %v1032 = vmul.f32 1.0, %v1031
  %v1033 = vrcp.pop %v952
  %v1034 = vmul.f32 1.0, %v1033
  %v1035 = vrcp.pop %v953
  %v1036 = vmul.f32 1.0, %v1035
  %v1037 = vrcp.pop %v954
  %v1038 = vmul.f32 1.0, %v1037
  %v1039 = vrcp.pop %v955
  %v1040 = vmul.f32 1.0, %v1039
  %v1041 = vrcp.pop %v956
  %v1042 = vmul.f32 1.0, %v1041
  %v1043 = vrcp.pop %v957
  %v1044 = vmul.f32 1.0, %v1043
  %v1045 = vrcp.pop %v958
  %v1046 = vmul.f32 1.0, %v1045
  %v1047 = vrcp.pop %v959
  %v1048 = vmul.f32 1.0, %v1047
  %v1049 = vrcp.pop %v960
  %v1050 = vmul.f32 1.0, %v1049
  %v1051 = vrcp.pop %v961
  %v1052 = vmul.f32 1.0, %v1051
  %v1053 = vrcp.pop %v962
  %v1054 = vmul.f32 1.0, %v1053
  %v1055 = vrcp.pop %v963
  %v1056 = vmul.f32 1.0, %v1055
  %v1057 = vrcp.pop %v964
  %v1058 = vmul.f32 1.0, %v1057
  %v1059 = vrcp.pop %v965
  %v1060 = vmul.f32 1.0, %v1059
  %v1061 = vrcp.pop %v966
  %v1062 = vmul.f32 1.0, %v1061
  %v1063 = vrcp.pop %v967
  %v1064 = vmul.f32 1.0, %v1063
  %v1065 = vrcp.pop %v968
  %v1066 = vmul.f32 1.0, %v1065
  %v1067 = vrcp.pop %v969
  %v1068 = vmul.f32 1.0, %v1067
  %v1069 = vrcp.pop %v970
  %v1070 = vmul.f32 1.0, %v1069
  %v1071 = vrcp.pop %v971
  %v1072 = vmul.f32 1.0, %v1071
  %v1073 = vrcp.pop %v972
  %v1074 = vmul.f32 1.0, %v1073
  %v1075 = vrcp.pop %v973
  %v1076 = vmul.f32 1.0, %v1075
  %v1077 = vrcp.pop %v974
  %v1078 = vmul.f32 1.0, %v1077
  %v1079 = vrcp.pop %v975
  %v1080 = vmul.f32 1.0, %v1079
  %v1081 = vrcp.pop %v976
  %v1082 = vmul.f32 1.0, %v1081
  %v1083 = vrcp.pop %v977
  %v1084 = vmul.f32 1.0, %v1083
  %v1085 = vrcp.pop %v978
  %v1086 = vmul.f32 1.0, %v1085
  %v1087 = vrcp.pop %v979
  %v1088 = vmul.f32 1.0, %v1087
  %v1089 = vrcp.pop %v980
  %v1090 = vmul.f32 1.0, %v1089
  %v1091 = vrcp.pop %v981
  %v1092 = vmul.f32 1.0, %v1091
  %v1093 = vrcp.pop %v982
  %v1094 = vmul.f32 1.0, %v1093
  %v1095 = vrcp.pop %v983
  %v1096 = vmul.f32 1.0, %v1095
  %v1097 = vrcp.pop %v984
  %v1098 = vmul.f32 1.0, %v1097
  %v1099 = vrcp.pop %v985
  %v1100 = vmul.f32 1.0, %v1099
  %v1101 = vrcp.pop %v986
  %v1102 = vmul.f32 1.0, %v1101
  %v1103 = vrcp.pop %v987
  %v1104 = vmul.f32 1.0, %v1103
  %v1105 = vrcp.pop %v988
  %v1106 = vmul.f32 1.0, %v1105
  %v1107 = vrcp.pop %v989
  %v1108 = vmul.f32 1.0, %v1107
  %v1109 = vrcp.pop %v990
  %v1110 = vmul.f32 1.0, %v1109
  %v1111 = vrcp.pop %v991
  %v1112 = vmul.f32 1.0, %v1111
  %v1113 = vrcp.pop %v992
  %v1114 = vmul.f32 1.0, %v1113
  %v1115 = vrcp.pop %v993
  %v1116 = vmul.f32 1.0, %v1115
  %v1117 = vrcp.pop %v994
  %v1118 = vmul.f32 1.0, %v1117
  %v1119 = vrcp.pop %v995
  %v1120 = vmul.f32 1.0, %v1119
  %v1121 = vrcp.pop %v996
  %v1122 = vmul.f32 1.0, %v1121
  %v1123 = vrcp.pop %v997
  %v1124 = vmul.f32 1.0, %v1123
  %v1125 = vrcp.pop %v998
  %v1126 = vmul.f32 1.0, %v1125
  %v1127 = vmul.f32 %v1000, 1.0614054
  %v1128 = vmul.f32 %v1002, 1.0614054
  %v1129 = vmul.f32 %v1004, 1.0614054
  %v1130 = vmul.f32 %v1006, 1.0614054
  %v1131 = vmul.f32 %v1008, 1.0614054
  %v1132 = vmul.f32 %v1010, 1.0614054
  %v1133 = vmul.f32 %v1012, 1.0614054
  %v1134 = vmul.f32 %v1014, 1.0614054
  %v1135 = vmul.f32 %v1016, 1.0614054
  %v1136 = vmul.f32 %v1018, 1.0614054
  %v1137 = vmul.f32 %v1020, 1.0614054
  %v1138 = vmul.f32 %v1022, 1.0614054
  %v1139 = vmul.f32 %v1024, 1.0614054
  %v1140 = vmul.f32 %v1026, 1.0614054
  %v1141 = vmul.f32 %v1028, 1.0614054
  %v1142 = vmul.f32 %v1030, 1.0614054
  %v1143 = vmul.f32 %v1032, 1.0614054
  %v1144 = vmul.f32 %v1034, 1.0614054
  %v1145 = vmul.f32 %v1036, 1.0614054
  %v1146 = vmul.f32 %v1038, 1.0614054
  %v1147 = vmul.f32 %v1040, 1.0614054
  %v1148 = vmul.f32 %v1042, 1.0614054
  %v1149 = vmul.f32 %v1044, 1.0614054
  %v1150 = vmul.f32 %v1046, 1.0614054
  %v1151 = vmul.f32 %v1048, 1.0614054
  %v1152 = vmul.f32 %v1050, 1.0614054
  %v1153 = vmul.f32 %v1052, 1.0614054
  %v1154 = vmul.f32 %v1054, 1.0614054
  %v1155 = vmul.f32 %v1056, 1.0614054
  %v1156 = vmul.f32 %v1058, 1.0614054
  %v1157 = vmul.f32 %v1060, 1.0614054
  %v1158 = vmul.f32 %v1062, 1.0614054
  %v1159 = vmul.f32 %v1064, 1.0614054
  %v1160 = vmul.f32 %v1066, 1.0614054
  %v1161 = vmul.f32 %v1068, 1.0614054
  %v1162 = vmul.f32 %v1070, 1.0614054
  %v1163 = vmul.f32 %v1072, 1.0614054
  %v1164 = vmul.f32 %v1074, 1.0614054
  %v1165 = vmul.f32 %v1076, 1.0614054
  %v1166 = vmul.f32 %v1078, 1.0614054
  %v1167 = vmul.f32 %v1080, 1.0614054
  %v1168 = vmul.f32 %v1082, 1.0614054
  %v1169 = vmul.f32 %v1084, 1.0614054
  %v1170 = vmul.f32 %v1086, 1.0614054
  %v1171 = vmul.f32 %v1088, 1.0614054
  %v1172 = vmul.f32 %v1090, 1.0614054
  %v1173 = vmul.f32 %v1092, 1.0614054
  %v1174 = vmul.f32 %v1094, 1.0614054
  %v1175 = vmul.f32 %v1096, 1.0614054
  %v1176 = vmul.f32 %v1098, 1.0614054
  %v1177 = vmul.f32 %v1100, 1.0614054
  %v1178 = vmul.f32 %v1102, 1.0614054
  %v1179 = vmul.f32 %v1104, 1.0614054
  %v1180 = vmul.f32 %v1106, 1.0614054
  %v1181 = vmul.f32 %v1108, 1.0614054
  %v1182 = vmul.f32 %v1110, 1.0614054
  %v1183 = vmul.f32 %v1112, 1.0614054
  %v1184 = vmul.f32 %v1114, 1.0614054
  %v1185 = vmul.f32 %v1116, 1.0614054
  %v1186 = vmul.f32 %v1118, 1.0614054
  %v1187 = vmul.f32 %v1120, 1.0614054
  %v1188 = vmul.f32 %v1122, 1.0614054
  %v1189 = vmul.f32 %v1124, 1.0614054
  %v1190 = vmul.f32 %v1126, 1.0614054
  %v1191 = vadd.f32 %v1127, -1.4531521
  %v1192 = vadd.f32 %v1128, -1.4531521
  %v1193 = vadd.f32 %v1129, -1.4531521
  %v1194 = vadd.f32 %v1130, -1.4531521
  %v1195 = vadd.f32 %v1131, -1.4531521
  %v1196 = vadd.f32 %v1132, -1.4531521
  %v1197 = vadd.f32 %v1133, -1.4531521
  %v1198 = vadd.f32 %v1134, -1.4531521
  %v1199 = vadd.f32 %v1135, -1.4531521
  %v1200 = vadd.f32 %v1136, -1.4531521
  %v1201 = vadd.f32 %v1137, -1.4531521
  %v1202 = vadd.f32 %v1138, -1.4531521
  %v1203 = vadd.f32 %v1139, -1.4531521
  %v1204 = vadd.f32 %v1140, -1.4531521
  %v1205 = vadd.f32 %v1141, -1.4531521
  %v1206 = vadd.f32 %v1142, -1.4531521
  %v1207 = vadd.f32 %v1143, -1.4531521
  %v1208 = vadd.f32 %v1144, -1.4531521
  %v1209 = vadd.f32 %v1145, -1.4531521
  %v1210 = vadd.f32 %v1146, -1.4531521
  %v1211 = vadd.f32 %v1147, -1.4531521
  %v1212 = vadd.f32 %v1148, -1.4531521
  %v1213 = vadd.f32 %v1149, -1.4531521
  %v1214 = vadd.f32 %v1150, -1.4531521
  %v1215 = vadd.f32 %v1151, -1.4531521
  %v1216 = vadd.f32 %v1152, -1.4531521
  %v1217 = vadd.f32 %v1153, -1.4531521
  %v1218 = vadd.f32 %v1154, -1.4531521
  %v1219 = vadd.f32 %v1155, -1.4531521
  %v1220 = vadd.f32 %v1156, -1.4531521
  %v1221 = vadd.f32 %v1157, -1.4531521
  %v1222 = vadd.f32 %v1158, -1.4531521
  %v1223 = vadd.f32 %v1159, -1.4531521
  %v1224 = vadd.f32 %v1160, -1.4531521
  %v1225 = vadd.f32 %v1161, -1.4531521
  %v1226 = vadd.f32 %v1162, -1.4531521
  %v1227 = vadd.f32 %v1163, -1.4531521
  %v1228 = vadd.f32 %v1164, -1.4531521
  %v1229 = vadd.f32 %v1165, -1.4531521
  %v1230 = vadd.f32 %v1166, -1.4531521
  %v1231 = vadd.f32 %v1167, -1.4531521
  %v1232 = vadd.f32 %v1168, -1.4531521
  %v1233 = vadd.f32 %v1169, -1.4531521
  %v1234 = vadd.f32 %v1170, -1.4531521
  %v1235 = vadd.f32 %v1171, -1.4531521
  %v1236 = vadd.f32 %v1172, -1.4531521
  %v1237 = vadd.f32 %v1173, -1.4531521
  %v1238 = vadd.f32 %v1174, -1.4531521
  %v1239 = vadd.f32 %v1175, -1.4531521
  %v1240 = vadd.f32 %v1176, -1.4531521
  %v1241 = vadd.f32 %v1177, -1.4531521
  %v1242 = vadd.f32 %v1178, -1.4531521
  %v1243 = vadd.f32 %v1179, -1.4531521
  %v1244 = vadd.f32 %v1180, -1.4531521
  %v1245 = vadd.f32 %v1181, -1.4531521
  %v1246 = vadd.f32 %v1182, -1.4531521
  %v1247 = vadd.f32 %v1183, -1.4531521
  %v1248 = vadd.f32 %v1184, -1.4531521
  %v1249 = vadd.f32 %v1185, -1.4531521
  %v1250 = vadd.f32 %v1186, -1.4531521
  %v1251 = vadd.f32 %v1187, -1.4531521
  %v1252 = vadd.f32 %v1188, -1.4531521
  %v1253 = vadd.f32 %v1189, -1.4531521
  %v1254 = vadd.f32 %v1190, -1.4531521
  %v1255 = vmul.f32 %v1191, %v1000
  %v1256 = vmul.f32 %v1192, %v1002
  %v1257 = vmul.f32 %v1193, %v1004
  %v1258 = vmul.f32 %v1194, %v1006
  %v1259 = vmul.f32 %v1195, %v1008
  %v1260 = vmul.f32 %v1196, %v1010
  %v1261 = vmul.f32 %v1197, %v1012
  %v1262 = vmul.f32 %v1198, %v1014
  %v1263 = vmul.f32 %v1199, %v1016
  %v1264 = vmul.f32 %v1200, %v1018
  %v1265 = vmul.f32 %v1201, %v1020
  %v1266 = vmul.f32 %v1202, %v1022
  %v1267 = vmul.f32 %v1203, %v1024
  %v1268 = vmul.f32 %v1204, %v1026
  %v1269 = vmul.f32 %v1205, %v1028
  %v1270 = vmul.f32 %v1206, %v1030
  %v1271 = vmul.f32 %v1207, %v1032
  %v1272 = vmul.f32 %v1208, %v1034
  %v1273 = vmul.f32 %v1209, %v1036
  %v1274 = vmul.f32 %v1210, %v1038
  %v1275 = vmul.f32 %v1211, %v1040
  %v1276 = vmul.f32 %v1212, %v1042
  %v1277 = vmul.f32 %v1213, %v1044
  %v1278 = vmul.f32 %v1214, %v1046
  %v1279 = vmul.f32 %v1215, %v1048
  %v1280 = vmul.f32 %v1216, %v1050
  %v1281 = vmul.f32 %v1217, %v1052
  %v1282 = vmul.f32 %v1218, %v1054
  %v1283 = vmul.f32 %v1219, %v1056
  %v1284 = vmul.f32 %v1220, %v1058
  %v1285 = vmul.f32 %v1221, %v1060
  %v1286 = vmul.f32 %v1222, %v1062
  %v1287 = vmul.f32 %v1223, %v1064
  %v1288 = vmul.f32 %v1224, %v1066
  %v1289 = vmul.f32 %v1225, %v1068
  %v1290 = vmul.f32 %v1226, %v1070
  %v1291 = vmul.f32 %v1227, %v1072
  %v1292 = vmul.f32 %v1228, %v1074
  %v1293 = vmul.f32 %v1229, %v1076
  %v1294 = vmul.f32 %v1230, %v1078
  %v1295 = vmul.f32 %v1231, %v1080
  %v1296 = vmul.f32 %v1232, %v1082
  %v1297 = vmul.f32 %v1233, %v1084
  %v1298 = vmul.f32 %v1234, %v1086
  %v1299 = vmul.f32 %v1235, %v1088
  %v1300 = vmul.f32 %v1236, %v1090
  %v1301 = vmul.f32 %v1237, %v1092
  %v1302 = vmul.f32 %v1238, %v1094
  %v1303 = vmul.f32 %v1239, %v1096
  %v1304 = vmul.f32 %v1240, %v1098
  %v1305 = vmul.f32 %v1241, %v1100
  %v1306 = vmul.f32 %v1242, %v1102
  %v1307 = vmul.f32 %v1243, %v1104
  %v1308 = vmul.f32 %v1244, %v1106
  %v1309 = vmul.f32 %v1245, %v1108
  %v1310 = vmul.f32 %v1246, %v1110
  %v1311 = vmul.f32 %v1247, %v1112
  %v1312 = vmul.f32 %v1248, %v1114
  %v1313 = vmul.f32 %v1249, %v1116
  %v1314 = vmul.f32 %v1250, %v1118
  %v1315 = vmul.f32 %v1251, %v1120
  %v1316 = vmul.f32 %v1252, %v1122
  %v1317 = vmul.f32 %v1253, %v1124
  %v1318 = vmul.f32 %v1254, %v1126
  %v1319 = vadd.f32 %v1255, 1.4214138
  %v1320 = vadd.f32 %v1256, 1.4214138
  %v1321 = vadd.f32 %v1257, 1.4214138
  %v1322 = vadd.f32 %v1258, 1.4214138
  %v1323 = vadd.f32 %v1259, 1.4214138
  %v1324 = vadd.f32 %v1260, 1.4214138
  %v1325 = vadd.f32 %v1261, 1.4214138
  %v1326 = vadd.f32 %v1262, 1.4214138
  %v1327 = vadd.f32 %v1263, 1.4214138
  %v1328 = vadd.f32 %v1264, 1.4214138
  %v1329 = vadd.f32 %v1265, 1.4214138
  %v1330 = vadd.f32 %v1266, 1.4214138
  %v1331 = vadd.f32 %v1267, 1.4214138
  %v1332 = vadd.f32 %v1268, 1.4214138
  %v1333 = vadd.f32 %v1269, 1.4214138
  %v1334 = vadd.f32 %v1270, 1.4214138
  %v1335 = vadd.f32 %v1271, 1.4214138
  %v1336 = vadd.f32 %v1272, 1.4214138
  %v1337 = vadd.f32 %v1273, 1.4214138
  %v1338 = vadd.f32 %v1274, 1.4214138
  %v1339 = vadd.f32 %v1275, 1.4214138
  %v1340 = vadd.f32 %v1276, 1.4214138
  %v1341 = vadd.f32 %v1277, 1.4214138
  %v1342 = vadd.f32 %v1278, 1.4214138
  %v1343 = vadd.f32 %v1279, 1.4214138
  %v1344 = vadd.f32 %v1280, 1.4214138
  %v1345 = vadd.f32 %v1281, 1.4214138
  %v1346 = vadd.f32 %v1282, 1.4214138
  %v1347 = vadd.f32 %v1283, 1.4214138
  %v1348 = vadd.f32 %v1284, 1.4214138
  %v1349 = vadd.f32 %v1285, 1.4214138
  %v1350 = vadd.f32 %v1286, 1.4214138
  %v1351 = vadd.f32 %v1287, 1.4214138
  %v1352 = vadd.f32 %v1288, 1.4214138
  %v1353 = vadd.f32 %v1289, 1.4214138
  %v1354 = vadd.f32 %v1290, 1.4214138
  %v1355 = vadd.f32 %v1291, 1.4214138
  %v1356 = vadd.f32 %v1292, 1.4214138
  %v1357 = vadd.f32 %v1293, 1.4214138
  %v1358 = vadd.f32 %v1294, 1.4214138
  %v1359 = vadd.f32 %v1295, 1.4214138
  %v1360 = vadd.f32 %v1296, 1.4214138
  %v1361 = vadd.f32 %v1297, 1.4214138
  %v1362 = vadd.f32 %v1298, 1.4214138
  %v1363 = vadd.f32 %v1299, 1.4214138
  %v1364 = vadd.f32 %v1300, 1.4214138
  %v1365 = vadd.f32 %v1301, 1.4214138
  %v1366 = vadd.f32 %v1302, 1.4214138
  %v1367 = vadd.f32 %v1303, 1.4214138
  %v1368 = vadd.f32 %v1304, 1.4214138
  %v1369 = vadd.f32 %v1305, 1.4214138
  %v1370 = vadd.f32 %v1306, 1.4214138
  %v1371 = vadd.f32 %v1307, 1.4214138
  %v1372 = vadd.f32 %v1308, 1.4214138
  %v1373 = vadd.f32 %v1309, 1.4214138
  %v1374 = vadd.f32 %v1310, 1.4214138
  %v1375 = vadd.f32 %v1311, 1.4214138
  %v1376 = vadd.f32 %v1312, 1.4214138
  %v1377 = vadd.f32 %v1313, 1.4214138
  %v1378 = vadd.f32 %v1314, 1.4214138
  %v1379 = vadd.f32 %v1315, 1.4214138
  %v1380 = vadd.f32 %v1316, 1.4214138
  %v1381 = vadd.f32 %v1317, 1.4214138
  %v1382 = vadd.f32 %v1318, 1.4214138
  %v1383 = vmul.f32 %v1319, %v1000
  %v1384 = vmul.f32 %v1320, %v1002
  %v1385 = vmul.f32 %v1321, %v1004
  %v1386 = vmul.f32 %v1322, %v1006
  %v1387 = vmul.f32 %v1323, %v1008
  %v1388 = vmul.f32 %v1324, %v1010
  %v1389 = vmul.f32 %v1325, %v1012
  %v1390 = vmul.f32 %v1326, %v1014
  %v1391 = vmul.f32 %v1327, %v1016
  %v1392 = vmul.f32 %v1328, %v1018
  %v1393 = vmul.f32 %v1329, %v1020
  %v1394 = vmul.f32 %v1330, %v1022
  %v1395 = vmul.f32 %v1331, %v1024
  %v1396 = vmul.f32 %v1332, %v1026
  %v1397 = vmul.f32 %v1333, %v1028
  %v1398 = vmul.f32 %v1334, %v1030
  %v1399 = vmul.f32 %v1335, %v1032
  %v1400 = vmul.f32 %v1336, %v1034
  %v1401 = vmul.f32 %v1337, %v1036
  %v1402 = vmul.f32 %v1338, %v1038
  %v1403 = vmul.f32 %v1339, %v1040
  %v1404 = vmul.f32 %v1340, %v1042
  %v1405 = vmul.f32 %v1341, %v1044
  %v1406 = vmul.f32 %v1342, %v1046
  %v1407 = vmul.f32 %v1343, %v1048
  %v1408 = vmul.f32 %v1344, %v1050
  %v1409 = vmul.f32 %v1345, %v1052
  %v1410 = vmul.f32 %v1346, %v1054
  %v1411 = vmul.f32 %v1347, %v1056
  %v1412 = vmul.f32 %v1348, %v1058
  %v1413 = vmul.f32 %v1349, %v1060
  %v1414 = vmul.f32 %v1350, %v1062
  %v1415 = vmul.f32 %v1351, %v1064
  %v1416 = vmul.f32 %v1352, %v1066
  %v1417 = vmul.f32 %v1353, %v1068
  %v1418 = vmul.f32 %v1354, %v1070
  %v1419 = vmul.f32 %v1355, %v1072
  %v1420 = vmul.f32 %v1356, %v1074
  %v1421 = vmul.f32 %v1357, %v1076
  %v1422 = vmul.f32 %v1358, %v1078
  %v1423 = vmul.f32 %v1359, %v1080
  %v1424 = vmul.f32 %v1360, %v1082
  %v1425 = vmul.f32 %v1361, %v1084
  %v1426 = vmul.f32 %v1362, %v1086
  %v1427 = vmul.f32 %v1363, %v1088
  %v1428 = vmul.f32 %v1364, %v1090
  %v1429 = vmul.f32 %v1365, %v1092
  %v1430 = vmul.f32 %v1366, %v1094
  %v1431 = vmul.f32 %v1367, %v1096
  %v1432 = vmul.f32 %v1368, %v1098
  %v1433 = vmul.f32 %v1369, %v1100
  %v1434 = vmul.f32 %v1370, %v1102
  %v1435 = vmul.f32 %v1371, %v1104
  %v1436 = vmul.f32 %v1372, %v1106
  %v1437 = vmul.f32 %v1373, %v1108
  %v1438 = vmul.f32 %v1374, %v1110
  %v1439 = vmul.f32 %v1375, %v1112
  %v1440 = vmul.f32 %v1376, %v1114
  %v1441 = vmul.f32 %v1377, %v1116
  %v1442 = vmul.f32 %v1378, %v1118
  %v1443 = vmul.f32 %v1379, %v1120
  %v1444 = vmul.f32 %v1380, %v1122
  %v1445 = vmul.f32 %v1381, %v1124
  %v1446 = vmul.f32 %v1382, %v1126
  %v1447 = vadd.f32 %v1383, -0.28449672
  %v1448 = vadd.f32 %v1384, -0.28449672
  %v1449 = vadd.f32 %v1385, -0.28449672
  %v1450 = vadd.f32 %v1386, -0.28449672
  %v1451 = vadd.f32 %v1387, -0.28449672
  %v1452 = vadd.f32 %v1388, -0.28449672
  %v1453 = vadd.f32 %v1389, -0.28449672
  %v1454 = vadd.f32 %v1390, -0.28449672
  %v1455 = vadd.f32 %v1391, -0.28449672
  %v1456 = vadd.f32 %v1392, -0.28449672
  %v1457 = vadd.f32 %v1393, -0.28449672
  %v1458 = vadd.f32 %v1394, -0.28449672
  %v1459 = vadd.f32 %v1395, -0.28449672
  %v1460 = vadd.f32 %v1396, -0.28449672
  %v1461 = vadd.f32 %v1397, -0.28449672
  %v1462 = vadd.f32 %v1398, -0.28449672
  %v1463 = vadd.f32 %v1399, -0.28449672
  %v1464 = vadd.f32 %v1400, -0.28449672
  %v1465 = vadd.f32 %v1401, -0.28449672
  %v1466 = vadd.f32 %v1402, -0.28449672
  %v1467 = vadd.f32 %v1403, -0.28449672
  %v1468 = vadd.f32 %v1404, -0.28449672
  %v1469 = vadd.f32 %v1405, -0.28449672
  %v1470 = vadd.f32 %v1406, -0.28449672
  %v1471 = vadd.f32 %v1407, -0.28449672
  %v1472 = vadd.f32 %v1408, -0.28449672
  %v1473 = vadd.f32 %v1409, -0.28449672
  %v1474 = vadd.f32 %v1410, -0.28449672
  %v1475 = vadd.f32 %v1411, -0.28449672
  %v1476 = vadd.f32 %v1412, -0.28449672
  %v1477 = vadd.f32 %v1413, -0.28449672
  %v1478 = vadd.f32 %v1414, -0.28449672
  %v1479 = vadd.f32 %v1415, -0.28449672
  %v1480 = vadd.f32 %v1416, -0.28449672
  %v1481 = vadd.f32 %v1417, -0.28449672
  %v1482 = vadd.f32 %v1418, -0.28449672
  %v1483 = vadd.f32 %v1419, -0.28449672
  %v1484 = vadd.f32 %v1420, -0.28449672
  %v1485 = vadd.f32 %v1421, -0.28449672
  %v1486 = vadd.f32 %v1422, -0.28449672
  %v1487 = vadd.f32 %v1423, -0.28449672
  %v1488 = vadd.f32 %v1424, -0.28449672
  %v1489 = vadd.f32 %v1425, -0.28449672
  %v1490 = vadd.f32 %v1426, -0.28449672
  %v1491 = vadd.f32 %v1427, -0.28449672
  %v1492 = vadd.f32 %v1428, -0.28449672
  %v1493 = vadd.f32 %v1429, -0.28449672
  %v1494 = vadd.f32 %v1430, -0.28449672
  %v1495 = vadd.f32 %v1431, -0.28449672
  %v1496 = vadd.f32 %v1432, -0.28449672
  %v1497 = vadd.f32 %v1433, -0.28449672
  %v1498 = vadd.f32 %v1434, -0.28449672
  %v1499 = vadd.f32 %v1435, -0.28449672
  %v1500 = vadd.f32 %v1436, -0.28449672
  %v1501 = vadd.f32 %v1437, -0.28449672
  %v1502 = vadd.f32 %v1438, -0.28449672
  %v1503 = vadd.f32 %v1439, -0.28449672
  %v1504 = vadd.f32 %v1440, -0.28449672
  %v1505 = vadd.f32 %v1441, -0.28449672
  %v1506 = vadd.f32 %v1442, -0.28449672
  %v1507 = vadd.f32 %v1443, -0.28449672
  %v1508 = vadd.f32 %v1444, -0.28449672
  %v1509 = vadd.f32 %v1445, -0.28449672
  %v1510 = vadd.f32 %v1446, -0.28449672
  %v1511 = vmul.f32 %v1447, %v1000
  %v1512 = vmul.f32 %v1448, %v1002
  %v1513 = vmul.f32 %v1449, %v1004
  %v1514 = vmul.f32 %v1450, %v1006
  %v1515 = vmul.f32 %v1451, %v1008
  %v1516 = vmul.f32 %v1452, %v1010
  %v1517 = vmul.f32 %v1453, %v1012
  %v1518 = vmul.f32 %v1454, %v1014
  %v1519 = vmul.f32 %v1455, %v1016
  %v1520 = vmul.f32 %v1456, %v1018
  %v1521 = vmul.f32 %v1457, %v1020
  %v1522 = vmul.f32 %v1458, %v1022
  %v1523 = vmul.f32 %v1459, %v1024
  %v1524 = vmul.f32 %v1460, %v1026
  %v1525 = vmul.f32 %v1461, %v1028
  %v1526 = vmul.f32 %v1462, %v1030
  %v1527 = vmul.f32 %v1463, %v1032
  %v1528 = vmul.f32 %v1464, %v1034
  %v1529 = vmul.f32 %v1465, %v1036
  %v1530 = vmul.f32 %v1466, %v1038
  %v1531 = vmul.f32 %v1467, %v1040
  %v1532 = vmul.f32 %v1468, %v1042
  %v1533 = vmul.f32 %v1469, %v1044
  %v1534 = vmul.f32 %v1470, %v1046
  %v1535 = vmul.f32 %v1471, %v1048
  %v1536 = vmul.f32 %v1472, %v1050
  %v1537 = vmul.f32 %v1473, %v1052
  %v1538 = vmul.f32 %v1474, %v1054
  %v1539 = vmul.f32 %v1475, %v1056
  %v1540 = vmul.f32 %v1476, %v1058
  %v1541 = vmul.f32 %v1477, %v1060
  %v1542 = vmul.f32 %v1478, %v1062
  %v1543 = vmul.f32 %v1479, %v1064
  %v1544 = vmul.f32 %v1480, %v1066
  %v1545 = vmul.f32 %v1481, %v1068
  %v1546 = vmul.f32 %v1482, %v1070
  %v1547 = vmul.f32 %v1483, %v1072
  %v1548 = vmul.f32 %v1484, %v1074
  %v1549 = vmul.f32 %v1485, %v1076
  %v1550 = vmul.f32 %v1486, %v1078
  %v1551 = vmul.f32 %v1487, %v1080
  %v1552 = vmul.f32 %v1488, %v1082
  %v1553 = vmul.f32 %v1489, %v1084
  %v1554 = vmul.f32 %v1490, %v1086
  %v1555 = vmul.f32 %v1491, %v1088
  %v1556 = vmul.f32 %v1492, %v1090
  %v1557 = vmul.f32 %v1493, %v1092
  %v1558 = vmul.f32 %v1494, %v1094
  %v1559 = vmul.f32 %v1495, %v1096
  %v1560 = vmul.f32 %v1496, %v1098
  %v1561 = vmul.f32 %v1497, %v1100
  %v1562 = vmul.f32 %v1498, %v1102
  %v1563 = vmul.f32 %v1499, %v1104
  %v1564 = vmul.f32 %v1500, %v1106
  %v1565 = vmul.f32 %v1501, %v1108
  %v1566 = vmul.f32 %v1502, %v1110
  %v1567 = vmul.f32 %v1503, %v1112
  %v1568 = vmul.f32 %v1504, %v1114
  %v1569 = vmul.f32 %v1505, %v1116
  %v1570 = vmul.f32 %v1506, %v1118
  %v1571 = vmul.f32 %v1507, %v1120
  %v1572 = vmul.f32 %v1508, %v1122
  %v1573 = vmul.f32 %v1509, %v1124
  %v1574 = vmul.f32 %v1510, %v1126
  %v1575 = vadd.f32 %v1511, 0.2548296
  %v1576 = vadd.f32 %v1512, 0.2548296
  %v1577 = vadd.f32 %v1513, 0.2548296
  %v1578 = vadd.f32 %v1514, 0.2548296
  %v1579 = vadd.f32 %v1515, 0.2548296
  %v1580 = vadd.f32 %v1516, 0.2548296
  %v1581 = vadd.f32 %v1517, 0.2548296
  %v1582 = vadd.f32 %v1518, 0.2548296
  %v1583 = vadd.f32 %v1519, 0.2548296
  %v1584 = vadd.f32 %v1520, 0.2548296
  %v1585 = vadd.f32 %v1521, 0.2548296
  %v1586 = vadd.f32 %v1522, 0.2548296
  %v1587 = vadd.f32 %v1523, 0.2548296
  %v1588 = vadd.f32 %v1524, 0.2548296
  %v1589 = vadd.f32 %v1525, 0.2548296
  %v1590 = vadd.f32 %v1526, 0.2548296
  %v1591 = vadd.f32 %v1527, 0.2548296
  %v1592 = vadd.f32 %v1528, 0.2548296
  %v1593 = vadd.f32 %v1529, 0.2548296
  %v1594 = vadd.f32 %v1530, 0.2548296
  %v1595 = vadd.f32 %v1531, 0.2548296
  %v1596 = vadd.f32 %v1532, 0.2548296
  %v1597 = vadd.f32 %v1533, 0.2548296
  %v1598 = vadd.f32 %v1534, 0.2548296
  %v1599 = vadd.f32 %v1535, 0.2548296
  %v1600 = vadd.f32 %v1536, 0.2548296
  %v1601 = vadd.f32 %v1537, 0.2548296
  %v1602 = vadd.f32 %v1538, 0.2548296
  %v1603 = vadd.f32 %v1539, 0.2548296
  %v1604 = vadd.f32 %v1540, 0.2548296
  %v1605 = vadd.f32 %v1541, 0.2548296
  %v1606 = vadd.f32 %v1542, 0.2548296
  %v1607 = vadd.f32 %v1543, 0.2548296
  %v1608 = vadd.f32 %v1544, 0.2548296
  %v1609 = vadd.f32 %v1545, 0.2548296
  %v1610 = vadd.f32 %v1546, 0.2548296
  %v1611 = vadd.f32 %v1547, 0.2548296
  %v1612 = vadd.f32 %v1548, 0.2548296
  %v1613 = vadd.f32 %v1549, 0.2548296
  %v1614 = vadd.f32 %v1550, 0.2548296
  %v1615 = vadd.f32 %v1551, 0.2548296
  %v1616 = vadd.f32 %v1552, 0.2548296
  %v1617 = vadd.f32 %v1553, 0.2548296
  %v1618 = vadd.f32 %v1554, 0.2548296
  %v1619 = vadd.f32 %v1555, 0.2548296
  %v1620 = vadd.f32 %v1556, 0.2548296
  %v1621 = vadd.f32 %v1557, 0.2548296
  %v1622 = vadd.f32 %v1558, 0.2548296
  %v1623 = vadd.f32 %v1559, 0.2548296
  %v1624 = vadd.f32 %v1560, 0.2548296
  %v1625 = vadd.f32 %v1561, 0.2548296
  %v1626 = vadd.f32 %v1562, 0.2548296
  %v1627 = vadd.f32 %v1563, 0.2548296
  %v1628 = vadd.f32 %v1564, 0.2548296
  %v1629 = vadd.f32 %v1565, 0.2548296
  %v1630 = vadd.f32 %v1566, 0.2548296
  %v1631 = vadd.f32 %v1567, 0.2548296
  %v1632 = vadd.f32 %v1568, 0.2548296
  %v1633 = vadd.f32 %v1569, 0.2548296
  %v1634 = vadd.f32 %v1570, 0.2548296
  %v1635 = vadd.f32 %v1571, 0.2548296
  %v1636 = vadd.f32 %v1572, 0.2548296
  %v1637 = vadd.f32 %v1573, 0.2548296
  %v1638 = vadd.f32 %v1574, 0.2548296
  %v1639 = vmul.f32 %v1575, %v1000
  %v1640 = vmul.f32 %v1576, %v1002
  %v1641 = vmul.f32 %v1577, %v1004
  %v1642 = vmul.f32 %v1578, %v1006
  %v1643 = vmul.f32 %v1579, %v1008
  %v1644 = vmul.f32 %v1580, %v1010
  %v1645 = vmul.f32 %v1581, %v1012
  %v1646 = vmul.f32 %v1582, %v1014
  %v1647 = vmul.f32 %v1583, %v1016
  %v1648 = vmul.f32 %v1584, %v1018
  %v1649 = vmul.f32 %v1585, %v1020
  %v1650 = vmul.f32 %v1586, %v1022
  %v1651 = vmul.f32 %v1587, %v1024
  %v1652 = vmul.f32 %v1588, %v1026
  %v1653 = vmul.f32 %v1589, %v1028
  %v1654 = vmul.f32 %v1590, %v1030
  %v1655 = vmul.f32 %v1591, %v1032
  %v1656 = vmul.f32 %v1592, %v1034
  %v1657 = vmul.f32 %v1593, %v1036
  %v1658 = vmul.f32 %v1594, %v1038
  %v1659 = vmul.f32 %v1595, %v1040
  %v1660 = vmul.f32 %v1596, %v1042
  %v1661 = vmul.f32 %v1597, %v1044
  %v1662 = vmul.f32 %v1598, %v1046
  %v1663 = vmul.f32 %v1599, %v1048
  %v1664 = vmul.f32 %v1600, %v1050
  %v1665 = vmul.f32 %v1601, %v1052
  %v1666 = vmul.f32 %v1602, %v1054
  %v1667 = vmul.f32 %v1603, %v1056
  %v1668 = vmul.f32 %v1604, %v1058
  %v1669 = vmul.f32 %v1605, %v1060
  %v1670 = vmul.f32 %v1606, %v1062
  %v1671 = vmul.f32 %v1607, %v1064
  %v1672 = vmul.f32 %v1608, %v1066
  %v1673 = vmul.f32 %v1609, %v1068
  %v1674 = vmul.f32 %v1610, %v1070
  %v1675 = vmul.f32 %v1611, %v1072
  %v1676 = vmul.f32 %v1612, %v1074
  %v1677 = vmul.f32 %v1613, %v1076
  %v1678 = vmul.f32 %v1614, %v1078
  %v1679 = vmul.f32 %v1615, %v1080
  %v1680 = vmul.f32 %v1616, %v1082
  %v1681 = vmul.f32 %v1617, %v1084
  %v1682 = vmul.f32 %v1618, %v1086
  %v1683 = vmul.f32 %v1619, %v1088
  %v1684 = vmul.f32 %v1620, %v1090
  %v1685 = vmul.f32 %v1621, %v1092
  %v1686 = vmul.f32 %v1622, %v1094
  %v1687 = vmul.f32 %v1623, %v1096
  %v1688 = vmul.f32 %v1624, %v1098
  %v1689 = vmul.f32 %v1625, %v1100
  %v1690 = vmul.f32 %v1626, %v1102
  %v1691 = vmul.f32 %v1627, %v1104
  %v1692 = vmul.f32 %v1628, %v1106
  %v1693 = vmul.f32 %v1629, %v1108
  %v1694 = vmul.f32 %v1630, %v1110
  %v1695 = vmul.f32 %v1631, %v1112
  %v1696 = vmul.f32 %v1632, %v1114
  %v1697 = vmul.f32 %v1633, %v1116
  %v1698 = vmul.f32 %v1634, %v1118
  %v1699 = vmul.f32 %v1635, %v1120
  %v1700 = vmul.f32 %v1636, %v1122
  %v1701 = vmul.f32 %v1637, %v1124
  %v1702 = vmul.f32 %v1638, %v1126
  %v1703 = vsub.f32 0.0, %v807
  %v1704 = vsub.f32 0.0, %v808
  %v1705 = vsub.f32 0.0, %v809
  %v1706 = vsub.f32 0.0, %v810
  %v1707 = vsub.f32 0.0, %v811
  %v1708 = vsub.f32 0.0, %v812
  %v1709 = vsub.f32 0.0, %v813
  %v1710 = vsub.f32 0.0, %v814
  %v1711 = vsub.f32 0.0, %v815
  %v1712 = vsub.f32 0.0, %v816
  %v1713 = vsub.f32 0.0, %v817
  %v1714 = vsub.f32 0.0, %v818
  %v1715 = vsub.f32 0.0, %v819
  %v1716 = vsub.f32 0.0, %v820
  %v1717 = vsub.f32 0.0, %v821
  %v1718 = vsub.f32 0.0, %v822
  %v1719 = vsub.f32 0.0, %v823
  %v1720 = vsub.f32 0.0, %v824
  %v1721 = vsub.f32 0.0, %v825
  %v1722 = vsub.f32 0.0, %v826
  %v1723 = vsub.f32 0.0, %v827
  %v1724 = vsub.f32 0.0, %v828
  %v1725 = vsub.f32 0.0, %v829
  %v1726 = vsub.f32 0.0, %v830
  %v1727 = vsub.f32 0.0, %v831
  %v1728 = vsub.f32 0.0, %v832
  %v1729 = vsub.f32 0.0, %v833
  %v1730 = vsub.f32 0.0, %v834
  %v1731 = vsub.f32 0.0, %v835
  %v1732 = vsub.f32 0.0, %v836
  %v1733 = vsub.f32 0.0, %v837
  %v1734 = vsub.f32 0.0, %v838
  %v1735 = vsub.f32 0.0, %v839
  %v1736 = vsub.f32 0.0, %v840
  %v1737 = vsub.f32 0.0, %v841
  %v1738 = vsub.f32 0.0, %v842
  %v1739 = vsub.f32 0.0, %v843
  %v1740 = vsub.f32 0.0, %v844
  %v1741 = vsub.f32 0.0, %v845
  %v1742 = vsub.f32 0.0, %v846
  %v1743 = vsub.f32 0.0, %v847
  %v1744 = vsub.f32 0.0, %v848
  %v1745 = vsub.f32 0.0, %v849
  %v1746 = vsub.f32 0.0, %v850
  %v1747 = vsub.f32 0.0, %v851
  %v1748 = vsub.f32 0.0, %v852
  %v1749 = vsub.f32 0.0, %v853
  %v1750 = vsub.f32 0.0, %v854
  %v1751 = vsub.f32 0.0, %v855
  %v1752 = vsub.f32 0.0, %v856
  %v1753 = vsub.f32 0.0, %v857
  %v1754 = vsub.f32 0.0, %v858
  %v1755 = vsub.f32 0.0, %v859
  %v1756 = vsub.f32 0.0, %v860
  %v1757 = vsub.f32 0.0, %v861
  %v1758 = vsub.f32 0.0, %v862
  %v1759 = vsub.f32 0.0, %v863
  %v1760 = vsub.f32 0.0, %v864
  %v1761 = vsub.f32 0.0, %v865
  %v1762 = vsub.f32 0.0, %v866
  %v1763 = vsub.f32 0.0, %v867
  %v1764 = vsub.f32 0.0, %v868
  %v1765 = vsub.f32 0.0, %v869
  %v1766 = vsub.f32 0.0, %v870
  %v1767 = vmul.f32 %v1703, %v807
  %v1768 = vmul.f32 %v1704, %v808
  %v1769 = vmul.f32 %v1705, %v809
  %v1770 = vmul.f32 %v1706, %v810
  %v1771 = vmul.f32 %v1707, %v811
  %v1772 = vmul.f32 %v1708, %v812
  %v1773 = vmul.f32 %v1709, %v813
  %v1774 = vmul.f32 %v1710, %v814
  %v1775 = vmul.f32 %v1711, %v815
  %v1776 = vmul.f32 %v1712, %v816
  %v1777 = vmul.f32 %v1713, %v817
  %v1778 = vmul.f32 %v1714, %v818
  %v1779 = vmul.f32 %v1715, %v819
  %v1780 = vmul.f32 %v1716, %v820
  %v1781 = vmul.f32 %v1717, %v821
  %v1782 = vmul.f32 %v1718, %v822
  %v1783 = vmul.f32 %v1719, %v823
  %v1784 = vmul.f32 %v1720, %v824
  %v1785 = vmul.f32 %v1721, %v825
  %v1786 = vmul.f32 %v1722, %v826
  %v1787 = vmul.f32 %v1723, %v827
  %v1788 = vmul.f32 %v1724, %v828
  %v1789 = vmul.f32 %v1725, %v829
  %v1790 = vmul.f32 %v1726, %v830
  %v1791 = vmul.f32 %v1727, %v831
  %v1792 = vmul.f32 %v1728, %v832
  %v1793 = vmul.f32 %v1729, %v833
  %v1794 = vmul.f32 %v1730, %v834
  %v1795 = vmul.f32 %v1731, %v835
  %v1796 = vmul.f32 %v1732, %v836
  %v1797 = vmul.f32 %v1733, %v837
  %v1798 = vmul.f32 %v1734, %v838
  %v1799 = vmul.f32 %v1735, %v839
  %v1800 = vmul.f32 %v1736, %v840
  %v1801 = vmul.f32 %v1737, %v841
  %v1802 = vmul.f32 %v1738, %v842
  %v1803 = vmul.f32 %v1739, %v843
  %v1804 = vmul.f32 %v1740, %v844
  %v1805 = vmul.f32 %v1741, %v845
  %v1806 = vmul.f32 %v1742, %v846
  %v1807 = vmul.f32 %v1743, %v847
  %v1808 = vmul.f32 %v1744, %v848
  %v1809 = vmul.f32 %v1745, %v849
  %v1810 = vmul.f32 %v1746, %v850
  %v1811 = vmul.f32 %v1747, %v851
  %v1812 = vmul.f32 %v1748, %v852
  %v1813 = vmul.f32 %v1749, %v853
  %v1814 = vmul.f32 %v1750, %v854
  %v1815 = vmul.f32 %v1751, %v855
  %v1816 = vmul.f32 %v1752, %v856
  %v1817 = vmul.f32 %v1753, %v857
  %v1818 = vmul.f32 %v1754, %v858
  %v1819 = vmul.f32 %v1755, %v859
  %v1820 = vmul.f32 %v1756, %v860
  %v1821 = vmul.f32 %v1757, %v861
  %v1822 = vmul.f32 %v1758, %v862
  %v1823 = vmul.f32 %v1759, %v863
  %v1824 = vmul.f32 %v1760, %v864
  %v1825 = vmul.f32 %v1761, %v865
  %v1826 = vmul.f32 %v1762, %v866
  %v1827 = vmul.f32 %v1763, %v867
  %v1828 = vmul.f32 %v1764, %v868
  %v1829 = vmul.f32 %v1765, %v869
  %v1830 = vmul.f32 %v1766, %v870
  %v1831 = vmul.f32 %v1767, 1.442695
  %v1832 = vpow.pop %v1831
  %v1833 = vmul.f32 %v1768, 1.442695
  %v1834 = vpow.pop %v1833
  %v1835 = vmul.f32 %v1769, 1.442695
  %v1836 = vpow.pop %v1835
  %v1837 = vmul.f32 %v1770, 1.442695
  %v1838 = vpow.pop %v1837
  %v1839 = vmul.f32 %v1771, 1.442695
  %v1840 = vpow.pop %v1839
  %v1841 = vmul.f32 %v1772, 1.442695
  %v1842 = vpow.pop %v1841
  %v1843 = vmul.f32 %v1773, 1.442695
  %v1844 = vpow.pop %v1843
  %v1845 = vmul.f32 %v1774, 1.442695
  %v1846 = vpow.pop %v1845
  %v1847 = vmul.f32 %v1775, 1.442695
  %v1848 = vpow.pop %v1847
  %v1849 = vmul.f32 %v1776, 1.442695
  %v1850 = vpow.pop %v1849
  %v1851 = vmul.f32 %v1777, 1.442695
  %v1852 = vpow.pop %v1851
  %v1853 = vmul.f32 %v1778, 1.442695
  %v1854 = vpow.pop %v1853
  %v1855 = vmul.f32 %v1779, 1.442695
  %v1856 = vpow.pop %v1855
  %v1857 = vmul.f32 %v1780, 1.442695
  %v1858 = vpow.pop %v1857
  %v1859 = vmul.f32 %v1781, 1.442695
  %v1860 = vpow.pop %v1859
  %v1861 = vmul.f32 %v1782, 1.442695
  %v1862 = vpow.pop %v1861
  %v1863 = vmul.f32 %v1783, 1.442695
  %v1864 = vpow.pop %v1863
  %v1865 = vmul.f32 %v1784, 1.442695
  %v1866 = vpow.pop %v1865
  %v1867 = vmul.f32 %v1785, 1.442695
  %v1868 = vpow.pop %v1867
  %v1869 = vmul.f32 %v1786, 1.442695
  %v1870 = vpow.pop %v1869
  %v1871 = vmul.f32 %v1787, 1.442695
  %v1872 = vpow.pop %v1871
  %v1873 = vmul.f32 %v1788, 1.442695
  %v1874 = vpow.pop %v1873
  %v1875 = vmul.f32 %v1789, 1.442695
  %v1876 = vpow.pop %v1875
  %v1877 = vmul.f32 %v1790, 1.442695
  %v1878 = vpow.pop %v1877
  %v1879 = vmul.f32 %v1791, 1.442695
  %v1880 = vpow.pop %v1879
  %v1881 = vmul.f32 %v1792, 1.442695
  %v1882 = vpow.pop %v1881
  %v1883 = vmul.f32 %v1793, 1.442695
  %v1884 = vpow.pop %v1883
  %v1885 = vmul.f32 %v1794, 1.442695
  %v1886 = vpow.pop %v1885
  %v1887 = vmul.f32 %v1795, 1.442695
  %v1888 = vpow.pop %v1887
  %v1889 = vmul.f32 %v1796, 1.442695
  %v1890 = vpow.pop %v1889
  %v1891 = vmul.f32 %v1797, 1.442695
  %v1892 = vpow.pop %v1891
  %v1893 = vmul.f32 %v1798, 1.442695
  %v1894 = vpow.pop %v1893
  %v1895 = vmul.f32 %v1799, 1.442695
  %v1896 = vpow.pop %v1895
  %v1897 = vmul.f32 %v1800, 1.442695
  %v1898 = vpow.pop %v1897
  %v1899 = vmul.f32 %v1801, 1.442695
  %v1900 = vpow.pop %v1899
  %v1901 = vmul.f32 %v1802, 1.442695
  %v1902 = vpow.pop %v1901
  %v1903 = vmul.f32 %v1803, 1.442695
  %v1904 = vpow.pop %v1903
  %v1905 = vmul.f32 %v1804, 1.442695
  %v1906 = vpow.pop %v1905
  %v1907 = vmul.f32 %v1805, 1.442695
  %v1908 = vpow.pop %v1907
  %v1909 = vmul.f32 %v1806, 1.442695
  %v1910 = vpow.pop %v1909
  %v1911 = vmul.f32 %v1807, 1.442695
  %v1912 = vpow.pop %v1911
  %v1913 = vmul.f32 %v1808, 1.442695
  %v1914 = vpow.pop %v1913
  %v1915 = vmul.f32 %v1809, 1.442695
  %v1916 = vpow.pop %v1915
  %v1917 = vmul.f32 %v1810, 1.442695
  %v1918 = vpow.pop %v1917
  %v1919 = vmul.f32 %v1811, 1.442695
  %v1920 = vpow.pop %v1919
  %v1921 = vmul.f32 %v1812, 1.442695
  %v1922 = vpow.pop %v1921
  %v1923 = vmul.f32 %v1813, 1.442695
  %v1924 = vpow.pop %v1923
  %v1925 = vmul.f32 %v1814, 1.442695
  %v1926 = vpow.pop %v1925
  %v1927 = vmul.f32 %v1815, 1.442695
  %v1928 = vpow.pop %v1927
  %v1929 = vmul.f32 %v1816, 1.442695
  %v1930 = vpow.pop %v1929
  %v1931 = vmul.f32 %v1817, 1.442695
  %v1932 = vpow.pop %v1931
  %v1933 = vmul.f32 %v1818, 1.442695
  %v1934 = vpow.pop %v1933
  %v1935 = vmul.f32 %v1819, 1.442695
  %v1936 = vpow.pop %v1935
  %v1937 = vmul.f32 %v1820, 1.442695
  %v1938 = vpow.pop %v1937
  %v1939 = vmul.f32 %v1821, 1.442695
  %v1940 = vpow.pop %v1939
  %v1941 = vmul.f32 %v1822, 1.442695
  %v1942 = vpow.pop %v1941
  %v1943 = vmul.f32 %v1823, 1.442695
  %v1944 = vpow.pop %v1943
  %v1945 = vmul.f32 %v1824, 1.442695
  %v1946 = vpow.pop %v1945
  %v1947 = vmul.f32 %v1825, 1.442695
  %v1948 = vpow.pop %v1947
  %v1949 = vmul.f32 %v1826, 1.442695
  %v1950 = vpow.pop %v1949
  %v1951 = vmul.f32 %v1827, 1.442695
  %v1952 = vpow.pop %v1951
  %v1953 = vmul.f32 %v1828, 1.442695
  %v1954 = vpow.pop %v1953
  %v1955 = vmul.f32 %v1829, 1.442695
  %v1956 = vpow.pop %v1955
  %v1957 = vmul.f32 %v1830, 1.442695
  %v1958 = vpow.pop %v1957
  %v1959 = vmul.f32 %v1639, %v1832
  %v1960 = vmul.f32 %v1640, %v1834
  %v1961 = vmul.f32 %v1641, %v1836
  %v1962 = vmul.f32 %v1642, %v1838
  %v1963 = vmul.f32 %v1643, %v1840
  %v1964 = vmul.f32 %v1644, %v1842
  %v1965 = vmul.f32 %v1645, %v1844
  %v1966 = vmul.f32 %v1646, %v1846
  %v1967 = vmul.f32 %v1647, %v1848
  %v1968 = vmul.f32 %v1648, %v1850
  %v1969 = vmul.f32 %v1649, %v1852
  %v1970 = vmul.f32 %v1650, %v1854
  %v1971 = vmul.f32 %v1651, %v1856
  %v1972 = vmul.f32 %v1652, %v1858
  %v1973 = vmul.f32 %v1653, %v1860
  %v1974 = vmul.f32 %v1654, %v1862
  %v1975 = vmul.f32 %v1655, %v1864
  %v1976 = vmul.f32 %v1656, %v1866
  %v1977 = vmul.f32 %v1657, %v1868
  %v1978 = vmul.f32 %v1658, %v1870
  %v1979 = vmul.f32 %v1659, %v1872
  %v1980 = vmul.f32 %v1660, %v1874
  %v1981 = vmul.f32 %v1661, %v1876
  %v1982 = vmul.f32 %v1662, %v1878
  %v1983 = vmul.f32 %v1663, %v1880
  %v1984 = vmul.f32 %v1664, %v1882
  %v1985 = vmul.f32 %v1665, %v1884
  %v1986 = vmul.f32 %v1666, %v1886
  %v1987 = vmul.f32 %v1667, %v1888
  %v1988 = vmul.f32 %v1668, %v1890
  %v1989 = vmul.f32 %v1669, %v1892
  %v1990 = vmul.f32 %v1670, %v1894
  %v1991 = vmul.f32 %v1671, %v1896
  %v1992 = vmul.f32 %v1672, %v1898
  %v1993 = vmul.f32 %v1673, %v1900
  %v1994 = vmul.f32 %v1674, %v1902
  %v1995 = vmul.f32 %v1675, %v1904
  %v1996 = vmul.f32 %v1676, %v1906
  %v1997 = vmul.f32 %v1677, %v1908
  %v1998 = vmul.f32 %v1678, %v1910
  %v1999 = vmul.f32 %v1679, %v1912
  %v2000 = vmul.f32 %v1680, %v1914
  %v2001 = vmul.f32 %v1681, %v1916
  %v2002 = vmul.f32 %v1682, %v1918
  %v2003 = vmul.f32 %v1683, %v1920
  %v2004 = vmul.f32 %v1684, %v1922
  %v2005 = vmul.f32 %v1685, %v1924
  %v2006 = vmul.f32 %v1686, %v1926
  %v2007 = vmul.f32 %v1687, %v1928
  %v2008 = vmul.f32 %v1688, %v1930
  %v2009 = vmul.f32 %v1689, %v1932
  %v2010 = vmul.f32 %v1690, %v1934
  %v2011 = vmul.f32 %v1691, %v1936
  %v2012 = vmul.f32 %v1692, %v1938
  %v2013 = vmul.f32 %v1693, %v1940
  %v2014 = vmul.f32 %v1694, %v1942
  %v2015 = vmul.f32 %v1695, %v1944
  %v2016 = vmul.f32 %v1696, %v1946
  %v2017 = vmul.f32 %v1697, %v1948
  %v2018 = vmul.f32 %v1698, %v1950
  %v2019 = vmul.f32 %v1699, %v1952
  %v2020 = vmul.f32 %v1700, %v1954
  %v2021 = vmul.f32 %v1701, %v1956
  %v2022 = vmul.f32 %v1702, %v1958
  %v2023 = vsub.f32 1.0, %v1959
  %v2024 = vsub.f32 1.0, %v1960
  %v2025 = vsub.f32 1.0, %v1961
  %v2026 = vsub.f32 1.0, %v1962
  %v2027 = vsub.f32 1.0, %v1963
  %v2028 = vsub.f32 1.0, %v1964
  %v2029 = vsub.f32 1.0, %v1965
  %v2030 = vsub.f32 1.0, %v1966
  %v2031 = vsub.f32 1.0, %v1967
  %v2032 = vsub.f32 1.0, %v1968
  %v2033 = vsub.f32 1.0, %v1969
  %v2034 = vsub.f32 1.0, %v1970
  %v2035 = vsub.f32 1.0, %v1971
  %v2036 = vsub.f32 1.0, %v1972
  %v2037 = vsub.f32 1.0, %v1973
  %v2038 = vsub.f32 1.0, %v1974
  %v2039 = vsub.f32 1.0, %v1975
  %v2040 = vsub.f32 1.0, %v1976
  %v2041 = vsub.f32 1.0, %v1977
  %v2042 = vsub.f32 1.0, %v1978
  %v2043 = vsub.f32 1.0, %v1979
  %v2044 = vsub.f32 1.0, %v1980
  %v2045 = vsub.f32 1.0, %v1981
  %v2046 = vsub.f32 1.0, %v1982
  %v2047 = vsub.f32 1.0, %v1983
  %v2048 = vsub.f32 1.0, %v1984
  %v2049 = vsub.f32 1.0, %v1985
  %v2050 = vsub.f32 1.0, %v1986
  %v2051 = vsub.f32 1.0, %v1987
  %v2052 = vsub.f32 1.0, %v1988
  %v2053 = vsub.f32 1.0, %v1989
  %v2054 = vsub.f32 1.0, %v1990
  %v2055 = vsub.f32 1.0, %v1991
  %v2056 = vsub.f32 1.0, %v1992
  %v2057 = vsub.f32 1.0, %v1993
  %v2058 = vsub.f32 1.0, %v1994
  %v2059 = vsub.f32 1.0, %v1995
  %v2060 = vsub.f32 1.0, %v1996
  %v2061 = vsub.f32 1.0, %v1997
  %v2062 = vsub.f32 1.0, %v1998
  %v2063 = vsub.f32 1.0, %v1999
  %v2064 = vsub.f32 1.0, %v2000
  %v2065 = vsub.f32 1.0, %v2001
  %v2066 = vsub.f32 1.0, %v2002
  %v2067 = vsub.f32 1.0, %v2003
  %v2068 = vsub.f32 1.0, %v2004
  %v2069 = vsub.f32 1.0, %v2005
  %v2070 = vsub.f32 1.0, %v2006
  %v2071 = vsub.f32 1.0, %v2007
  %v2072 = vsub.f32 1.0, %v2008
  %v2073 = vsub.f32 1.0, %v2009
  %v2074 = vsub.f32 1.0, %v2010
  %v2075 = vsub.f32 1.0, %v2011
  %v2076 = vsub.f32 1.0, %v2012
  %v2077 = vsub.f32 1.0, %v2013
  %v2078 = vsub.f32 1.0, %v2014
  %v2079 = vsub.f32 1.0, %v2015
  %v2080 = vsub.f32 1.0, %v2016
  %v2081 = vsub.f32 1.0, %v2017
  %v2082 = vsub.f32 1.0, %v2018
  %v2083 = vsub.f32 1.0, %v2019
  %v2084 = vsub.f32 1.0, %v2020
  %v2085 = vsub.f32 1.0, %v2021
  %v2086 = vsub.f32 1.0, %v2022
  %vm2087 = vcmp.lt.f32.partialorder %v743, 0.0
  %vm2088 = vcmp.lt.f32.partialorder %v744, 0.0
  %vm2089 = vcmp.lt.f32.partialorder %v745, 0.0
  %vm2090 = vcmp.lt.f32.partialorder %v746, 0.0
  %vm2091 = vcmp.lt.f32.partialorder %v747, 0.0
  %vm2092 = vcmp.lt.f32.partialorder %v748, 0.0
  %vm2093 = vcmp.lt.f32.partialorder %v749, 0.0
  %vm2094 = vcmp.lt.f32.partialorder %v750, 0.0
  %vm2095 = vcmp.lt.f32.partialorder %v751, 0.0
  %vm2096 = vcmp.lt.f32.partialorder %v752, 0.0
  %vm2097 = vcmp.lt.f32.partialorder %v753, 0.0
  %vm2098 = vcmp.lt.f32.partialorder %v754, 0.0
  %vm2099 = vcmp.lt.f32.partialorder %v755, 0.0
  %vm2100 = vcmp.lt.f32.partialorder %v756, 0.0
  %vm2101 = vcmp.lt.f32.partialorder %v757, 0.0
  %vm2102 = vcmp.lt.f32.partialorder %v758, 0.0
  %vm2103 = vcmp.lt.f32.partialorder %v759, 0.0
  %vm2104 = vcmp.lt.f32.partialorder %v760, 0.0
  %vm2105 = vcmp.lt.f32.partialorder %v761, 0.0
  %vm2106 = vcmp.lt.f32.partialorder %v762, 0.0
  %vm2107 = vcmp.lt.f32.partialorder %v763, 0.0
  %vm2108 = vcmp.lt.f32.partialorder %v764, 0.0
  %vm2109 = vcmp.lt.f32.partialorder %v765, 0.0
  %vm2110 = vcmp.lt.f32.partialorder %v766, 0.0
  %vm2111 = vcmp.lt.f32.partialorder %v767, 0.0
  %vm2112 = vcmp.lt.f32.partialorder %v768, 0.0
  %vm2113 = vcmp.lt.f32.partialorder %v769, 0.0
  %vm2114 = vcmp.lt.f32.partialorder %v770, 0.0
  %vm2115 = vcmp.lt.f32.partialorder %v771, 0.0
  %vm2116 = vcmp.lt.f32.partialorder %v772, 0.0
  %vm2117 = vcmp.lt.f32.partialorder %v773, 0.0
  %vm2118 = vcmp.lt.f32.partialorder %v774, 0.0
  %vm2119 = vcmp.lt.f32.partialorder %v775, 0.0
  %vm2120 = vcmp.lt.f32.partialorder %v776, 0.0
  %vm2121 = vcmp.lt.f32.partialorder %v777, 0.0
  %vm2122 = vcmp.lt.f32.partialorder %v778, 0.0
  %vm2123 = vcmp.lt.f32.partialorder %v779, 0.0
  %vm2124 = vcmp.lt.f32.partialorder %v780, 0.0
  %vm2125 = vcmp.lt.f32.partialorder %v781, 0.0
  %vm2126 = vcmp.lt.f32.partialorder %v782, 0.0
  %vm2127 = vcmp.lt.f32.partialorder %v783, 0.0
  %vm2128 = vcmp.lt.f32.partialorder %v784, 0.0
  %vm2129 = vcmp.lt.f32.partialorder %v785, 0.0
  %vm2130 = vcmp.lt.f32.partialorder %v786, 0.0
  %vm2131 = vcmp.lt.f32.partialorder %v787, 0.0
  %vm2132 = vcmp.lt.f32.partialorder %v788, 0.0
  %vm2133 = vcmp.lt.f32.partialorder %v789, 0.0
  %vm2134 = vcmp.lt.f32.partialorder %v790, 0.0
  %vm2135 = vcmp.lt.f32.partialorder %v791, 0.0
  %vm2136 = vcmp.lt.f32.partialorder %v792, 0.0
  %vm2137 = vcmp.lt.f32.partialorder %v793, 0.0
  %vm2138 = vcmp.lt.f32.partialorder %v794, 0.0
  %vm2139 = vcmp.lt.f32.partialorder %v795, 0.0
  %vm2140 = vcmp.lt.f32.partialorder %v796, 0.0
  %vm2141 = vcmp.lt.f32.partialorder %v797, 0.0
  %vm2142 = vcmp.lt.f32.partialorder %v798, 0.0
  %vm2143 = vcmp.lt.f32.partialorder %v799, 0.0
  %vm2144 = vcmp.lt.f32.partialorder %v800, 0.0
  %vm2145 = vcmp.lt.f32.partialorder %v801, 0.0
  %vm2146 = vcmp.lt.f32.partialorder %v802, 0.0
  %vm2147 = vcmp.lt.f32.partialorder %v803, 0.0
  %vm2148 = vcmp.lt.f32.partialorder %v804, 0.0
  %vm2149 = vcmp.lt.f32.partialorder %v805, 0.0
  %vm2150 = vcmp.lt.f32.partialorder %v806, 0.0
  %v2151 = vsub.f32 0.0, %v2023
  %v2152 = vsub.f32 0.0, %v2024
  %v2153 = vsub.f32 0.0, %v2025
  %v2154 = vsub.f32 0.0, %v2026
  %v2155 = vsub.f32 0.0, %v2027
  %v2156 = vsub.f32 0.0, %v2028
  %v2157 = vsub.f32 0.0, %v2029
  %v2158 = vsub.f32 0.0, %v2030
  %v2159 = vsub.f32 0.0, %v2031
  %v2160 = vsub.f32 0.0, %v2032
  %v2161 = vsub.f32 0.0, %v2033
  %v2162 = vsub.f32 0.0, %v2034
  %v2163 = vsub.f32 0.0, %v2035
  %v2164 = vsub.f32 0.0, %v2036
  %v2165 = vsub.f32 0.0, %v2037
  %v2166 = vsub.f32 0.0, %v2038
  %v2167 = vsub.f32 0.0, %v2039
  %v2168 = vsub.f32 0.0, %v2040
  %v2169 = vsub.f32 0.0, %v2041
  %v2170 = vsub.f32 0.0, %v2042
  %v2171 = vsub.f32 0.0, %v2043
  %v2172 = vsub.f32 0.0, %v2044
  %v2173 = vsub.f32 0.0, %v2045
  %v2174 = vsub.f32 0.0, %v2046
  %v2175 = vsub.f32 0.0, %v2047
  %v2176 = vsub.f32 0.0, %v2048
  %v2177 = vsub.f32 0.0, %v2049
  %v2178 = vsub.f32 0.0, %v2050
  %v2179 = vsub.f32 0.0, %v2051
  %v2180 = vsub.f32 0.0, %v2052
  %v2181 = vsub.f32 0.0, %v2053
  %v2182 = vsub.f32 0.0, %v2054
  %v2183 = vsub.f32 0.0, %v2055
  %v2184 = vsub.f32 0.0, %v2056
  %v2185 = vsub.f32 0.0, %v2057
  %v2186 = vsub.f32 0.0, %v2058
  %v2187 = vsub.f32 0.0, %v2059
  %v2188 = vsub.f32 0.0, %v2060
  %v2189 = vsub.f32 0.0, %v2061
  %v2190 = vsub.f32 0.0, %v2062
  %v2191 = vsub.f32 0.0, %v2063
  %v2192 = vsub.f32 0.0, %v2064
  %v2193 = vsub.f32 0.0, %v2065
  %v2194 = vsub.f32 0.0, %v2066
  %v2195 = vsub.f32 0.0, %v2067
  %v2196 = vsub.f32 0.0, %v2068
  %v2197 = vsub.f32 0.0, %v2069
  %v2198 = vsub.f32 0.0, %v2070
  %v2199 = vsub.f32 0.0, %v2071
  %v2200 = vsub.f32 0.0, %v2072
  %v2201 = vsub.f32 0.0, %v2073
  %v2202 = vsub.f32 0.0, %v2074
  %v2203 = vsub.f32 0.0, %v2075
  %v2204 = vsub.f32 0.0, %v2076
  %v2205 = vsub.f32 0.0, %v2077
  %v2206 = vsub.f32 0.0, %v2078
  %v2207 = vsub.f32 0.0, %v2079
  %v2208 = vsub.f32 0.0, %v2080
  %v2209 = vsub.f32 0.0, %v2081
  %v2210 = vsub.f32 0.0, %v2082
  %v2211 = vsub.f32 0.0, %v2083
  %v2212 = vsub.f32 0.0, %v2084
  %v2213 = vsub.f32 0.0, %v2085
  %v2214 = vsub.f32 0.0, %v2086
  %v2215 = vsel %vm2087, %v2151, %v2023
  %v2216 = vsel %vm2088, %v2152, %v2024
  %v2217 = vsel %vm2089, %v2153, %v2025
  %v2218 = vsel %vm2090, %v2154, %v2026
  %v2219 = vsel %vm2091, %v2155, %v2027
  %v2220 = vsel %vm2092, %v2156, %v2028
  %v2221 = vsel %vm2093, %v2157, %v2029
  %v2222 = vsel %vm2094, %v2158, %v2030
  %v2223 = vsel %vm2095, %v2159, %v2031
  %v2224 = vsel %vm2096, %v2160, %v2032
  %v2225 = vsel %vm2097, %v2161, %v2033
  %v2226 = vsel %vm2098, %v2162, %v2034
  %v2227 = vsel %vm2099, %v2163, %v2035
  %v2228 = vsel %vm2100, %v2164, %v2036
  %v2229 = vsel %vm2101, %v2165, %v2037
  %v2230 = vsel %vm2102, %v2166, %v2038
  %v2231 = vsel %vm2103, %v2167, %v2039
  %v2232 = vsel %vm2104, %v2168, %v2040
  %v2233 = vsel %vm2105, %v2169, %v2041
  %v2234 = vsel %vm2106, %v2170, %v2042
  %v2235 = vsel %vm2107, %v2171, %v2043
  %v2236 = vsel %vm2108, %v2172, %v2044
  %v2237 = vsel %vm2109, %v2173, %v2045
  %v2238 = vsel %vm2110, %v2174, %v2046
  %v2239 = vsel %vm2111, %v2175, %v2047
  %v2240 = vsel %vm2112, %v2176, %v2048
  %v2241 = vsel %vm2113, %v2177, %v2049
  %v2242 = vsel %vm2114, %v2178, %v2050
  %v2243 = vsel %vm2115, %v2179, %v2051
  %v2244 = vsel %vm2116, %v2180, %v2052
  %v2245 = vsel %vm2117, %v2181, %v2053
  %v2246 = vsel %vm2118, %v2182, %v2054
  %v2247 = vsel %vm2119, %v2183, %v2055
  %v2248 = vsel %vm2120, %v2184, %v2056
  %v2249 = vsel %vm2121, %v2185, %v2057
  %v2250 = vsel %vm2122, %v2186, %v2058
  %v2251 = vsel %vm2123, %v2187, %v2059
  %v2252 = vsel %vm2124, %v2188, %v2060
  %v2253 = vsel %vm2125, %v2189, %v2061
  %v2254 = vsel %vm2126, %v2190, %v2062
  %v2255 = vsel %vm2127, %v2191, %v2063
  %v2256 = vsel %vm2128, %v2192, %v2064
  %v2257 = vsel %vm2129, %v2193, %v2065
  %v2258 = vsel %vm2130, %v2194, %v2066
  %v2259 = vsel %vm2131, %v2195, %v2067
  %v2260 = vsel %vm2132, %v2196, %v2068
  %v2261 = vsel %vm2133, %v2197, %v2069
  %v2262 = vsel %vm2134, %v2198, %v2070
  %v2263 = vsel %vm2135, %v2199, %v2071
  %v2264 = vsel %vm2136, %v2200, %v2072
  %v2265 = vsel %vm2137, %v2201, %v2073
  %v2266 = vsel %vm2138, %v2202, %v2074
  %v2267 = vsel %vm2139, %v2203, %v2075
  %v2268 = vsel %vm2140, %v2204, %v2076
  %v2269 = vsel %vm2141, %v2205, %v2077
  %v2270 = vsel %vm2142, %v2206, %v2078
  %v2271 = vsel %vm2143, %v2207, %v2079
  %v2272 = vsel %vm2144, %v2208, %v2080
  %v2273 = vsel %vm2145, %v2209, %v2081
  %v2274 = vsel %vm2146, %v2210, %v2082
  %v2275 = vsel %vm2147, %v2211, %v2083
  %v2276 = vsel %vm2148, %v2212, %v2084
  %v2277 = vsel %vm2149, %v2213, %v2085
  %v2278 = vsel %vm2150, %v2214, %v2086
  %v2279 = vadd.f32 %v2215, 1.0
  %v2280 = vadd.f32 %v2216, 1.0
  %v2281 = vadd.f32 %v2217, 1.0
  %v2282 = vadd.f32 %v2218, 1.0
  %v2283 = vadd.f32 %v2219, 1.0
  %v2284 = vadd.f32 %v2220, 1.0
  %v2285 = vadd.f32 %v2221, 1.0
  %v2286 = vadd.f32 %v2222, 1.0
  %v2287 = vadd.f32 %v2223, 1.0
  %v2288 = vadd.f32 %v2224, 1.0
  %v2289 = vadd.f32 %v2225, 1.0
  %v2290 = vadd.f32 %v2226, 1.0
  %v2291 = vadd.f32 %v2227, 1.0
  %v2292 = vadd.f32 %v2228, 1.0
  %v2293 = vadd.f32 %v2229, 1.0
  %v2294 = vadd.f32 %v2230, 1.0
  %v2295 = vadd.f32 %v2231, 1.0
  %v2296 = vadd.f32 %v2232, 1.0
  %v2297 = vadd.f32 %v2233, 1.0
  %v2298 = vadd.f32 %v2234, 1.0
  %v2299 = vadd.f32 %v2235, 1.0
  %v2300 = vadd.f32 %v2236, 1.0
  %v2301 = vadd.f32 %v2237, 1.0
  %v2302 = vadd.f32 %v2238, 1.0
  %v2303 = vadd.f32 %v2239, 1.0
  %v2304 = vadd.f32 %v2240, 1.0
  %v2305 = vadd.f32 %v2241, 1.0
  %v2306 = vadd.f32 %v2242, 1.0
  %v2307 = vadd.f32 %v2243, 1.0
  %v2308 = vadd.f32 %v2244, 1.0
  %v2309 = vadd.f32 %v2245, 1.0
  %v2310 = vadd.f32 %v2246, 1.0
  %v2311 = vadd.f32 %v2247, 1.0
  %v2312 = vadd.f32 %v2248, 1.0
  %v2313 = vadd.f32 %v2249, 1.0
  %v2314 = vadd.f32 %v2250, 1.0
  %v2315 = vadd.f32 %v2251, 1.0
  %v2316 = vadd.f32 %v2252, 1.0
  %v2317 = vadd.f32 %v2253, 1.0
  %v2318 = vadd.f32 %v2254, 1.0
  %v2319 = vadd.f32 %v2255, 1.0
  %v2320 = vadd.f32 %v2256, 1.0
  %v2321 = vadd.f32 %v2257, 1.0
  %v2322 = vadd.f32 %v2258, 1.0
  %v2323 = vadd.f32 %v2259, 1.0
  %v2324 = vadd.f32 %v2260, 1.0
  %v2325 = vadd.f32 %v2261, 1.0
  %v2326 = vadd.f32 %v2262, 1.0
  %v2327 = vadd.f32 %v2263, 1.0
  %v2328 = vadd.f32 %v2264, 1.0
  %v2329 = vadd.f32 %v2265, 1.0
  %v2330 = vadd.f32 %v2266, 1.0
  %v2331 = vadd.f32 %v2267, 1.0
  %v2332 = vadd.f32 %v2268, 1.0
  %v2333 = vadd.f32 %v2269, 1.0
  %v2334 = vadd.f32 %v2270, 1.0
  %v2335 = vadd.f32 %v2271, 1.0
  %v2336 = vadd.f32 %v2272, 1.0
  %v2337 = vadd.f32 %v2273, 1.0
  %v2338 = vadd.f32 %v2274, 1.0
  %v2339 = vadd.f32 %v2275, 1.0
  %v2340 = vadd.f32 %v2276, 1.0
  %v2341 = vadd.f32 %v2277, 1.0
  %v2342 = vadd.f32 %v2278, 1.0
  %v2343 = vmul.f32 %v679, %v2279
  %v2344 = vmul.f32 %v680, %v2280
  %v2345 = vmul.f32 %v681, %v2281
  %v2346 = vmul.f32 %v682, %v2282
  %v2347 = vmul.f32 %v683, %v2283
  %v2348 = vmul.f32 %v684, %v2284
  %v2349 = vmul.f32 %v685, %v2285
  %v2350 = vmul.f32 %v686, %v2286
  %v2351 = vmul.f32 %v687, %v2287
  %v2352 = vmul.f32 %v688, %v2288
  %v2353 = vmul.f32 %v689, %v2289
  %v2354 = vmul.f32 %v690, %v2290
  %v2355 = vmul.f32 %v691, %v2291
  %v2356 = vmul.f32 %v692, %v2292
  %v2357 = vmul.f32 %v693, %v2293
  %v2358 = vmul.f32 %v694, %v2294
  %v2359 = vmul.f32 %v695, %v2295
  %v2360 = vmul.f32 %v696, %v2296
  %v2361 = vmul.f32 %v697, %v2297
  %v2362 = vmul.f32 %v698, %v2298
  %v2363 = vmul.f32 %v699, %v2299
  %v2364 = vmul.f32 %v700, %v2300
  %v2365 = vmul.f32 %v701, %v2301
  %v2366 = vmul.f32 %v702, %v2302
  %v2367 = vmul.f32 %v703, %v2303
  %v2368 = vmul.f32 %v704, %v2304
  %v2369 = vmul.f32 %v705, %v2305
  %v2370 = vmul.f32 %v706, %v2306
  %v2371 = vmul.f32 %v707, %v2307
  %v2372 = vmul.f32 %v708, %v2308
  %v2373 = vmul.f32 %v709, %v2309
  %v2374 = vmul.f32 %v710, %v2310
  %v2375 = vmul.f32 %v711, %v2311
  %v2376 = vmul.f32 %v712, %v2312
  %v2377 = vmul.f32 %v713, %v2313
  %v2378 = vmul.f32 %v714, %v2314
  %v2379 = vmul.f32 %v715, %v2315
  %v2380 = vmul.f32 %v716, %v2316
  %v2381 = vmul.f32 %v717, %v2317
  %v2382 = vmul.f32 %v718, %v2318
  %v2383 = vmul.f32 %v719, %v2319
  %v2384 = vmul.f32 %v720, %v2320
  %v2385 = vmul.f32 %v721, %v2321
  %v2386 = vmul.f32 %v722, %v2322
  %v2387 = vmul.f32 %v723, %v2323
  %v2388 = vmul.f32 %v724, %v2324
  %v2389 = vmul.f32 %v725, %v2325
  %v2390 = vmul.f32 %v726, %v2326
  %v2391 = vmul.f32 %v727, %v2327
  %v2392 = vmul.f32 %v728, %v2328
  %v2393 = vmul.f32 %v729, %v2329
  %v2394 = vmul.f32 %v730, %v2330
  %v2395 = vmul.f32 %v731, %v2331
  %v2396 = vmul.f32 %v732, %v2332
  %v2397 = vmul.f32 %v733, %v2333
  %v2398 = vmul.f32 %v734, %v2334
  %v2399 = vmul.f32 %v735, %v2335
  %v2400 = vmul.f32 %v736, %v2336
  %v2401 = vmul.f32 %v737, %v2337
  %v2402 = vmul.f32 %v738, %v2338
  %v2403 = vmul.f32 %v739, %v2339
  %v2404 = vmul.f32 %v740, %v2340
  %v2405 = vmul.f32 %v741, %v2341
  %v2406 = vmul.f32 %v742, %v2342
  %v2407 = vld [vmem:[%s3] sm:$0xff]
  %v2408 = vld [vmem:[%s3 + $0x8] sm:$0xff]
  %v2409 = vld [vmem:[%s3 + $0x10] sm:$0xff]
  %v2410 = vld [vmem:[%s3 + $0x18] sm:$0xff]
  %v2411 = vld [vmem:[%s3 + $0x20] sm:$0xff]
  %v2412 = vld [vmem:[%s3 + $0x28] sm:$0xff]
  %v2413 = vld [vmem:[%s3 + $0x30] sm:$0xff]
  %v2414 = vld [vmem:[%s3 + $0x38] sm:$0xff]
  %v2415 = vld [vmem:[%s3 + $0x40] sm:$0xff]
  %v2416 = vld [vmem:[%s3 + $0x48] sm:$0xff]
  %v2417 = vld [vmem:[%s3 + $0x50] sm:$0xff]
  %v2418 = vld [vmem:[%s3 + $0x58] sm:$0xff]
  %v2419 = vld [vmem:[%s3 + $0x60] sm:$0xff]
  %v2420 = vld [vmem:[%s3 + $0x68] sm:$0xff]
  %v2421 = vld [vmem:[%s3 + $0x70] sm:$0xff]
  %v2422 = vld [vmem:[%s3 + $0x78] sm:$0xff]
  %v2423 = vld [vmem:[#allocation2] sm:$0x1]
  %v2425 = vlaneseq
  %v2426 = vshrl.u32 %v2425, 7
  %v2427 = vsub.s32 0, %v2426
  %v2428 = vrot.slane %v2423, %v2427
  %2430 = vmatprep.subr.mxu0 0.0
  %2431 = vmatpush1.msra.mxu0 %v2407
  %2432 = vmatprep.subr.mxu0 0.0
  %2433 = vmatpush1.msra.mxu0 %v2408
  %2434 = vmatprep.subr.mxu0 0.0
  %2435 = vmatpush1.msra.mxu0 %v2409
  %2436 = vmatprep.subr.mxu0 0.0
  %2437 = vmatpush1.msra.mxu0 %v2410
  %2438 = vmatprep.subr.mxu0 0.0
  %2439 = vmatpush1.msra.mxu0 %v2411
  %2440 = vmatprep.subr.mxu0 0.0
  %2441 = vmatpush1.msra.mxu0 %v2412
  %2442 = vmatprep.subr.mxu0 0.0
  %2443 = vmatpush1.msra.mxu0 %v2413
  %2444 = vmatprep.subr.mxu0 0.0
  %2445 = vmatpush1.msra.mxu0 %v2414
  %2446 = vmatprep.subr.mxu0 0.0
  %2447 = vmatpush1.msra.mxu0 %v2415
  %2448 = vmatprep.subr.mxu0 0.0
  %2449 = vmatpush1.msra.mxu0 %v2416
  %2450 = vmatprep.subr.mxu0 0.0
  %2451 = vmatpush1.msra.mxu0 %v2417
  %2452 = vmatprep.subr.mxu0 0.0
  %2453 = vmatpush1.msra.mxu0 %v2418
  %2454 = vmatprep.subr.mxu0 0.0
  %2455 = vmatpush1.msra.mxu0 %v2419
  %2456 = vmatprep.subr.mxu0 0.0
  %2457 = vmatpush1.msra.mxu0 %v2420
  %2458 = vmatprep.subr.mxu0 0.0
  %2459 = vmatpush1.msra.mxu0 %v2421
  %2460 = vmatprep.subr.mxu0 0.0
  %2461 = vmatpush1.msra.mxu0 %v2422
  %2462 = vmatprep.subr.mxu0 0.0
  %2463 = vmatpush1.msra.mxu0 0.0
  %2464 = vmatprep.subr.mxu0 0.0
  %2465 = vmatpush1.msra.mxu0 0.0
  %2466 = vmatprep.subr.mxu0 0.0
  %2467 = vmatpush1.msra.mxu0 0.0
  %2468 = vmatprep.subr.mxu0 0.0
  %2469 = vmatpush1.msra.mxu0 0.0
  %2470 = vmatprep.subr.mxu0 0.0
  %2471 = vmatpush1.msra.mxu0 0.0
  %2472 = vmatprep.subr.mxu0 0.0
  %2473 = vmatpush1.msra.mxu0 0.0
  %2474 = vmatprep.subr.mxu0 0.0
  %2475 = vmatpush1.msra.mxu0 0.0
  %2476 = vmatprep.subr.mxu0 0.0
  %2477 = vmatpush1.msra.mxu0 0.0
  %2478 = vmatprep.subr.mxu0 0.0
  %2479 = vmatpush1.msra.mxu0 0.0
  %2480 = vmatprep.subr.mxu0 0.0
  %2481 = vmatpush1.msra.mxu0 0.0
  %2482 = vmatprep.subr.mxu0 0.0
  %2483 = vmatpush1.msra.mxu0 0.0
  %2484 = vmatprep.subr.mxu0 0.0
  %2485 = vmatpush1.msra.mxu0 0.0
  %2486 = vmatprep.subr.mxu0 0.0
  %2487 = vmatpush1.msra.mxu0 0.0
  %2488 = vmatprep.subr.mxu0 0.0
  %2489 = vmatpush1.msra.mxu0 0.0
  %2490 = vmatprep.subr.mxu0 0.0
  %2491 = vmatpush1.msra.mxu0 0.0
  %2492 = vmatprep.subr.mxu0 0.0
  %2493 = vmatpush1.msra.mxu0 0.0
  %2494 = vmatprep.mubr.f32.mxu0 0.0
  %2495 = vmatmul.mubr.f32.gmra.mrb[0].mxu0 %v2343
  %v2496 = vpop.f32.mrb[0].mxu0
  %v2497 = vadd.f32 %v2428, %v2496
  %v2498 = vpop.f32.mrb[0].mxu0
  %2499 = vmatprep.mubr.f32.mxu0 0.0
  %2500 = vmatmul.mubr.f32.gmra.mrb[0].mxu0 %v2344
  %v2501 = vpop.f32.mrb[0].mxu0
  %v2502 = vadd.f32 %v2428, %v2501
  %v2503 = vpop.f32.mrb[0].mxu0
  %2504 = vmatprep.mubr.f32.mxu0 0.0
  %2505 = vmatmul.mubr.f32.gmra.mrb[0].mxu0 %v2345
  %v2506 = vpop.f32.mrb[0].mxu0
  %v2507 = vadd.f32 %v2428, %v2506
  %v2508 = vpop.f32.mrb[0].mxu0
  %2509 = vmatprep.mubr.f32.mxu0 0.0
  %2510 = vmatmul.mubr.f32.gmra.mrb[0].mxu0 %v2346
  %v2511 = vpop.f32.mrb[0].mxu0
  %v2512 = vadd.f32 %v2428, %v2511
  %v2513 = vpop.f32.mrb[0].mxu0
  %2514 = vmatprep.mubr.f32.mxu0 0.0
  %2515 = vmatmul.mubr.f32.gmra.mrb[0].mxu0 %v2347
  %v2516 = vpop.f32.mrb[0].mxu0
  %v2517 = vadd.f32 %v2428, %v2516
  %v2518 = vpop.f32.mrb[0].mxu0
  %2519 = vmatprep.mubr.f32.mxu0 0.0
  %2520 = vmatmul.mubr.f32.gmra.mrb[0].mxu0 %v2348
  %v2521 = vpop.f32.mrb[0].mxu0
  %v2522 = vadd.f32 %v2428, %v2521
  %v2523 = vpop.f32.mrb[0].mxu0
  %2524 = vmatprep.mubr.f32.mxu0 0.0
  %2525 = vmatmul.mubr.f32.gmra.mrb[0].mxu0 %v2349
  %v2526 = vpop.f32.mrb[0].mxu0
  %v2527 = vadd.f32 %v2428, %v2526
  %v2528 = vpop.f32.mrb[0].mxu0
  %2529 = vmatprep.mubr.f32.mxu0 0.0
  %2530 = vmatmul.mubr.f32.gmra.mrb[0].mxu0 %v2350
  %v2531 = vpop.f32.mrb[0].mxu0
  %v2532 = vadd.f32 %v2428, %v2531
  %v2533 = vpop.f32.mrb[0].mxu0
  %2534 = vmatprep.mubr.f32.mxu0 0.0
  %2535 = vmatmul.mubr.f32.gmra.mrb[0].mxu0 %v2351
  %v2536 = vpop.f32.mrb[0].mxu0
  %v2537 = vadd.f32 %v2428, %v2536
  %v2538 = vpop.f32.mrb[0].mxu0
  %2539 = vmatprep.mubr.f32.mxu0 0.0
  %2540 = vmatmul.mubr.f32.gmra.mrb[0].mxu0 %v2352
  %v2541 = vpop.f32.mrb[0].mxu0
  %v2542 = vadd.f32 %v2428, %v2541
  %v2543 = vpop.f32.mrb[0].mxu0
  %2544 = vmatprep.mubr.f32.mxu0 0.0
  %2545 = vmatmul.mubr.f32.gmra.mrb[0].mxu0 %v2353
  %v2546 = vpop.f32.mrb[0].mxu0
  %v2547 = vadd.f32 %v2428, %v2546
  %v2548 = vpop.f32.mrb[0].mxu0
  %2549 = vmatprep.mubr.f32.mxu0 0.0
  %2550 = vmatmul.mubr.f32.gmra.mrb[0].mxu0 %v2354
  %v2551 = vpop.f32.mrb[0].mxu0
  %v2552 = vadd.f32 %v2428, %v2551
  %v2553 = vpop.f32.mrb[0].mxu0
  %2554 = vmatprep.mubr.f32.mxu0 0.0
  %2555 = vmatmul.mubr.f32.gmra.mrb[0].mxu0 %v2355
  %v2556 = vpop.f32.mrb[0].mxu0
  %v2557 = vadd.f32 %v2428, %v2556
  %v2558 = vpop.f32.mrb[0].mxu0
  %2559 = vmatprep.mubr.f32.mxu0 0.0
  %2560 = vmatmul.mubr.f32.gmra.mrb[0].mxu0 %v2356
  %v2561 = vpop.f32.mrb[0].mxu0
  %v2562 = vadd.f32 %v2428, %v2561
  %v2563 = vpop.f32.mrb[0].mxu0
  %2564 = vmatprep.mubr.f32.mxu0 0.0
  %2565 = vmatmul.mubr.f32.gmra.mrb[0].mxu0 %v2357
  %v2566 = vpop.f32.mrb[0].mxu0
  %v2567 = vadd.f32 %v2428, %v2566
  %v2568 = vpop.f32.mrb[0].mxu0
  %2569 = vmatprep.mubr.f32.mxu0 0.0
  %2570 = vmatmul.mubr.f32.gmra.mrb[0].mxu0 %v2358
  %v2571 = vpop.f32.mrb[0].mxu0
  %v2572 = vadd.f32 %v2428, %v2571
  %v2573 = vpop.f32.mrb[0].mxu0
  %2574 = vmatprep.mubr.f32.mxu0 0.0
  %2575 = vmatmul.mubr.f32.gmra.mrb[0].mxu0 %v2359
  %v2576 = vpop.f32.mrb[0].mxu0
  %v2577 = vadd.f32 %v2428, %v2576
  %v2578 = vpop.f32.mrb[0].mxu0
  %2579 = vmatprep.mubr.f32.mxu0 0.0
  %2580 = vmatmul.mubr.f32.gmra.mrb[0].mxu0 %v2360
  %v2581 = vpop.f32.mrb[0].mxu0
  %v2582 = vadd.f32 %v2428, %v2581
  %v2583 = vpop.f32.mrb[0].mxu0
  %2584 = vmatprep.mubr.f32.mxu0 0.0
  %2585 = vmatmul.mubr.f32.gmra.mrb[0].mxu0 %v2361
  %v2586 = vpop.f32.mrb[0].mxu0
  %v2587 = vadd.f32 %v2428, %v2586
  %v2588 = vpop.f32.mrb[0].mxu0
  %2589 = vmatprep.mubr.f32.mxu0 0.0
  %2590 = vmatmul.mubr.f32.gmra.mrb[0].mxu0 %v2362
  %v2591 = vpop.f32.mrb[0].mxu0
  %v2592 = vadd.f32 %v2428, %v2591
  %v2593 = vpop.f32.mrb[0].mxu0
  %2594 = vmatprep.mubr.f32.mxu0 0.0
  %2595 = vmatmul.mubr.f32.gmra.mrb[0].mxu0 %v2363
  %v2596 = vpop.f32.mrb[0].mxu0
  %v2597 = vadd.f32 %v2428, %v2596
  %v2598 = vpop.f32.mrb[0].mxu0
  %2599 = vmatprep.mubr.f32.mxu0 0.0
  %2600 = vmatmul.mubr.f32.gmra.mrb[0].mxu0 %v2364
  %v2601 = vpop.f32.mrb[0].mxu0
  %v2602 = vadd.f32 %v2428, %v2601
  %v2603 = vpop.f32.mrb[0].mxu0
  %2604 = vmatprep.mubr.f32.mxu0 0.0
  %2605 = vmatmul.mubr.f32.gmra.mrb[0].mxu0 %v2365
  %v2606 = vpop.f32.mrb[0].mxu0
  %v2607 = vadd.f32 %v2428, %v2606
  %v2608 = vpop.f32.mrb[0].mxu0
  %2609 = vmatprep.mubr.f32.mxu0 0.0
  %2610 = vmatmul.mubr.f32.gmra.mrb[0].mxu0 %v2366
  %v2611 = vpop.f32.mrb[0].mxu0
  %v2612 = vadd.f32 %v2428, %v2611
  %v2613 = vpop.f32.mrb[0].mxu0
  %2614 = vmatprep.mubr.f32.mxu0 0.0
  %2615 = vmatmul.mubr.f32.gmra.mrb[0].mxu0 %v2367
  %v2616 = vpop.f32.mrb[0].mxu0
  %v2617 = vadd.f32 %v2428, %v2616
  %v2618 = vpop.f32.mrb[0].mxu0
  %2619 = vmatprep.mubr.f32.mxu0 0.0
  %2620 = vmatmul.mubr.f32.gmra.mrb[0].mxu0 %v2368
  %v2621 = vpop.f32.mrb[0].mxu0
  %v2622 = vadd.f32 %v2428, %v2621
  %v2623 = vpop.f32.mrb[0].mxu0
  %2624 = vmatprep.mubr.f32.mxu0 0.0
  %2625 = vmatmul.mubr.f32.gmra.mrb[0].mxu0 %v2369
  %v2626 = vpop.f32.mrb[0].mxu0
  %v2627 = vadd.f32 %v2428, %v2626
  %v2628 = vpop.f32.mrb[0].mxu0
  %2629 = vmatprep.mubr.f32.mxu0 0.0
  %2630 = vmatmul.mubr.f32.gmra.mrb[0].mxu0 %v2370
  %v2631 = vpop.f32.mrb[0].mxu0
  %v2632 = vadd.f32 %v2428, %v2631
  %v2633 = vpop.f32.mrb[0].mxu0
  %2634 = vmatprep.mubr.f32.mxu0 0.0
  %2635 = vmatmul.mubr.f32.gmra.mrb[0].mxu0 %v2371
  %v2636 = vpop.f32.mrb[0].mxu0
  %v2637 = vadd.f32 %v2428, %v2636
  %v2638 = vpop.f32.mrb[0].mxu0
  %2639 = vmatprep.mubr.f32.mxu0 0.0
  %2640 = vmatmul.mubr.f32.gmra.mrb[0].mxu0 %v2372
  %v2641 = vpop.f32.mrb[0].mxu0
  %v2642 = vadd.f32 %v2428, %v2641
  %v2643 = vpop.f32.mrb[0].mxu0
  %2644 = vmatprep.mubr.f32.mxu0 0.0
  %2645 = vmatmul.mubr.f32.gmra.mrb[0].mxu0 %v2373
  %v2646 = vpop.f32.mrb[0].mxu0
  %v2647 = vadd.f32 %v2428, %v2646
  %v2648 = vpop.f32.mrb[0].mxu0
  %2649 = vmatprep.mubr.f32.mxu0 0.0
  %2650 = vmatmul.mubr.f32.gmra.mrb[0].mxu0 %v2374
  %v2651 = vpop.f32.mrb[0].mxu0
  %v2652 = vadd.f32 %v2428, %v2651
  %v2653 = vpop.f32.mrb[0].mxu0
  %2654 = vmatprep.mubr.f32.mxu0 0.0
  %2655 = vmatmul.mubr.f32.gmra.mrb[0].mxu0 %v2375
  %v2656 = vpop.f32.mrb[0].mxu0
  %v2657 = vadd.f32 %v2428, %v2656
  %v2658 = vpop.f32.mrb[0].mxu0
  %2659 = vmatprep.mubr.f32.mxu0 0.0
  %2660 = vmatmul.mubr.f32.gmra.mrb[0].mxu0 %v2376
  %v2661 = vpop.f32.mrb[0].mxu0
  %v2662 = vadd.f32 %v2428, %v2661
  %v2663 = vpop.f32.mrb[0].mxu0
  %2664 = vmatprep.mubr.f32.mxu0 0.0
  %2665 = vmatmul.mubr.f32.gmra.mrb[0].mxu0 %v2377
  %v2666 = vpop.f32.mrb[0].mxu0
  %v2667 = vadd.f32 %v2428, %v2666
  %v2668 = vpop.f32.mrb[0].mxu0
  %2669 = vmatprep.mubr.f32.mxu0 0.0
  %2670 = vmatmul.mubr.f32.gmra.mrb[0].mxu0 %v2378
  %v2671 = vpop.f32.mrb[0].mxu0
  %v2672 = vadd.f32 %v2428, %v2671
  %v2673 = vpop.f32.mrb[0].mxu0
  %2674 = vmatprep.mubr.f32.mxu0 0.0
  %2675 = vmatmul.mubr.f32.gmra.mrb[0].mxu0 %v2379
  %v2676 = vpop.f32.mrb[0].mxu0
  %v2677 = vadd.f32 %v2428, %v2676
  %v2678 = vpop.f32.mrb[0].mxu0
  %2679 = vmatprep.mubr.f32.mxu0 0.0
  %2680 = vmatmul.mubr.f32.gmra.mrb[0].mxu0 %v2380
  %v2681 = vpop.f32.mrb[0].mxu0
  %v2682 = vadd.f32 %v2428, %v2681
  %v2683 = vpop.f32.mrb[0].mxu0
  %2684 = vmatprep.mubr.f32.mxu0 0.0
  %2685 = vmatmul.mubr.f32.gmra.mrb[0].mxu0 %v2381
  %v2686 = vpop.f32.mrb[0].mxu0
  %v2687 = vadd.f32 %v2428, %v2686
  %v2688 = vpop.f32.mrb[0].mxu0
  %2689 = vmatprep.mubr.f32.mxu0 0.0
  %2690 = vmatmul.mubr.f32.gmra.mrb[0].mxu0 %v2382
  %v2691 = vpop.f32.mrb[0].mxu0
  %v2692 = vadd.f32 %v2428, %v2691
  %v2693 = vpop.f32.mrb[0].mxu0
  %2694 = vmatprep.mubr.f32.mxu0 0.0
  %2695 = vmatmul.mubr.f32.gmra.mrb[0].mxu0 %v2383
  %v2696 = vpop.f32.mrb[0].mxu0
  %v2697 = vadd.f32 %v2428, %v2696
  %v2698 = vpop.f32.mrb[0].mxu0
  %2699 = vmatprep.mubr.f32.mxu0 0.0
  %2700 = vmatmul.mubr.f32.gmra.mrb[0].mxu0 %v2384
  %v2701 = vpop.f32.mrb[0].mxu0
  %v2702 = vadd.f32 %v2428, %v2701
  %v2703 = vpop.f32.mrb[0].mxu0
  %2704 = vmatprep.mubr.f32.mxu0 0.0
  %2705 = vmatmul.mubr.f32.gmra.mrb[0].mxu0 %v2385
  %v2706 = vpop.f32.mrb[0].mxu0
  %v2707 = vadd.f32 %v2428, %v2706
  %v2708 = vpop.f32.mrb[0].mxu0
  %2709 = vmatprep.mubr.f32.mxu0 0.0
  %2710 = vmatmul.mubr.f32.gmra.mrb[0].mxu0 %v2386
  %v2711 = vpop.f32.mrb[0].mxu0
  %v2712 = vadd.f32 %v2428, %v2711
  %v2713 = vpop.f32.mrb[0].mxu0
  %2714 = vmatprep.mubr.f32.mxu0 0.0
  %2715 = vmatmul.mubr.f32.gmra.mrb[0].mxu0 %v2387
  %v2716 = vpop.f32.mrb[0].mxu0
  %v2717 = vadd.f32 %v2428, %v2716
  %v2718 = vpop.f32.mrb[0].mxu0
  %2719 = vmatprep.mubr.f32.mxu0 0.0
  %2720 = vmatmul.mubr.f32.gmra.mrb[0].mxu0 %v2388
  %v2721 = vpop.f32.mrb[0].mxu0
  %v2722 = vadd.f32 %v2428, %v2721
  %v2723 = vpop.f32.mrb[0].mxu0
  %2724 = vmatprep.mubr.f32.mxu0 0.0
  %2725 = vmatmul.mubr.f32.gmra.mrb[0].mxu0 %v2389
  %v2726 = vpop.f32.mrb[0].mxu0
  %v2727 = vadd.f32 %v2428, %v2726
  %v2728 = vpop.f32.mrb[0].mxu0
  %2729 = vmatprep.mubr.f32.mxu0 0.0
  %2730 = vmatmul.mubr.f32.gmra.mrb[0].mxu0 %v2390
  %v2731 = vpop.f32.mrb[0].mxu0
  %v2732 = vadd.f32 %v2428, %v2731
  %v2733 = vpop.f32.mrb[0].mxu0
  %2734 = vmatprep.mubr.f32.mxu0 0.0
  %2735 = vmatmul.mubr.f32.gmra.mrb[0].mxu0 %v2391
  %v2736 = vpop.f32.mrb[0].mxu0
  %v2737 = vadd.f32 %v2428, %v2736
  %v2738 = vpop.f32.mrb[0].mxu0
  %2739 = vmatprep.mubr.f32.mxu0 0.0
  %2740 = vmatmul.mubr.f32.gmra.mrb[0].mxu0 %v2392
  %v2741 = vpop.f32.mrb[0].mxu0
  %v2742 = vadd.f32 %v2428, %v2741
  %v2743 = vpop.f32.mrb[0].mxu0
  %2744 = vmatprep.mubr.f32.mxu0 0.0
  %2745 = vmatmul.mubr.f32.gmra.mrb[0].mxu0 %v2393
  %v2746 = vpop.f32.mrb[0].mxu0
  %v2747 = vadd.f32 %v2428, %v2746
  %v2748 = vpop.f32.mrb[0].mxu0
  %2749 = vmatprep.mubr.f32.mxu0 0.0
  %2750 = vmatmul.mubr.f32.gmra.mrb[0].mxu0 %v2394
  %v2751 = vpop.f32.mrb[0].mxu0
  %v2752 = vadd.f32 %v2428, %v2751
  %v2753 = vpop.f32.mrb[0].mxu0
  %2754 = vmatprep.mubr.f32.mxu0 0.0
  %2755 = vmatmul.mubr.f32.gmra.mrb[0].mxu0 %v2395
  %v2756 = vpop.f32.mrb[0].mxu0
  %v2757 = vadd.f32 %v2428, %v2756
  %v2758 = vpop.f32.mrb[0].mxu0
  %2759 = vmatprep.mubr.f32.mxu0 0.0
  %2760 = vmatmul.mubr.f32.gmra.mrb[0].mxu0 %v2396
  %v2761 = vpop.f32.mrb[0].mxu0
  %v2762 = vadd.f32 %v2428, %v2761
  %v2763 = vpop.f32.mrb[0].mxu0
  %2764 = vmatprep.mubr.f32.mxu0 0.0
  %2765 = vmatmul.mubr.f32.gmra.mrb[0].mxu0 %v2397
  %v2766 = vpop.f32.mrb[0].mxu0
  %v2767 = vadd.f32 %v2428, %v2766
  %v2768 = vpop.f32.mrb[0].mxu0
  %2769 = vmatprep.mubr.f32.mxu0 0.0
  %2770 = vmatmul.mubr.f32.gmra.mrb[0].mxu0 %v2398
  %v2771 = vpop.f32.mrb[0].mxu0
  %v2772 = vadd.f32 %v2428, %v2771
  %v2773 = vpop.f32.mrb[0].mxu0
  %2774 = vmatprep.mubr.f32.mxu0 0.0
  %2775 = vmatmul.mubr.f32.gmra.mrb[0].mxu0 %v2399
  %v2776 = vpop.f32.mrb[0].mxu0
  %v2777 = vadd.f32 %v2428, %v2776
  %v2778 = vpop.f32.mrb[0].mxu0
  %2779 = vmatprep.mubr.f32.mxu0 0.0
  %2780 = vmatmul.mubr.f32.gmra.mrb[0].mxu0 %v2400
  %v2781 = vpop.f32.mrb[0].mxu0
  %v2782 = vadd.f32 %v2428, %v2781
  %v2783 = vpop.f32.mrb[0].mxu0
  %2784 = vmatprep.mubr.f32.mxu0 0.0
  %2785 = vmatmul.mubr.f32.gmra.mrb[0].mxu0 %v2401
  %v2786 = vpop.f32.mrb[0].mxu0
  %v2787 = vadd.f32 %v2428, %v2786
  %v2788 = vpop.f32.mrb[0].mxu0
  %2789 = vmatprep.mubr.f32.mxu0 0.0
  %2790 = vmatmul.mubr.f32.gmra.mrb[0].mxu0 %v2402
  %v2791 = vpop.f32.mrb[0].mxu0
  %v2792 = vadd.f32 %v2428, %v2791
  %v2793 = vpop.f32.mrb[0].mxu0
  %2794 = vmatprep.mubr.f32.mxu0 0.0
  %2795 = vmatmul.mubr.f32.gmra.mrb[0].mxu0 %v2403
  %v2796 = vpop.f32.mrb[0].mxu0
  %v2797 = vadd.f32 %v2428, %v2796
  %v2798 = vpop.f32.mrb[0].mxu0
  %2799 = vmatprep.mubr.f32.mxu0 0.0
  %2800 = vmatmul.mubr.f32.gmra.mrb[0].mxu0 %v2404
  %v2801 = vpop.f32.mrb[0].mxu0
  %v2802 = vadd.f32 %v2428, %v2801
  %v2803 = vpop.f32.mrb[0].mxu0
  %2804 = vmatprep.mubr.f32.mxu0 0.0
  %2805 = vmatmul.mubr.f32.gmra.mrb[0].mxu0 %v2405
  %v2806 = vpop.f32.mrb[0].mxu0
  %v2807 = vadd.f32 %v2428, %v2806
  %v2808 = vpop.f32.mrb[0].mxu0
  %2809 = vmatprep.mubr.f32.mxu0 0.0
  %2810 = vmatmul.mubr.f32.gmra.mrb[0].mxu0 %v2406
  %v2811 = vpop.f32.mrb[0].mxu0
  %v2812 = vadd.f32 %v2428, %v2811
  %v2813 = vpop.f32.mrb[0].mxu0
  %2814 = vdwg.mxu0
  %vm2815 = vcmask 7168
  %2816 = vst.msk [vmem:[%s5] sm:$0xff] %vm2815, %v2497
  %2817 = vst.msk [vmem:[%s5 + $0x8] sm:$0xff] %vm2815, %v2502
  %2818 = vst.msk [vmem:[%s5 + $0x10] sm:$0xff] %vm2815, %v2507
  %2819 = vst.msk [vmem:[%s5 + $0x18] sm:$0xff] %vm2815, %v2512
  %2820 = vst.msk [vmem:[%s5 + $0x20] sm:$0xff] %vm2815, %v2517
  %2821 = vst.msk [vmem:[%s5 + $0x28] sm:$0xff] %vm2815, %v2522
  %2822 = vst.msk [vmem:[%s5 + $0x30] sm:$0xff] %vm2815, %v2527
  %2823 = vst.msk [vmem:[%s5 + $0x38] sm:$0xff] %vm2815, %v2532
  %2824 = vst.msk [vmem:[%s5 + $0x40] sm:$0xff] %vm2815, %v2537
  %2825 = vst.msk [vmem:[%s5 + $0x48] sm:$0xff] %vm2815, %v2542
  %2826 = vst.msk [vmem:[%s5 + $0x50] sm:$0xff] %vm2815, %v2547
  %2827 = vst.msk [vmem:[%s5 + $0x58] sm:$0xff] %vm2815, %v2552
  %2828 = vst.msk [vmem:[%s5 + $0x60] sm:$0xff] %vm2815, %v2557
  %2829 = vst.msk [vmem:[%s5 + $0x68] sm:$0xff] %vm2815, %v2562
  %2830 = vst.msk [vmem:[%s5 + $0x70] sm:$0xff] %vm2815, %v2567
  %2831 = vst.msk [vmem:[%s5 + $0x78] sm:$0xff] %vm2815, %v2572
  %2832 = vst.msk [vmem:[%s5 + $0x80] sm:$0xff] %vm2815, %v2577
  %2833 = vst.msk [vmem:[%s5 + $0x88] sm:$0xff] %vm2815, %v2582
  %2834 = vst.msk [vmem:[%s5 + $0x90] sm:$0xff] %vm2815, %v2587
  %2835 = vst.msk [vmem:[%s5 + $0x98] sm:$0xff] %vm2815, %v2592
  %2836 = vst.msk [vmem:[%s5 + $0xa0] sm:$0xff] %vm2815, %v2597
  %2837 = vst.msk [vmem:[%s5 + $0xa8] sm:$0xff] %vm2815, %v2602
  %2838 = vst.msk [vmem:[%s5 + $0xb0] sm:$0xff] %vm2815, %v2607
  %2839 = vst.msk [vmem:[%s5 + $0xb8] sm:$0xff] %vm2815, %v2612
  %2840 = vst.msk [vmem:[%s5 + $0xc0] sm:$0xff] %vm2815, %v2617
  %2841 = vst.msk [vmem:[%s5 + $0xc8] sm:$0xff] %vm2815, %v2622
  %2842 = vst.msk [vmem:[%s5 + $0xd0] sm:$0xff] %vm2815, %v2627
  %2843 = vst.msk [vmem:[%s5 + $0xd8] sm:$0xff] %vm2815, %v2632
  %2844 = vst.msk [vmem:[%s5 + $0xe0] sm:$0xff] %vm2815, %v2637
  %2845 = vst.msk [vmem:[%s5 + $0xe8] sm:$0xff] %vm2815, %v2642
  %2846 = vst.msk [vmem:[%s5 + $0xf0] sm:$0xff] %vm2815, %v2647
  %2847 = vst.msk [vmem:[%s5 + $0xf8] sm:$0xff] %vm2815, %v2652
  %2848 = vst.msk [vmem:[%s5 + $0x100] sm:$0xff] %vm2815, %v2657
  %2849 = vst.msk [vmem:[%s5 + $0x108] sm:$0xff] %vm2815, %v2662
  %2850 = vst.msk [vmem:[%s5 + $0x110] sm:$0xff] %vm2815, %v2667
  %2851 = vst.msk [vmem:[%s5 + $0x118] sm:$0xff] %vm2815, %v2672
  %2852 = vst.msk [vmem:[%s5 + $0x120] sm:$0xff] %vm2815, %v2677
  %2853 = vst.msk [vmem:[%s5 + $0x128] sm:$0xff] %vm2815, %v2682
  %2854 = vst.msk [vmem:[%s5 + $0x130] sm:$0xff] %vm2815, %v2687
  %2855 = vst.msk [vmem:[%s5 + $0x138] sm:$0xff] %vm2815, %v2692
  %2856 = vst.msk [vmem:[%s5 + $0x140] sm:$0xff] %vm2815, %v2697
  %2857 = vst.msk [vmem:[%s5 + $0x148] sm:$0xff] %vm2815, %v2702
  %2858 = vst.msk [vmem:[%s5 + $0x150] sm:$0xff] %vm2815, %v2707
  %2859 = vst.msk [vmem:[%s5 + $0x158] sm:$0xff] %vm2815, %v2712
  %2860 = vst.msk [vmem:[%s5 + $0x160] sm:$0xff] %vm2815, %v2717
  %2861 = vst.msk [vmem:[%s5 + $0x168] sm:$0xff] %vm2815, %v2722
  %2862 = vst.msk [vmem:[%s5 + $0x170] sm:$0xff] %vm2815, %v2727
  %2863 = vst.msk [vmem:[%s5 + $0x178] sm:$0xff] %vm2815, %v2732
  %2864 = vst.msk [vmem:[%s5 + $0x180] sm:$0xff] %vm2815, %v2737
  %2865 = vst.msk [vmem:[%s5 + $0x188] sm:$0xff] %vm2815, %v2742
  %2866 = vst.msk [vmem:[%s5 + $0x190] sm:$0xff] %vm2815, %v2747
  %2867 = vst.msk [vmem:[%s5 + $0x198] sm:$0xff] %vm2815, %v2752
  %2868 = vst.msk [vmem:[%s5 + $0x1a0] sm:$0xff] %vm2815, %v2757
  %2869 = vst.msk [vmem:[%s5 + $0x1a8] sm:$0xff] %vm2815, %v2762
  %2870 = vst.msk [vmem:[%s5 + $0x1b0] sm:$0xff] %vm2815, %v2767
  %2871 = vst.msk [vmem:[%s5 + $0x1b8] sm:$0xff] %vm2815, %v2772
  %2872 = vst.msk [vmem:[%s5 + $0x1c0] sm:$0xff] %vm2815, %v2777
  %2873 = vst.msk [vmem:[%s5 + $0x1c8] sm:$0xff] %vm2815, %v2782
  %2874 = vst.msk [vmem:[%s5 + $0x1d0] sm:$0xff] %vm2815, %v2787
  %2875 = vst.msk [vmem:[%s5 + $0x1d8] sm:$0xff] %vm2815, %v2792
  %2876 = vst.msk [vmem:[%s5 + $0x1e0] sm:$0xff] %vm2815, %v2797
  %2877 = vst.msk [vmem:[%s5 + $0x1e8] sm:$0xff] %vm2815, %v2802
  %2878 = vst.msk [vmem:[%s5 + $0x1f0] sm:$0xff] %vm2815, %v2807
  %2879 = vst.msk [vmem:[%s5 + $0x1f8] sm:$0xff] %vm2815, %v2812
  // Predicated region
  $region22: #{_lambda_.19} parent=0 // pred_check
    _
  $region23: #{_lambda_.19} parent=0 // pred_check_branch
    %2881 = sbr.rel (0) target = $region25
  $region24: #{_lambda_.19} parent=0 // pred_region
    _
  $region25: #{_lambda_.19} parent=0 // pred_fallthru
    _
  // Predicated region
  $region26: #{_lambda_.19} parent=0 // pred_check
    _
  $region27: #{_lambda_.19} parent=0 // pred_check_branch
    %2883 = sbr.rel (0) target = $region29
  $region28: #{_lambda_.19} parent=0 // pred_region
    _
  $region29: #{_lambda_.19} parent=0 // pred_fallthru
    _

</llo_original>
